<compile_context>
chip_gen: v5e
topology: v5e:2x2
jax: 0.10.0
libtpu: 0.0.40
codegen_flags: <defaults>
</compile_context>

<pallas_src>
import functools

import jax
import jax.numpy as jnp
from jax.experimental import pallas as pl
from jax.experimental.pallas import tpu as pltpu

_VMEM_LIMIT = 48 * 1024 * 1024  # explicit scoped-VMEM budget (fits v7x 64 MiB)


def _round_up(x, m):
    return ((x + m - 1) // m) * m


# ---------------------------------------------------------------------------
# Kernel 1: row-tiled matmul + bias  (ConvTranspose2d(k=2,s=2), BN folded in)
# ---------------------------------------------------------------------------
def _matmul_bias_kernel(x_ref, w_ref, b_ref, o_ref):
    acc = jnp.dot(x_ref[...], w_ref[...], preferred_element_type=jnp.float32)
    o_ref[...] = (acc + b_ref[...]).astype(o_ref.dtype)


def _matmul_bias(x2d, w2d, bias, out_dtype):
    m, k = x2d.shape
    nout = w2d.shape[1]
    # Big row tiles (<=512) but keep >= 2 grid steps so both v7x TensorCores
    # get work on the "parallel" grid axis.
    tm = min(512, max(8, _round_up((m + 1) // 2, 8)))
    m_pad = _round_up(m, tm)
    if m_pad != m:
        x2d = jnp.pad(x2d, ((0, m_pad - m), (0, 0)))
    cost = pl.CostEstimate(
        flops=2 * m_pad * k * nout,
        transcendentals=0,
        bytes_accessed=(m_pad * k * x2d.dtype.itemsize
                        + k * nout * w2d.dtype.itemsize + nout * 4
                        + m_pad * nout * jnp.dtype(out_dtype).itemsize))
    # TODO(synk): mark constant w/b operands pipeline_mode=pl.Buffered(1) when
    # VMEM gets tight (v7x with large K*Nout); unnecessary at these sizes.
    out = pl.pallas_call(
        _matmul_bias_kernel,
        out_shape=jax.ShapeDtypeStruct((m_pad, nout), out_dtype),
        grid=(m_pad // tm,),
        in_specs=[
            pl.BlockSpec((tm, k), lambda i: (i, 0)),
            pl.BlockSpec((k, nout), lambda i: (0, 0)),
            pl.BlockSpec((1, nout), lambda i: (0, 0)),
        ],
        out_specs=pl.BlockSpec((tm, nout), lambda i: (i, 0)),
        compiler_params=pltpu.CompilerParams(
            dimension_semantics=("parallel",),
            vmem_limit_bytes=_VMEM_LIMIT),
        cost_estimate=cost,
    )(x2d, w2d, bias.reshape(1, nout).astype(jnp.float32))
    return out[:m]


# ---------------------------------------------------------------------------
# Kernels 2 & 3: 3x3 conv as 9 shifted-tap matmuls on a flat (pixels, C) tile
# held in VMEM (no HBM im2col).  The spatially zero-padded image is flattened
# row-major to (rows = H*W (+slack), C); tap (a, b) is then a contiguous row
# window starting at (a*W + b)*dilation.  Columns >= Wout of each output row
# are wrap-around garbage and are sliced away by the caller.  Multiple input
# "branches" implement the skip-connection concat without materializing it.
# ---------------------------------------------------------------------------
def _conv3x3_kernel(*refs, n_branches, has_affine, w_row, dil):
    o_ref = refs[-1]
    p_out, cpad = o_ref.shape[1], o_ref.shape[2]
    acc = jnp.zeros((p_out, cpad), jnp.float32)
    for br in range(n_branches):
        x_ref, w_ref = refs[2 * br], refs[2 * br + 1]
        for a in range(3):
            for b in range(3):
                start = (a * w_row + b) * dil
                acc = acc + jnp.dot(x_ref[0, pl.ds(start, p_out), :],
                                    w_ref[a * 3 + b],
                                    preferred_element_type=jnp.float32)
    acc = jnp.maximum(acc + refs[2 * n_branches][...], 0.0)       # bias + ReLU
    if has_affine:                                                # folded BN2
        acc = acc * refs[2 * n_branches + 1][...] + refs[2 * n_branches + 2][...]
    o_ref[0] = acc.astype(o_ref.dtype)


def _conv3x3(branches, bias, affine, *, w_row, dil, p_out, out_dtype):
    """branches: [(x_flat (N, P, C) bf16, w (9, C, Cpad) bf16), ...]."""
    n = branches[0][0].shape[0]
    cpad = branches[0][1].shape[-1]
    operands, in_specs = [], []
    flops = 0
    byts = n * p_out * cpad * jnp.dtype(out_dtype).itemsize
    for x_flat, w in branches:
        operands += [x_flat, w]
        in_specs += [
            pl.BlockSpec((1,) + tuple(x_flat.shape[1:]), lambda i: (i, 0, 0)),
            pl.BlockSpec(tuple(w.shape), lambda i: (0, 0, 0)),
        ]
        flops += 2 * n * p_out * 9 * w.shape[1] * cpad
        byts += x_flat.size * x_flat.dtype.itemsize + w.size * w.dtype.itemsize
    vec_spec = pl.BlockSpec((1, cpad), lambda i: (0, 0))
    operands.append(bias.reshape(1, cpad).astype(jnp.float32))
    in_specs.append(vec_spec)
    if affine is not None:
        for v in affine:
            operands.append(v.reshape(1, cpad).astype(jnp.float32))
            in_specs.append(vec_spec)
    kernel = functools.partial(
        _conv3x3_kernel, n_branches=len(branches),
        has_affine=affine is not None, w_row=w_row, dil=dil)
    return pl.pallas_call(
        kernel,
        out_shape=jax.ShapeDtypeStruct((n, p_out, cpad), out_dtype),
        grid=(n,),
        in_specs=in_specs,
        out_specs=pl.BlockSpec((1, p_out, cpad), lambda i: (i, 0, 0)),
        compiler_params=pltpu.CompilerParams(
            dimension_semantics=("parallel",),
            vmem_limit_bytes=_VMEM_LIMIT),
        cost_estimate=pl.CostEstimate(flops=flops, transcendentals=0,
                                      bytes_accessed=byts),
    )(*operands)


# ---------------------------------------------------------------------------
# Plain-JAX layout glue (pad/crop, flatten, BN folding)
# ---------------------------------------------------------------------------
def _pad_or_crop_hw(x, pads):
    """x: NHWC.  pads = (w_left, w_right, h_top, h_bot), like F.pad on NCHW;
    negative values crop (torch.nn.functional.pad semantics)."""
    w_l, w_r, h_t, h_b = pads
    _, h, w, _ = x.shape
    x = x[:, max(0, -h_t): h - max(0, -h_b), max(0, -w_l): w - max(0, -w_r), :]
    return jnp.pad(x, ((0, 0),
                       (max(0, h_t), max(0, h_b)),
                       (max(0, w_l), max(0, w_r)),
                       (0, 0)))


def _flatten_rows(x_nhwc, min_rows):
    """(N,H,W,C) -> (N,P,C) row-major pixels, zero-padded to >= min_rows rows."""
    n, h, w, c = x_nhwc.shape
    p = h * w
    x = x_nhwc.reshape(n, p, c)
    p_pad = _round_up(max(p, min_rows), 8)
    if p_pad != p:
        x = jnp.pad(x, ((0, 0), (0, p_pad - p), (0, 0)))
    return x


def _fold_bn(gamma, beta, mean, var, eps=1e-5):
    scale = gamma * jax.lax.rsqrt(var + eps)
    return scale, beta - mean * scale


# ---------------------------------------------------------------------------
# UpConv module
# ---------------------------------------------------------------------------
class UpConvPallas:
    def __init__(self, in_channels, out_channels, padding=0, dilation=1,
                 crop=True, key=None):
        self.in_channels = in_channels
        self.out_channels = out_channels
        self.padding = padding
        self.dilation = dilation
        self.crop = crop

        key = jax.random.PRNGKey(1234) if key is None else key
        ks = jax.random.split(key, 12)
        f32 = jnp.float32

        # ConvTranspose2d(in, out, 2, 2): weight (Cin, Cout, 2, 2)
        self.up_w = 0.1 * jax.random.normal(ks[0], (in_channels, out_channels, 2, 2), f32)
        self.up_b = 0.1 * jax.random.normal(ks[1], (out_channels,), f32)

        # BatchNorm2d(in_channels) — eval-mode parameters
        self.bn1_gamma = 1.0 + 0.1 * jax.random.normal(ks[2], (in_channels,), f32)
        self.bn1_beta = 0.1 * jax.random.normal(ks[3], (in_channels,), f32)
        self.bn1_mean = 0.1 * jax.random.normal(ks[4], (in_channels,), f32)
        self.bn1_var = jax.random.uniform(ks[5], (in_channels,), f32, 0.5, 1.5)

        # Conv2d(in_channels, out_channels, 3): weight (Cout, Cin, 3, 3)
        self.conv1_w = 0.1 * jax.random.normal(ks[6], (out_channels, in_channels, 3, 3), f32)
        self.conv1_b = 0.1 * jax.random.normal(ks[7], (out_channels,), f32)

        # BatchNorm2d(out_channels)
        self.bn2_gamma = 1.0 + 0.1 * jax.random.normal(ks[8], (out_channels,), f32)
        self.bn2_beta = 0.1 * jax.random.normal(ks[9], (out_channels,), f32)
        self.bn2_mean = 0.1 * jax.random.normal(ks[10], (out_channels,), f32)
        self.bn2_var = jax.random.uniform(ks[11], (out_channels,), f32, 0.5, 1.5)

        # Conv2d(out_channels, out_channels, 3)
        k_a, k_b = jax.random.split(ks[11])
        self.conv2_w = 0.1 * jax.random.normal(k_a, (out_channels, out_channels, 3, 3), f32)
        self.conv2_b = 0.1 * jax.random.normal(k_b, (out_channels,), f32)

    def __call__(self, x_prev, x_cur):
        f32, bf16 = jnp.float32, jnp.bfloat16
        pad, dil = self.padding, self.dilation
        cout = self.out_channels
        cpad = _round_up(cout, 128)              # lane-dense output channels

        # NCHW (PyTorch) -> NHWC (kernel layout)
        x_prev = jnp.transpose(x_prev, (0, 2, 3, 1)).astype(f32)
        x_cur = jnp.transpose(x_cur, (0, 2, 3, 1)).astype(f32)
        n, hc, wc, cin = x_cur.shape
        cprev = x_prev.shape[-1]
        cprev_pad = _round_up(cprev, 128)

        # ---- fold BatchNorm1 (acts on the concat channels: [up | skip]) ----
        scale1, shift1 = _fold_bn(self.bn1_gamma, self.bn1_beta,
                                  self.bn1_mean, self.bn1_var)
        s1_up, t1_up = scale1[:cout], shift1[:cout]
        s1_pv, t1_pv = scale1[cout:], shift1[cout:]

        # ---- ConvTranspose2d(k=2,s=2) as one matmul; BN1(up part) folded ----
        # weight (Cin, Cout, 2, 2) -> columns ordered (a, b, c_pad)
        w_up = jnp.transpose(self.up_w, (0, 2, 3, 1)) * s1_up
        b_up = s1_up * self.up_b
        if self.crop:
            b_up = b_up + t1_up      # up is never F.pad'ed when crop=True
        w_up = jnp.pad(w_up, ((0, 0), (0, 0), (0, 0), (0, cpad - cout)))
        b_up = jnp.pad(jnp.broadcast_to(b_up, (2, 2, cout)),
                       ((0, 0), (0, 0), (0, cpad - cout)))
        up_flat = _matmul_bias(
            x_cur.reshape(n * hc * wc, cin).astype(bf16),
            w_up.reshape(cin, 4 * cpad).astype(bf16),
            b_up.reshape(4 * cpad), out_dtype=bf16)
        # de-interleave the 2x2 phases -> (N, 2hc, 2wc, Cpad)
        # TODO(synk): fold this de-interleave into conv1's input indexing (or a
        # strided in-kernel store) to drop the remaining XLA transpose.
        up = up_flat.reshape(n, hc, wc, 2, 2, cpad)
        up = jnp.transpose(up, (0, 1, 3, 2, 4, 5)).reshape(n, 2 * hc, 2 * wc, cpad)

        # ---- crop / pad alignment (F.pad semantics) + BN1 on the skip ----
        hcu, wcu = up.shape[1:3]
        hp, wp = x_prev.shape[1:3]
        diff_h, diff_w = hcu - hp, wcu - wp
        if self.crop:
            h_p, w_p = diff_h // 2, diff_w // 2
            x_prev = _pad_or_crop_hw(x_prev, (w_p, diff_w - w_p, h_p, diff_h - h_p))
        else:
            diff_h, diff_w = -diff_h, -diff_w
            h_p, w_p = diff_h // 2, diff_w // 2
            up = _pad_or_crop_hw(up, (w_p, diff_w - w_p, h_p, diff_h - h_p))
            # BN1 shift applied after F.pad (matches torch pad-then-BN order)
            up = (up.astype(f32) + jnp.pad(t1_up, (0, cpad - cout))).astype(bf16)
        # skip branch: F.pad/crop first, then folded BN1 affine (torch order,
        # so conv zero-padding and F.pad zeros stay numerically exact)
        xp = (x_prev * s1_pv + t1_pv).astype(bf16)
        xp = jnp.pad(xp, ((0, 0), (0, 0), (0, 0), (0, cprev_pad - cprev)))
        assert up.shape[1:3] == xp.shape[1:3]

        # ---- conv geometry (flat-row bookkeeping incl. conv zero padding) ----
        if pad:
            up = jnp.pad(up, ((0, 0), (pad, pad), (pad, pad), (0, 0)))
            xp = jnp.pad(xp, ((0, 0), (pad, pad), (pad, pad), (0, 0)))
        h1_in, w1_row = up.shape[1], up.shape[2]
        h1_v, w1_v = h1_in - 2 * dil, w1_row - 2 * dil     # valid conv1 output
        if pad == 0:
            w2_row = w1_row                                 # reuse o1 directly
            h2_v, w2_v = h1_v - 2 * dil, w1_v - 2 * dil
        else:
            w2_row = w1_v + 2 * pad
            h2_v, w2_v = h1_v + 2 * pad - 2 * dil, w1_v + 2 * pad - 2 * dil
        p2_out = _round_up(h2_v * w2_row, 8)
        p1_need = h1_v * w1_row
        if pad == 0:      # conv2 reads o1's flat buffer directly -> add slack
            p1_need = max(p1_need, 2 * dil * w2_row + 2 * dil + p2_out)
        p1_out = _round_up(p1_need, 8)
        p1_in = 2 * dil * w1_row + 2 * dil + p1_out

        # ---- conv1 (split over the concat; BN2 + ReLU fused epilogue) ----
        scale2, shift2 = _fold_bn(self.bn2_gamma, self.bn2_beta,
                                  self.bn2_mean, self.bn2_var)
        w1 = jnp.transpose(self.conv1_w, (2, 3, 1, 0))     # (kh, kw, ci, co)
        w1a = jnp.pad(w1[:, :, :cout, :],
                      ((0, 0), (0, 0), (0, cpad - cout), (0, cpad - cout)))
        w1b = jnp.pad(w1[:, :, cout:, :],
                      ((0, 0), (0, 0), (0, cprev_pad - cprev), (0, cpad - cout)))
        o1 = _conv3x3(
            [(_flatten_rows(up, p1_in), w1a.reshape(9, cpad, cpad).astype(bf16)),
             (_flatten_rows(xp, p1_in), w1b.reshape(9, cprev_pad, cpad).astype(bf16))],
            jnp.pad(self.conv1_b, (0, cpad - cout)),
            (jnp.pad(scale2, (0, cpad - cout)), jnp.pad(shift2, (0, cpad - cout))),
            w_row=w1_row, dil=dil, p_out=p1_out, out_dtype=bf16)

        # ---- conv2 + ReLU ----
        w2 = jnp.pad(jnp.transpose(self.conv2_w, (2, 3, 1, 0)),
                     ((0, 0), (0, 0), (0, cpad - cout), (0, cpad - cout)))
        if pad == 0:
            x2_flat = o1         # no inter-kernel HBM glue when padding == 0
        else:
            o1_map = o1[:, :h1_v * w1_row, :].reshape(n, h1_v, w1_row, cpad)
            o1_map = jnp.pad(o1_map[:, :, :w1_v, :],
                             ((0, 0), (pad, pad), (pad, pad), (0, 0)))
            x2_flat = _flatten_rows(o1_map, 2 * dil * w2_row + 2 * dil + p2_out)
        o2 = _conv3x3(
            [(x2_flat, w2.reshape(9, cpad, cpad).astype(bf16))],
            jnp.pad(self.conv2_b, (0, cpad - cout)), None,
            w_row=w2_row, dil=dil, p_out=p2_out, out_dtype=f32)

        # ---- extract the valid region, back to NCHW ----
        out = o2[:, :h2_v * w2_row, :cout].reshape(n, h2_v, w2_row, cout)
        out = out[:, :, :w2_v, :]
        return jnp.transpose(out, (0, 3, 1, 2))


if __name__ == "__main__":
    in_channels, out_channels = 8, 4
    key = jax.random.PRNGKey(0)
    k_prev, k_cur = jax.random.split(key)

    # x_cur: decoder feature (to be upsampled); x_prev: encoder skip (cropped)
    x_cur = jax.random.normal(k_cur, (2, in_channels, 8, 8), jnp.float32)
    x_prev = jax.random.normal(k_prev, (2, in_channels - out_channels, 20, 20),
                               jnp.float32)

    model = UpConvPallas(in_channels, out_channels, padding=0, dilation=1,
                         crop=True, key=jax.random.PRNGKey(42))
    fwd = jax.jit(lambda a, b: model(a, b))
    out = jax.block_until_ready(fwd(x_prev, x_cur))
    assert out.shape == (2, out_channels, 12, 12), out.shape
    assert bool(jnp.all(jnp.isfinite(out)))
    print("KERNEL_OK")
</pallas_src>

<mosaic_0001>
module attributes {stable_mosaic.version = 11 : i64} {
  func.func @_matmul_bias_kernel(%arg0: i32, %arg1: memref<64x8xbf16, #tpu.memory_space<vmem>>, %arg2: memref<8x512xbf16, #tpu.memory_space<vmem>>, %arg3: memref<1x512xf32, #tpu.memory_space<vmem>>, %arg4: memref<64x512xbf16, #tpu.memory_space<vmem>>) attributes {dimension_semantics = [#tpu.dimension_semantics<parallel>], iteration_bounds = array<i64: 2>, scalar_prefetch = 0 : i64, scratch_operands = 0 : i64, tpu.core_type = #tpu.core_type<tc>, window_params = [{transform_indices = @transform_0, window_bounds = array<i64: 64, 8>}, {pipeline_mode = #tpu.pipeline_mode<synchronous>, transform_indices = @transform_1, window_bounds = array<i64: 8, 512>}, {pipeline_mode = #tpu.pipeline_mode<synchronous>, transform_indices = @transform_2, window_bounds = array<i64: 1, 512>}, {transform_indices = @transform_3, window_bounds = array<i64: 64, 512>}]} {
    %c0 = arith.constant 0 : index
    %c0_0 = arith.constant 0 : index
    %0 = vector.load %arg1[%c0, %c0_0] : memref<64x8xbf16, #tpu.memory_space<vmem>>, vector<64x8xbf16>
    %c0_1 = arith.constant 0 : index
    %c0_2 = arith.constant 0 : index
    %1 = vector.load %arg2[%c0_1, %c0_2] : memref<8x512xbf16, #tpu.memory_space<vmem>>, vector<8x512xbf16>
    %cst = arith.constant dense<0.000000e+00> : vector<64x512xf32>
    %2 = tpu.matmul %0, %1, %cst {dimension_numbers = #tpu.dot_dimension_numbers<[1], [0], [0], [1], [0, 0, 1, 1], [], []>} : vector<64x8xbf16>, vector<8x512xbf16>, vector<64x512xf32> -> vector<64x512xf32>
    %c0_3 = arith.constant 0 : index
    %c0_4 = arith.constant 0 : index
    %3 = vector.load %arg3[%c0_3, %c0_4] : memref<1x512xf32, #tpu.memory_space<vmem>>, vector<1x512xf32>
    %4 = vector.broadcast %3 : vector<1x512xf32> to vector<64x512xf32>
    %5 = arith.addf %2, %4 : vector<64x512xf32>
    %6 = arith.truncf %5 : vector<64x512xf32> to vector<64x512xbf16>
    %c0_5 = arith.constant 0 : index
    %c0_6 = arith.constant 0 : index
    %7 = vector.load %arg4[%c0_5, %c0_6] : memref<64x512xbf16, #tpu.memory_space<vmem>>, vector<64x512xbf16>
    tpu.vector_store %arg4[%c0_5, %c0_6], %6 {strides = array<i32>} : memref<64x512xbf16, #tpu.memory_space<vmem>>, vector<64x512xbf16>,
    return
  }
  func.func @transform_0(%arg0: i32) -> (i32, i32) {
    %c0_i32 = arith.constant 0 : i32
    %c0_i32_0 = arith.constant 0 : i32
    return %arg0, %c0_i32 : i32, i32
  }
  func.func @transform_1(%arg0: i32) -> (i32, i32) {
    %c0_i32 = arith.constant 0 : i32
    %c0_i32_0 = arith.constant 0 : i32
    %c0_i32_1 = arith.constant 0 : i32
    return %c0_i32, %c0_i32_0 : i32, i32
  }
  func.func @transform_2(%arg0: i32) -> (i32, i32) {
    %c0_i32 = arith.constant 0 : i32
    %c0_i32_0 = arith.constant 0 : i32
    %c0_i32_1 = arith.constant 0 : i32
    return %c0_i32, %c0_i32_0 : i32, i32
  }
  func.func @transform_3(%arg0: i32) -> (i32, i32) {
    %c0_i32 = arith.constant 0 : i32
    %c0_i32_0 = arith.constant 0 : i32
    return %arg0, %c0_i32 : i32, i32
  }
}

module attributes {stable_mosaic.version = 11 : i64} {
  func.func @_conv3x3_kernel(%arg0: i32, %arg1: memref<1x272x128xbf16, #tpu.memory_space<vmem>>, %arg2: memref<9x128x128xbf16, #tpu.memory_space<vmem>>, %arg3: memref<1x272x128xbf16, #tpu.memory_space<vmem>>, %arg4: memref<9x128x128xbf16, #tpu.memory_space<vmem>>, %arg5: memref<1x128xf32, #tpu.memory_space<vmem>>, %arg6: memref<1x128xf32, #tpu.memory_space<vmem>>, %arg7: memref<1x128xf32, #tpu.memory_space<vmem>>, %arg8: memref<1x232x128xbf16, #tpu.memory_space<vmem>>) attributes {dimension_semantics = [#tpu.dimension_semantics<parallel>], iteration_bounds = array<i64: 2>, scalar_prefetch = 0 : i64, scratch_operands = 0 : i64, tpu.core_type = #tpu.core_type<tc>, window_params = [{transform_indices = @transform_0, window_bounds = array<i64: 1, 272, 128>}, {pipeline_mode = #tpu.pipeline_mode<synchronous>, transform_indices = @transform_1, window_bounds = array<i64: 9, 128, 128>}, {transform_indices = @transform_2, window_bounds = array<i64: 1, 272, 128>}, {pipeline_mode = #tpu.pipeline_mode<synchronous>, transform_indices = @transform_3, window_bounds = array<i64: 9, 128, 128>}, {pipeline_mode = #tpu.pipeline_mode<synchronous>, transform_indices = @transform_4, window_bounds = array<i64: 1, 128>}, {pipeline_mode = #tpu.pipeline_mode<synchronous>, transform_indices = @transform_5, window_bounds = array<i64: 1, 128>}, {pipeline_mode = #tpu.pipeline_mode<synchronous>, transform_indices = @transform_6, window_bounds = array<i64: 1, 128>}, {transform_indices = @transform_7, window_bounds = array<i64: 1, 232, 128>}]} {
    %cst = arith.constant 0.000000e+00 : f32
    %0 = vector.broadcast %cst : f32 to vector<232x128xf32>
    %c0 = arith.constant 0 : index
    %c0_0 = arith.constant 0 : index
    %c0_1 = arith.constant 0 : index
    %1 = vector.load %arg1[%c0, %c0_0, %c0_1] : memref<1x272x128xbf16, #tpu.memory_space<vmem>>, vector<1x232x128xbf16>
    %2 = vector.shape_cast %1 : vector<1x232x128xbf16> to vector<232x128xbf16>
    %c0_2 = arith.constant 0 : index
    %c0_3 = arith.constant 0 : index
    %c0_4 = arith.constant 0 : index
    %3 = vector.load %arg2[%c0_2, %c0_3, %c0_4] : memref<9x128x128xbf16, #tpu.memory_space<vmem>>, vector<1x128x128xbf16>
    %4 = vector.shape_cast %3 : vector<1x128x128xbf16> to vector<128x128xbf16>
    %cst_5 = arith.constant dense<0.000000e+00> : vector<232x128xf32>
    %5 = tpu.matmul %2, %4, %cst_5 {dimension_numbers = #tpu.dot_dimension_numbers<[1], [0], [0], [1], [0, 0, 1, 1], [], []>} : vector<232x128xbf16>, vector<128x128xbf16>, vector<232x128xf32> -> vector<232x128xf32>
    %6 = arith.addf %0, %5 : vector<232x128xf32>
    %c0_6 = arith.constant 0 : index
    %c1 = arith.constant 1 : index
    %c0_7 = arith.constant 0 : index
    %7 = vector.load %arg1[%c0_6, %c1, %c0_7] : memref<1x272x128xbf16, #tpu.memory_space<vmem>>, vector<1x232x128xbf16>
    %8 = vector.shape_cast %7 : vector<1x232x128xbf16> to vector<232x128xbf16>
    %c1_8 = arith.constant 1 : index
    %c0_9 = arith.constant 0 : index
    %c0_10 = arith.constant 0 : index
    %9 = vector.load %arg2[%c1_8, %c0_9, %c0_10] : memref<9x128x128xbf16, #tpu.memory_space<vmem>>, vector<1x128x128xbf16>
    %10 = vector.shape_cast %9 : vector<1x128x128xbf16> to vector<128x128xbf16>
    %cst_11 = arith.constant dense<0.000000e+00> : vector<232x128xf32>
    %11 = tpu.matmul %8, %10, %cst_11 {dimension_numbers = #tpu.dot_dimension_numbers<[1], [0], [0], [1], [0, 0, 1, 1], [], []>} : vector<232x128xbf16>, vector<128x128xbf16>, vector<232x128xf32> -> vector<232x128xf32>
    %12 = arith.addf %6, %11 : vector<232x128xf32>
    %c0_12 = arith.constant 0 : index
    %c2 = arith.constant 2 : index
    %c0_13 = arith.constant 0 : index
    %13 = vector.load %arg1[%c0_12, %c2, %c0_13] : memref<1x272x128xbf16, #tpu.memory_space<vmem>>, vector<1x232x128xbf16>
    %14 = vector.shape_cast %13 : vector<1x232x128xbf16> to vector<232x128xbf16>
    %c2_14 = arith.constant 2 : index
    %c0_15 = arith.constant 0 : index
    %c0_16 = arith.constant 0 : index
    %15 = vector.load %arg2[%c2_14, %c0_15, %c0_16] : memref<9x128x128xbf16, #tpu.memory_space<vmem>>, vector<1x128x128xbf16>
    %16 = vector.shape_cast %15 : vector<1x128x128xbf16> to vector<128x128xbf16>
    %cst_17 = arith.constant dense<0.000000e+00> : vector<232x128xf32>
    %17 = tpu.matmul %14, %16, %cst_17 {dimension_numbers = #tpu.dot_dimension_numbers<[1], [0], [0], [1], [0, 0, 1, 1], [], []>} : vector<232x128xbf16>, vector<128x128xbf16>, vector<232x128xf32> -> vector<232x128xf32>
    %18 = arith.addf %12, %17 : vector<232x128xf32>
    %c0_18 = arith.constant 0 : index
    %c16 = arith.constant 16 : index
    %c0_19 = arith.constant 0 : index
    %19 = vector.load %arg1[%c0_18, %c16, %c0_19] : memref<1x272x128xbf16, #tpu.memory_space<vmem>>, vector<1x232x128xbf16>
    %20 = vector.shape_cast %19 : vector<1x232x128xbf16> to vector<232x128xbf16>
    %c3 = arith.constant 3 : index
    %c0_20 = arith.constant 0 : index
    %c0_21 = arith.constant 0 : index
    %21 = vector.load %arg2[%c3, %c0_20, %c0_21] : memref<9x128x128xbf16, #tpu.memory_space<vmem>>, vector<1x128x128xbf16>
    %22 = vector.shape_cast %21 : vector<1x128x128xbf16> to vector<128x128xbf16>
    %cst_22 = arith.constant dense<0.000000e+00> : vector<232x128xf32>
    %23 = tpu.matmul %20, %22, %cst_22 {dimension_numbers = #tpu.dot_dimension_numbers<[1], [0], [0], [1], [0, 0, 1, 1], [], []>} : vector<232x128xbf16>, vector<128x128xbf16>, vector<232x128xf32> -> vector<232x128xf32>
    %24 = arith.addf %18, %23 : vector<232x128xf32>
    %c0_23 = arith.constant 0 : index
    %c17 = arith.constant 17 : index
    %c0_24 = arith.constant 0 : index
    %25 = vector.load %arg1[%c0_23, %c17, %c0_24] : memref<1x272x128xbf16, #tpu.memory_space<vmem>>, vector<1x232x128xbf16>
    %26 = vector.shape_cast %25 : vector<1x232x128xbf16> to vector<232x128xbf16>
    %c4 = arith.constant 4 : index
    %c0_25 = arith.constant 0 : index
    %c0_26 = arith.constant 0 : index
    %27 = vector.load %arg2[%c4, %c0_25, %c0_26] : memref<9x128x128xbf16, #tpu.memory_space<vmem>>, vector<1x128x128xbf16>
    %28 = vector.shape_cast %27 : vector<1x128x128xbf16> to vector<128x128xbf16>
    %cst_27 = arith.constant dense<0.000000e+00> : vector<232x128xf32>
    %29 = tpu.matmul %26, %28, %cst_27 {dimension_numbers = #tpu.dot_dimension_numbers<[1], [0], [0], [1], [0, 0, 1, 1], [], []>} : vector<232x128xbf16>, vector<128x128xbf16>, vector<232x128xf32> -> vector<232x128xf32>
    %30 = arith.addf %24, %29 : vector<232x128xf32>
    %c0_28 = arith.constant 0 : index
    %c18 = arith.constant 18 : index
    %c0_29 = arith.constant 0 : index
    %31 = vector.load %arg1[%c0_28, %c18, %c0_29] : memref<1x272x128xbf16, #tpu.memory_space<vmem>>, vector<1x232x128xbf16>
    %32 = vector.shape_cast %31 : vector<1x232x128xbf16> to vector<232x128xbf16>
    %c5 = arith.constant 5 : index
    %c0_30 = arith.constant 0 : index
    %c0_31 = arith.constant 0 : index
    %33 = vector.load %arg2[%c5, %c0_30, %c0_31] : memref<9x128x128xbf16, #tpu.memory_space<vmem>>, vector<1x128x128xbf16>
    %34 = vector.shape_cast %33 : vector<1x128x128xbf16> to vector<128x128xbf16>
    %cst_32 = arith.constant dense<0.000000e+00> : vector<232x128xf32>
    %35 = tpu.matmul %32, %34, %cst_32 {dimension_numbers = #tpu.dot_dimension_numbers<[1], [0], [0], [1], [0, 0, 1, 1], [], []>} : vector<232x128xbf16>, vector<128x128xbf16>, vector<232x128xf32> -> vector<232x128xf32>
    %36 = arith.addf %30, %35 : vector<232x128xf32>
    %c0_33 = arith.constant 0 : index
    %c32 = arith.constant 32 : index
    %c0_34 = arith.constant 0 : index
    %37 = vector.load %arg1[%c0_33, %c32, %c0_34] : memref<1x272x128xbf16, #tpu.memory_space<vmem>>, vector<1x232x128xbf16>
    %38 = vector.shape_cast %37 : vector<1x232x128xbf16> to vector<232x128xbf16>
    %c6 = arith.constant 6 : index
    %c0_35 = arith.constant 0 : index
    %c0_36 = arith.constant 0 : index
    %39 = vector.load %arg2[%c6, %c0_35, %c0_36] : memref<9x128x128xbf16, #tpu.memory_space<vmem>>, vector<1x128x128xbf16>
    %40 = vector.shape_cast %39 : vector<1x128x128xbf16> to vector<128x128xbf16>
    %cst_37 = arith.constant dense<0.000000e+00> : vector<232x128xf32>
    %41 = tpu.matmul %38, %40, %cst_37 {dimension_numbers = #tpu.dot_dimension_numbers<[1], [0], [0], [1], [0, 0, 1, 1], [], []>} : vector<232x128xbf16>, vector<128x128xbf16>, vector<232x128xf32> -> vector<232x128xf32>
    %42 = arith.addf %36, %41 : vector<232x128xf32>
    %c0_38 = arith.constant 0 : index
    %c33 = arith.constant 33 : index
    %c0_39 = arith.constant 0 : index
    %43 = vector.load %arg1[%c0_38, %c33, %c0_39] : memref<1x272x128xbf16, #tpu.memory_space<vmem>>, vector<1x232x128xbf16>
    %44 = vector.shape_cast %43 : vector<1x232x128xbf16> to vector<232x128xbf16>
    %c7 = arith.constant 7 : index
    %c0_40 = arith.constant 0 : index
    %c0_41 = arith.constant 0 : index
    %45 = vector.load %arg2[%c7, %c0_40, %c0_41] : memref<9x128x128xbf16, #tpu.memory_space<vmem>>, vector<1x128x128xbf16>
    %46 = vector.shape_cast %45 : vector<1x128x128xbf16> to vector<128x128xbf16>
    %cst_42 = arith.constant dense<0.000000e+00> : vector<232x128xf32>
    %47 = tpu.matmul %44, %46, %cst_42 {dimension_numbers = #tpu.dot_dimension_numbers<[1], [0], [0], [1], [0, 0, 1, 1], [], []>} : vector<232x128xbf16>, vector<128x128xbf16>, vector<232x128xf32> -> vector<232x128xf32>
    %48 = arith.addf %42, %47 : vector<232x128xf32>
    %c0_43 = arith.constant 0 : index
    %c34 = arith.constant 34 : index
    %c0_44 = arith.constant 0 : index
    %49 = vector.load %arg1[%c0_43, %c34, %c0_44] : memref<1x272x128xbf16, #tpu.memory_space<vmem>>, vector<1x232x128xbf16>
    %50 = vector.shape_cast %49 : vector<1x232x128xbf16> to vector<232x128xbf16>
    %c8 = arith.constant 8 : index
    %c0_45 = arith.constant 0 : index
    %c0_46 = arith.constant 0 : index
    %51 = vector.load %arg2[%c8, %c0_45, %c0_46] : memref<9x128x128xbf16, #tpu.memory_space<vmem>>, vector<1x128x128xbf16>
    %52 = vector.shape_cast %51 : vector<1x128x128xbf16> to vector<128x128xbf16>
    %cst_47 = arith.constant dense<0.000000e+00> : vector<232x128xf32>
    %53 = tpu.matmul %50, %52, %cst_47 {dimension_numbers = #tpu.dot_dimension_numbers<[1], [0], [0], [1], [0, 0, 1, 1], [], []>} : vector<232x128xbf16>, vector<128x128xbf16>, vector<232x128xf32> -> vector<232x128xf32>
    %54 = arith.addf %48, %53 : vector<232x128xf32>
    %c0_48 = arith.constant 0 : index
    %c0_49 = arith.constant 0 : index
    %c0_50 = arith.constant 0 : index
    %55 = vector.load %arg3[%c0_48, %c0_49, %c0_50] : memref<1x272x128xbf16, #tpu.memory_space<vmem>>, vector<1x232x128xbf16>
    %56 = vector.shape_cast %55 : vector<1x232x128xbf16> to vector<232x128xbf16>
    %c0_51 = arith.constant 0 : index
    %c0_52 = arith.constant 0 : index
    %c0_53 = arith.constant 0 : index
    %57 = vector.load %arg4[%c0_51, %c0_52, %c0_53] : memref<9x128x128xbf16, #tpu.memory_space<vmem>>, vector<1x128x128xbf16>
    %58 = vector.shape_cast %57 : vector<1x128x128xbf16> to vector<128x128xbf16>
    %cst_54 = arith.constant dense<0.000000e+00> : vector<232x128xf32>
    %59 = tpu.matmul %56, %58, %cst_54 {dimension_numbers = #tpu.dot_dimension_numbers<[1], [0], [0], [1], [0, 0, 1, 1], [], []>} : vector<232x128xbf16>, vector<128x128xbf16>, vector<232x128xf32> -> vector<232x128xf32>
    %60 = arith.addf %54, %59 : vector<232x128xf32>
    %c0_55 = arith.constant 0 : index
    %c1_56 = arith.constant 1 : index
    %c0_57 = arith.constant 0 : index
    %61 = vector.load %arg3[%c0_55, %c1_56, %c0_57] : memref<1x272x128xbf16, #tpu.memory_space<vmem>>, vector<1x232x128xbf16>
    %62 = vector.shape_cast %61 : vector<1x232x128xbf16> to vector<232x128xbf16>
    %c1_58 = arith.constant 1 : index
    %c0_59 = arith.constant 0 : index
    %c0_60 = arith.constant 0 : index
    %63 = vector.load %arg4[%c1_58, %c0_59, %c0_60] : memref<9x128x128xbf16, #tpu.memory_space<vmem>>, vector<1x128x128xbf16>
    %64 = vector.shape_cast %63 : vector<1x128x128xbf16> to vector<128x128xbf16>
    %cst_61 = arith.constant dense<0.000000e+00> : vector<232x128xf32>
    %65 = tpu.matmul %62, %64, %cst_61 {dimension_numbers = #tpu.dot_dimension_numbers<[1], [0], [0], [1], [0, 0, 1, 1], [], []>} : vector<232x128xbf16>, vector<128x128xbf16>, vector<232x128xf32> -> vector<232x128xf32>
    %66 = arith.addf %60, %65 : vector<232x128xf32>
    %c0_62 = arith.constant 0 : index
    %c2_63 = arith.constant 2 : index
    %c0_64 = arith.constant 0 : index
    %67 = vector.load %arg3[%c0_62, %c2_63, %c0_64] : memref<1x272x128xbf16, #tpu.memory_space<vmem>>, vector<1x232x128xbf16>
    %68 = vector.shape_cast %67 : vector<1x232x128xbf16> to vector<232x128xbf16>
    %c2_65 = arith.constant 2 : index
    %c0_66 = arith.constant 0 : index
    %c0_67 = arith.constant 0 : index
    %69 = vector.load %arg4[%c2_65, %c0_66, %c0_67] : memref<9x128x128xbf16, #tpu.memory_space<vmem>>, vector<1x128x128xbf16>
    %70 = vector.shape_cast %69 : vector<1x128x128xbf16> to vector<128x128xbf16>
    %cst_68 = arith.constant dense<0.000000e+00> : vector<232x128xf32>
    %71 = tpu.matmul %68, %70, %cst_68 {dimension_numbers = #tpu.dot_dimension_numbers<[1], [0], [0], [1], [0, 0, 1, 1], [], []>} : vector<232x128xbf16>, vector<128x128xbf16>, vector<232x128xf32> -> vector<232x128xf32>
    %72 = arith.addf %66, %71 : vector<232x128xf32>
    %c0_69 = arith.constant 0 : index
    %c16_70 = arith.constant 16 : index
    %c0_71 = arith.constant 0 : index
    %73 = vector.load %arg3[%c0_69, %c16_70, %c0_71] : memref<1x272x128xbf16, #tpu.memory_space<vmem>>, vector<1x232x128xbf16>
    %74 = vector.shape_cast %73 : vector<1x232x128xbf16> to vector<232x128xbf16>
    %c3_72 = arith.constant 3 : index
    %c0_73 = arith.constant 0 : index
    %c0_74 = arith.constant 0 : index
    %75 = vector.load %arg4[%c3_72, %c0_73, %c0_74] : memref<9x128x128xbf16, #tpu.memory_space<vmem>>, vector<1x128x128xbf16>
    %76 = vector.shape_cast %75 : vector<1x128x128xbf16> to vector<128x128xbf16>
    %cst_75 = arith.constant dense<0.000000e+00> : vector<232x128xf32>
    %77 = tpu.matmul %74, %76, %cst_75 {dimension_numbers = #tpu.dot_dimension_numbers<[1], [0], [0], [1], [0, 0, 1, 1], [], []>} : vector<232x128xbf16>, vector<128x128xbf16>, vector<232x128xf32> -> vector<232x128xf32>
    %78 = arith.addf %72, %77 : vector<232x128xf32>
    %c0_76 = arith.constant 0 : index
    %c17_77 = arith.constant 17 : index
    %c0_78 = arith.constant 0 : index
    %79 = vector.load %arg3[%c0_76, %c17_77, %c0_78] : memref<1x272x128xbf16, #tpu.memory_space<vmem>>, vector<1x232x128xbf16>
    %80 = vector.shape_cast %79 : vector<1x232x128xbf16> to vector<232x128xbf16>
    %c4_79 = arith.constant 4 : index
    %c0_80 = arith.constant 0 : index
    %c0_81 = arith.constant 0 : index
    %81 = vector.load %arg4[%c4_79, %c0_80, %c0_81] : memref<9x128x128xbf16, #tpu.memory_space<vmem>>, vector<1x128x128xbf16>
    %82 = vector.shape_cast %81 : vector<1x128x128xbf16> to vector<128x128xbf16>
    %cst_82 = arith.constant dense<0.000000e+00> : vector<232x128xf32>
    %83 = tpu.matmul %80, %82, %cst_82 {dimension_numbers = #tpu.dot_dimension_numbers<[1], [0], [0], [1], [0, 0, 1, 1], [], []>} : vector<232x128xbf16>, vector<128x128xbf16>, vector<232x128xf32> -> vector<232x128xf32>
    %84 = arith.addf %78, %83 : vector<232x128xf32>
    %c0_83 = arith.constant 0 : index
    %c18_84 = arith.constant 18 : index
    %c0_85 = arith.constant 0 : index
    %85 = vector.load %arg3[%c0_83, %c18_84, %c0_85] : memref<1x272x128xbf16, #tpu.memory_space<vmem>>, vector<1x232x128xbf16>
    %86 = vector.shape_cast %85 : vector<1x232x128xbf16> to vector<232x128xbf16>
    %c5_86 = arith.constant 5 : index
    %c0_87 = arith.constant 0 : index
    %c0_88 = arith.constant 0 : index
    %87 = vector.load %arg4[%c5_86, %c0_87, %c0_88] : memref<9x128x128xbf16, #tpu.memory_space<vmem>>, vector<1x128x128xbf16>
    %88 = vector.shape_cast %87 : vector<1x128x128xbf16> to vector<128x128xbf16>
    %cst_89 = arith.constant dense<0.000000e+00> : vector<232x128xf32>
    %89 = tpu.matmul %86, %88, %cst_89 {dimension_numbers = #tpu.dot_dimension_numbers<[1], [0], [0], [1], [0, 0, 1, 1], [], []>} : vector<232x128xbf16>, vector<128x128xbf16>, vector<232x128xf32> -> vector<232x128xf32>
    %90 = arith.addf %84, %89 : vector<232x128xf32>
    %c0_90 = arith.constant 0 : index
    %c32_91 = arith.constant 32 : index
    %c0_92 = arith.constant 0 : index
    %91 = vector.load %arg3[%c0_90, %c32_91, %c0_92] : memref<1x272x128xbf16, #tpu.memory_space<vmem>>, vector<1x232x128xbf16>
    %92 = vector.shape_cast %91 : vector<1x232x128xbf16> to vector<232x128xbf16>
    %c6_93 = arith.constant 6 : index
    %c0_94 = arith.constant 0 : index
    %c0_95 = arith.constant 0 : index
    %93 = vector.load %arg4[%c6_93, %c0_94, %c0_95] : memref<9x128x128xbf16, #tpu.memory_space<vmem>>, vector<1x128x128xbf16>
    %94 = vector.shape_cast %93 : vector<1x128x128xbf16> to vector<128x128xbf16>
    %cst_96 = arith.constant dense<0.000000e+00> : vector<232x128xf32>
    %95 = tpu.matmul %92, %94, %cst_96 {dimension_numbers = #tpu.dot_dimension_numbers<[1], [0], [0], [1], [0, 0, 1, 1], [], []>} : vector<232x128xbf16>, vector<128x128xbf16>, vector<232x128xf32> -> vector<232x128xf32>
    %96 = arith.addf %90, %95 : vector<232x128xf32>
    %c0_97 = arith.constant 0 : index
    %c33_98 = arith.constant 33 : index
    %c0_99 = arith.constant 0 : index
    %97 = vector.load %arg3[%c0_97, %c33_98, %c0_99] : memref<1x272x128xbf16, #tpu.memory_space<vmem>>, vector<1x232x128xbf16>
    %98 = vector.shape_cast %97 : vector<1x232x128xbf16> to vector<232x128xbf16>
    %c7_100 = arith.constant 7 : index
    %c0_101 = arith.constant 0 : index
    %c0_102 = arith.constant 0 : index
    %99 = vector.load %arg4[%c7_100, %c0_101, %c0_102] : memref<9x128x128xbf16, #tpu.memory_space<vmem>>, vector<1x128x128xbf16>
    %100 = vector.shape_cast %99 : vector<1x128x128xbf16> to vector<128x128xbf16>
    %cst_103 = arith.constant dense<0.000000e+00> : vector<232x128xf32>
    %101 = tpu.matmul %98, %100, %cst_103 {dimension_numbers = #tpu.dot_dimension_numbers<[1], [0], [0], [1], [0, 0, 1, 1], [], []>} : vector<232x128xbf16>, vector<128x128xbf16>, vector<232x128xf32> -> vector<232x128xf32>
    %102 = arith.addf %96, %101 : vector<232x128xf32>
    %c0_104 = arith.constant 0 : index
    %c34_105 = arith.constant 34 : index
    %c0_106 = arith.constant 0 : index
    %103 = vector.load %arg3[%c0_104, %c34_105, %c0_106] : memref<1x272x128xbf16, #tpu.memory_space<vmem>>, vector<1x232x128xbf16>
    %104 = vector.shape_cast %103 : vector<1x232x128xbf16> to vector<232x128xbf16>
    %c8_107 = arith.constant 8 : index
    %c0_108 = arith.constant 0 : index
    %c0_109 = arith.constant 0 : index
    %105 = vector.load %arg4[%c8_107, %c0_108, %c0_109] : memref<9x128x128xbf16, #tpu.memory_space<vmem>>, vector<1x128x128xbf16>
    %106 = vector.shape_cast %105 : vector<1x128x128xbf16> to vector<128x128xbf16>
    %cst_110 = arith.constant dense<0.000000e+00> : vector<232x128xf32>
    %107 = tpu.matmul %104, %106, %cst_110 {dimension_numbers = #tpu.dot_dimension_numbers<[1], [0], [0], [1], [0, 0, 1, 1], [], []>} : vector<232x128xbf16>, vector<128x128xbf16>, vector<232x128xf32> -> vector<232x128xf32>
    %108 = arith.addf %102, %107 : vector<232x128xf32>
    %c0_111 = arith.constant 0 : index
    %c0_112 = arith.constant 0 : index
    %109 = vector.load %arg5[%c0_111, %c0_112] : memref<1x128xf32, #tpu.memory_space<vmem>>, vector<1x128xf32>
    %110 = vector.broadcast %109 : vector<1x128xf32> to vector<232x128xf32>
    %111 = arith.addf %108, %110 : vector<232x128xf32>
    %cst_113 = arith.constant 0.000000e+00 : f32
    %112 = vector.broadcast %cst_113 : f32 to vector<232x128xf32>
    %113 = arith.maximumf %111, %112 : vector<232x128xf32>
    %c0_114 = arith.constant 0 : index
    %c0_115 = arith.constant 0 : index
    %114 = vector.load %arg6[%c0_114, %c0_115] : memref<1x128xf32, #tpu.memory_space<vmem>>, vector<1x128xf32>
    %115 = vector.broadcast %114 : vector<1x128xf32> to vector<232x128xf32>
    %116 = arith.mulf %113, %115 : vector<232x128xf32>
    %c0_116 = arith.constant 0 : index
    %c0_117 = arith.constant 0 : index
    %117 = vector.load %arg7[%c0_116, %c0_117] : memref<1x128xf32, #tpu.memory_space<vmem>>, vector<1x128xf32>
    %118 = vector.broadcast %117 : vector<1x128xf32> to vector<232x128xf32>
    %119 = arith.addf %116, %118 : vector<232x128xf32>
    %120 = arith.truncf %119 : vector<232x128xf32> to vector<232x128xbf16>
    %c0_118 = arith.constant 0 : index
    %c0_119 = arith.constant 0 : index
    %c0_120 = arith.constant 0 : index
    %121 = vector.load %arg8[%c0_118, %c0_119, %c0_120] : memref<1x232x128xbf16, #tpu.memory_space<vmem>>, vector<1x232x128xbf16>
    %122 = vector.shape_cast %121 : vector<1x232x128xbf16> to vector<232x128xbf16>
    %123 = vector.shape_cast %120 : vector<232x128xbf16> to vector<1x232x128xbf16>
    tpu.vector_store %arg8[%c0_118, %c0_119, %c0_120], %123 {strides = array<i32>} : memref<1x232x128xbf16, #tpu.memory_space<vmem>>, vector<1x232x128xbf16>,
    return
  }
  func.func @transform_0(%arg0: i32) -> (i32, i32, i32) {
    %c0_i32 = arith.constant 0 : i32
    %c0_i32_0 = arith.constant 0 : i32
    %c0_i32_1 = arith.constant 0 : i32
    return %arg0, %c0_i32, %c0_i32_0 : i32, i32, i32
  }
  func.func @transform_1(%arg0: i32) -> (i32, i32, i32) {
    %c0_i32 = arith.constant 0 : i32
    %c0_i32_0 = arith.constant 0 : i32
    %c0_i32_1 = arith.constant 0 : i32
    %c0_i32_2 = arith.constant 0 : i32
    return %c0_i32, %c0_i32_0, %c0_i32_1 : i32, i32, i32
  }
  func.func @transform_2(%arg0: i32) -> (i32, i32, i32) {
    %c0_i32 = arith.constant 0 : i32
    %c0_i32_0 = arith.constant 0 : i32
    %c0_i32_1 = arith.constant 0 : i32
    return %arg0, %c0_i32, %c0_i32_0 : i32, i32, i32
  }
  func.func @transform_3(%arg0: i32) -> (i32, i32, i32) {
    %c0_i32 = arith.constant 0 : i32
    %c0_i32_0 = arith.constant 0 : i32
    %c0_i32_1 = arith.constant 0 : i32
    %c0_i32_2 = arith.constant 0 : i32
    return %c0_i32, %c0_i32_0, %c0_i32_1 : i32, i32, i32
  }
  func.func @transform_4(%arg0: i32) -> (i32, i32) {
    %c0_i32 = arith.constant 0 : i32
    %c0_i32_0 = arith.constant 0 : i32
    %c0_i32_1 = arith.constant 0 : i32
    return %c0_i32, %c0_i32_0 : i32, i32
  }
  func.func @transform_5(%arg0: i32) -> (i32, i32) {
    %c0_i32 = arith.constant 0 : i32
    %c0_i32_0 = arith.constant 0 : i32
    %c0_i32_1 = arith.constant 0 : i32
    return %c0_i32, %c0_i32_0 : i32, i32
  }
  func.func @transform_6(%arg0: i32) -> (i32, i32) {
    %c0_i32 = arith.constant 0 : i32
    %c0_i32_0 = arith.constant 0 : i32
    %c0_i32_1 = arith.constant 0 : i32
    return %c0_i32, %c0_i32_0 : i32, i32
  }
  func.func @transform_7(%arg0: i32) -> (i32, i32, i32) {
    %c0_i32 = arith.constant 0 : i32
    %c0_i32_0 = arith.constant 0 : i32
    %c0_i32_1 = arith.constant 0 : i32
    return %arg0, %c0_i32, %c0_i32_0 : i32, i32, i32
  }
}

module attributes {stable_mosaic.version = 11 : i64} {
  func.func @_conv3x3_kernel(%arg0: i32, %arg1: memref<1x232x128xbf16, #tpu.memory_space<vmem>>, %arg2: memref<9x128x128xbf16, #tpu.memory_space<vmem>>, %arg3: memref<1x128xf32, #tpu.memory_space<vmem>>, %arg4: memref<1x192x128xf32, #tpu.memory_space<vmem>>) attributes {dimension_semantics = [#tpu.dimension_semantics<parallel>], iteration_bounds = array<i64: 2>, scalar_prefetch = 0 : i64, scratch_operands = 0 : i64, tpu.core_type = #tpu.core_type<tc>, window_params = [{transform_indices = @transform_0, window_bounds = array<i64: 1, 232, 128>}, {pipeline_mode = #tpu.pipeline_mode<synchronous>, transform_indices = @transform_1, window_bounds = array<i64: 9, 128, 128>}, {pipeline_mode = #tpu.pipeline_mode<synchronous>, transform_indices = @transform_2, window_bounds = array<i64: 1, 128>}, {transform_indices = @transform_3, window_bounds = array<i64: 1, 192, 128>}]} {
    %cst = arith.constant 0.000000e+00 : f32
    %0 = vector.broadcast %cst : f32 to vector<192x128xf32>
    %c0 = arith.constant 0 : index
    %c0_0 = arith.constant 0 : index
    %c0_1 = arith.constant 0 : index
    %1 = vector.load %arg1[%c0, %c0_0, %c0_1] : memref<1x232x128xbf16, #tpu.memory_space<vmem>>, vector<1x192x128xbf16>
    %2 = vector.shape_cast %1 : vector<1x192x128xbf16> to vector<192x128xbf16>
    %c0_2 = arith.constant 0 : index
    %c0_3 = arith.constant 0 : index
    %c0_4 = arith.constant 0 : index
    %3 = vector.load %arg2[%c0_2, %c0_3, %c0_4] : memref<9x128x128xbf16, #tpu.memory_space<vmem>>, vector<1x128x128xbf16>
    %4 = vector.shape_cast %3 : vector<1x128x128xbf16> to vector<128x128xbf16>
    %cst_5 = arith.constant dense<0.000000e+00> : vector<192x128xf32>
    %5 = tpu.matmul %2, %4, %cst_5 {dimension_numbers = #tpu.dot_dimension_numbers<[1], [0], [0], [1], [0, 0, 1, 1], [], []>} : vector<192x128xbf16>, vector<128x128xbf16>, vector<192x128xf32> -> vector<192x128xf32>
    %6 = arith.addf %0, %5 : vector<192x128xf32>
    %c0_6 = arith.constant 0 : index
    %c1 = arith.constant 1 : index
    %c0_7 = arith.constant 0 : index
    %7 = vector.load %arg1[%c0_6, %c1, %c0_7] : memref<1x232x128xbf16, #tpu.memory_space<vmem>>, vector<1x192x128xbf16>
    %8 = vector.shape_cast %7 : vector<1x192x128xbf16> to vector<192x128xbf16>
    %c1_8 = arith.constant 1 : index
    %c0_9 = arith.constant 0 : index
    %c0_10 = arith.constant 0 : index
    %9 = vector.load %arg2[%c1_8, %c0_9, %c0_10] : memref<9x128x128xbf16, #tpu.memory_space<vmem>>, vector<1x128x128xbf16>
    %10 = vector.shape_cast %9 : vector<1x128x128xbf16> to vector<128x128xbf16>
    %cst_11 = arith.constant dense<0.000000e+00> : vector<192x128xf32>
    %11 = tpu.matmul %8, %10, %cst_11 {dimension_numbers = #tpu.dot_dimension_numbers<[1], [0], [0], [1], [0, 0, 1, 1], [], []>} : vector<192x128xbf16>, vector<128x128xbf16>, vector<192x128xf32> -> vector<192x128xf32>
    %12 = arith.addf %6, %11 : vector<192x128xf32>
    %c0_12 = arith.constant 0 : index
    %c2 = arith.constant 2 : index
    %c0_13 = arith.constant 0 : index
    %13 = vector.load %arg1[%c0_12, %c2, %c0_13] : memref<1x232x128xbf16, #tpu.memory_space<vmem>>, vector<1x192x128xbf16>
    %14 = vector.shape_cast %13 : vector<1x192x128xbf16> to vector<192x128xbf16>
    %c2_14 = arith.constant 2 : index
    %c0_15 = arith.constant 0 : index
    %c0_16 = arith.constant 0 : index
    %15 = vector.load %arg2[%c2_14, %c0_15, %c0_16] : memref<9x128x128xbf16, #tpu.memory_space<vmem>>, vector<1x128x128xbf16>
    %16 = vector.shape_cast %15 : vector<1x128x128xbf16> to vector<128x128xbf16>
    %cst_17 = arith.constant dense<0.000000e+00> : vector<192x128xf32>
    %17 = tpu.matmul %14, %16, %cst_17 {dimension_numbers = #tpu.dot_dimension_numbers<[1], [0], [0], [1], [0, 0, 1, 1], [], []>} : vector<192x128xbf16>, vector<128x128xbf16>, vector<192x128xf32> -> vector<192x128xf32>
    %18 = arith.addf %12, %17 : vector<192x128xf32>
    %c0_18 = arith.constant 0 : index
    %c16 = arith.constant 16 : index
    %c0_19 = arith.constant 0 : index
    %19 = vector.load %arg1[%c0_18, %c16, %c0_19] : memref<1x232x128xbf16, #tpu.memory_space<vmem>>, vector<1x192x128xbf16>
    %20 = vector.shape_cast %19 : vector<1x192x128xbf16> to vector<192x128xbf16>
    %c3 = arith.constant 3 : index
    %c0_20 = arith.constant 0 : index
    %c0_21 = arith.constant 0 : index
    %21 = vector.load %arg2[%c3, %c0_20, %c0_21] : memref<9x128x128xbf16, #tpu.memory_space<vmem>>, vector<1x128x128xbf16>
    %22 = vector.shape_cast %21 : vector<1x128x128xbf16> to vector<128x128xbf16>
    %cst_22 = arith.constant dense<0.000000e+00> : vector<192x128xf32>
    %23 = tpu.matmul %20, %22, %cst_22 {dimension_numbers = #tpu.dot_dimension_numbers<[1], [0], [0], [1], [0, 0, 1, 1], [], []>} : vector<192x128xbf16>, vector<128x128xbf16>, vector<192x128xf32> -> vector<192x128xf32>
    %24 = arith.addf %18, %23 : vector<192x128xf32>
    %c0_23 = arith.constant 0 : index
    %c17 = arith.constant 17 : index
    %c0_24 = arith.constant 0 : index
    %25 = vector.load %arg1[%c0_23, %c17, %c0_24] : memref<1x232x128xbf16, #tpu.memory_space<vmem>>, vector<1x192x128xbf16>
    %26 = vector.shape_cast %25 : vector<1x192x128xbf16> to vector<192x128xbf16>
    %c4 = arith.constant 4 : index
    %c0_25 = arith.constant 0 : index
    %c0_26 = arith.constant 0 : index
    %27 = vector.load %arg2[%c4, %c0_25, %c0_26] : memref<9x128x128xbf16, #tpu.memory_space<vmem>>, vector<1x128x128xbf16>
    %28 = vector.shape_cast %27 : vector<1x128x128xbf16> to vector<128x128xbf16>
    %cst_27 = arith.constant dense<0.000000e+00> : vector<192x128xf32>
    %29 = tpu.matmul %26, %28, %cst_27 {dimension_numbers = #tpu.dot_dimension_numbers<[1], [0], [0], [1], [0, 0, 1, 1], [], []>} : vector<192x128xbf16>, vector<128x128xbf16>, vector<192x128xf32> -> vector<192x128xf32>
    %30 = arith.addf %24, %29 : vector<192x128xf32>
    %c0_28 = arith.constant 0 : index
    %c18 = arith.constant 18 : index
    %c0_29 = arith.constant 0 : index
    %31 = vector.load %arg1[%c0_28, %c18, %c0_29] : memref<1x232x128xbf16, #tpu.memory_space<vmem>>, vector<1x192x128xbf16>
    %32 = vector.shape_cast %31 : vector<1x192x128xbf16> to vector<192x128xbf16>
    %c5 = arith.constant 5 : index
    %c0_30 = arith.constant 0 : index
    %c0_31 = arith.constant 0 : index
    %33 = vector.load %arg2[%c5, %c0_30, %c0_31] : memref<9x128x128xbf16, #tpu.memory_space<vmem>>, vector<1x128x128xbf16>
    %34 = vector.shape_cast %33 : vector<1x128x128xbf16> to vector<128x128xbf16>
    %cst_32 = arith.constant dense<0.000000e+00> : vector<192x128xf32>
    %35 = tpu.matmul %32, %34, %cst_32 {dimension_numbers = #tpu.dot_dimension_numbers<[1], [0], [0], [1], [0, 0, 1, 1], [], []>} : vector<192x128xbf16>, vector<128x128xbf16>, vector<192x128xf32> -> vector<192x128xf32>
    %36 = arith.addf %30, %35 : vector<192x128xf32>
    %c0_33 = arith.constant 0 : index
    %c32 = arith.constant 32 : index
    %c0_34 = arith.constant 0 : index
    %37 = vector.load %arg1[%c0_33, %c32, %c0_34] : memref<1x232x128xbf16, #tpu.memory_space<vmem>>, vector<1x192x128xbf16>
    %38 = vector.shape_cast %37 : vector<1x192x128xbf16> to vector<192x128xbf16>
    %c6 = arith.constant 6 : index
    %c0_35 = arith.constant 0 : index
    %c0_36 = arith.constant 0 : index
    %39 = vector.load %arg2[%c6, %c0_35, %c0_36] : memref<9x128x128xbf16, #tpu.memory_space<vmem>>, vector<1x128x128xbf16>
    %40 = vector.shape_cast %39 : vector<1x128x128xbf16> to vector<128x128xbf16>
    %cst_37 = arith.constant dense<0.000000e+00> : vector<192x128xf32>
    %41 = tpu.matmul %38, %40, %cst_37 {dimension_numbers = #tpu.dot_dimension_numbers<[1], [0], [0], [1], [0, 0, 1, 1], [], []>} : vector<192x128xbf16>, vector<128x128xbf16>, vector<192x128xf32> -> vector<192x128xf32>
    %42 = arith.addf %36, %41 : vector<192x128xf32>
    %c0_38 = arith.constant 0 : index
    %c33 = arith.constant 33 : index
    %c0_39 = arith.constant 0 : index
    %43 = vector.load %arg1[%c0_38, %c33, %c0_39] : memref<1x232x128xbf16, #tpu.memory_space<vmem>>, vector<1x192x128xbf16>
    %44 = vector.shape_cast %43 : vector<1x192x128xbf16> to vector<192x128xbf16>
    %c7 = arith.constant 7 : index
    %c0_40 = arith.constant 0 : index
    %c0_41 = arith.constant 0 : index
    %45 = vector.load %arg2[%c7, %c0_40, %c0_41] : memref<9x128x128xbf16, #tpu.memory_space<vmem>>, vector<1x128x128xbf16>
    %46 = vector.shape_cast %45 : vector<1x128x128xbf16> to vector<128x128xbf16>
    %cst_42 = arith.constant dense<0.000000e+00> : vector<192x128xf32>
    %47 = tpu.matmul %44, %46, %cst_42 {dimension_numbers = #tpu.dot_dimension_numbers<[1], [0], [0], [1], [0, 0, 1, 1], [], []>} : vector<192x128xbf16>, vector<128x128xbf16>, vector<192x128xf32> -> vector<192x128xf32>
    %48 = arith.addf %42, %47 : vector<192x128xf32>
    %c0_43 = arith.constant 0 : index
    %c34 = arith.constant 34 : index
    %c0_44 = arith.constant 0 : index
    %49 = vector.load %arg1[%c0_43, %c34, %c0_44] : memref<1x232x128xbf16, #tpu.memory_space<vmem>>, vector<1x192x128xbf16>
    %50 = vector.shape_cast %49 : vector<1x192x128xbf16> to vector<192x128xbf16>
    %c8 = arith.constant 8 : index
    %c0_45 = arith.constant 0 : index
    %c0_46 = arith.constant 0 : index
    %51 = vector.load %arg2[%c8, %c0_45, %c0_46] : memref<9x128x128xbf16, #tpu.memory_space<vmem>>, vector<1x128x128xbf16>
    %52 = vector.shape_cast %51 : vector<1x128x128xbf16> to vector<128x128xbf16>
    %cst_47 = arith.constant dense<0.000000e+00> : vector<192x128xf32>
    %53 = tpu.matmul %50, %52, %cst_47 {dimension_numbers = #tpu.dot_dimension_numbers<[1], [0], [0], [1], [0, 0, 1, 1], [], []>} : vector<192x128xbf16>, vector<128x128xbf16>, vector<192x128xf32> -> vector<192x128xf32>
    %54 = arith.addf %48, %53 : vector<192x128xf32>
    %c0_48 = arith.constant 0 : index
    %c0_49 = arith.constant 0 : index
    %55 = vector.load %arg3[%c0_48, %c0_49] : memref<1x128xf32, #tpu.memory_space<vmem>>, vector<1x128xf32>
    %56 = vector.broadcast %55 : vector<1x128xf32> to vector<192x128xf32>
    %57 = arith.addf %54, %56 : vector<192x128xf32>
    %cst_50 = arith.constant 0.000000e+00 : f32
    %58 = vector.broadcast %cst_50 : f32 to vector<192x128xf32>
    %59 = arith.maximumf %57, %58 : vector<192x128xf32>
    %c0_51 = arith.constant 0 : index
    %c0_52 = arith.constant 0 : index
    %c0_53 = arith.constant 0 : index
    %60 = vector.load %arg4[%c0_51, %c0_52, %c0_53] : memref<1x192x128xf32, #tpu.memory_space<vmem>>, vector<1x192x128xf32>
    %61 = vector.shape_cast %60 : vector<1x192x128xf32> to vector<192x128xf32>
    %62 = vector.shape_cast %59 : vector<192x128xf32> to vector<1x192x128xf32>
    tpu.vector_store %arg4[%c0_51, %c0_52, %c0_53], %62 {strides = array<i32>} : memref<1x192x128xf32, #tpu.memory_space<vmem>>, vector<1x192x128xf32>,
    return
  }
  func.func @transform_0(%arg0: i32) -> (i32, i32, i32) {
    %c0_i32 = arith.constant 0 : i32
    %c0_i32_0 = arith.constant 0 : i32
    %c0_i32_1 = arith.constant 0 : i32
    return %arg0, %c0_i32, %c0_i32_0 : i32, i32, i32
  }
  func.func @transform_1(%arg0: i32) -> (i32, i32, i32) {
    %c0_i32 = arith.constant 0 : i32
    %c0_i32_0 = arith.constant 0 : i32
    %c0_i32_1 = arith.constant 0 : i32
    %c0_i32_2 = arith.constant 0 : i32
    return %c0_i32, %c0_i32_0, %c0_i32_1 : i32, i32, i32
  }
  func.func @transform_2(%arg0: i32) -> (i32, i32) {
    %c0_i32 = arith.constant 0 : i32
    %c0_i32_0 = arith.constant 0 : i32
    %c0_i32_1 = arith.constant 0 : i32
    return %c0_i32, %c0_i32_0 : i32, i32
  }
  func.func @transform_3(%arg0: i32) -> (i32, i32, i32) {
    %c0_i32 = arith.constant 0 : i32
    %c0_i32_0 = arith.constant 0 : i32
    %c0_i32_1 = arith.constant 0 : i32
    return %arg0, %c0_i32, %c0_i32_0 : i32, i32, i32
  }
}

</mosaic_0001>

<llo_original>
// kernel: _lambda_.3
$region0: #{_lambda_.3}
  #allocation0 [shape = 'u32[]', space=smem, size = 0x4, offset = 0x4, fixed_abs, tag = 'smem constant byte address 0x4 - core index']
  #allocation1 [shape = 'u32[72,128]{1,0:T(1,128)}', space=vmem, size = 0x9000, scoped, tag = 'internal scratch']
  %s0 = inlined_call_operand.vmem [shape: bf16[128,8], index: 0, kind: input, shape index: {}]
  %s1 = inlined_call_operand.vmem [shape: bf16[8,512], index: 1, kind: input, shape index: {}]
  %s2 = inlined_call_operand.vmem [shape: f32[1,512], index: 2, kind: input, shape index: {}]
  %s3 = inlined_call_operand.vmem [shape: bf16[128,512], index: 3, kind: output, shape index: {}]
  %s4 = sld [smem:[#allocation0]]
  $region45: #{_lambda_.3} parent=0
    _
  %s6 = ssub.s32 1, %s4
  %s7 = scalar_select 0, %s6, %s4
  loop: start=0, step=1, limit=4
  $region2: #{_lambda_.3} parent=0 // loop_pre_header
    _
  $region3: #{_lambda_.3} parent=0 // loop_header
    %s9 = sphi 0, %s13
    %p10 = scmp.ge.s32.totalorder %s9, 4
    %s19 = sphi 0, %s21
    %s22 = sphi 0, %s19
    %s23 = sphi 0, %s22
    %s39 = sphi 0, %s23
    %s43 = sphi 0, %s43
    %s45 = sphi 0, %s43
    %s46 = sphi 0, %s45
    %s60 = sphi 0, %s46
    %s64 = sphi 0, %s64
    %s66 = sphi 0, %s64
    %s67 = sphi 0, %s66
    %s81 = sphi 0, %s67
    %s87 = sphi 0, %s89
    %s90 = sphi 0, %s87
    %s91 = sphi 0, %s90
    %s107 = sphi 0, %s91
  $region4: #{_lambda_.3} parent=0 // loop_header_branch
    %12 = sbr.rel (%p10) target = $region8
  $region5: #{_lambda_.3} parent=0 // loop_body
    %s14 = ssub.s32 %s9, 1
    %s15 = ssub.s32 %s9, 2
    %s16 = sadd.s32 %s9, 1
    %s17 = ssub.s32 %s9, %s16
    %p18 = scmp.eq.s32.totalorder %s17, 0
    %s20 = sadd.s32 %s19, 1
    %s21 = scalar_select %p18, %s19, %s20
    %p24 = pneg %p18
    %p25 = scmp.eq.s32.totalorder %s9, 1
    %p26 = por %p24, %p25
    %p27 = scmp.ne.s32.totalorder %s19, %s22
    %p28 = scmp.eq.s32.totalorder %s9, 0
    %p29 = por %p27, %p28
    %p30 = scmp.ne.s32.totalorder %s19, %s22
    %p31 = scmp.eq.s32.totalorder %s14, 1
    %p32 = por %p30, %p31
    %p33 = scmp.ne.s32.totalorder %s22, %s23
    %p34 = scmp.eq.s32.totalorder %s14, 0
    %p35 = por %p33, %p34
    %p36 = scmp.ne.s32.totalorder %s22, %s23
    %p37 = scmp.eq.s32.totalorder %s15, 1
    %p38 = por %p36, %p37
    %p40 = scmp.ne.s32.totalorder %s23, %s39
    %p41 = scmp.eq.s32.totalorder %s15, 0
    %p42 = por %p40, %p41
    %s44 = sadd.s32 %s43, 1
    %p47 = scmp.eq.s32.totalorder %s9, 1
    %p48 = scmp.ne.s32.totalorder %s43, %s45
    %p49 = scmp.eq.s32.totalorder %s9, 0
    %p50 = por %p48, %p49
    %p51 = scmp.ne.s32.totalorder %s43, %s45
    %p52 = scmp.eq.s32.totalorder %s14, 1
    %p53 = por %p51, %p52
    %p54 = scmp.ne.s32.totalorder %s45, %s46
    %p55 = scmp.eq.s32.totalorder %s14, 0
    %p56 = por %p54, %p55
    %p57 = scmp.ne.s32.totalorder %s45, %s46
    %p58 = scmp.eq.s32.totalorder %s15, 1
    %p59 = por %p57, %p58
    %p61 = scmp.ne.s32.totalorder %s46, %s60
    %p62 = scmp.eq.s32.totalorder %s15, 0
    %p63 = por %p61, %p62
    %s65 = sadd.s32 %s64, 1
    %p68 = scmp.eq.s32.totalorder %s9, 1
    %p69 = scmp.ne.s32.totalorder %s64, %s66
    %p70 = scmp.eq.s32.totalorder %s9, 0
    %p71 = por %p69, %p70
    %p72 = scmp.ne.s32.totalorder %s64, %s66
    %p73 = scmp.eq.s32.totalorder %s14, 1
    %p74 = por %p72, %p73
    %p75 = scmp.ne.s32.totalorder %s66, %s67
    %p76 = scmp.eq.s32.totalorder %s14, 0
    %p77 = por %p75, %p76
    %p78 = scmp.ne.s32.totalorder %s66, %s67
    %p79 = scmp.eq.s32.totalorder %s15, 1
    %p80 = por %p78, %p79
    %p82 = scmp.ne.s32.totalorder %s67, %s81
    %p83 = scmp.eq.s32.totalorder %s15, 0
    %p84 = por %p82, %p83
    %s85 = ssub.s32 %s9, %s16
    %p86 = scmp.eq.s32.totalorder %s85, 0
    %s88 = sadd.s32 %s87, 1
    %s89 = scalar_select %p86, %s87, %s88
    %p92 = pneg %p86
    %p93 = scmp.eq.s32.totalorder %s9, 1
    %p94 = por %p92, %p93
    %p95 = scmp.ne.s32.totalorder %s87, %s90
    %p96 = scmp.eq.s32.totalorder %s9, 0
    %p97 = por %p95, %p96
    %p98 = scmp.ne.s32.totalorder %s87, %s90
    %p99 = scmp.eq.s32.totalorder %s14, 1
    %p100 = por %p98, %p99
    %p101 = scmp.ne.s32.totalorder %s90, %s91
    %p102 = scmp.eq.s32.totalorder %s14, 0
    %p103 = por %p101, %p102
    %p104 = scmp.ne.s32.totalorder %s90, %s91
    %p105 = scmp.eq.s32.totalorder %s15, 1
    %p106 = por %p104, %p105
    %p108 = scmp.ne.s32.totalorder %s91, %s107
    %p109 = scmp.eq.s32.totalorder %s15, 0
    %p110 = por %p108, %p109
    %p111 = scmp.le.s32.totalorder 1, %s9
    %p112 = scmp.lt.s32.totalorder %s9, 3
    %p113 = pnand %p111, %p112
    %p114 = pneg %p113
    // Predicated region
    $region9: #{_lambda_.3} parent=5 // pred_check
      _
    $region10: #{_lambda_.3} parent=5 // pred_check_branch
      %116 = sbr.rel (%p113) target = $region12
    $region11: #{_lambda_.3} parent=5 // pred_region
      %s117 = ssub.s32 %s9, 1
      // Predicated region
      $region13: #{_lambda_.3} parent=11 // pred_check
        %p118 = pneg %p56
      $region14: #{_lambda_.3} parent=11 // pred_check_branch
        %120 = sbr.rel (%p118) target = $region16
      $region15: #{_lambda_.3} parent=11 // pred_region
        _
      $region16: #{_lambda_.3} parent=11 // pred_fallthru
        _
      // Predicated region
      $region17: #{_lambda_.3} parent=11 // pred_check
        %p121 = pneg %p77
      $region18: #{_lambda_.3} parent=11 // pred_check_branch
        %123 = sbr.rel (%p121) target = $region20
      $region19: #{_lambda_.3} parent=11 // pred_region
        _
      $region20: #{_lambda_.3} parent=11 // pred_fallthru
        _
    $region12: #{_lambda_.3} parent=5 // pred_fallthru
      _
    %p124 = scmp.lt.s32.totalorder %s9, 2
    // Predicated region
    $region21: #{_lambda_.3} parent=5 // pred_check
      %p125 = pneg %p124
    $region22: #{_lambda_.3} parent=5 // pred_check_branch
      %127 = sbr.rel (%p125) target = $region24
    $region23: #{_lambda_.3} parent=5 // pred_region
      // Predicated region
      $region25: #{_lambda_.3} parent=23 // pred_check
        %p128 = pneg %p29
      $region26: #{_lambda_.3} parent=23 // pred_check_branch
        %130 = sbr.rel (%p128) target = $region28
      $region27: #{_lambda_.3} parent=23 // pred_region
        %s131 = smul.u32 8, %s9
        %p132 = scmp.lt.s32.totalorder %s131, 15
        %s133 = scalar_select %p132, %s131, 15
        %s134 = smul.addr %s133, 4
        %s135 = scalar_lea.vmem %s0, %s134
        %s136 = smul.u32 8, %s9
      $region28: #{_lambda_.3} parent=23 // pred_fallthru
        _
    $region24: #{_lambda_.3} parent=5 // pred_fallthru
      _
    %p137 = scmp.le.s32.totalorder 1, %s9
    %p138 = scmp.lt.s32.totalorder %s9, 3
    %p139 = pnand %p137, %p138
    %p140 = pneg %p139
    // Predicated region
    $region29: #{_lambda_.3} parent=5 // pred_check
      _
    $region30: #{_lambda_.3} parent=5 // pred_check_branch
      %142 = sbr.rel (%p139) target = $region32
    $region31: #{_lambda_.3} parent=5 // pred_region
      %s143 = ssub.s32 %s9, 1
      %s144 = smul.u32 8, %s14
      %p145 = scmp.lt.s32.totalorder %s144, 15
      %s146 = scalar_select %p145, %s144, 15
      %s147 = smul.addr %s146, 4
      %s148 = scalar_lea.vmem %s0, %s147
      %p149 = pneg %p35
      %p150 = pneg %p32
      %p151 = pneg %p56
      %p152 = pneg %p53
      %p153 = pneg %p77
      %p154 = pneg %p74
      %p155 = pneg %p103
      %p156 = pneg %p100
      %s157 = smul.u32 8, %s14
      %p158 = scmp.lt.s32.totalorder %s157, 15
      %s159 = scalar_select %p158, %s157, 15
      %s160 = smul.addr %s159, 4
      %s161 = smul.addr %s160, 4
      %s162 = scalar_lea.vmem %s3, %s161
      %s163 = smul.u32 8, %s14
      %p164 = scmp.lt.s32.totalorder %s163, 15
      %s165 = scalar_select %p164, %s163, 15
      %s166 = smul.addr %s165, 4
      %s167 = scalar_lea.vmem %s0, %s166
      %s168 = smul.u32 8, %s14
      %s169 = smul.u32 8, %s14
      %p170 = scmp.lt.s32.totalorder %s169, 15
      %s171 = scalar_select %p170, %s169, 15
      %s172 = smul.addr %s171, 4
      %s173 = smul.addr %s172, 4
      %s174 = scalar_lea.vmem %s3, %s173
      %s175 = smul.u32 8, %s14
      %v177 = vld [vmem:[%s167] sm:$0xf]
      %v178 = vld [vmem:[%s167 + $0x4] sm:$0xf]
      %v179 = vld [vmem:[%s167 + $0x8] sm:$0xf]
      %v180 = vld [vmem:[%s167 + $0xc] sm:$0xf]
      %v181 = vld [vmem:[%s167 + $0x10] sm:$0xf]
      %v182 = vld [vmem:[%s167 + $0x14] sm:$0xf]
      %v183 = vld [vmem:[%s167 + $0x18] sm:$0xf]
      %v184 = vld [vmem:[%s167 + $0x1c] sm:$0xf]
      %v185 = vld [vmem:[%s1] sm:$0xff]
      %v186 = vld [vmem:[%s1 + $0x8] sm:$0xff]
      %v187 = vld [vmem:[%s2] sm:$0xf]
      %v189 = vperm.slane %v187, 0
      %v190 = vperm.slane %v187, 1
      %v191 = vperm.slane %v187, 2
      %v192 = vperm.slane %v187, 3
      %v205 = vunpack.c.l.b16 %v177
      %v206 = vunpack.c.l.b16 %v178
      %v207 = vunpack.c.l.b16 %v179
      %v208 = vunpack.c.l.b16 %v180
      %v209 = vunpack.c.l.b16 %v181
      %v210 = vunpack.c.l.b16 %v182
      %v211 = vunpack.c.l.b16 %v183
      %v212 = vunpack.c.l.b16 %v184
      %v213 = vpack.c.b16 %v206, %v205
      %v214 = vpack.c.b16 %v208, %v207
      %v215 = vpack.c.b16 %v210, %v209
      %v216 = vpack.c.b16 %v212, %v211
      %v219 = vunpack.c.l.b16 %v185
      %v220 = vunpack.c.h.b16 %v185
      %v221 = vunpack.c.l.b16 %v186
      %v222 = vunpack.c.h.b16 %v186
      %v223 = vpack.c.b16 %v219, %v219
      %v224 = vpack.c.b16 %v220, %v220
      %v225 = vpack.c.b16 %v221, %v221
      %v226 = vpack.c.b16 %v222, %v222
      %vm227 = vcmask 64512
      %v229 = vsel %vm227, %v213, 0
      %v232 = vsel %vm227, %v214, 0
      %v235 = vsel %vm227, %v215, 0
      %v238 = vsel %vm227, %v216, 0
      %vm240 = vcmask 1043456
      %v242 = vsel %vm240, %v223, 0
      %v245 = vsel %vm240, %v224, 0
      %v248 = vsel %vm240, %v225, 0
      %v251 = vsel %vm240, %v226, 0
      %253 = vmatpush.bf16.msra.mxu0 0
      %254 = vmatpush.bf16.msra.mxu0 0
      %255 = vmatpush.bf16.msra.mxu0 0
      %256 = vmatpush.bf16.msra.mxu0 0
      %257 = vmatpush.bf16.msra.mxu0 0
      %258 = vmatpush.bf16.msra.mxu0 0
      %259 = vmatpush.bf16.msra.mxu0 0
      %260 = vmatpush.bf16.msra.mxu0 %v242
      %261 = vmatmul.bf16.gmra.mxu0 %v229
      %v262 = vpop.f32.mrf.mxu0
      %v263 = vadd.f32 %v189, %v262
      %v264 = vpop.f32.mrf.mxu0
      %v265 = vadd.f32 %v189, %v264
      %266 = vmatmul.bf16.gmra.mxu0 %v232
      %v267 = vpop.f32.mrf.mxu0
      %v268 = vadd.f32 %v189, %v267
      %v269 = vpop.f32.mrf.mxu0
      %v270 = vadd.f32 %v189, %v269
      %271 = vmatmul.bf16.gmra.mxu0 %v235
      %v272 = vpop.f32.mrf.mxu0
      %v273 = vadd.f32 %v189, %v272
      %v274 = vpop.f32.mrf.mxu0
      %v275 = vadd.f32 %v189, %v274
      %276 = vmatmul.bf16.gmra.mxu0 %v238
      %v277 = vpop.f32.mrf.mxu0
      %v278 = vadd.f32 %v189, %v277
      %v279 = vpop.f32.mrf.mxu0
      %v280 = vadd.f32 %v189, %v279
      %281 = vdwg.mxu0
      %282 = vmatpush.bf16.msra.mxu0 0
      %283 = vmatpush.bf16.msra.mxu0 0
      %284 = vmatpush.bf16.msra.mxu0 0
      %285 = vmatpush.bf16.msra.mxu0 0
      %286 = vmatpush.bf16.msra.mxu0 0
      %287 = vmatpush.bf16.msra.mxu0 0
      %288 = vmatpush.bf16.msra.mxu0 0
      %289 = vmatpush.bf16.msra.mxu0 %v245
      %290 = vmatmul.bf16.gmra.mxu0 %v229
      %v291 = vpop.f32.mrf.mxu0
      %v292 = vadd.f32 %v190, %v291
      %v293 = vpop.f32.mrf.mxu0
      %v294 = vadd.f32 %v190, %v293
      %295 = vmatmul.bf16.gmra.mxu0 %v232
      %v296 = vpop.f32.mrf.mxu0
      %v297 = vadd.f32 %v190, %v296
      %v298 = vpop.f32.mrf.mxu0
      %v299 = vadd.f32 %v190, %v298
      %300 = vmatmul.bf16.gmra.mxu0 %v235
      %v301 = vpop.f32.mrf.mxu0
      %v302 = vadd.f32 %v190, %v301
      %v303 = vpop.f32.mrf.mxu0
      %v304 = vadd.f32 %v190, %v303
      %305 = vmatmul.bf16.gmra.mxu0 %v238
      %v306 = vpop.f32.mrf.mxu0
      %v307 = vadd.f32 %v190, %v306
      %v308 = vpop.f32.mrf.mxu0
      %v309 = vadd.f32 %v190, %v308
      %310 = vdwg.mxu0
      %311 = vmatpush.bf16.msra.mxu0 0
      %312 = vmatpush.bf16.msra.mxu0 0
      %313 = vmatpush.bf16.msra.mxu0 0
      %314 = vmatpush.bf16.msra.mxu0 0
      %315 = vmatpush.bf16.msra.mxu0 0
      %316 = vmatpush.bf16.msra.mxu0 0
      %317 = vmatpush.bf16.msra.mxu0 0
      %318 = vmatpush.bf16.msra.mxu0 %v248
      %319 = vmatmul.bf16.gmra.mxu0 %v229
      %v320 = vpop.f32.mrf.mxu0
      %v321 = vadd.f32 %v191, %v320
      %v322 = vpop.f32.mrf.mxu0
      %v323 = vadd.f32 %v191, %v322
      %324 = vmatmul.bf16.gmra.mxu0 %v232
      %v325 = vpop.f32.mrf.mxu0
      %v326 = vadd.f32 %v191, %v325
      %v327 = vpop.f32.mrf.mxu0
      %v328 = vadd.f32 %v191, %v327
      %329 = vmatmul.bf16.gmra.mxu0 %v235
      %v330 = vpop.f32.mrf.mxu0
      %v331 = vadd.f32 %v191, %v330
      %v332 = vpop.f32.mrf.mxu0
      %v333 = vadd.f32 %v191, %v332
      %334 = vmatmul.bf16.gmra.mxu0 %v238
      %v335 = vpop.f32.mrf.mxu0
      %v336 = vadd.f32 %v191, %v335
      %v337 = vpop.f32.mrf.mxu0
      %v338 = vadd.f32 %v191, %v337
      %339 = vdwg.mxu0
      %340 = vmatpush.bf16.msra.mxu0 0
      %341 = vmatpush.bf16.msra.mxu0 0
      %342 = vmatpush.bf16.msra.mxu0 0
      %343 = vmatpush.bf16.msra.mxu0 0
      %344 = vmatpush.bf16.msra.mxu0 0
      %345 = vmatpush.bf16.msra.mxu0 0
      %346 = vmatpush.bf16.msra.mxu0 0
      %347 = vmatpush.bf16.msra.mxu0 %v251
      %348 = vmatmul.bf16.gmra.mxu0 %v229
      %v349 = vpop.f32.mrf.mxu0
      %v350 = vadd.f32 %v192, %v349
      %v351 = vpop.f32.mrf.mxu0
      %v352 = vadd.f32 %v192, %v351
      %353 = vmatmul.bf16.gmra.mxu0 %v232
      %v354 = vpop.f32.mrf.mxu0
      %v355 = vadd.f32 %v192, %v354
      %v356 = vpop.f32.mrf.mxu0
      %v357 = vadd.f32 %v192, %v356
      %358 = vmatmul.bf16.gmra.mxu0 %v235
      %v359 = vpop.f32.mrf.mxu0
      %v360 = vadd.f32 %v192, %v359
      %v361 = vpop.f32.mrf.mxu0
      %v362 = vadd.f32 %v192, %v361
      %363 = vmatmul.bf16.gmra.mxu0 %v238
      %v364 = vpop.f32.mrf.mxu0
      %v365 = vadd.f32 %v192, %v364
      %v366 = vpop.f32.mrf.mxu0
      %v367 = vadd.f32 %v192, %v366
      %368 = vdwg.mxu0
      %v369 = vpack.c.bf16 %v292, %v263
      %v370 = vpack.c.bf16 %v350, %v321
      %v371 = vpack.c.bf16 %v294, %v265
      %v372 = vpack.c.bf16 %v352, %v323
      %v373 = vpack.c.bf16 %v297, %v268
      %v374 = vpack.c.bf16 %v355, %v326
      %v375 = vpack.c.bf16 %v299, %v270
      %v376 = vpack.c.bf16 %v357, %v328
      %v377 = vpack.c.bf16 %v302, %v273
      %v378 = vpack.c.bf16 %v360, %v331
      %v379 = vpack.c.bf16 %v304, %v275
      %v380 = vpack.c.bf16 %v362, %v333
      %v381 = vpack.c.bf16 %v307, %v278
      %v382 = vpack.c.bf16 %v365, %v336
      %v383 = vpack.c.bf16 %v309, %v280
      %v384 = vpack.c.bf16 %v367, %v338
      %385 = vst [vmem:[%s174] sm:$0xff] %v369
      %386 = vst [vmem:[%s174 + $0x8] sm:$0xff] %v370
      %387 = vst [vmem:[%s174 + $0x10] sm:$0xff] %v371
      %388 = vst [vmem:[%s174 + $0x18] sm:$0xff] %v372
      %389 = vst [vmem:[%s174 + $0x20] sm:$0xff] %v373
      %390 = vst [vmem:[%s174 + $0x28] sm:$0xff] %v374
      %391 = vst [vmem:[%s174 + $0x30] sm:$0xff] %v375
      %392 = vst [vmem:[%s174 + $0x38] sm:$0xff] %v376
      %393 = vst [vmem:[%s174 + $0x40] sm:$0xff] %v377
      %394 = vst [vmem:[%s174 + $0x48] sm:$0xff] %v378
      %395 = vst [vmem:[%s174 + $0x50] sm:$0xff] %v379
      %396 = vst [vmem:[%s174 + $0x58] sm:$0xff] %v380
      %397 = vst [vmem:[%s174 + $0x60] sm:$0xff] %v381
      %398 = vst [vmem:[%s174 + $0x68] sm:$0xff] %v382
      %399 = vst [vmem:[%s174 + $0x70] sm:$0xff] %v383
      %400 = vst [vmem:[%s174 + $0x78] sm:$0xff] %v384
      %s401 = smul.u32 8, %s14
      %p402 = scmp.lt.s32.totalorder %s401, 15
      %s403 = scalar_select %p402, %s401, 15
      %s404 = smul.addr %s403, 4
      %s405 = smul.addr %s404, 4
      %s406 = scalar_lea.vmem %s3, %s405
      // Predicated region
      $region33: #{_lambda_.3} parent=31 // pred_check
        %p407 = pneg %p100
      $region34: #{_lambda_.3} parent=31 // pred_check_branch
        %409 = sbr.rel (%p407) target = $region36
      $region35: #{_lambda_.3} parent=31 // pred_region
        %s410 = smul.u32 8, %s14
      $region36: #{_lambda_.3} parent=31 // pred_fallthru
        _
    $region32: #{_lambda_.3} parent=5 // pred_fallthru
      _
    %p411 = scmp.le.s32.totalorder 2, %s9
    // Predicated region
    $region37: #{_lambda_.3} parent=5 // pred_check
      %p412 = pneg %p411
    $region38: #{_lambda_.3} parent=5 // pred_check_branch
      %414 = sbr.rel (%p412) target = $region40
    $region39: #{_lambda_.3} parent=5 // pred_region
      %s415 = ssub.s32 %s9, 2
      // Predicated region
      $region41: #{_lambda_.3} parent=39 // pred_check
        %p416 = pneg %p106
      $region42: #{_lambda_.3} parent=39 // pred_check_branch
        %418 = sbr.rel (%p416) target = $region44
      $region43: #{_lambda_.3} parent=39 // pred_region
        %s419 = smul.u32 8, %s15
        %p420 = scmp.lt.s32.totalorder %s419, 15
        %s421 = scalar_select %p420, %s419, 15
        %s422 = smul.addr %s421, 4
        %s423 = smul.addr %s422, 4
        %s424 = scalar_lea.vmem %s3, %s423
      $region44: #{_lambda_.3} parent=39 // pred_fallthru
        _
    $region40: #{_lambda_.3} parent=5 // pred_fallthru
      _
  $region6: #{_lambda_.3} parent=0 // loop_footer
    %s13 = sadd.s32 1, %s9
  $region7: #{_lambda_.3} parent=0 // loop_footer_branch
    %8 = sbr.rel target = $region3
  $region8: #{_lambda_.3} parent=0 // loop_exit
    _

// kernel: _lambda_.5
$region0: #{_lambda_.5}
  #allocation0 [shape = 'u32[]', space=smem, size = 0x4, offset = 0x4, fixed_abs, tag = 'smem constant byte address 0x4 - core index']
  #allocation1 [shape = 'u32[72,128]{1,0:T(1,128)}', space=vmem, size = 0x9000, scoped, tag = 'internal scratch']
  %s0 = inlined_call_operand.vmem [shape: bf16[2,232,128], index: 0, kind: input, shape index: {}]
  %s1 = inlined_call_operand.vmem [shape: bf16[9,128,128], index: 1, kind: input, shape index: {}]
  %s2 = inlined_call_operand.vmem [shape: f32[1,128], index: 2, kind: input, shape index: {}]
  %s3 = inlined_call_operand.vmem [shape: f32[2,192,128], index: 3, kind: output, shape index: {}]
  %s4 = sld [smem:[#allocation0]]
  $region45: #{_lambda_.5} parent=0
    _
  %s6 = ssub.s32 1, %s4
  %s7 = scalar_select 0, %s6, %s4
  loop: start=0, step=1, limit=4
  $region2: #{_lambda_.5} parent=0 // loop_pre_header
    _
  $region3: #{_lambda_.5} parent=0 // loop_header
    %s9 = sphi 0, %s13
    %p10 = scmp.ge.s32.totalorder %s9, 4
    %s19 = sphi 0, %s21
    %s22 = sphi 0, %s19
    %s23 = sphi 0, %s22
    %s39 = sphi 0, %s23
    %s43 = sphi 0, %s43
    %s45 = sphi 0, %s43
    %s46 = sphi 0, %s45
    %s60 = sphi 0, %s46
    %s64 = sphi 0, %s64
    %s66 = sphi 0, %s64
    %s67 = sphi 0, %s66
    %s81 = sphi 0, %s67
    %s87 = sphi 0, %s89
    %s90 = sphi 0, %s87
    %s91 = sphi 0, %s90
    %s107 = sphi 0, %s91
  $region4: #{_lambda_.5} parent=0 // loop_header_branch
    %12 = sbr.rel (%p10) target = $region8
  $region5: #{_lambda_.5} parent=0 // loop_body
    %s14 = ssub.s32 %s9, 1
    %s15 = ssub.s32 %s9, 2
    %s16 = sadd.s32 %s9, 1
    %s17 = ssub.s32 %s9, %s16
    %p18 = scmp.eq.s32.totalorder %s17, 0
    %s20 = sadd.s32 %s19, 1
    %s21 = scalar_select %p18, %s19, %s20
    %p24 = pneg %p18
    %p25 = scmp.eq.s32.totalorder %s9, 1
    %p26 = por %p24, %p25
    %p27 = scmp.ne.s32.totalorder %s19, %s22
    %p28 = scmp.eq.s32.totalorder %s9, 0
    %p29 = por %p27, %p28
    %p30 = scmp.ne.s32.totalorder %s19, %s22
    %p31 = scmp.eq.s32.totalorder %s14, 1
    %p32 = por %p30, %p31
    %p33 = scmp.ne.s32.totalorder %s22, %s23
    %p34 = scmp.eq.s32.totalorder %s14, 0
    %p35 = por %p33, %p34
    %p36 = scmp.ne.s32.totalorder %s22, %s23
    %p37 = scmp.eq.s32.totalorder %s15, 1
    %p38 = por %p36, %p37
    %p40 = scmp.ne.s32.totalorder %s23, %s39
    %p41 = scmp.eq.s32.totalorder %s15, 0
    %p42 = por %p40, %p41
    %s44 = sadd.s32 %s43, 1
    %p47 = scmp.eq.s32.totalorder %s9, 1
    %p48 = scmp.ne.s32.totalorder %s43, %s45
    %p49 = scmp.eq.s32.totalorder %s9, 0
    %p50 = por %p48, %p49
    %p51 = scmp.ne.s32.totalorder %s43, %s45
    %p52 = scmp.eq.s32.totalorder %s14, 1
    %p53 = por %p51, %p52
    %p54 = scmp.ne.s32.totalorder %s45, %s46
    %p55 = scmp.eq.s32.totalorder %s14, 0
    %p56 = por %p54, %p55
    %p57 = scmp.ne.s32.totalorder %s45, %s46
    %p58 = scmp.eq.s32.totalorder %s15, 1
    %p59 = por %p57, %p58
    %p61 = scmp.ne.s32.totalorder %s46, %s60
    %p62 = scmp.eq.s32.totalorder %s15, 0
    %p63 = por %p61, %p62
    %s65 = sadd.s32 %s64, 1
    %p68 = scmp.eq.s32.totalorder %s9, 1
    %p69 = scmp.ne.s32.totalorder %s64, %s66
    %p70 = scmp.eq.s32.totalorder %s9, 0
    %p71 = por %p69, %p70
    %p72 = scmp.ne.s32.totalorder %s64, %s66
    %p73 = scmp.eq.s32.totalorder %s14, 1
    %p74 = por %p72, %p73
    %p75 = scmp.ne.s32.totalorder %s66, %s67
    %p76 = scmp.eq.s32.totalorder %s14, 0
    %p77 = por %p75, %p76
    %p78 = scmp.ne.s32.totalorder %s66, %s67
    %p79 = scmp.eq.s32.totalorder %s15, 1
    %p80 = por %p78, %p79
    %p82 = scmp.ne.s32.totalorder %s67, %s81
    %p83 = scmp.eq.s32.totalorder %s15, 0
    %p84 = por %p82, %p83
    %s85 = ssub.s32 %s9, %s16
    %p86 = scmp.eq.s32.totalorder %s85, 0
    %s88 = sadd.s32 %s87, 1
    %s89 = scalar_select %p86, %s87, %s88
    %p92 = pneg %p86
    %p93 = scmp.eq.s32.totalorder %s9, 1
    %p94 = por %p92, %p93
    %p95 = scmp.ne.s32.totalorder %s87, %s90
    %p96 = scmp.eq.s32.totalorder %s9, 0
    %p97 = por %p95, %p96
    %p98 = scmp.ne.s32.totalorder %s87, %s90
    %p99 = scmp.eq.s32.totalorder %s14, 1
    %p100 = por %p98, %p99
    %p101 = scmp.ne.s32.totalorder %s90, %s91
    %p102 = scmp.eq.s32.totalorder %s14, 0
    %p103 = por %p101, %p102
    %p104 = scmp.ne.s32.totalorder %s90, %s91
    %p105 = scmp.eq.s32.totalorder %s15, 1
    %p106 = por %p104, %p105
    %p108 = scmp.ne.s32.totalorder %s91, %s107
    %p109 = scmp.eq.s32.totalorder %s15, 0
    %p110 = por %p108, %p109
    %p111 = scmp.le.s32.totalorder 1, %s9
    %p112 = scmp.lt.s32.totalorder %s9, 3
    %p113 = pnand %p111, %p112
    %p114 = pneg %p113
    // Predicated region
    $region9: #{_lambda_.5} parent=5 // pred_check
      _
    $region10: #{_lambda_.5} parent=5 // pred_check_branch
      %116 = sbr.rel (%p113) target = $region12
    $region11: #{_lambda_.5} parent=5 // pred_region
      %s117 = ssub.s32 %s9, 1
      // Predicated region
      $region13: #{_lambda_.5} parent=11 // pred_check
        %p118 = pneg %p56
      $region14: #{_lambda_.5} parent=11 // pred_check_branch
        %120 = sbr.rel (%p118) target = $region16
      $region15: #{_lambda_.5} parent=11 // pred_region
        _
      $region16: #{_lambda_.5} parent=11 // pred_fallthru
        _
      // Predicated region
      $region17: #{_lambda_.5} parent=11 // pred_check
        %p121 = pneg %p77
      $region18: #{_lambda_.5} parent=11 // pred_check_branch
        %123 = sbr.rel (%p121) target = $region20
      $region19: #{_lambda_.5} parent=11 // pred_region
        _
      $region20: #{_lambda_.5} parent=11 // pred_fallthru
        _
    $region12: #{_lambda_.5} parent=5 // pred_fallthru
      _
    %p124 = scmp.lt.s32.totalorder %s9, 2
    // Predicated region
    $region21: #{_lambda_.5} parent=5 // pred_check
      %p125 = pneg %p124
    $region22: #{_lambda_.5} parent=5 // pred_check_branch
      %127 = sbr.rel (%p125) target = $region24
    $region23: #{_lambda_.5} parent=5 // pred_region
      // Predicated region
      $region25: #{_lambda_.5} parent=23 // pred_check
        %p128 = pneg %p29
      $region26: #{_lambda_.5} parent=23 // pred_check_branch
        %130 = sbr.rel (%p128) target = $region28
      $region27: #{_lambda_.5} parent=23 // pred_region
        %p131 = scmp.lt.s32.totalorder %s9, 1
        %s132 = scalar_select %p131, %s9, 1
        %s133 = smul.addr %s132, 29
        %s134 = smul.addr %s133, 4
        %s135 = scalar_lea.vmem %s0, %s134
      $region28: #{_lambda_.5} parent=23 // pred_fallthru
        _
    $region24: #{_lambda_.5} parent=5 // pred_fallthru
      _
    %p136 = scmp.le.s32.totalorder 1, %s9
    %p137 = scmp.lt.s32.totalorder %s9, 3
    %p138 = pnand %p136, %p137
    %p139 = pneg %p138
    // Predicated region
    $region29: #{_lambda_.5} parent=5 // pred_check
      _
    $region30: #{_lambda_.5} parent=5 // pred_check_branch
      %141 = sbr.rel (%p138) target = $region32
    $region31: #{_lambda_.5} parent=5 // pred_region
      %s142 = ssub.s32 %s9, 1
      %p143 = scmp.lt.s32.totalorder %s14, 1
      %s144 = scalar_select %p143, %s14, 1
      %s145 = smul.addr %s144, 29
      %s146 = smul.addr %s145, 4
      %s147 = scalar_lea.vmem %s0, %s146
      %p148 = pneg %p35
      %p149 = pneg %p32
      %p150 = pneg %p56
      %p151 = pneg %p53
      %p152 = pneg %p77
      %p153 = pneg %p74
      %p154 = pneg %p103
      %p155 = pneg %p100
      %p156 = scmp.lt.s32.totalorder %s14, 1
      %s157 = scalar_select %p156, %s14, 1
      %s158 = smul.addr %s157, 24
      %s159 = smul.addr %s158, 8
      %s160 = scalar_lea.vmem %s3, %s159
      %p161 = scmp.lt.s32.totalorder %s14, 1
      %s162 = scalar_select %p161, %s14, 1
      %s163 = smul.addr %s162, 29
      %s164 = smul.addr %s163, 4
      %s165 = scalar_lea.vmem %s0, %s164
      %p166 = scmp.lt.s32.totalorder %s14, 1
      %s167 = scalar_select %p166, %s14, 1
      %s168 = smul.addr %s167, 24
      %s169 = smul.addr %s168, 8
      %s170 = scalar_lea.vmem %s3, %s169
      %v171 = vld [vmem:[%s165] sm:$0xf]
      %v172 = vld [vmem:[%s165 + $0x4] sm:$0xf]
      %v173 = vld [vmem:[%s165 + $0x8] sm:$0xf]
      %v174 = vld [vmem:[%s165 + $0xc] sm:$0xf]
      %v175 = vld [vmem:[%s165 + $0x10] sm:$0xf]
      %v176 = vld [vmem:[%s165 + $0x14] sm:$0xf]
      %v177 = vld [vmem:[%s165 + $0x18] sm:$0xf]
      %v178 = vld [vmem:[%s165 + $0x1c] sm:$0xf]
      %v179 = vld [vmem:[%s165 + $0x20] sm:$0xf]
      %v180 = vld [vmem:[%s165 + $0x24] sm:$0xf]
      %v181 = vld [vmem:[%s165 + $0x28] sm:$0xf]
      %v182 = vld [vmem:[%s165 + $0x2c] sm:$0xf]
      %v183 = vld [vmem:[%s165 + $0x30] sm:$0xf]
      %v184 = vld [vmem:[%s165 + $0x34] sm:$0xf]
      %v185 = vld [vmem:[%s165 + $0x38] sm:$0xf]
      %v186 = vld [vmem:[%s165 + $0x3c] sm:$0xf]
      %v187 = vld [vmem:[%s165 + $0x40] sm:$0xf]
      %v188 = vld [vmem:[%s165 + $0x44] sm:$0xf]
      %v189 = vld [vmem:[%s165 + $0x48] sm:$0xf]
      %v190 = vld [vmem:[%s165 + $0x4c] sm:$0xf]
      %v191 = vld [vmem:[%s165 + $0x50] sm:$0xf]
      %v192 = vld [vmem:[%s165 + $0x54] sm:$0xf]
      %v193 = vld [vmem:[%s165 + $0x58] sm:$0xf]
      %v194 = vld [vmem:[%s165 + $0x5c] sm:$0xf]
      %v195 = vld [vmem:[%s1] sm:$0xf]
      %v196 = vld [vmem:[%s1 + $0x4] sm:$0xf]
      %v197 = vld [vmem:[%s1 + $0x8] sm:$0xf]
      %v198 = vld [vmem:[%s1 + $0xc] sm:$0xf]
      %v199 = vld [vmem:[%s1 + $0x10] sm:$0xf]
      %v200 = vld [vmem:[%s1 + $0x14] sm:$0xf]
      %v201 = vld [vmem:[%s1 + $0x18] sm:$0xf]
      %v202 = vld [vmem:[%s1 + $0x1c] sm:$0xf]
      %v203 = vld [vmem:[%s1 + $0x20] sm:$0xf]
      %v204 = vld [vmem:[%s1 + $0x24] sm:$0xf]
      %v205 = vld [vmem:[%s1 + $0x28] sm:$0xf]
      %v206 = vld [vmem:[%s1 + $0x2c] sm:$0xf]
      %v207 = vld [vmem:[%s1 + $0x30] sm:$0xf]
      %v208 = vld [vmem:[%s1 + $0x34] sm:$0xf]
      %v209 = vld [vmem:[%s1 + $0x38] sm:$0xf]
      %v210 = vld [vmem:[%s1 + $0x3c] sm:$0xf]
      %v211 = vld [vmem:[%s165 + $0x60] sm:$0x1]
      %s212 = scalar_lea.vmem %s1, 64
      %v213 = vld [vmem:[%s212] sm:$0xf]
      %v214 = vld [vmem:[%s212 + $0x4] sm:$0xf]
      %v215 = vld [vmem:[%s212 + $0x8] sm:$0xf]
      %v216 = vld [vmem:[%s212 + $0xc] sm:$0xf]
      %v217 = vld [vmem:[%s212 + $0x10] sm:$0xf]
      %v218 = vld [vmem:[%s212 + $0x14] sm:$0xf]
      %v219 = vld [vmem:[%s212 + $0x18] sm:$0xf]
      %v220 = vld [vmem:[%s212 + $0x1c] sm:$0xf]
      %v221 = vld [vmem:[%s212 + $0x20] sm:$0xf]
      %v222 = vld [vmem:[%s212 + $0x24] sm:$0xf]
      %v223 = vld [vmem:[%s212 + $0x28] sm:$0xf]
      %v224 = vld [vmem:[%s212 + $0x2c] sm:$0xf]
      %v225 = vld [vmem:[%s212 + $0x30] sm:$0xf]
      %v226 = vld [vmem:[%s212 + $0x34] sm:$0xf]
      %v227 = vld [vmem:[%s212 + $0x38] sm:$0xf]
      %v228 = vld [vmem:[%s212 + $0x3c] sm:$0xf]
      %v254 = vunpack.c.l.b16 %v171
      %v255 = vunpack.c.l.b16 %v172
      %v256 = vunpack.c.l.b16 %v173
      %v257 = vunpack.c.l.b16 %v174
      %v258 = vunpack.c.l.b16 %v175
      %v259 = vunpack.c.l.b16 %v176
      %v260 = vunpack.c.l.b16 %v177
      %v261 = vunpack.c.l.b16 %v178
      %v262 = vunpack.c.l.b16 %v179
      %v263 = vunpack.c.l.b16 %v180
      %v264 = vunpack.c.l.b16 %v181
      %v265 = vunpack.c.l.b16 %v182
      %v266 = vunpack.c.l.b16 %v183
      %v267 = vunpack.c.l.b16 %v184
      %v268 = vunpack.c.l.b16 %v185
      %v269 = vunpack.c.l.b16 %v186
      %v270 = vunpack.c.l.b16 %v187
      %v271 = vunpack.c.l.b16 %v188
      %v272 = vunpack.c.l.b16 %v189
      %v273 = vunpack.c.l.b16 %v190
      %v274 = vunpack.c.l.b16 %v191
      %v275 = vunpack.c.l.b16 %v192
      %v276 = vunpack.c.l.b16 %v193
      %v277 = vunpack.c.l.b16 %v194
      %v278 = vunpack.c.l.b16 %v211
      %v279 = vpack.c.b16 %v255, %v254
      %v280 = vpack.c.b16 %v257, %v256
      %v281 = vpack.c.b16 %v259, %v258
      %v282 = vpack.c.b16 %v261, %v260
      %v283 = vpack.c.b16 %v263, %v262
      %v284 = vpack.c.b16 %v265, %v264
      %v285 = vpack.c.b16 %v267, %v266
      %v286 = vpack.c.b16 %v269, %v268
      %v287 = vpack.c.b16 %v271, %v270
      %v288 = vpack.c.b16 %v273, %v272
      %v289 = vpack.c.b16 %v275, %v274
      %v290 = vpack.c.b16 %v277, %v276
      %v291 = vpack.c.b16 %v278, %v278
      %vm292 = vsmask.f32 7424
      %v294 = vshrl.u32 %v279, 16
      %v296 = vshll.u32 %v279, 16
      %v298 = vrot.slane %v296, 1
      %v299 = vor.u32 %v294, %v298
      %v301 = vshll.u32 %v280, 16
      %v303 = vrot.slane %v301, 1
      %v304 = vsel %vm292, %v299, %v303
      %v305 = vshrl.u32 %v280, 16
      %v307 = vor.u32 %v305, %v303
      %v309 = vshll.u32 %v281, 16
      %v311 = vrot.slane %v309, 1
      %v312 = vsel %vm292, %v307, %v311
      %v313 = vshrl.u32 %v281, 16
      %v315 = vor.u32 %v313, %v311
      %v317 = vshll.u32 %v282, 16
      %v319 = vrot.slane %v317, 1
      %v320 = vsel %vm292, %v315, %v319
      %v321 = vshrl.u32 %v282, 16
      %v323 = vor.u32 %v321, %v319
      %v325 = vshll.u32 %v283, 16
      %v327 = vrot.slane %v325, 1
      %v328 = vsel %vm292, %v323, %v327
      %v329 = vshrl.u32 %v283, 16
      %v331 = vor.u32 %v329, %v327
      %v333 = vshll.u32 %v284, 16
      %v335 = vrot.slane %v333, 1
      %v336 = vsel %vm292, %v331, %v335
      %v337 = vshrl.u32 %v284, 16
      %v339 = vor.u32 %v337, %v335
      %v341 = vshll.u32 %v285, 16
      %v343 = vrot.slane %v341, 1
      %v344 = vsel %vm292, %v339, %v343
      %v345 = vshrl.u32 %v285, 16
      %v347 = vor.u32 %v345, %v343
      %v349 = vshll.u32 %v286, 16
      %v351 = vrot.slane %v349, 1
      %v352 = vsel %vm292, %v347, %v351
      %v353 = vshrl.u32 %v286, 16
      %v355 = vor.u32 %v353, %v351
      %v357 = vshll.u32 %v287, 16
      %v359 = vrot.slane %v357, 1
      %v360 = vsel %vm292, %v355, %v359
      %v361 = vshrl.u32 %v287, 16
      %v363 = vor.u32 %v361, %v359
      %v365 = vshll.u32 %v288, 16
      %v367 = vrot.slane %v365, 1
      %v368 = vsel %vm292, %v363, %v367
      %v369 = vshrl.u32 %v288, 16
      %v371 = vor.u32 %v369, %v367
      %v373 = vshll.u32 %v289, 16
      %v375 = vrot.slane %v373, 1
      %v376 = vsel %vm292, %v371, %v375
      %v377 = vshrl.u32 %v289, 16
      %v379 = vor.u32 %v377, %v375
      %v381 = vshll.u32 %v290, 16
      %v383 = vrot.slane %v381, 1
      %v384 = vsel %vm292, %v379, %v383
      %v385 = vshrl.u32 %v290, 16
      %v387 = vor.u32 %v385, %v383
      %v389 = vshll.u32 %v291, 16
      %v391 = vrot.slane %v389, 1
      %v392 = vsel %vm292, %v387, %v391
      %v421 = vunpack.c.l.b16 %v213
      %v422 = vunpack.c.l.b16 %v214
      %v423 = vunpack.c.l.b16 %v215
      %v424 = vunpack.c.l.b16 %v216
      %v425 = vunpack.c.l.b16 %v217
      %v426 = vunpack.c.l.b16 %v218
      %v427 = vunpack.c.l.b16 %v219
      %v428 = vunpack.c.l.b16 %v220
      %v429 = vunpack.c.l.b16 %v221
      %v430 = vunpack.c.l.b16 %v222
      %v431 = vunpack.c.l.b16 %v223
      %v432 = vunpack.c.l.b16 %v224
      %v433 = vunpack.c.l.b16 %v225
      %v434 = vunpack.c.l.b16 %v226
      %v435 = vunpack.c.l.b16 %v227
      %v436 = vunpack.c.l.b16 %v228
      %v437 = vpack.c.b16 %v422, %v421
      %v438 = vpack.c.b16 %v424, %v423
      %v439 = vpack.c.b16 %v426, %v425
      %v440 = vpack.c.b16 %v428, %v427
      %v441 = vpack.c.b16 %v430, %v429
      %v442 = vpack.c.b16 %v432, %v431
      %v443 = vpack.c.b16 %v434, %v433
      %v444 = vpack.c.b16 %v436, %v435
      %453 = vmatpush.bf16.msra.mxu0 %v444
      %454 = vmatpush.bf16.msra.mxu0 %v443
      %455 = vmatpush.bf16.msra.mxu0 %v442
      %456 = vmatpush.bf16.msra.mxu0 %v441
      %457 = vmatpush.bf16.msra.mxu0 %v440
      %458 = vmatpush.bf16.msra.mxu0 %v439
      %459 = vmatpush.bf16.msra.mxu0 %v438
      %460 = vmatpush.bf16.msra.mxu0 %v437
      %461 = vmatmul.bf16.gmra.mxu0 %v304
      %v462 = vpop.f32.mrf.mxu0
      %v463 = vadd.f32 0.0, %v462
      %v464 = vpop.f32.mrf.mxu0
      %v465 = vadd.f32 0.0, %v464
      %466 = vmatmul.bf16.gmra.mxu0 %v312
      %v467 = vpop.f32.mrf.mxu0
      %v468 = vadd.f32 0.0, %v467
      %v469 = vpop.f32.mrf.mxu0
      %v470 = vadd.f32 0.0, %v469
      %471 = vmatmul.bf16.gmra.mxu0 %v320
      %v472 = vpop.f32.mrf.mxu0
      %v473 = vadd.f32 0.0, %v472
      %v474 = vpop.f32.mrf.mxu0
      %v475 = vadd.f32 0.0, %v474
      %476 = vmatmul.bf16.gmra.mxu0 %v328
      %v477 = vpop.f32.mrf.mxu0
      %v478 = vadd.f32 0.0, %v477
      %v479 = vpop.f32.mrf.mxu0
      %v480 = vadd.f32 0.0, %v479
      %481 = vmatmul.bf16.gmra.mxu0 %v336
      %v482 = vpop.f32.mrf.mxu0
      %v483 = vadd.f32 0.0, %v482
      %v484 = vpop.f32.mrf.mxu0
      %v485 = vadd.f32 0.0, %v484
      %486 = vmatmul.bf16.gmra.mxu0 %v344
      %v487 = vpop.f32.mrf.mxu0
      %v488 = vadd.f32 0.0, %v487
      %v489 = vpop.f32.mrf.mxu0
      %v490 = vadd.f32 0.0, %v489
      %491 = vmatmul.bf16.gmra.mxu0 %v352
      %v492 = vpop.f32.mrf.mxu0
      %v493 = vadd.f32 0.0, %v492
      %v494 = vpop.f32.mrf.mxu0
      %v495 = vadd.f32 0.0, %v494
      %496 = vmatmul.bf16.gmra.mxu0 %v360
      %v497 = vpop.f32.mrf.mxu0
      %v498 = vadd.f32 0.0, %v497
      %v499 = vpop.f32.mrf.mxu0
      %v500 = vadd.f32 0.0, %v499
      %501 = vmatmul.bf16.gmra.mxu0 %v368
      %v502 = vpop.f32.mrf.mxu0
      %v503 = vadd.f32 0.0, %v502
      %v504 = vpop.f32.mrf.mxu0
      %v505 = vadd.f32 0.0, %v504
      %506 = vmatmul.bf16.gmra.mxu0 %v376
      %v507 = vpop.f32.mrf.mxu0
      %v508 = vadd.f32 0.0, %v507
      %v509 = vpop.f32.mrf.mxu0
      %v510 = vadd.f32 0.0, %v509
      %511 = vmatmul.bf16.gmra.mxu0 %v384
      %v512 = vpop.f32.mrf.mxu0
      %v513 = vadd.f32 0.0, %v512
      %v514 = vpop.f32.mrf.mxu0
      %v515 = vadd.f32 0.0, %v514
      %516 = vmatmul.bf16.gmra.mxu0 %v392
      %v517 = vpop.f32.mrf.mxu0
      %v518 = vadd.f32 0.0, %v517
      %v519 = vpop.f32.mrf.mxu0
      %v520 = vadd.f32 0.0, %v519
      %521 = vdwg.mxu0
      %v550 = vunpack.c.l.b16 %v195
      %v551 = vunpack.c.l.b16 %v196
      %v552 = vunpack.c.l.b16 %v197
      %v553 = vunpack.c.l.b16 %v198
      %v554 = vunpack.c.l.b16 %v199
      %v555 = vunpack.c.l.b16 %v200
      %v556 = vunpack.c.l.b16 %v201
      %v557 = vunpack.c.l.b16 %v202
      %v558 = vunpack.c.l.b16 %v203
      %v559 = vunpack.c.l.b16 %v204
      %v560 = vunpack.c.l.b16 %v205
      %v561 = vunpack.c.l.b16 %v206
      %v562 = vunpack.c.l.b16 %v207
      %v563 = vunpack.c.l.b16 %v208
      %v564 = vunpack.c.l.b16 %v209
      %v565 = vunpack.c.l.b16 %v210
      %v566 = vpack.c.b16 %v551, %v550
      %v567 = vpack.c.b16 %v553, %v552
      %v568 = vpack.c.b16 %v555, %v554
      %v569 = vpack.c.b16 %v557, %v556
      %v570 = vpack.c.b16 %v559, %v558
      %v571 = vpack.c.b16 %v561, %v560
      %v572 = vpack.c.b16 %v563, %v562
      %v573 = vpack.c.b16 %v565, %v564
      %582 = vmatpush.bf16.msra.mxu0 %v573
      %583 = vmatpush.bf16.msra.mxu0 %v572
      %584 = vmatpush.bf16.msra.mxu0 %v571
      %585 = vmatpush.bf16.msra.mxu0 %v570
      %586 = vmatpush.bf16.msra.mxu0 %v569
      %587 = vmatpush.bf16.msra.mxu0 %v568
      %588 = vmatpush.bf16.msra.mxu0 %v567
      %589 = vmatpush.bf16.msra.mxu0 %v566
      %590 = vmatmul.bf16.gmra.mxu0 %v279
      %v591 = vpop.f32.mrf.mxu0
      %v592 = vadd.f32 %v463, %v591
      %v593 = vpop.f32.mrf.mxu0
      %v594 = vadd.f32 %v465, %v593
      %595 = vmatmul.bf16.gmra.mxu0 %v280
      %v596 = vpop.f32.mrf.mxu0
      %v597 = vadd.f32 %v468, %v596
      %v598 = vpop.f32.mrf.mxu0
      %v599 = vadd.f32 %v470, %v598
      %600 = vmatmul.bf16.gmra.mxu0 %v281
      %v601 = vpop.f32.mrf.mxu0
      %v602 = vadd.f32 %v473, %v601
      %v603 = vpop.f32.mrf.mxu0
      %v604 = vadd.f32 %v475, %v603
      %605 = vmatmul.bf16.gmra.mxu0 %v282
      %v606 = vpop.f32.mrf.mxu0
      %v607 = vadd.f32 %v478, %v606
      %v608 = vpop.f32.mrf.mxu0
      %v609 = vadd.f32 %v480, %v608
      %610 = vmatmul.bf16.gmra.mxu0 %v283
      %v611 = vpop.f32.mrf.mxu0
      %v612 = vadd.f32 %v483, %v611
      %v613 = vpop.f32.mrf.mxu0
      %v614 = vadd.f32 %v485, %v613
      %615 = vmatmul.bf16.gmra.mxu0 %v284
      %v616 = vpop.f32.mrf.mxu0
      %v617 = vadd.f32 %v488, %v616
      %v618 = vpop.f32.mrf.mxu0
      %v619 = vadd.f32 %v490, %v618
      %620 = vmatmul.bf16.gmra.mxu0 %v285
      %v621 = vpop.f32.mrf.mxu0
      %v622 = vadd.f32 %v493, %v621
      %v623 = vpop.f32.mrf.mxu0
      %v624 = vadd.f32 %v495, %v623
      %625 = vmatmul.bf16.gmra.mxu0 %v286
      %v626 = vpop.f32.mrf.mxu0
      %v627 = vadd.f32 %v498, %v626
      %v628 = vpop.f32.mrf.mxu0
      %v629 = vadd.f32 %v500, %v628
      %630 = vmatmul.bf16.gmra.mxu0 %v287
      %v631 = vpop.f32.mrf.mxu0
      %v632 = vadd.f32 %v503, %v631
      %v633 = vpop.f32.mrf.mxu0
      %v634 = vadd.f32 %v505, %v633
      %635 = vmatmul.bf16.gmra.mxu0 %v288
      %v636 = vpop.f32.mrf.mxu0
      %v637 = vadd.f32 %v508, %v636
      %v638 = vpop.f32.mrf.mxu0
      %v639 = vadd.f32 %v510, %v638
      %640 = vmatmul.bf16.gmra.mxu0 %v289
      %v641 = vpop.f32.mrf.mxu0
      %v642 = vadd.f32 %v513, %v641
      %v643 = vpop.f32.mrf.mxu0
      %v644 = vadd.f32 %v515, %v643
      %645 = vmatmul.bf16.gmra.mxu0 %v290
      %v646 = vpop.f32.mrf.mxu0
      %v647 = vadd.f32 %v518, %v646
      %v648 = vpop.f32.mrf.mxu0
      %v649 = vadd.f32 %v520, %v648
      %650 = vdwg.mxu0
      %v651 = vld [vmem:[%s165] sm:$0xe]
      %s652 = scalar_lea.vmem %s1, 128
      %v653 = vld [vmem:[%s652] sm:$0xf]
      %v654 = vld [vmem:[%s652 + $0x4] sm:$0xf]
      %v655 = vld [vmem:[%s652 + $0x8] sm:$0xf]
      %v656 = vld [vmem:[%s652 + $0xc] sm:$0xf]
      %v657 = vld [vmem:[%s652 + $0x10] sm:$0xf]
      %v658 = vld [vmem:[%s652 + $0x14] sm:$0xf]
      %v659 = vld [vmem:[%s652 + $0x18] sm:$0xf]
      %v660 = vld [vmem:[%s652 + $0x1c] sm:$0xf]
      %v661 = vld [vmem:[%s652 + $0x20] sm:$0xf]
      %v662 = vld [vmem:[%s652 + $0x24] sm:$0xf]
      %v663 = vld [vmem:[%s652 + $0x28] sm:$0xf]
      %v664 = vld [vmem:[%s652 + $0x2c] sm:$0xf]
      %v665 = vld [vmem:[%s652 + $0x30] sm:$0xf]
      %v666 = vld [vmem:[%s652 + $0x34] sm:$0xf]
      %v667 = vld [vmem:[%s652 + $0x38] sm:$0xf]
      %v668 = vld [vmem:[%s652 + $0x3c] sm:$0xf]
      %v670 = vunpack.c.l.b16 %v651
      %v671 = vpack.c.b16 %v255, %v670
      %vm672 = vcmask 1046528
      %v673 = vrot.slane %v671, 1
      %v674 = vrot.slane %v280, 1
      %v675 = vsel %vm672, %v673, %v674
      %v676 = vrot.slane %v281, 1
      %v677 = vsel %vm672, %v674, %v676
      %v678 = vrot.slane %v282, 1
      %v679 = vsel %vm672, %v676, %v678
      %v680 = vrot.slane %v283, 1
      %v681 = vsel %vm672, %v678, %v680
      %v682 = vrot.slane %v284, 1
      %v683 = vsel %vm672, %v680, %v682
      %v684 = vrot.slane %v285, 1
      %v685 = vsel %vm672, %v682, %v684
      %v686 = vrot.slane %v286, 1
      %v687 = vsel %vm672, %v684, %v686
      %v688 = vrot.slane %v287, 1
      %v689 = vsel %vm672, %v686, %v688
      %v690 = vrot.slane %v288, 1
      %v691 = vsel %vm672, %v688, %v690
      %v692 = vrot.slane %v289, 1
      %v693 = vsel %vm672, %v690, %v692
      %v694 = vrot.slane %v290, 1
      %v695 = vsel %vm672, %v692, %v694
      %v696 = vrot.slane %v291, 1
      %v697 = vsel %vm672, %v694, %v696
      %v726 = vunpack.c.l.b16 %v653
      %v727 = vunpack.c.l.b16 %v654
      %v728 = vunpack.c.l.b16 %v655
      %v729 = vunpack.c.l.b16 %v656
      %v730 = vunpack.c.l.b16 %v657
      %v731 = vunpack.c.l.b16 %v658
      %v732 = vunpack.c.l.b16 %v659
      %v733 = vunpack.c.l.b16 %v660
      %v734 = vunpack.c.l.b16 %v661
      %v735 = vunpack.c.l.b16 %v662
      %v736 = vunpack.c.l.b16 %v663
      %v737 = vunpack.c.l.b16 %v664
      %v738 = vunpack.c.l.b16 %v665
      %v739 = vunpack.c.l.b16 %v666
      %v740 = vunpack.c.l.b16 %v667
      %v741 = vunpack.c.l.b16 %v668
      %v742 = vpack.c.b16 %v727, %v726
      %v743 = vpack.c.b16 %v729, %v728
      %v744 = vpack.c.b16 %v731, %v730
      %v745 = vpack.c.b16 %v733, %v732
      %v746 = vpack.c.b16 %v735, %v734
      %v747 = vpack.c.b16 %v737, %v736
      %v748 = vpack.c.b16 %v739, %v738
      %v749 = vpack.c.b16 %v741, %v740
      %758 = vmatpush.bf16.msra.mxu0 %v749
      %759 = vmatpush.bf16.msra.mxu0 %v748
      %760 = vmatpush.bf16.msra.mxu0 %v747
      %761 = vmatpush.bf16.msra.mxu0 %v746
      %762 = vmatpush.bf16.msra.mxu0 %v745
      %763 = vmatpush.bf16.msra.mxu0 %v744
      %764 = vmatpush.bf16.msra.mxu0 %v743
      %765 = vmatpush.bf16.msra.mxu0 %v742
      %766 = vmatmul.bf16.gmra.mxu0 %v675
      %v767 = vpop.f32.mrf.mxu0
      %v768 = vadd.f32 0.0, %v767
      %v769 = vpop.f32.mrf.mxu0
      %v770 = vadd.f32 0.0, %v769
      %771 = vmatmul.bf16.gmra.mxu0 %v677
      %v772 = vpop.f32.mrf.mxu0
      %v773 = vadd.f32 0.0, %v772
      %v774 = vpop.f32.mrf.mxu0
      %v775 = vadd.f32 0.0, %v774
      %776 = vmatmul.bf16.gmra.mxu0 %v679
      %v777 = vpop.f32.mrf.mxu0
      %v778 = vadd.f32 0.0, %v777
      %v779 = vpop.f32.mrf.mxu0
      %v780 = vadd.f32 0.0, %v779
      %781 = vmatmul.bf16.gmra.mxu0 %v681
      %v782 = vpop.f32.mrf.mxu0
      %v783 = vadd.f32 0.0, %v782
      %v784 = vpop.f32.mrf.mxu0
      %v785 = vadd.f32 0.0, %v784
      %786 = vmatmul.bf16.gmra.mxu0 %v683
      %v787 = vpop.f32.mrf.mxu0
      %v788 = vadd.f32 0.0, %v787
      %v789 = vpop.f32.mrf.mxu0
      %v790 = vadd.f32 0.0, %v789
      %791 = vmatmul.bf16.gmra.mxu0 %v685
      %v792 = vpop.f32.mrf.mxu0
      %v793 = vadd.f32 0.0, %v792
      %v794 = vpop.f32.mrf.mxu0
      %v795 = vadd.f32 0.0, %v794
      %796 = vmatmul.bf16.gmra.mxu0 %v687
      %v797 = vpop.f32.mrf.mxu0
      %v798 = vadd.f32 0.0, %v797
      %v799 = vpop.f32.mrf.mxu0
      %v800 = vadd.f32 0.0, %v799
      %801 = vmatmul.bf16.gmra.mxu0 %v689
      %v802 = vpop.f32.mrf.mxu0
      %v803 = vadd.f32 0.0, %v802
      %v804 = vpop.f32.mrf.mxu0
      %v805 = vadd.f32 0.0, %v804
      %806 = vmatmul.bf16.gmra.mxu0 %v691
      %v807 = vpop.f32.mrf.mxu0
      %v808 = vadd.f32 0.0, %v807
      %v809 = vpop.f32.mrf.mxu0
      %v810 = vadd.f32 0.0, %v809
      %811 = vmatmul.bf16.gmra.mxu0 %v693
      %v812 = vpop.f32.mrf.mxu0
      %v813 = vadd.f32 0.0, %v812
      %v814 = vpop.f32.mrf.mxu0
      %v815 = vadd.f32 0.0, %v814
      %816 = vmatmul.bf16.gmra.mxu0 %v695
      %v817 = vpop.f32.mrf.mxu0
      %v818 = vadd.f32 0.0, %v817
      %v819 = vpop.f32.mrf.mxu0
      %v820 = vadd.f32 0.0, %v819
      %821 = vmatmul.bf16.gmra.mxu0 %v697
      %v822 = vpop.f32.mrf.mxu0
      %v823 = vadd.f32 0.0, %v822
      %v824 = vpop.f32.mrf.mxu0
      %v825 = vadd.f32 0.0, %v824
      %826 = vdwg.mxu0
      %v827 = vadd.f32 %v592, %v768
      %v828 = vadd.f32 %v594, %v770
      %v829 = vadd.f32 %v597, %v773
      %v830 = vadd.f32 %v599, %v775
      %v831 = vadd.f32 %v602, %v778
      %v832 = vadd.f32 %v604, %v780
      %v833 = vadd.f32 %v607, %v783
      %v834 = vadd.f32 %v609, %v785
      %v835 = vadd.f32 %v612, %v788
      %v836 = vadd.f32 %v614, %v790
      %v837 = vadd.f32 %v617, %v793
      %v838 = vadd.f32 %v619, %v795
      %v839 = vadd.f32 %v622, %v798
      %v840 = vadd.f32 %v624, %v800
      %v841 = vadd.f32 %v627, %v803
      %v842 = vadd.f32 %v629, %v805
      %v843 = vadd.f32 %v632, %v808
      %v844 = vadd.f32 %v634, %v810
      %v845 = vadd.f32 %v637, %v813
      %v846 = vadd.f32 %v639, %v815
      %v847 = vadd.f32 %v642, %v818
      %v848 = vadd.f32 %v644, %v820
      %v849 = vadd.f32 %v647, %v823
      %v850 = vadd.f32 %v649, %v825
      %v851 = vld [vmem:[%s165 + $0x8] sm:$0xf]
      %v852 = vld [vmem:[%s165 + $0xc] sm:$0xf]
      %v853 = vld [vmem:[%s165 + $0x10] sm:$0xf]
      %v854 = vld [vmem:[%s165 + $0x14] sm:$0xf]
      %v855 = vld [vmem:[%s165 + $0x18] sm:$0xf]
      %v856 = vld [vmem:[%s165 + $0x1c] sm:$0xf]
      %v857 = vld [vmem:[%s165 + $0x20] sm:$0xf]
      %v858 = vld [vmem:[%s165 + $0x24] sm:$0xf]
      %v859 = vld [vmem:[%s165 + $0x28] sm:$0xf]
      %v860 = vld [vmem:[%s165 + $0x2c] sm:$0xf]
      %v861 = vld [vmem:[%s165 + $0x30] sm:$0xf]
      %v862 = vld [vmem:[%s165 + $0x34] sm:$0xf]
      %v863 = vld [vmem:[%s165 + $0x38] sm:$0xf]
      %v864 = vld [vmem:[%s165 + $0x3c] sm:$0xf]
      %v865 = vld [vmem:[%s165 + $0x40] sm:$0xf]
      %v866 = vld [vmem:[%s165 + $0x44] sm:$0xf]
      %v867 = vld [vmem:[%s165 + $0x48] sm:$0xf]
      %v868 = vld [vmem:[%s165 + $0x4c] sm:$0xf]
      %v869 = vld [vmem:[%s165 + $0x50] sm:$0xf]
      %v870 = vld [vmem:[%s165 + $0x54] sm:$0xf]
      %v871 = vld [vmem:[%s165 + $0x58] sm:$0xf]
      %v872 = vld [vmem:[%s165 + $0x5c] sm:$0xf]
      %v873 = vld [vmem:[%s165 + $0x60] sm:$0xf]
      %v874 = vld [vmem:[%s165 + $0x64] sm:$0xf]
      %s875 = scalar_lea.vmem %s1, 192
      %v876 = vld [vmem:[%s875] sm:$0xf]
      %v877 = vld [vmem:[%s875 + $0x4] sm:$0xf]
      %v878 = vld [vmem:[%s875 + $0x8] sm:$0xf]
      %v879 = vld [vmem:[%s875 + $0xc] sm:$0xf]
      %v880 = vld [vmem:[%s875 + $0x10] sm:$0xf]
      %v881 = vld [vmem:[%s875 + $0x14] sm:$0xf]
      %v882 = vld [vmem:[%s875 + $0x18] sm:$0xf]
      %v883 = vld [vmem:[%s875 + $0x1c] sm:$0xf]
      %v884 = vld [vmem:[%s875 + $0x20] sm:$0xf]
      %v885 = vld [vmem:[%s875 + $0x24] sm:$0xf]
      %v886 = vld [vmem:[%s875 + $0x28] sm:$0xf]
      %v887 = vld [vmem:[%s875 + $0x2c] sm:$0xf]
      %v888 = vld [vmem:[%s875 + $0x30] sm:$0xf]
      %v889 = vld [vmem:[%s875 + $0x34] sm:$0xf]
      %v890 = vld [vmem:[%s875 + $0x38] sm:$0xf]
      %v891 = vld [vmem:[%s875 + $0x3c] sm:$0xf]
      %v916 = vunpack.c.l.b16 %v851
      %v917 = vunpack.c.l.b16 %v852
      %v918 = vunpack.c.l.b16 %v853
      %v919 = vunpack.c.l.b16 %v854
      %v920 = vunpack.c.l.b16 %v855
      %v921 = vunpack.c.l.b16 %v856
      %v922 = vunpack.c.l.b16 %v857
      %v923 = vunpack.c.l.b16 %v858
      %v924 = vunpack.c.l.b16 %v859
      %v925 = vunpack.c.l.b16 %v860
      %v926 = vunpack.c.l.b16 %v861
      %v927 = vunpack.c.l.b16 %v862
      %v928 = vunpack.c.l.b16 %v863
      %v929 = vunpack.c.l.b16 %v864
      %v930 = vunpack.c.l.b16 %v865
      %v931 = vunpack.c.l.b16 %v866
      %v932 = vunpack.c.l.b16 %v867
      %v933 = vunpack.c.l.b16 %v868
      %v934 = vunpack.c.l.b16 %v869
      %v935 = vunpack.c.l.b16 %v870
      %v936 = vunpack.c.l.b16 %v871
      %v937 = vunpack.c.l.b16 %v872
      %v938 = vunpack.c.l.b16 %v873
      %v939 = vunpack.c.l.b16 %v874
      %v940 = vpack.c.b16 %v917, %v916
      %v941 = vpack.c.b16 %v919, %v918
      %v942 = vpack.c.b16 %v921, %v920
      %v943 = vpack.c.b16 %v923, %v922
      %v944 = vpack.c.b16 %v925, %v924
      %v945 = vpack.c.b16 %v927, %v926
      %v946 = vpack.c.b16 %v929, %v928
      %v947 = vpack.c.b16 %v931, %v930
      %v948 = vpack.c.b16 %v933, %v932
      %v949 = vpack.c.b16 %v935, %v934
      %v950 = vpack.c.b16 %v937, %v936
      %v951 = vpack.c.b16 %v939, %v938
      %v980 = vunpack.c.l.b16 %v876
      %v981 = vunpack.c.l.b16 %v877
      %v982 = vunpack.c.l.b16 %v878
      %v983 = vunpack.c.l.b16 %v879
      %v984 = vunpack.c.l.b16 %v880
      %v985 = vunpack.c.l.b16 %v881
      %v986 = vunpack.c.l.b16 %v882
      %v987 = vunpack.c.l.b16 %v883
      %v988 = vunpack.c.l.b16 %v884
      %v989 = vunpack.c.l.b16 %v885
      %v990 = vunpack.c.l.b16 %v886
      %v991 = vunpack.c.l.b16 %v887
      %v992 = vunpack.c.l.b16 %v888
      %v993 = vunpack.c.l.b16 %v889
      %v994 = vunpack.c.l.b16 %v890
      %v995 = vunpack.c.l.b16 %v891
      %v996 = vpack.c.b16 %v981, %v980
      %v997 = vpack.c.b16 %v983, %v982
      %v998 = vpack.c.b16 %v985, %v984
      %v999 = vpack.c.b16 %v987, %v986
      %v1000 = vpack.c.b16 %v989, %v988
      %v1001 = vpack.c.b16 %v991, %v990
      %v1002 = vpack.c.b16 %v993, %v992
      %v1003 = vpack.c.b16 %v995, %v994
      %1012 = vmatpush.bf16.msra.mxu0 %v1003
      %1013 = vmatpush.bf16.msra.mxu0 %v1002
      %1014 = vmatpush.bf16.msra.mxu0 %v1001
      %1015 = vmatpush.bf16.msra.mxu0 %v1000
      %1016 = vmatpush.bf16.msra.mxu0 %v999
      %1017 = vmatpush.bf16.msra.mxu0 %v998
      %1018 = vmatpush.bf16.msra.mxu0 %v997
      %1019 = vmatpush.bf16.msra.mxu0 %v996
      %1020 = vmatmul.bf16.gmra.mxu0 %v940
      %v1021 = vpop.f32.mrf.mxu0
      %v1022 = vadd.f32 0.0, %v1021
      %v1023 = vpop.f32.mrf.mxu0
      %v1024 = vadd.f32 0.0, %v1023
      %1025 = vmatmul.bf16.gmra.mxu0 %v941
      %v1026 = vpop.f32.mrf.mxu0
      %v1027 = vadd.f32 0.0, %v1026
      %v1028 = vpop.f32.mrf.mxu0
      %v1029 = vadd.f32 0.0, %v1028
      %1030 = vmatmul.bf16.gmra.mxu0 %v942
      %v1031 = vpop.f32.mrf.mxu0
      %v1032 = vadd.f32 0.0, %v1031
      %v1033 = vpop.f32.mrf.mxu0
      %v1034 = vadd.f32 0.0, %v1033
      %1035 = vmatmul.bf16.gmra.mxu0 %v943
      %v1036 = vpop.f32.mrf.mxu0
      %v1037 = vadd.f32 0.0, %v1036
      %v1038 = vpop.f32.mrf.mxu0
      %v1039 = vadd.f32 0.0, %v1038
      %1040 = vmatmul.bf16.gmra.mxu0 %v944
      %v1041 = vpop.f32.mrf.mxu0
      %v1042 = vadd.f32 0.0, %v1041
      %v1043 = vpop.f32.mrf.mxu0
      %v1044 = vadd.f32 0.0, %v1043
      %1045 = vmatmul.bf16.gmra.mxu0 %v945
      %v1046 = vpop.f32.mrf.mxu0
      %v1047 = vadd.f32 0.0, %v1046
      %v1048 = vpop.f32.mrf.mxu0
      %v1049 = vadd.f32 0.0, %v1048
      %1050 = vmatmul.bf16.gmra.mxu0 %v946
      %v1051 = vpop.f32.mrf.mxu0
      %v1052 = vadd.f32 0.0, %v1051
      %v1053 = vpop.f32.mrf.mxu0
      %v1054 = vadd.f32 0.0, %v1053
      %1055 = vmatmul.bf16.gmra.mxu0 %v947
      %v1056 = vpop.f32.mrf.mxu0
      %v1057 = vadd.f32 0.0, %v1056
      %v1058 = vpop.f32.mrf.mxu0
      %v1059 = vadd.f32 0.0, %v1058
      %1060 = vmatmul.bf16.gmra.mxu0 %v948
      %v1061 = vpop.f32.mrf.mxu0
      %v1062 = vadd.f32 0.0, %v1061
      %v1063 = vpop.f32.mrf.mxu0
      %v1064 = vadd.f32 0.0, %v1063
      %1065 = vmatmul.bf16.gmra.mxu0 %v949
      %v1066 = vpop.f32.mrf.mxu0
      %v1067 = vadd.f32 0.0, %v1066
      %v1068 = vpop.f32.mrf.mxu0
      %v1069 = vadd.f32 0.0, %v1068
      %1070 = vmatmul.bf16.gmra.mxu0 %v950
      %v1071 = vpop.f32.mrf.mxu0
      %v1072 = vadd.f32 0.0, %v1071
      %v1073 = vpop.f32.mrf.mxu0
      %v1074 = vadd.f32 0.0, %v1073
      %1075 = vmatmul.bf16.gmra.mxu0 %v951
      %v1076 = vpop.f32.mrf.mxu0
      %v1077 = vadd.f32 0.0, %v1076
      %v1078 = vpop.f32.mrf.mxu0
      %v1079 = vadd.f32 0.0, %v1078
      %1080 = vdwg.mxu0
      %v1081 = vadd.f32 %v827, %v1022
      %v1082 = vadd.f32 %v828, %v1024
      %v1083 = vadd.f32 %v829, %v1027
      %v1084 = vadd.f32 %v830, %v1029
      %v1085 = vadd.f32 %v831, %v1032
      %v1086 = vadd.f32 %v832, %v1034
      %v1087 = vadd.f32 %v833, %v1037
      %v1088 = vadd.f32 %v834, %v1039
      %v1089 = vadd.f32 %v835, %v1042
      %v1090 = vadd.f32 %v836, %v1044
      %v1091 = vadd.f32 %v837, %v1047
      %v1092 = vadd.f32 %v838, %v1049
      %v1093 = vadd.f32 %v839, %v1052
      %v1094 = vadd.f32 %v840, %v1054
      %v1095 = vadd.f32 %v841, %v1057
      %v1096 = vadd.f32 %v842, %v1059
      %v1097 = vadd.f32 %v843, %v1062
      %v1098 = vadd.f32 %v844, %v1064
      %v1099 = vadd.f32 %v845, %v1067
      %v1100 = vadd.f32 %v846, %v1069
      %v1101 = vadd.f32 %v847, %v1072
      %v1102 = vadd.f32 %v848, %v1074
      %v1103 = vadd.f32 %v849, %v1077
      %v1104 = vadd.f32 %v850, %v1079
      %v1105 = vld [vmem:[%s165 + $0x8] sm:$0xf]
      %v1106 = vld [vmem:[%s165 + $0xc] sm:$0xf]
      %v1107 = vld [vmem:[%s165 + $0x10] sm:$0xf]
      %v1108 = vld [vmem:[%s165 + $0x14] sm:$0xf]
      %v1109 = vld [vmem:[%s165 + $0x18] sm:$0xf]
      %v1110 = vld [vmem:[%s165 + $0x1c] sm:$0xf]
      %v1111 = vld [vmem:[%s165 + $0x20] sm:$0xf]
      %v1112 = vld [vmem:[%s165 + $0x24] sm:$0xf]
      %v1113 = vld [vmem:[%s165 + $0x28] sm:$0xf]
      %v1114 = vld [vmem:[%s165 + $0x2c] sm:$0xf]
      %v1115 = vld [vmem:[%s165 + $0x30] sm:$0xf]
      %v1116 = vld [vmem:[%s165 + $0x34] sm:$0xf]
      %v1117 = vld [vmem:[%s165 + $0x38] sm:$0xf]
      %v1118 = vld [vmem:[%s165 + $0x3c] sm:$0xf]
      %v1119 = vld [vmem:[%s165 + $0x40] sm:$0xf]
      %v1120 = vld [vmem:[%s165 + $0x44] sm:$0xf]
      %v1121 = vld [vmem:[%s165 + $0x48] sm:$0xf]
      %v1122 = vld [vmem:[%s165 + $0x4c] sm:$0xf]
      %v1123 = vld [vmem:[%s165 + $0x50] sm:$0xf]
      %v1124 = vld [vmem:[%s165 + $0x54] sm:$0xf]
      %v1125 = vld [vmem:[%s165 + $0x58] sm:$0xf]
      %v1126 = vld [vmem:[%s165 + $0x5c] sm:$0xf]
      %v1127 = vld [vmem:[%s165 + $0x60] sm:$0xf]
      %v1128 = vld [vmem:[%s165 + $0x64] sm:$0xf]
      %v1129 = vld [vmem:[%s165 + $0x68] sm:$0x1]
      %s1130 = scalar_lea.vmem %s1, 256
      %v1131 = vld [vmem:[%s1130] sm:$0xf]
      %v1132 = vld [vmem:[%s1130 + $0x4] sm:$0xf]
      %v1133 = vld [vmem:[%s1130 + $0x8] sm:$0xf]
      %v1134 = vld [vmem:[%s1130 + $0xc] sm:$0xf]
      %v1135 = vld [vmem:[%s1130 + $0x10] sm:$0xf]
      %v1136 = vld [vmem:[%s1130 + $0x14] sm:$0xf]
      %v1137 = vld [vmem:[%s1130 + $0x18] sm:$0xf]
      %v1138 = vld [vmem:[%s1130 + $0x1c] sm:$0xf]
      %v1139 = vld [vmem:[%s1130 + $0x20] sm:$0xf]
      %v1140 = vld [vmem:[%s1130 + $0x24] sm:$0xf]
      %v1141 = vld [vmem:[%s1130 + $0x28] sm:$0xf]
      %v1142 = vld [vmem:[%s1130 + $0x2c] sm:$0xf]
      %v1143 = vld [vmem:[%s1130 + $0x30] sm:$0xf]
      %v1144 = vld [vmem:[%s1130 + $0x34] sm:$0xf]
      %v1145 = vld [vmem:[%s1130 + $0x38] sm:$0xf]
      %v1146 = vld [vmem:[%s1130 + $0x3c] sm:$0xf]
      %v1172 = vunpack.c.l.b16 %v1105
      %v1173 = vunpack.c.l.b16 %v1106
      %v1174 = vunpack.c.l.b16 %v1107
      %v1175 = vunpack.c.l.b16 %v1108
      %v1176 = vunpack.c.l.b16 %v1109
      %v1177 = vunpack.c.l.b16 %v1110
      %v1178 = vunpack.c.l.b16 %v1111
      %v1179 = vunpack.c.l.b16 %v1112
      %v1180 = vunpack.c.l.b16 %v1113
      %v1181 = vunpack.c.l.b16 %v1114
      %v1182 = vunpack.c.l.b16 %v1115
      %v1183 = vunpack.c.l.b16 %v1116
      %v1184 = vunpack.c.l.b16 %v1117
      %v1185 = vunpack.c.l.b16 %v1118
      %v1186 = vunpack.c.l.b16 %v1119
      %v1187 = vunpack.c.l.b16 %v1120
      %v1188 = vunpack.c.l.b16 %v1121
      %v1189 = vunpack.c.l.b16 %v1122
      %v1190 = vunpack.c.l.b16 %v1123
      %v1191 = vunpack.c.l.b16 %v1124
      %v1192 = vunpack.c.l.b16 %v1125
      %v1193 = vunpack.c.l.b16 %v1126
      %v1194 = vunpack.c.l.b16 %v1127
      %v1195 = vunpack.c.l.b16 %v1128
      %v1196 = vunpack.c.l.b16 %v1129
      %v1197 = vpack.c.b16 %v1173, %v1172
      %v1198 = vpack.c.b16 %v1175, %v1174
      %v1199 = vpack.c.b16 %v1177, %v1176
      %v1200 = vpack.c.b16 %v1179, %v1178
      %v1201 = vpack.c.b16 %v1181, %v1180
      %v1202 = vpack.c.b16 %v1183, %v1182
      %v1203 = vpack.c.b16 %v1185, %v1184
      %v1204 = vpack.c.b16 %v1187, %v1186
      %v1205 = vpack.c.b16 %v1189, %v1188
      %v1206 = vpack.c.b16 %v1191, %v1190
      %v1207 = vpack.c.b16 %v1193, %v1192
      %v1208 = vpack.c.b16 %v1195, %v1194
      %v1209 = vpack.c.b16 %v1196, %v1196
      %v1211 = vshrl.u32 %v1197, 16
      %v1213 = vshll.u32 %v1197, 16
      %v1215 = vrot.slane %v1213, 1
      %v1216 = vor.u32 %v1211, %v1215
      %v1218 = vshll.u32 %v1198, 16
      %v1220 = vrot.slane %v1218, 1
      %v1221 = vsel %vm292, %v1216, %v1220
      %v1222 = vshrl.u32 %v1198, 16
      %v1224 = vor.u32 %v1222, %v1220
      %v1226 = vshll.u32 %v1199, 16
      %v1228 = vrot.slane %v1226, 1
      %v1229 = vsel %vm292, %v1224, %v1228
      %v1230 = vshrl.u32 %v1199, 16
      %v1232 = vor.u32 %v1230, %v1228
      %v1234 = vshll.u32 %v1200, 16
      %v1236 = vrot.slane %v1234, 1
      %v1237 = vsel %vm292, %v1232, %v1236
      %v1238 = vshrl.u32 %v1200, 16
      %v1240 = vor.u32 %v1238, %v1236
      %v1242 = vshll.u32 %v1201, 16
      %v1244 = vrot.slane %v1242, 1
      %v1245 = vsel %vm292, %v1240, %v1244
      %v1246 = vshrl.u32 %v1201, 16
      %v1248 = vor.u32 %v1246, %v1244
      %v1250 = vshll.u32 %v1202, 16
      %v1252 = vrot.slane %v1250, 1
      %v1253 = vsel %vm292, %v1248, %v1252
      %v1254 = vshrl.u32 %v1202, 16
      %v1256 = vor.u32 %v1254, %v1252
      %v1258 = vshll.u32 %v1203, 16
      %v1260 = vrot.slane %v1258, 1
      %v1261 = vsel %vm292, %v1256, %v1260
      %v1262 = vshrl.u32 %v1203, 16
      %v1264 = vor.u32 %v1262, %v1260
      %v1266 = vshll.u32 %v1204, 16
      %v1268 = vrot.slane %v1266, 1
      %v1269 = vsel %vm292, %v1264, %v1268
      %v1270 = vshrl.u32 %v1204, 16
      %v1272 = vor.u32 %v1270, %v1268
      %v1274 = vshll.u32 %v1205, 16
      %v1276 = vrot.slane %v1274, 1
      %v1277 = vsel %vm292, %v1272, %v1276
      %v1278 = vshrl.u32 %v1205, 16
      %v1280 = vor.u32 %v1278, %v1276
      %v1282 = vshll.u32 %v1206, 16
      %v1284 = vrot.slane %v1282, 1
      %v1285 = vsel %vm292, %v1280, %v1284
      %v1286 = vshrl.u32 %v1206, 16
      %v1288 = vor.u32 %v1286, %v1284
      %v1290 = vshll.u32 %v1207, 16
      %v1292 = vrot.slane %v1290, 1
      %v1293 = vsel %vm292, %v1288, %v1292
      %v1294 = vshrl.u32 %v1207, 16
      %v1296 = vor.u32 %v1294, %v1292
      %v1298 = vshll.u32 %v1208, 16
      %v1300 = vrot.slane %v1298, 1
      %v1301 = vsel %vm292, %v1296, %v1300
      %v1302 = vshrl.u32 %v1208, 16
      %v1304 = vor.u32 %v1302, %v1300
      %v1306 = vshll.u32 %v1209, 16
      %v1308 = vrot.slane %v1306, 1
      %v1309 = vsel %vm292, %v1304, %v1308
      %v1338 = vunpack.c.l.b16 %v1131
      %v1339 = vunpack.c.l.b16 %v1132
      %v1340 = vunpack.c.l.b16 %v1133
      %v1341 = vunpack.c.l.b16 %v1134
      %v1342 = vunpack.c.l.b16 %v1135
      %v1343 = vunpack.c.l.b16 %v1136
      %v1344 = vunpack.c.l.b16 %v1137
      %v1345 = vunpack.c.l.b16 %v1138
      %v1346 = vunpack.c.l.b16 %v1139
      %v1347 = vunpack.c.l.b16 %v1140
      %v1348 = vunpack.c.l.b16 %v1141
      %v1349 = vunpack.c.l.b16 %v1142
      %v1350 = vunpack.c.l.b16 %v1143
      %v1351 = vunpack.c.l.b16 %v1144
      %v1352 = vunpack.c.l.b16 %v1145
      %v1353 = vunpack.c.l.b16 %v1146
      %v1354 = vpack.c.b16 %v1339, %v1338
      %v1355 = vpack.c.b16 %v1341, %v1340
      %v1356 = vpack.c.b16 %v1343, %v1342
      %v1357 = vpack.c.b16 %v1345, %v1344
      %v1358 = vpack.c.b16 %v1347, %v1346
      %v1359 = vpack.c.b16 %v1349, %v1348
      %v1360 = vpack.c.b16 %v1351, %v1350
      %v1361 = vpack.c.b16 %v1353, %v1352
      %1370 = vmatpush.bf16.msra.mxu0 %v1361
      %1371 = vmatpush.bf16.msra.mxu0 %v1360
      %1372 = vmatpush.bf16.msra.mxu0 %v1359
      %1373 = vmatpush.bf16.msra.mxu0 %v1358
      %1374 = vmatpush.bf16.msra.mxu0 %v1357
      %1375 = vmatpush.bf16.msra.mxu0 %v1356
      %1376 = vmatpush.bf16.msra.mxu0 %v1355
      %1377 = vmatpush.bf16.msra.mxu0 %v1354
      %1378 = vmatmul.bf16.gmra.mxu0 %v1221
      %v1379 = vpop.f32.mrf.mxu0
      %v1380 = vadd.f32 0.0, %v1379
      %v1381 = vpop.f32.mrf.mxu0
      %v1382 = vadd.f32 0.0, %v1381
      %1383 = vmatmul.bf16.gmra.mxu0 %v1229
      %v1384 = vpop.f32.mrf.mxu0
      %v1385 = vadd.f32 0.0, %v1384
      %v1386 = vpop.f32.mrf.mxu0
      %v1387 = vadd.f32 0.0, %v1386
      %1388 = vmatmul.bf16.gmra.mxu0 %v1237
      %v1389 = vpop.f32.mrf.mxu0
      %v1390 = vadd.f32 0.0, %v1389
      %v1391 = vpop.f32.mrf.mxu0
      %v1392 = vadd.f32 0.0, %v1391
      %1393 = vmatmul.bf16.gmra.mxu0 %v1245
      %v1394 = vpop.f32.mrf.mxu0
      %v1395 = vadd.f32 0.0, %v1394
      %v1396 = vpop.f32.mrf.mxu0
      %v1397 = vadd.f32 0.0, %v1396
      %1398 = vmatmul.bf16.gmra.mxu0 %v1253
      %v1399 = vpop.f32.mrf.mxu0
      %v1400 = vadd.f32 0.0, %v1399
      %v1401 = vpop.f32.mrf.mxu0
      %v1402 = vadd.f32 0.0, %v1401
      %1403 = vmatmul.bf16.gmra.mxu0 %v1261
      %v1404 = vpop.f32.mrf.mxu0
      %v1405 = vadd.f32 0.0, %v1404
      %v1406 = vpop.f32.mrf.mxu0
      %v1407 = vadd.f32 0.0, %v1406
      %1408 = vmatmul.bf16.gmra.mxu0 %v1269
      %v1409 = vpop.f32.mrf.mxu0
      %v1410 = vadd.f32 0.0, %v1409
      %v1411 = vpop.f32.mrf.mxu0
      %v1412 = vadd.f32 0.0, %v1411
      %1413 = vmatmul.bf16.gmra.mxu0 %v1277
      %v1414 = vpop.f32.mrf.mxu0
      %v1415 = vadd.f32 0.0, %v1414
      %v1416 = vpop.f32.mrf.mxu0
      %v1417 = vadd.f32 0.0, %v1416
      %1418 = vmatmul.bf16.gmra.mxu0 %v1285
      %v1419 = vpop.f32.mrf.mxu0
      %v1420 = vadd.f32 0.0, %v1419
      %v1421 = vpop.f32.mrf.mxu0
      %v1422 = vadd.f32 0.0, %v1421
      %1423 = vmatmul.bf16.gmra.mxu0 %v1293
      %v1424 = vpop.f32.mrf.mxu0
      %v1425 = vadd.f32 0.0, %v1424
      %v1426 = vpop.f32.mrf.mxu0
      %v1427 = vadd.f32 0.0, %v1426
      %1428 = vmatmul.bf16.gmra.mxu0 %v1301
      %v1429 = vpop.f32.mrf.mxu0
      %v1430 = vadd.f32 0.0, %v1429
      %v1431 = vpop.f32.mrf.mxu0
      %v1432 = vadd.f32 0.0, %v1431
      %1433 = vmatmul.bf16.gmra.mxu0 %v1309
      %v1434 = vpop.f32.mrf.mxu0
      %v1435 = vadd.f32 0.0, %v1434
      %v1436 = vpop.f32.mrf.mxu0
      %v1437 = vadd.f32 0.0, %v1436
      %1438 = vdwg.mxu0
      %v1439 = vadd.f32 %v1081, %v1380
      %v1440 = vadd.f32 %v1082, %v1382
      %v1441 = vadd.f32 %v1083, %v1385
      %v1442 = vadd.f32 %v1084, %v1387
      %v1443 = vadd.f32 %v1085, %v1390
      %v1444 = vadd.f32 %v1086, %v1392
      %v1445 = vadd.f32 %v1087, %v1395
      %v1446 = vadd.f32 %v1088, %v1397
      %v1447 = vadd.f32 %v1089, %v1400
      %v1448 = vadd.f32 %v1090, %v1402
      %v1449 = vadd.f32 %v1091, %v1405
      %v1450 = vadd.f32 %v1092, %v1407
      %v1451 = vadd.f32 %v1093, %v1410
      %v1452 = vadd.f32 %v1094, %v1412
      %v1453 = vadd.f32 %v1095, %v1415
      %v1454 = vadd.f32 %v1096, %v1417
      %v1455 = vadd.f32 %v1097, %v1420
      %v1456 = vadd.f32 %v1098, %v1422
      %v1457 = vadd.f32 %v1099, %v1425
      %v1458 = vadd.f32 %v1100, %v1427
      %v1459 = vadd.f32 %v1101, %v1430
      %v1460 = vadd.f32 %v1102, %v1432
      %v1461 = vadd.f32 %v1103, %v1435
      %v1462 = vadd.f32 %v1104, %v1437
      %v1463 = vld [vmem:[%s165 + $0x8] sm:$0xe]
      %s1464 = scalar_lea.vmem %s1, 320
      %v1465 = vld [vmem:[%s1464] sm:$0xf]
      %v1466 = vld [vmem:[%s1464 + $0x4] sm:$0xf]
      %v1467 = vld [vmem:[%s1464 + $0x8] sm:$0xf]
      %v1468 = vld [vmem:[%s1464 + $0xc] sm:$0xf]
      %v1469 = vld [vmem:[%s1464 + $0x10] sm:$0xf]
      %v1470 = vld [vmem:[%s1464 + $0x14] sm:$0xf]
      %v1471 = vld [vmem:[%s1464 + $0x18] sm:$0xf]
      %v1472 = vld [vmem:[%s1464 + $0x1c] sm:$0xf]
      %v1473 = vld [vmem:[%s1464 + $0x20] sm:$0xf]
      %v1474 = vld [vmem:[%s1464 + $0x24] sm:$0xf]
      %v1475 = vld [vmem:[%s1464 + $0x28] sm:$0xf]
      %v1476 = vld [vmem:[%s1464 + $0x2c] sm:$0xf]
      %v1477 = vld [vmem:[%s1464 + $0x30] sm:$0xf]
      %v1478 = vld [vmem:[%s1464 + $0x34] sm:$0xf]
      %v1479 = vld [vmem:[%s1464 + $0x38] sm:$0xf]
      %v1480 = vld [vmem:[%s1464 + $0x3c] sm:$0xf]
      %v1482 = vunpack.c.l.b16 %v1463
      %v1483 = vpack.c.b16 %v1173, %v1482
      %v1484 = vrot.slane %v1483, 1
      %v1485 = vrot.slane %v1198, 1
      %v1486 = vsel %vm672, %v1484, %v1485
      %v1487 = vrot.slane %v1199, 1
      %v1488 = vsel %vm672, %v1485, %v1487
      %v1489 = vrot.slane %v1200, 1
      %v1490 = vsel %vm672, %v1487, %v1489
      %v1491 = vrot.slane %v1201, 1
      %v1492 = vsel %vm672, %v1489, %v1491
      %v1493 = vrot.slane %v1202, 1
      %v1494 = vsel %vm672, %v1491, %v1493
      %v1495 = vrot.slane %v1203, 1
      %v1496 = vsel %vm672, %v1493, %v1495
      %v1497 = vrot.slane %v1204, 1
      %v1498 = vsel %vm672, %v1495, %v1497
      %v1499 = vrot.slane %v1205, 1
      %v1500 = vsel %vm672, %v1497, %v1499
      %v1501 = vrot.slane %v1206, 1
      %v1502 = vsel %vm672, %v1499, %v1501
      %v1503 = vrot.slane %v1207, 1
      %v1504 = vsel %vm672, %v1501, %v1503
      %v1505 = vrot.slane %v1208, 1
      %v1506 = vsel %vm672, %v1503, %v1505
      %v1507 = vrot.slane %v1209, 1
      %v1508 = vsel %vm672, %v1505, %v1507
      %v1537 = vunpack.c.l.b16 %v1465
      %v1538 = vunpack.c.l.b16 %v1466
      %v1539 = vunpack.c.l.b16 %v1467
      %v1540 = vunpack.c.l.b16 %v1468
      %v1541 = vunpack.c.l.b16 %v1469
      %v1542 = vunpack.c.l.b16 %v1470
      %v1543 = vunpack.c.l.b16 %v1471
      %v1544 = vunpack.c.l.b16 %v1472
      %v1545 = vunpack.c.l.b16 %v1473
      %v1546 = vunpack.c.l.b16 %v1474
      %v1547 = vunpack.c.l.b16 %v1475
      %v1548 = vunpack.c.l.b16 %v1476
      %v1549 = vunpack.c.l.b16 %v1477
      %v1550 = vunpack.c.l.b16 %v1478
      %v1551 = vunpack.c.l.b16 %v1479
      %v1552 = vunpack.c.l.b16 %v1480
      %v1553 = vpack.c.b16 %v1538, %v1537
      %v1554 = vpack.c.b16 %v1540, %v1539
      %v1555 = vpack.c.b16 %v1542, %v1541
      %v1556 = vpack.c.b16 %v1544, %v1543
      %v1557 = vpack.c.b16 %v1546, %v1545
      %v1558 = vpack.c.b16 %v1548, %v1547
      %v1559 = vpack.c.b16 %v1550, %v1549
      %v1560 = vpack.c.b16 %v1552, %v1551
      %1569 = vmatpush.bf16.msra.mxu0 %v1560
      %1570 = vmatpush.bf16.msra.mxu0 %v1559
      %1571 = vmatpush.bf16.msra.mxu0 %v1558
      %1572 = vmatpush.bf16.msra.mxu0 %v1557
      %1573 = vmatpush.bf16.msra.mxu0 %v1556
      %1574 = vmatpush.bf16.msra.mxu0 %v1555
      %1575 = vmatpush.bf16.msra.mxu0 %v1554
      %1576 = vmatpush.bf16.msra.mxu0 %v1553
      %1577 = vmatmul.bf16.gmra.mxu0 %v1486
      %v1578 = vpop.f32.mrf.mxu0
      %v1579 = vadd.f32 0.0, %v1578
      %v1580 = vpop.f32.mrf.mxu0
      %v1581 = vadd.f32 0.0, %v1580
      %1582 = vmatmul.bf16.gmra.mxu0 %v1488
      %v1583 = vpop.f32.mrf.mxu0
      %v1584 = vadd.f32 0.0, %v1583
      %v1585 = vpop.f32.mrf.mxu0
      %v1586 = vadd.f32 0.0, %v1585
      %1587 = vmatmul.bf16.gmra.mxu0 %v1490
      %v1588 = vpop.f32.mrf.mxu0
      %v1589 = vadd.f32 0.0, %v1588
      %v1590 = vpop.f32.mrf.mxu0
      %v1591 = vadd.f32 0.0, %v1590
      %1592 = vmatmul.bf16.gmra.mxu0 %v1492
      %v1593 = vpop.f32.mrf.mxu0
      %v1594 = vadd.f32 0.0, %v1593
      %v1595 = vpop.f32.mrf.mxu0
      %v1596 = vadd.f32 0.0, %v1595
      %1597 = vmatmul.bf16.gmra.mxu0 %v1494
      %v1598 = vpop.f32.mrf.mxu0
      %v1599 = vadd.f32 0.0, %v1598
      %v1600 = vpop.f32.mrf.mxu0
      %v1601 = vadd.f32 0.0, %v1600
      %1602 = vmatmul.bf16.gmra.mxu0 %v1496
      %v1603 = vpop.f32.mrf.mxu0
      %v1604 = vadd.f32 0.0, %v1603
      %v1605 = vpop.f32.mrf.mxu0
      %v1606 = vadd.f32 0.0, %v1605
      %1607 = vmatmul.bf16.gmra.mxu0 %v1498
      %v1608 = vpop.f32.mrf.mxu0
      %v1609 = vadd.f32 0.0, %v1608
      %v1610 = vpop.f32.mrf.mxu0
      %v1611 = vadd.f32 0.0, %v1610
      %1612 = vmatmul.bf16.gmra.mxu0 %v1500
      %v1613 = vpop.f32.mrf.mxu0
      %v1614 = vadd.f32 0.0, %v1613
      %v1615 = vpop.f32.mrf.mxu0
      %v1616 = vadd.f32 0.0, %v1615
      %1617 = vmatmul.bf16.gmra.mxu0 %v1502
      %v1618 = vpop.f32.mrf.mxu0
      %v1619 = vadd.f32 0.0, %v1618
      %v1620 = vpop.f32.mrf.mxu0
      %v1621 = vadd.f32 0.0, %v1620
      %1622 = vmatmul.bf16.gmra.mxu0 %v1504
      %v1623 = vpop.f32.mrf.mxu0
      %v1624 = vadd.f32 0.0, %v1623
      %v1625 = vpop.f32.mrf.mxu0
      %v1626 = vadd.f32 0.0, %v1625
      %1627 = vmatmul.bf16.gmra.mxu0 %v1506
      %v1628 = vpop.f32.mrf.mxu0
      %v1629 = vadd.f32 0.0, %v1628
      %v1630 = vpop.f32.mrf.mxu0
      %v1631 = vadd.f32 0.0, %v1630
      %1632 = vmatmul.bf16.gmra.mxu0 %v1508
      %v1633 = vpop.f32.mrf.mxu0
      %v1634 = vadd.f32 0.0, %v1633
      %v1635 = vpop.f32.mrf.mxu0
      %v1636 = vadd.f32 0.0, %v1635
      %1637 = vdwg.mxu0
      %v1638 = vadd.f32 %v1439, %v1579
      %v1639 = vadd.f32 %v1440, %v1581
      %v1640 = vadd.f32 %v1441, %v1584
      %v1641 = vadd.f32 %v1442, %v1586
      %v1642 = vadd.f32 %v1443, %v1589
      %v1643 = vadd.f32 %v1444, %v1591
      %v1644 = vadd.f32 %v1445, %v1594
      %v1645 = vadd.f32 %v1446, %v1596
      %v1646 = vadd.f32 %v1447, %v1599
      %v1647 = vadd.f32 %v1448, %v1601
      %v1648 = vadd.f32 %v1449, %v1604
      %v1649 = vadd.f32 %v1450, %v1606
      %v1650 = vadd.f32 %v1451, %v1609
      %v1651 = vadd.f32 %v1452, %v1611
      %v1652 = vadd.f32 %v1453, %v1614
      %v1653 = vadd.f32 %v1454, %v1616
      %v1654 = vadd.f32 %v1455, %v1619
      %v1655 = vadd.f32 %v1456, %v1621
      %v1656 = vadd.f32 %v1457, %v1624
      %v1657 = vadd.f32 %v1458, %v1626
      %v1658 = vadd.f32 %v1459, %v1629
      %v1659 = vadd.f32 %v1460, %v1631
      %v1660 = vadd.f32 %v1461, %v1634
      %v1661 = vadd.f32 %v1462, %v1636
      %v1662 = vld [vmem:[%s165 + $0x10] sm:$0xf]
      %v1663 = vld [vmem:[%s165 + $0x14] sm:$0xf]
      %v1664 = vld [vmem:[%s165 + $0x18] sm:$0xf]
      %v1665 = vld [vmem:[%s165 + $0x1c] sm:$0xf]
      %v1666 = vld [vmem:[%s165 + $0x20] sm:$0xf]
      %v1667 = vld [vmem:[%s165 + $0x24] sm:$0xf]
      %v1668 = vld [vmem:[%s165 + $0x28] sm:$0xf]
      %v1669 = vld [vmem:[%s165 + $0x2c] sm:$0xf]
      %v1670 = vld [vmem:[%s165 + $0x30] sm:$0xf]
      %v1671 = vld [vmem:[%s165 + $0x34] sm:$0xf]
      %v1672 = vld [vmem:[%s165 + $0x38] sm:$0xf]
      %v1673 = vld [vmem:[%s165 + $0x3c] sm:$0xf]
      %v1674 = vld [vmem:[%s165 + $0x40] sm:$0xf]
      %v1675 = vld [vmem:[%s165 + $0x44] sm:$0xf]
      %v1676 = vld [vmem:[%s165 + $0x48] sm:$0xf]
      %v1677 = vld [vmem:[%s165 + $0x4c] sm:$0xf]
      %v1678 = vld [vmem:[%s165 + $0x50] sm:$0xf]
      %v1679 = vld [vmem:[%s165 + $0x54] sm:$0xf]
      %v1680 = vld [vmem:[%s165 + $0x58] sm:$0xf]
      %v1681 = vld [vmem:[%s165 + $0x5c] sm:$0xf]
      %v1682 = vld [vmem:[%s165 + $0x60] sm:$0xf]
      %v1683 = vld [vmem:[%s165 + $0x64] sm:$0xf]
      %v1684 = vld [vmem:[%s165 + $0x68] sm:$0xf]
      %v1685 = vld [vmem:[%s165 + $0x6c] sm:$0xf]
      %s1686 = scalar_lea.vmem %s1, 384
      %v1687 = vld [vmem:[%s1686] sm:$0xf]
      %v1688 = vld [vmem:[%s1686 + $0x4] sm:$0xf]
      %v1689 = vld [vmem:[%s1686 + $0x8] sm:$0xf]
      %v1690 = vld [vmem:[%s1686 + $0xc] sm:$0xf]
      %v1691 = vld [vmem:[%s1686 + $0x10] sm:$0xf]
      %v1692 = vld [vmem:[%s1686 + $0x14] sm:$0xf]
      %v1693 = vld [vmem:[%s1686 + $0x18] sm:$0xf]
      %v1694 = vld [vmem:[%s1686 + $0x1c] sm:$0xf]
      %v1695 = vld [vmem:[%s1686 + $0x20] sm:$0xf]
      %v1696 = vld [vmem:[%s1686 + $0x24] sm:$0xf]
      %v1697 = vld [vmem:[%s1686 + $0x28] sm:$0xf]
      %v1698 = vld [vmem:[%s1686 + $0x2c] sm:$0xf]
      %v1699 = vld [vmem:[%s1686 + $0x30] sm:$0xf]
      %v1700 = vld [vmem:[%s1686 + $0x34] sm:$0xf]
      %v1701 = vld [vmem:[%s1686 + $0x38] sm:$0xf]
      %v1702 = vld [vmem:[%s1686 + $0x3c] sm:$0xf]
      %v1727 = vunpack.c.l.b16 %v1662
      %v1728 = vunpack.c.l.b16 %v1663
      %v1729 = vunpack.c.l.b16 %v1664
      %v1730 = vunpack.c.l.b16 %v1665
      %v1731 = vunpack.c.l.b16 %v1666
      %v1732 = vunpack.c.l.b16 %v1667
      %v1733 = vunpack.c.l.b16 %v1668
      %v1734 = vunpack.c.l.b16 %v1669
      %v1735 = vunpack.c.l.b16 %v1670
      %v1736 = vunpack.c.l.b16 %v1671
      %v1737 = vunpack.c.l.b16 %v1672
      %v1738 = vunpack.c.l.b16 %v1673
      %v1739 = vunpack.c.l.b16 %v1674
      %v1740 = vunpack.c.l.b16 %v1675
      %v1741 = vunpack.c.l.b16 %v1676
      %v1742 = vunpack.c.l.b16 %v1677
      %v1743 = vunpack.c.l.b16 %v1678
      %v1744 = vunpack.c.l.b16 %v1679
      %v1745 = vunpack.c.l.b16 %v1680
      %v1746 = vunpack.c.l.b16 %v1681
      %v1747 = vunpack.c.l.b16 %v1682
      %v1748 = vunpack.c.l.b16 %v1683
      %v1749 = vunpack.c.l.b16 %v1684
      %v1750 = vunpack.c.l.b16 %v1685
      %v1751 = vpack.c.b16 %v1728, %v1727
      %v1752 = vpack.c.b16 %v1730, %v1729
      %v1753 = vpack.c.b16 %v1732, %v1731
      %v1754 = vpack.c.b16 %v1734, %v1733
      %v1755 = vpack.c.b16 %v1736, %v1735
      %v1756 = vpack.c.b16 %v1738, %v1737
      %v1757 = vpack.c.b16 %v1740, %v1739
      %v1758 = vpack.c.b16 %v1742, %v1741
      %v1759 = vpack.c.b16 %v1744, %v1743
      %v1760 = vpack.c.b16 %v1746, %v1745
      %v1761 = vpack.c.b16 %v1748, %v1747
      %v1762 = vpack.c.b16 %v1750, %v1749
      %v1791 = vunpack.c.l.b16 %v1687
      %v1792 = vunpack.c.l.b16 %v1688
      %v1793 = vunpack.c.l.b16 %v1689
      %v1794 = vunpack.c.l.b16 %v1690
      %v1795 = vunpack.c.l.b16 %v1691
      %v1796 = vunpack.c.l.b16 %v1692
      %v1797 = vunpack.c.l.b16 %v1693
      %v1798 = vunpack.c.l.b16 %v1694
      %v1799 = vunpack.c.l.b16 %v1695
      %v1800 = vunpack.c.l.b16 %v1696
      %v1801 = vunpack.c.l.b16 %v1697
      %v1802 = vunpack.c.l.b16 %v1698
      %v1803 = vunpack.c.l.b16 %v1699
      %v1804 = vunpack.c.l.b16 %v1700
      %v1805 = vunpack.c.l.b16 %v1701
      %v1806 = vunpack.c.l.b16 %v1702
      %v1807 = vpack.c.b16 %v1792, %v1791
      %v1808 = vpack.c.b16 %v1794, %v1793
      %v1809 = vpack.c.b16 %v1796, %v1795
      %v1810 = vpack.c.b16 %v1798, %v1797
      %v1811 = vpack.c.b16 %v1800, %v1799
      %v1812 = vpack.c.b16 %v1802, %v1801
      %v1813 = vpack.c.b16 %v1804, %v1803
      %v1814 = vpack.c.b16 %v1806, %v1805
      %1823 = vmatpush.bf16.msra.mxu0 %v1814
      %1824 = vmatpush.bf16.msra.mxu0 %v1813
      %1825 = vmatpush.bf16.msra.mxu0 %v1812
      %1826 = vmatpush.bf16.msra.mxu0 %v1811
      %1827 = vmatpush.bf16.msra.mxu0 %v1810
      %1828 = vmatpush.bf16.msra.mxu0 %v1809
      %1829 = vmatpush.bf16.msra.mxu0 %v1808
      %1830 = vmatpush.bf16.msra.mxu0 %v1807
      %1831 = vmatmul.bf16.gmra.mxu0 %v1751
      %v1832 = vpop.f32.mrf.mxu0
      %v1833 = vadd.f32 0.0, %v1832
      %v1834 = vpop.f32.mrf.mxu0
      %v1835 = vadd.f32 0.0, %v1834
      %1836 = vmatmul.bf16.gmra.mxu0 %v1752
      %v1837 = vpop.f32.mrf.mxu0
      %v1838 = vadd.f32 0.0, %v1837
      %v1839 = vpop.f32.mrf.mxu0
      %v1840 = vadd.f32 0.0, %v1839
      %1841 = vmatmul.bf16.gmra.mxu0 %v1753
      %v1842 = vpop.f32.mrf.mxu0
      %v1843 = vadd.f32 0.0, %v1842
      %v1844 = vpop.f32.mrf.mxu0
      %v1845 = vadd.f32 0.0, %v1844
      %1846 = vmatmul.bf16.gmra.mxu0 %v1754
      %v1847 = vpop.f32.mrf.mxu0
      %v1848 = vadd.f32 0.0, %v1847
      %v1849 = vpop.f32.mrf.mxu0
      %v1850 = vadd.f32 0.0, %v1849
      %1851 = vmatmul.bf16.gmra.mxu0 %v1755
      %v1852 = vpop.f32.mrf.mxu0
      %v1853 = vadd.f32 0.0, %v1852
      %v1854 = vpop.f32.mrf.mxu0
      %v1855 = vadd.f32 0.0, %v1854
      %1856 = vmatmul.bf16.gmra.mxu0 %v1756
      %v1857 = vpop.f32.mrf.mxu0
      %v1858 = vadd.f32 0.0, %v1857
      %v1859 = vpop.f32.mrf.mxu0
      %v1860 = vadd.f32 0.0, %v1859
      %1861 = vmatmul.bf16.gmra.mxu0 %v1757
      %v1862 = vpop.f32.mrf.mxu0
      %v1863 = vadd.f32 0.0, %v1862
      %v1864 = vpop.f32.mrf.mxu0
      %v1865 = vadd.f32 0.0, %v1864
      %1866 = vmatmul.bf16.gmra.mxu0 %v1758
      %v1867 = vpop.f32.mrf.mxu0
      %v1868 = vadd.f32 0.0, %v1867
      %v1869 = vpop.f32.mrf.mxu0
      %v1870 = vadd.f32 0.0, %v1869
      %1871 = vmatmul.bf16.gmra.mxu0 %v1759
      %v1872 = vpop.f32.mrf.mxu0
      %v1873 = vadd.f32 0.0, %v1872
      %v1874 = vpop.f32.mrf.mxu0
      %v1875 = vadd.f32 0.0, %v1874
      %1876 = vmatmul.bf16.gmra.mxu0 %v1760
      %v1877 = vpop.f32.mrf.mxu0
      %v1878 = vadd.f32 0.0, %v1877
      %v1879 = vpop.f32.mrf.mxu0
      %v1880 = vadd.f32 0.0, %v1879
      %1881 = vmatmul.bf16.gmra.mxu0 %v1761
      %v1882 = vpop.f32.mrf.mxu0
      %v1883 = vadd.f32 0.0, %v1882
      %v1884 = vpop.f32.mrf.mxu0
      %v1885 = vadd.f32 0.0, %v1884
      %1886 = vmatmul.bf16.gmra.mxu0 %v1762
      %v1887 = vpop.f32.mrf.mxu0
      %v1888 = vadd.f32 0.0, %v1887
      %v1889 = vpop.f32.mrf.mxu0
      %v1890 = vadd.f32 0.0, %v1889
      %1891 = vdwg.mxu0
      %v1892 = vadd.f32 %v1638, %v1833
      %v1893 = vadd.f32 %v1639, %v1835
      %v1894 = vadd.f32 %v1640, %v1838
      %v1895 = vadd.f32 %v1641, %v1840
      %v1896 = vadd.f32 %v1642, %v1843
      %v1897 = vadd.f32 %v1643, %v1845
      %v1898 = vadd.f32 %v1644, %v1848
      %v1899 = vadd.f32 %v1645, %v1850
      %v1900 = vadd.f32 %v1646, %v1853
      %v1901 = vadd.f32 %v1647, %v1855
      %v1902 = vadd.f32 %v1648, %v1858
      %v1903 = vadd.f32 %v1649, %v1860
      %v1904 = vadd.f32 %v1650, %v1863
      %v1905 = vadd.f32 %v1651, %v1865
      %v1906 = vadd.f32 %v1652, %v1868
      %v1907 = vadd.f32 %v1653, %v1870
      %v1908 = vadd.f32 %v1654, %v1873
      %v1909 = vadd.f32 %v1655, %v1875
      %v1910 = vadd.f32 %v1656, %v1878
      %v1911 = vadd.f32 %v1657, %v1880
      %v1912 = vadd.f32 %v1658, %v1883
      %v1913 = vadd.f32 %v1659, %v1885
      %v1914 = vadd.f32 %v1660, %v1888
      %v1915 = vadd.f32 %v1661, %v1890
      %v1916 = vld [vmem:[%s165 + $0x10] sm:$0xf]
      %v1917 = vld [vmem:[%s165 + $0x14] sm:$0xf]
      %v1918 = vld [vmem:[%s165 + $0x18] sm:$0xf]
      %v1919 = vld [vmem:[%s165 + $0x1c] sm:$0xf]
      %v1920 = vld [vmem:[%s165 + $0x20] sm:$0xf]
      %v1921 = vld [vmem:[%s165 + $0x24] sm:$0xf]
      %v1922 = vld [vmem:[%s165 + $0x28] sm:$0xf]
      %v1923 = vld [vmem:[%s165 + $0x2c] sm:$0xf]
      %v1924 = vld [vmem:[%s165 + $0x30] sm:$0xf]
      %v1925 = vld [vmem:[%s165 + $0x34] sm:$0xf]
      %v1926 = vld [vmem:[%s165 + $0x38] sm:$0xf]
      %v1927 = vld [vmem:[%s165 + $0x3c] sm:$0xf]
      %v1928 = vld [vmem:[%s165 + $0x40] sm:$0xf]
      %v1929 = vld [vmem:[%s165 + $0x44] sm:$0xf]
      %v1930 = vld [vmem:[%s165 + $0x48] sm:$0xf]
      %v1931 = vld [vmem:[%s165 + $0x4c] sm:$0xf]
      %v1932 = vld [vmem:[%s165 + $0x50] sm:$0xf]
      %v1933 = vld [vmem:[%s165 + $0x54] sm:$0xf]
      %v1934 = vld [vmem:[%s165 + $0x58] sm:$0xf]
      %v1935 = vld [vmem:[%s165 + $0x5c] sm:$0xf]
      %v1936 = vld [vmem:[%s165 + $0x60] sm:$0xf]
      %v1937 = vld [vmem:[%s165 + $0x64] sm:$0xf]
      %v1938 = vld [vmem:[%s165 + $0x68] sm:$0xf]
      %v1939 = vld [vmem:[%s165 + $0x6c] sm:$0xf]
      %v1940 = vld [vmem:[%s165 + $0x70] sm:$0x1]
      %s1941 = scalar_lea.vmem %s1, 448
      %v1942 = vld [vmem:[%s1941] sm:$0xf]
      %v1943 = vld [vmem:[%s1941 + $0x4] sm:$0xf]
      %v1944 = vld [vmem:[%s1941 + $0x8] sm:$0xf]
      %v1945 = vld [vmem:[%s1941 + $0xc] sm:$0xf]
      %v1946 = vld [vmem:[%s1941 + $0x10] sm:$0xf]
      %v1947 = vld [vmem:[%s1941 + $0x14] sm:$0xf]
      %v1948 = vld [vmem:[%s1941 + $0x18] sm:$0xf]
      %v1949 = vld [vmem:[%s1941 + $0x1c] sm:$0xf]
      %v1950 = vld [vmem:[%s1941 + $0x20] sm:$0xf]
      %v1951 = vld [vmem:[%s1941 + $0x24] sm:$0xf]
      %v1952 = vld [vmem:[%s1941 + $0x28] sm:$0xf]
      %v1953 = vld [vmem:[%s1941 + $0x2c] sm:$0xf]
      %v1954 = vld [vmem:[%s1941 + $0x30] sm:$0xf]
      %v1955 = vld [vmem:[%s1941 + $0x34] sm:$0xf]
      %v1956 = vld [vmem:[%s1941 + $0x38] sm:$0xf]
      %v1957 = vld [vmem:[%s1941 + $0x3c] sm:$0xf]
      %v1983 = vunpack.c.l.b16 %v1916
      %v1984 = vunpack.c.l.b16 %v1917
      %v1985 = vunpack.c.l.b16 %v1918
      %v1986 = vunpack.c.l.b16 %v1919
      %v1987 = vunpack.c.l.b16 %v1920
      %v1988 = vunpack.c.l.b16 %v1921
      %v1989 = vunpack.c.l.b16 %v1922
      %v1990 = vunpack.c.l.b16 %v1923
      %v1991 = vunpack.c.l.b16 %v1924
      %v1992 = vunpack.c.l.b16 %v1925
      %v1993 = vunpack.c.l.b16 %v1926
      %v1994 = vunpack.c.l.b16 %v1927
      %v1995 = vunpack.c.l.b16 %v1928
      %v1996 = vunpack.c.l.b16 %v1929
      %v1997 = vunpack.c.l.b16 %v1930
      %v1998 = vunpack.c.l.b16 %v1931
      %v1999 = vunpack.c.l.b16 %v1932
      %v2000 = vunpack.c.l.b16 %v1933
      %v2001 = vunpack.c.l.b16 %v1934
      %v2002 = vunpack.c.l.b16 %v1935
      %v2003 = vunpack.c.l.b16 %v1936
      %v2004 = vunpack.c.l.b16 %v1937
      %v2005 = vunpack.c.l.b16 %v1938
      %v2006 = vunpack.c.l.b16 %v1939
      %v2007 = vunpack.c.l.b16 %v1940
      %v2008 = vpack.c.b16 %v1984, %v1983
      %v2009 = vpack.c.b16 %v1986, %v1985
      %v2010 = vpack.c.b16 %v1988, %v1987
      %v2011 = vpack.c.b16 %v1990, %v1989
      %v2012 = vpack.c.b16 %v1992, %v1991
      %v2013 = vpack.c.b16 %v1994, %v1993
      %v2014 = vpack.c.b16 %v1996, %v1995
      %v2015 = vpack.c.b16 %v1998, %v1997
      %v2016 = vpack.c.b16 %v2000, %v1999
      %v2017 = vpack.c.b16 %v2002, %v2001
      %v2018 = vpack.c.b16 %v2004, %v2003
      %v2019 = vpack.c.b16 %v2006, %v2005
      %v2020 = vpack.c.b16 %v2007, %v2007
      %v2022 = vshrl.u32 %v2008, 16
      %v2024 = vshll.u32 %v2008, 16
      %v2026 = vrot.slane %v2024, 1
      %v2027 = vor.u32 %v2022, %v2026
      %v2029 = vshll.u32 %v2009, 16
      %v2031 = vrot.slane %v2029, 1
      %v2032 = vsel %vm292, %v2027, %v2031
      %v2033 = vshrl.u32 %v2009, 16
      %v2035 = vor.u32 %v2033, %v2031
      %v2037 = vshll.u32 %v2010, 16
      %v2039 = vrot.slane %v2037, 1
      %v2040 = vsel %vm292, %v2035, %v2039
      %v2041 = vshrl.u32 %v2010, 16
      %v2043 = vor.u32 %v2041, %v2039
      %v2045 = vshll.u32 %v2011, 16
      %v2047 = vrot.slane %v2045, 1
      %v2048 = vsel %vm292, %v2043, %v2047
      %v2049 = vshrl.u32 %v2011, 16
      %v2051 = vor.u32 %v2049, %v2047
      %v2053 = vshll.u32 %v2012, 16
      %v2055 = vrot.slane %v2053, 1
      %v2056 = vsel %vm292, %v2051, %v2055
      %v2057 = vshrl.u32 %v2012, 16
      %v2059 = vor.u32 %v2057, %v2055
      %v2061 = vshll.u32 %v2013, 16
      %v2063 = vrot.slane %v2061, 1
      %v2064 = vsel %vm292, %v2059, %v2063
      %v2065 = vshrl.u32 %v2013, 16
      %v2067 = vor.u32 %v2065, %v2063
      %v2069 = vshll.u32 %v2014, 16
      %v2071 = vrot.slane %v2069, 1
      %v2072 = vsel %vm292, %v2067, %v2071
      %v2073 = vshrl.u32 %v2014, 16
      %v2075 = vor.u32 %v2073, %v2071
      %v2077 = vshll.u32 %v2015, 16
      %v2079 = vrot.slane %v2077, 1
      %v2080 = vsel %vm292, %v2075, %v2079
      %v2081 = vshrl.u32 %v2015, 16
      %v2083 = vor.u32 %v2081, %v2079
      %v2085 = vshll.u32 %v2016, 16
      %v2087 = vrot.slane %v2085, 1
      %v2088 = vsel %vm292, %v2083, %v2087
      %v2089 = vshrl.u32 %v2016, 16
      %v2091 = vor.u32 %v2089, %v2087
      %v2093 = vshll.u32 %v2017, 16
      %v2095 = vrot.slane %v2093, 1
      %v2096 = vsel %vm292, %v2091, %v2095
      %v2097 = vshrl.u32 %v2017, 16
      %v2099 = vor.u32 %v2097, %v2095
      %v2101 = vshll.u32 %v2018, 16
      %v2103 = vrot.slane %v2101, 1
      %v2104 = vsel %vm292, %v2099, %v2103
      %v2105 = vshrl.u32 %v2018, 16
      %v2107 = vor.u32 %v2105, %v2103
      %v2109 = vshll.u32 %v2019, 16
      %v2111 = vrot.slane %v2109, 1
      %v2112 = vsel %vm292, %v2107, %v2111
      %v2113 = vshrl.u32 %v2019, 16
      %v2115 = vor.u32 %v2113, %v2111
      %v2117 = vshll.u32 %v2020, 16
      %v2119 = vrot.slane %v2117, 1
      %v2120 = vsel %vm292, %v2115, %v2119
      %v2149 = vunpack.c.l.b16 %v1942
      %v2150 = vunpack.c.l.b16 %v1943
      %v2151 = vunpack.c.l.b16 %v1944
      %v2152 = vunpack.c.l.b16 %v1945
      %v2153 = vunpack.c.l.b16 %v1946
      %v2154 = vunpack.c.l.b16 %v1947
      %v2155 = vunpack.c.l.b16 %v1948
      %v2156 = vunpack.c.l.b16 %v1949
      %v2157 = vunpack.c.l.b16 %v1950
      %v2158 = vunpack.c.l.b16 %v1951
      %v2159 = vunpack.c.l.b16 %v1952
      %v2160 = vunpack.c.l.b16 %v1953
      %v2161 = vunpack.c.l.b16 %v1954
      %v2162 = vunpack.c.l.b16 %v1955
      %v2163 = vunpack.c.l.b16 %v1956
      %v2164 = vunpack.c.l.b16 %v1957
      %v2165 = vpack.c.b16 %v2150, %v2149
      %v2166 = vpack.c.b16 %v2152, %v2151
      %v2167 = vpack.c.b16 %v2154, %v2153
      %v2168 = vpack.c.b16 %v2156, %v2155
      %v2169 = vpack.c.b16 %v2158, %v2157
      %v2170 = vpack.c.b16 %v2160, %v2159
      %v2171 = vpack.c.b16 %v2162, %v2161
      %v2172 = vpack.c.b16 %v2164, %v2163
      %2181 = vmatpush.bf16.msra.mxu0 %v2172
      %2182 = vmatpush.bf16.msra.mxu0 %v2171
      %2183 = vmatpush.bf16.msra.mxu0 %v2170
      %2184 = vmatpush.bf16.msra.mxu0 %v2169
      %2185 = vmatpush.bf16.msra.mxu0 %v2168
      %2186 = vmatpush.bf16.msra.mxu0 %v2167
      %2187 = vmatpush.bf16.msra.mxu0 %v2166
      %2188 = vmatpush.bf16.msra.mxu0 %v2165
      %2189 = vmatmul.bf16.gmra.mxu0 %v2032
      %v2190 = vpop.f32.mrf.mxu0
      %v2191 = vadd.f32 0.0, %v2190
      %v2192 = vpop.f32.mrf.mxu0
      %v2193 = vadd.f32 0.0, %v2192
      %2194 = vmatmul.bf16.gmra.mxu0 %v2040
      %v2195 = vpop.f32.mrf.mxu0
      %v2196 = vadd.f32 0.0, %v2195
      %v2197 = vpop.f32.mrf.mxu0
      %v2198 = vadd.f32 0.0, %v2197
      %2199 = vmatmul.bf16.gmra.mxu0 %v2048
      %v2200 = vpop.f32.mrf.mxu0
      %v2201 = vadd.f32 0.0, %v2200
      %v2202 = vpop.f32.mrf.mxu0
      %v2203 = vadd.f32 0.0, %v2202
      %2204 = vmatmul.bf16.gmra.mxu0 %v2056
      %v2205 = vpop.f32.mrf.mxu0
      %v2206 = vadd.f32 0.0, %v2205
      %v2207 = vpop.f32.mrf.mxu0
      %v2208 = vadd.f32 0.0, %v2207
      %2209 = vmatmul.bf16.gmra.mxu0 %v2064
      %v2210 = vpop.f32.mrf.mxu0
      %v2211 = vadd.f32 0.0, %v2210
      %v2212 = vpop.f32.mrf.mxu0
      %v2213 = vadd.f32 0.0, %v2212
      %2214 = vmatmul.bf16.gmra.mxu0 %v2072
      %v2215 = vpop.f32.mrf.mxu0
      %v2216 = vadd.f32 0.0, %v2215
      %v2217 = vpop.f32.mrf.mxu0
      %v2218 = vadd.f32 0.0, %v2217
      %2219 = vmatmul.bf16.gmra.mxu0 %v2080
      %v2220 = vpop.f32.mrf.mxu0
      %v2221 = vadd.f32 0.0, %v2220
      %v2222 = vpop.f32.mrf.mxu0
      %v2223 = vadd.f32 0.0, %v2222
      %2224 = vmatmul.bf16.gmra.mxu0 %v2088
      %v2225 = vpop.f32.mrf.mxu0
      %v2226 = vadd.f32 0.0, %v2225
      %v2227 = vpop.f32.mrf.mxu0
      %v2228 = vadd.f32 0.0, %v2227
      %2229 = vmatmul.bf16.gmra.mxu0 %v2096
      %v2230 = vpop.f32.mrf.mxu0
      %v2231 = vadd.f32 0.0, %v2230
      %v2232 = vpop.f32.mrf.mxu0
      %v2233 = vadd.f32 0.0, %v2232
      %2234 = vmatmul.bf16.gmra.mxu0 %v2104
      %v2235 = vpop.f32.mrf.mxu0
      %v2236 = vadd.f32 0.0, %v2235
      %v2237 = vpop.f32.mrf.mxu0
      %v2238 = vadd.f32 0.0, %v2237
      %2239 = vmatmul.bf16.gmra.mxu0 %v2112
      %v2240 = vpop.f32.mrf.mxu0
      %v2241 = vadd.f32 0.0, %v2240
      %v2242 = vpop.f32.mrf.mxu0
      %v2243 = vadd.f32 0.0, %v2242
      %2244 = vmatmul.bf16.gmra.mxu0 %v2120
      %v2245 = vpop.f32.mrf.mxu0
      %v2246 = vadd.f32 0.0, %v2245
      %v2247 = vpop.f32.mrf.mxu0
      %v2248 = vadd.f32 0.0, %v2247
      %2249 = vdwg.mxu0
      %v2250 = vadd.f32 %v1892, %v2191
      %v2251 = vadd.f32 %v1893, %v2193
      %v2252 = vadd.f32 %v1894, %v2196
      %v2253 = vadd.f32 %v1895, %v2198
      %v2254 = vadd.f32 %v1896, %v2201
      %v2255 = vadd.f32 %v1897, %v2203
      %v2256 = vadd.f32 %v1898, %v2206
      %v2257 = vadd.f32 %v1899, %v2208
      %v2258 = vadd.f32 %v1900, %v2211
      %v2259 = vadd.f32 %v1901, %v2213
      %v2260 = vadd.f32 %v1902, %v2216
      %v2261 = vadd.f32 %v1903, %v2218
      %v2262 = vadd.f32 %v1904, %v2221
      %v2263 = vadd.f32 %v1905, %v2223
      %v2264 = vadd.f32 %v1906, %v2226
      %v2265 = vadd.f32 %v1907, %v2228
      %v2266 = vadd.f32 %v1908, %v2231
      %v2267 = vadd.f32 %v1909, %v2233
      %v2268 = vadd.f32 %v1910, %v2236
      %v2269 = vadd.f32 %v1911, %v2238
      %v2270 = vadd.f32 %v1912, %v2241
      %v2271 = vadd.f32 %v1913, %v2243
      %v2272 = vadd.f32 %v1914, %v2246
      %v2273 = vadd.f32 %v1915, %v2248
      %v2274 = vld [vmem:[%s165 + $0x10] sm:$0xe]
      %s2275 = scalar_lea.vmem %s1, 512
      %v2276 = vld [vmem:[%s2275] sm:$0xf]
      %v2277 = vld [vmem:[%s2275 + $0x4] sm:$0xf]
      %v2278 = vld [vmem:[%s2275 + $0x8] sm:$0xf]
      %v2279 = vld [vmem:[%s2275 + $0xc] sm:$0xf]
      %v2280 = vld [vmem:[%s2275 + $0x10] sm:$0xf]
      %v2281 = vld [vmem:[%s2275 + $0x14] sm:$0xf]
      %v2282 = vld [vmem:[%s2275 + $0x18] sm:$0xf]
      %v2283 = vld [vmem:[%s2275 + $0x1c] sm:$0xf]
      %v2284 = vld [vmem:[%s2275 + $0x20] sm:$0xf]
      %v2285 = vld [vmem:[%s2275 + $0x24] sm:$0xf]
      %v2286 = vld [vmem:[%s2275 + $0x28] sm:$0xf]
      %v2287 = vld [vmem:[%s2275 + $0x2c] sm:$0xf]
      %v2288 = vld [vmem:[%s2275 + $0x30] sm:$0xf]
      %v2289 = vld [vmem:[%s2275 + $0x34] sm:$0xf]
      %v2290 = vld [vmem:[%s2275 + $0x38] sm:$0xf]
      %v2291 = vld [vmem:[%s2275 + $0x3c] sm:$0xf]
      %v2293 = vunpack.c.l.b16 %v2274
      %v2294 = vpack.c.b16 %v1984, %v2293
      %v2295 = vrot.slane %v2294, 1
      %v2296 = vrot.slane %v2009, 1
      %v2297 = vsel %vm672, %v2295, %v2296
      %v2298 = vrot.slane %v2010, 1
      %v2299 = vsel %vm672, %v2296, %v2298
      %v2300 = vrot.slane %v2011, 1
      %v2301 = vsel %vm672, %v2298, %v2300
      %v2302 = vrot.slane %v2012, 1
      %v2303 = vsel %vm672, %v2300, %v2302
      %v2304 = vrot.slane %v2013, 1
      %v2305 = vsel %vm672, %v2302, %v2304
      %v2306 = vrot.slane %v2014, 1
      %v2307 = vsel %vm672, %v2304, %v2306
      %v2308 = vrot.slane %v2015, 1
      %v2309 = vsel %vm672, %v2306, %v2308
      %v2310 = vrot.slane %v2016, 1
      %v2311 = vsel %vm672, %v2308, %v2310
      %v2312 = vrot.slane %v2017, 1
      %v2313 = vsel %vm672, %v2310, %v2312
      %v2314 = vrot.slane %v2018, 1
      %v2315 = vsel %vm672, %v2312, %v2314
      %v2316 = vrot.slane %v2019, 1
      %v2317 = vsel %vm672, %v2314, %v2316
      %v2318 = vrot.slane %v2020, 1
      %v2319 = vsel %vm672, %v2316, %v2318
      %v2348 = vunpack.c.l.b16 %v2276
      %v2349 = vunpack.c.l.b16 %v2277
      %v2350 = vunpack.c.l.b16 %v2278
      %v2351 = vunpack.c.l.b16 %v2279
      %v2352 = vunpack.c.l.b16 %v2280
      %v2353 = vunpack.c.l.b16 %v2281
      %v2354 = vunpack.c.l.b16 %v2282
      %v2355 = vunpack.c.l.b16 %v2283
      %v2356 = vunpack.c.l.b16 %v2284
      %v2357 = vunpack.c.l.b16 %v2285
      %v2358 = vunpack.c.l.b16 %v2286
      %v2359 = vunpack.c.l.b16 %v2287
      %v2360 = vunpack.c.l.b16 %v2288
      %v2361 = vunpack.c.l.b16 %v2289
      %v2362 = vunpack.c.l.b16 %v2290
      %v2363 = vunpack.c.l.b16 %v2291
      %v2364 = vpack.c.b16 %v2349, %v2348
      %v2365 = vpack.c.b16 %v2351, %v2350
      %v2366 = vpack.c.b16 %v2353, %v2352
      %v2367 = vpack.c.b16 %v2355, %v2354
      %v2368 = vpack.c.b16 %v2357, %v2356
      %v2369 = vpack.c.b16 %v2359, %v2358
      %v2370 = vpack.c.b16 %v2361, %v2360
      %v2371 = vpack.c.b16 %v2363, %v2362
      %2380 = vmatpush.bf16.msra.mxu0 %v2371
      %2381 = vmatpush.bf16.msra.mxu0 %v2370
      %2382 = vmatpush.bf16.msra.mxu0 %v2369
      %2383 = vmatpush.bf16.msra.mxu0 %v2368
      %2384 = vmatpush.bf16.msra.mxu0 %v2367
      %2385 = vmatpush.bf16.msra.mxu0 %v2366
      %2386 = vmatpush.bf16.msra.mxu0 %v2365
      %2387 = vmatpush.bf16.msra.mxu0 %v2364
      %2388 = vmatmul.bf16.gmra.mxu0 %v2297
      %v2389 = vpop.f32.mrf.mxu0
      %v2390 = vadd.f32 0.0, %v2389
      %v2391 = vpop.f32.mrf.mxu0
      %v2392 = vadd.f32 0.0, %v2391
      %2393 = vmatmul.bf16.gmra.mxu0 %v2299
      %v2394 = vpop.f32.mrf.mxu0
      %v2395 = vadd.f32 0.0, %v2394
      %v2396 = vpop.f32.mrf.mxu0
      %v2397 = vadd.f32 0.0, %v2396
      %2398 = vmatmul.bf16.gmra.mxu0 %v2301
      %v2399 = vpop.f32.mrf.mxu0
      %v2400 = vadd.f32 0.0, %v2399
      %v2401 = vpop.f32.mrf.mxu0
      %v2402 = vadd.f32 0.0, %v2401
      %2403 = vmatmul.bf16.gmra.mxu0 %v2303
      %v2404 = vpop.f32.mrf.mxu0
      %v2405 = vadd.f32 0.0, %v2404
      %v2406 = vpop.f32.mrf.mxu0
      %v2407 = vadd.f32 0.0, %v2406
      %2408 = vmatmul.bf16.gmra.mxu0 %v2305
      %v2409 = vpop.f32.mrf.mxu0
      %v2410 = vadd.f32 0.0, %v2409
      %v2411 = vpop.f32.mrf.mxu0
      %v2412 = vadd.f32 0.0, %v2411
      %2413 = vmatmul.bf16.gmra.mxu0 %v2307
      %v2414 = vpop.f32.mrf.mxu0
      %v2415 = vadd.f32 0.0, %v2414
      %v2416 = vpop.f32.mrf.mxu0
      %v2417 = vadd.f32 0.0, %v2416
      %2418 = vmatmul.bf16.gmra.mxu0 %v2309
      %v2419 = vpop.f32.mrf.mxu0
      %v2420 = vadd.f32 0.0, %v2419
      %v2421 = vpop.f32.mrf.mxu0
      %v2422 = vadd.f32 0.0, %v2421
      %2423 = vmatmul.bf16.gmra.mxu0 %v2311
      %v2424 = vpop.f32.mrf.mxu0
      %v2425 = vadd.f32 0.0, %v2424
      %v2426 = vpop.f32.mrf.mxu0
      %v2427 = vadd.f32 0.0, %v2426
      %2428 = vmatmul.bf16.gmra.mxu0 %v2313
      %v2429 = vpop.f32.mrf.mxu0
      %v2430 = vadd.f32 0.0, %v2429
      %v2431 = vpop.f32.mrf.mxu0
      %v2432 = vadd.f32 0.0, %v2431
      %2433 = vmatmul.bf16.gmra.mxu0 %v2315
      %v2434 = vpop.f32.mrf.mxu0
      %v2435 = vadd.f32 0.0, %v2434
      %v2436 = vpop.f32.mrf.mxu0
      %v2437 = vadd.f32 0.0, %v2436
      %2438 = vmatmul.bf16.gmra.mxu0 %v2317
      %v2439 = vpop.f32.mrf.mxu0
      %v2440 = vadd.f32 0.0, %v2439
      %v2441 = vpop.f32.mrf.mxu0
      %v2442 = vadd.f32 0.0, %v2441
      %2443 = vmatmul.bf16.gmra.mxu0 %v2319
      %v2444 = vpop.f32.mrf.mxu0
      %v2445 = vadd.f32 0.0, %v2444
      %v2446 = vpop.f32.mrf.mxu0
      %v2447 = vadd.f32 0.0, %v2446
      %2448 = vdwg.mxu0
      %v2449 = vadd.f32 %v2250, %v2390
      %v2450 = vadd.f32 %v2251, %v2392
      %v2451 = vadd.f32 %v2252, %v2395
      %v2452 = vadd.f32 %v2253, %v2397
      %v2453 = vadd.f32 %v2254, %v2400
      %v2454 = vadd.f32 %v2255, %v2402
      %v2455 = vadd.f32 %v2256, %v2405
      %v2456 = vadd.f32 %v2257, %v2407
      %v2457 = vadd.f32 %v2258, %v2410
      %v2458 = vadd.f32 %v2259, %v2412
      %v2459 = vadd.f32 %v2260, %v2415
      %v2460 = vadd.f32 %v2261, %v2417
      %v2461 = vadd.f32 %v2262, %v2420
      %v2462 = vadd.f32 %v2263, %v2422
      %v2463 = vadd.f32 %v2264, %v2425
      %v2464 = vadd.f32 %v2265, %v2427
      %v2465 = vadd.f32 %v2266, %v2430
      %v2466 = vadd.f32 %v2267, %v2432
      %v2467 = vadd.f32 %v2268, %v2435
      %v2468 = vadd.f32 %v2269, %v2437
      %v2469 = vadd.f32 %v2270, %v2440
      %v2470 = vadd.f32 %v2271, %v2442
      %v2471 = vadd.f32 %v2272, %v2445
      %v2472 = vadd.f32 %v2273, %v2447
      %v2473 = vld [vmem:[%s2] sm:$0x1]
      %v2475 = vperm.slane %v2473, 0
      %v2477 = vadd.f32 %v2449, %v2475
      %v2478 = vadd.f32 %v2450, %v2475
      %v2479 = vadd.f32 %v2451, %v2475
      %v2480 = vadd.f32 %v2452, %v2475
      %v2481 = vadd.f32 %v2453, %v2475
      %v2482 = vadd.f32 %v2454, %v2475
      %v2483 = vadd.f32 %v2455, %v2475
      %v2484 = vadd.f32 %v2456, %v2475
      %v2485 = vadd.f32 %v2457, %v2475
      %v2486 = vadd.f32 %v2458, %v2475
      %v2487 = vadd.f32 %v2459, %v2475
      %v2488 = vadd.f32 %v2460, %v2475
      %v2489 = vadd.f32 %v2461, %v2475
      %v2490 = vadd.f32 %v2462, %v2475
      %v2491 = vadd.f32 %v2463, %v2475
      %v2492 = vadd.f32 %v2464, %v2475
      %v2493 = vadd.f32 %v2465, %v2475
      %v2494 = vadd.f32 %v2466, %v2475
      %v2495 = vadd.f32 %v2467, %v2475
      %v2496 = vadd.f32 %v2468, %v2475
      %v2497 = vadd.f32 %v2469, %v2475
      %v2498 = vadd.f32 %v2470, %v2475
      %v2499 = vadd.f32 %v2471, %v2475
      %v2500 = vadd.f32 %v2472, %v2475
      %v2501 = vmax.f32 %v2477, 0.0
      %v2502 = vmax.f32 %v2478, 0.0
      %v2503 = vmax.f32 %v2479, 0.0
      %v2504 = vmax.f32 %v2480, 0.0
      %v2505 = vmax.f32 %v2481, 0.0
      %v2506 = vmax.f32 %v2482, 0.0
      %v2507 = vmax.f32 %v2483, 0.0
      %v2508 = vmax.f32 %v2484, 0.0
      %v2509 = vmax.f32 %v2485, 0.0
      %v2510 = vmax.f32 %v2486, 0.0
      %v2511 = vmax.f32 %v2487, 0.0
      %v2512 = vmax.f32 %v2488, 0.0
      %v2513 = vmax.f32 %v2489, 0.0
      %v2514 = vmax.f32 %v2490, 0.0
      %v2515 = vmax.f32 %v2491, 0.0
      %v2516 = vmax.f32 %v2492, 0.0
      %v2517 = vmax.f32 %v2493, 0.0
      %v2518 = vmax.f32 %v2494, 0.0
      %v2519 = vmax.f32 %v2495, 0.0
      %v2520 = vmax.f32 %v2496, 0.0
      %v2521 = vmax.f32 %v2497, 0.0
      %v2522 = vmax.f32 %v2498, 0.0
      %v2523 = vmax.f32 %v2499, 0.0
      %v2524 = vmax.f32 %v2500, 0.0
      %2525 = vst [vmem:[%s170] sm:$0xff] %v2501
      %2526 = vst [vmem:[%s170 + $0x8] sm:$0xff] %v2502
      %2527 = vst [vmem:[%s170 + $0x10] sm:$0xff] %v2503
      %2528 = vst [vmem:[%s170 + $0x18] sm:$0xff] %v2504
      %2529 = vst [vmem:[%s170 + $0x20] sm:$0xff] %v2505
      %2530 = vst [vmem:[%s170 + $0x28] sm:$0xff] %v2506
      %2531 = vst [vmem:[%s170 + $0x30] sm:$0xff] %v2507
      %2532 = vst [vmem:[%s170 + $0x38] sm:$0xff] %v2508
      %2533 = vst [vmem:[%s170 + $0x40] sm:$0xff] %v2509
      %2534 = vst [vmem:[%s170 + $0x48] sm:$0xff] %v2510
      %2535 = vst [vmem:[%s170 + $0x50] sm:$0xff] %v2511
      %2536 = vst [vmem:[%s170 + $0x58] sm:$0xff] %v2512
      %2537 = vst [vmem:[%s170 + $0x60] sm:$0xff] %v2513
      %2538 = vst [vmem:[%s170 + $0x68] sm:$0xff] %v2514
      %2539 = vst [vmem:[%s170 + $0x70] sm:$0xff] %v2515
      %2540 = vst [vmem:[%s170 + $0x78] sm:$0xff] %v2516
      %2541 = vst [vmem:[%s170 + $0x80] sm:$0xff] %v2517
      %2542 = vst [vmem:[%s170 + $0x88] sm:$0xff] %v2518
      %2543 = vst [vmem:[%s170 + $0x90] sm:$0xff] %v2519
      %2544 = vst [vmem:[%s170 + $0x98] sm:$0xff] %v2520
      %2545 = vst [vmem:[%s170 + $0xa0] sm:$0xff] %v2521
      %2546 = vst [vmem:[%s170 + $0xa8] sm:$0xff] %v2522
      %2547 = vst [vmem:[%s170 + $0xb0] sm:$0xff] %v2523
      %2548 = vst [vmem:[%s170 + $0xb8] sm:$0xff] %v2524
      %p2549 = scmp.lt.s32.totalorder %s14, 1
      %s2550 = scalar_select %p2549, %s14, 1
      %s2551 = smul.addr %s2550, 24
      %s2552 = smul.addr %s2551, 8
      %s2553 = scalar_lea.vmem %s3, %s2552
      // Predicated region
      $region33: #{_lambda_.5} parent=31 // pred_check
        %p2554 = pneg %p100
      $region34: #{_lambda_.5} parent=31 // pred_check_branch
        %2556 = sbr.rel (%p2554) target = $region36
      $region35: #{_lambda_.5} parent=31 // pred_region
        _
      $region36: #{_lambda_.5} parent=31 // pred_fallthru
        _
    $region32: #{_lambda_.5} parent=5 // pred_fallthru
      _
    %p2557 = scmp.le.s32.totalorder 2, %s9
    // Predicated region
    $region37: #{_lambda_.5} parent=5 // pred_check
      %p2558 = pneg %p2557
    $region38: #{_lambda_.5} parent=5 // pred_check_branch
      %2560 = sbr.rel (%p2558) target = $region40
    $region39: #{_lambda_.5} parent=5 // pred_region
      %s2561 = ssub.s32 %s9, 2
      // Predicated region
      $region41: #{_lambda_.5} parent=39 // pred_check
        %p2562 = pneg %p106
      $region42: #{_lambda_.5} parent=39 // pred_check_branch
        %2564 = sbr.rel (%p2562) target = $region44
      $region43: #{_lambda_.5} parent=39 // pred_region
        %p2565 = scmp.lt.s32.totalorder %s15, 1
        %s2566 = scalar_select %p2565, %s15, 1
        %s2567 = smul.addr %s2566, 24
        %s2568 = smul.addr %s2567, 8
        %s2569 = scalar_lea.vmem %s3, %s2568
      $region44: #{_lambda_.5} parent=39 // pred_fallthru
        _
    $region40: #{_lambda_.5} parent=5 // pred_fallthru
      _
  $region6: #{_lambda_.5} parent=0 // loop_footer
    %s13 = sadd.s32 1, %s9
  $region7: #{_lambda_.5} parent=0 // loop_footer_branch
    %8 = sbr.rel target = $region3
  $region8: #{_lambda_.5} parent=0 // loop_exit
    _

// kernel: _lambda_.4
$region0: #{_lambda_.4}
  #allocation0 [shape = 'u32[]', space=smem, size = 0x4, offset = 0x4, fixed_abs, tag = 'smem constant byte address 0x4 - core index']
  #allocation1 [shape = 'u32[72,128]{1,0:T(1,128)}', space=vmem, size = 0x9000, scoped, tag = 'internal scratch']
  %s0 = inlined_call_operand.vmem [shape: bf16[2,272,128], index: 0, kind: input, shape index: {}]
  %s1 = inlined_call_operand.vmem [shape: bf16[9,128,128], index: 1, kind: input, shape index: {}]
  %s2 = inlined_call_operand.vmem [shape: bf16[2,272,128], index: 2, kind: input, shape index: {}]
  %s3 = inlined_call_operand.vmem [shape: bf16[9,128,128], index: 3, kind: input, shape index: {}]
  %s4 = inlined_call_operand.vmem [shape: f32[1,128], index: 4, kind: input, shape index: {}]
  %s5 = inlined_call_operand.vmem [shape: f32[1,128], index: 5, kind: input, shape index: {}]
  %s6 = inlined_call_operand.vmem [shape: f32[1,128], index: 6, kind: input, shape index: {}]
  %s7 = inlined_call_operand.vmem [shape: bf16[2,232,128], index: 7, kind: output, shape index: {}]
  %s8 = sld [smem:[#allocation0]]
  $region61: #{_lambda_.4} parent=0
    _
  %s10 = ssub.s32 1, %s8
  %s11 = scalar_select 0, %s10, %s8
  loop: start=0, step=1, limit=4
  $region2: #{_lambda_.4} parent=0 // loop_pre_header
    _
  $region3: #{_lambda_.4} parent=0 // loop_header
    %s13 = sphi 0, %s17
    %p14 = scmp.ge.s32.totalorder %s13, 4
    %s23 = sphi 0, %s25
    %s26 = sphi 0, %s23
    %s27 = sphi 0, %s26
    %s43 = sphi 0, %s27
    %s47 = sphi 0, %s47
    %s49 = sphi 0, %s47
    %s50 = sphi 0, %s49
    %s64 = sphi 0, %s50
    %s70 = sphi 0, %s72
    %s73 = sphi 0, %s70
    %s74 = sphi 0, %s73
    %s90 = sphi 0, %s74
    %s94 = sphi 0, %s94
    %s96 = sphi 0, %s94
    %s97 = sphi 0, %s96
    %s111 = sphi 0, %s97
    %s115 = sphi 0, %s115
    %s117 = sphi 0, %s115
    %s118 = sphi 0, %s117
    %s132 = sphi 0, %s118
    %s136 = sphi 0, %s136
    %s138 = sphi 0, %s136
    %s139 = sphi 0, %s138
    %s153 = sphi 0, %s139
    %s157 = sphi 0, %s157
    %s159 = sphi 0, %s157
    %s160 = sphi 0, %s159
    %s174 = sphi 0, %s160
    %s180 = sphi 0, %s182
    %s183 = sphi 0, %s180
    %s184 = sphi 0, %s183
    %s200 = sphi 0, %s184
  $region4: #{_lambda_.4} parent=0 // loop_header_branch
    %16 = sbr.rel (%p14) target = $region8
  $region5: #{_lambda_.4} parent=0 // loop_body
    %s18 = ssub.s32 %s13, 1
    %s19 = ssub.s32 %s13, 2
    %s20 = sadd.s32 %s13, 1
    %s21 = ssub.s32 %s13, %s20
    %p22 = scmp.eq.s32.totalorder %s21, 0
    %s24 = sadd.s32 %s23, 1
    %s25 = scalar_select %p22, %s23, %s24
    %p28 = pneg %p22
    %p29 = scmp.eq.s32.totalorder %s13, 1
    %p30 = por %p28, %p29
    %p31 = scmp.ne.s32.totalorder %s23, %s26
    %p32 = scmp.eq.s32.totalorder %s13, 0
    %p33 = por %p31, %p32
    %p34 = scmp.ne.s32.totalorder %s23, %s26
    %p35 = scmp.eq.s32.totalorder %s18, 1
    %p36 = por %p34, %p35
    %p37 = scmp.ne.s32.totalorder %s26, %s27
    %p38 = scmp.eq.s32.totalorder %s18, 0
    %p39 = por %p37, %p38
    %p40 = scmp.ne.s32.totalorder %s26, %s27
    %p41 = scmp.eq.s32.totalorder %s19, 1
    %p42 = por %p40, %p41
    %p44 = scmp.ne.s32.totalorder %s27, %s43
    %p45 = scmp.eq.s32.totalorder %s19, 0
    %p46 = por %p44, %p45
    %s48 = sadd.s32 %s47, 1
    %p51 = scmp.eq.s32.totalorder %s13, 1
    %p52 = scmp.ne.s32.totalorder %s47, %s49
    %p53 = scmp.eq.s32.totalorder %s13, 0
    %p54 = por %p52, %p53
    %p55 = scmp.ne.s32.totalorder %s47, %s49
    %p56 = scmp.eq.s32.totalorder %s18, 1
    %p57 = por %p55, %p56
    %p58 = scmp.ne.s32.totalorder %s49, %s50
    %p59 = scmp.eq.s32.totalorder %s18, 0
    %p60 = por %p58, %p59
    %p61 = scmp.ne.s32.totalorder %s49, %s50
    %p62 = scmp.eq.s32.totalorder %s19, 1
    %p63 = por %p61, %p62
    %p65 = scmp.ne.s32.totalorder %s50, %s64
    %p66 = scmp.eq.s32.totalorder %s19, 0
    %p67 = por %p65, %p66
    %s68 = ssub.s32 %s13, %s20
    %p69 = scmp.eq.s32.totalorder %s68, 0
    %s71 = sadd.s32 %s70, 1
    %s72 = scalar_select %p69, %s70, %s71
    %p75 = pneg %p69
    %p76 = scmp.eq.s32.totalorder %s13, 1
    %p77 = por %p75, %p76
    %p78 = scmp.ne.s32.totalorder %s70, %s73
    %p79 = scmp.eq.s32.totalorder %s13, 0
    %p80 = por %p78, %p79
    %p81 = scmp.ne.s32.totalorder %s70, %s73
    %p82 = scmp.eq.s32.totalorder %s18, 1
    %p83 = por %p81, %p82
    %p84 = scmp.ne.s32.totalorder %s73, %s74
    %p85 = scmp.eq.s32.totalorder %s18, 0
    %p86 = por %p84, %p85
    %p87 = scmp.ne.s32.totalorder %s73, %s74
    %p88 = scmp.eq.s32.totalorder %s19, 1
    %p89 = por %p87, %p88
    %p91 = scmp.ne.s32.totalorder %s74, %s90
    %p92 = scmp.eq.s32.totalorder %s19, 0
    %p93 = por %p91, %p92
    %s95 = sadd.s32 %s94, 1
    %p98 = scmp.eq.s32.totalorder %s13, 1
    %p99 = scmp.ne.s32.totalorder %s94, %s96
    %p100 = scmp.eq.s32.totalorder %s13, 0
    %p101 = por %p99, %p100
    %p102 = scmp.ne.s32.totalorder %s94, %s96
    %p103 = scmp.eq.s32.totalorder %s18, 1
    %p104 = por %p102, %p103
    %p105 = scmp.ne.s32.totalorder %s96, %s97
    %p106 = scmp.eq.s32.totalorder %s18, 0
    %p107 = por %p105, %p106
    %p108 = scmp.ne.s32.totalorder %s96, %s97
    %p109 = scmp.eq.s32.totalorder %s19, 1
    %p110 = por %p108, %p109
    %p112 = scmp.ne.s32.totalorder %s97, %s111
    %p113 = scmp.eq.s32.totalorder %s19, 0
    %p114 = por %p112, %p113
    %s116 = sadd.s32 %s115, 1
    %p119 = scmp.eq.s32.totalorder %s13, 1
    %p120 = scmp.ne.s32.totalorder %s115, %s117
    %p121 = scmp.eq.s32.totalorder %s13, 0
    %p122 = por %p120, %p121
    %p123 = scmp.ne.s32.totalorder %s115, %s117
    %p124 = scmp.eq.s32.totalorder %s18, 1
    %p125 = por %p123, %p124
    %p126 = scmp.ne.s32.totalorder %s117, %s118
    %p127 = scmp.eq.s32.totalorder %s18, 0
    %p128 = por %p126, %p127
    %p129 = scmp.ne.s32.totalorder %s117, %s118
    %p130 = scmp.eq.s32.totalorder %s19, 1
    %p131 = por %p129, %p130
    %p133 = scmp.ne.s32.totalorder %s118, %s132
    %p134 = scmp.eq.s32.totalorder %s19, 0
    %p135 = por %p133, %p134
    %s137 = sadd.s32 %s136, 1
    %p140 = scmp.eq.s32.totalorder %s13, 1
    %p141 = scmp.ne.s32.totalorder %s136, %s138
    %p142 = scmp.eq.s32.totalorder %s13, 0
    %p143 = por %p141, %p142
    %p144 = scmp.ne.s32.totalorder %s136, %s138
    %p145 = scmp.eq.s32.totalorder %s18, 1
    %p146 = por %p144, %p145
    %p147 = scmp.ne.s32.totalorder %s138, %s139
    %p148 = scmp.eq.s32.totalorder %s18, 0
    %p149 = por %p147, %p148
    %p150 = scmp.ne.s32.totalorder %s138, %s139
    %p151 = scmp.eq.s32.totalorder %s19, 1
    %p152 = por %p150, %p151
    %p154 = scmp.ne.s32.totalorder %s139, %s153
    %p155 = scmp.eq.s32.totalorder %s19, 0
    %p156 = por %p154, %p155
    %s158 = sadd.s32 %s157, 1
    %p161 = scmp.eq.s32.totalorder %s13, 1
    %p162 = scmp.ne.s32.totalorder %s157, %s159
    %p163 = scmp.eq.s32.totalorder %s13, 0
    %p164 = por %p162, %p163
    %p165 = scmp.ne.s32.totalorder %s157, %s159
    %p166 = scmp.eq.s32.totalorder %s18, 1
    %p167 = por %p165, %p166
    %p168 = scmp.ne.s32.totalorder %s159, %s160
    %p169 = scmp.eq.s32.totalorder %s18, 0
    %p170 = por %p168, %p169
    %p171 = scmp.ne.s32.totalorder %s159, %s160
    %p172 = scmp.eq.s32.totalorder %s19, 1
    %p173 = por %p171, %p172
    %p175 = scmp.ne.s32.totalorder %s160, %s174
    %p176 = scmp.eq.s32.totalorder %s19, 0
    %p177 = por %p175, %p176
    %s178 = ssub.s32 %s13, %s20
    %p179 = scmp.eq.s32.totalorder %s178, 0
    %s181 = sadd.s32 %s180, 1
    %s182 = scalar_select %p179, %s180, %s181
    %p185 = pneg %p179
    %p186 = scmp.eq.s32.totalorder %s13, 1
    %p187 = por %p185, %p186
    %p188 = scmp.ne.s32.totalorder %s180, %s183
    %p189 = scmp.eq.s32.totalorder %s13, 0
    %p190 = por %p188, %p189
    %p191 = scmp.ne.s32.totalorder %s180, %s183
    %p192 = scmp.eq.s32.totalorder %s18, 1
    %p193 = por %p191, %p192
    %p194 = scmp.ne.s32.totalorder %s183, %s184
    %p195 = scmp.eq.s32.totalorder %s18, 0
    %p196 = por %p194, %p195
    %p197 = scmp.ne.s32.totalorder %s183, %s184
    %p198 = scmp.eq.s32.totalorder %s19, 1
    %p199 = por %p197, %p198
    %p201 = scmp.ne.s32.totalorder %s184, %s200
    %p202 = scmp.eq.s32.totalorder %s19, 0
    %p203 = por %p201, %p202
    %p204 = scmp.le.s32.totalorder 1, %s13
    %p205 = scmp.lt.s32.totalorder %s13, 3
    %p206 = pnand %p204, %p205
    %p207 = pneg %p206
    // Predicated region
    $region9: #{_lambda_.4} parent=5 // pred_check
      _
    $region10: #{_lambda_.4} parent=5 // pred_check_branch
      %209 = sbr.rel (%p206) target = $region12
    $region11: #{_lambda_.4} parent=5 // pred_region
      %s210 = ssub.s32 %s13, 1
      // Predicated region
      $region13: #{_lambda_.4} parent=11 // pred_check
        %p211 = pneg %p60
      $region14: #{_lambda_.4} parent=11 // pred_check_branch
        %213 = sbr.rel (%p211) target = $region16
      $region15: #{_lambda_.4} parent=11 // pred_region
        _
      $region16: #{_lambda_.4} parent=11 // pred_fallthru
        _
      // Predicated region
      $region17: #{_lambda_.4} parent=11 // pred_check
        %p214 = pneg %p107
      $region18: #{_lambda_.4} parent=11 // pred_check_branch
        %216 = sbr.rel (%p214) target = $region20
      $region19: #{_lambda_.4} parent=11 // pred_region
        _
      $region20: #{_lambda_.4} parent=11 // pred_fallthru
        _
      // Predicated region
      $region21: #{_lambda_.4} parent=11 // pred_check
        %p217 = pneg %p128
      $region22: #{_lambda_.4} parent=11 // pred_check_branch
        %219 = sbr.rel (%p217) target = $region24
      $region23: #{_lambda_.4} parent=11 // pred_region
        _
      $region24: #{_lambda_.4} parent=11 // pred_fallthru
        _
      // Predicated region
      $region25: #{_lambda_.4} parent=11 // pred_check
        %p220 = pneg %p149
      $region26: #{_lambda_.4} parent=11 // pred_check_branch
        %222 = sbr.rel (%p220) target = $region28
      $region27: #{_lambda_.4} parent=11 // pred_region
        _
      $region28: #{_lambda_.4} parent=11 // pred_fallthru
        _
      // Predicated region
      $region29: #{_lambda_.4} parent=11 // pred_check
        %p223 = pneg %p170
      $region30: #{_lambda_.4} parent=11 // pred_check_branch
        %225 = sbr.rel (%p223) target = $region32
      $region31: #{_lambda_.4} parent=11 // pred_region
        _
      $region32: #{_lambda_.4} parent=11 // pred_fallthru
        _
    $region12: #{_lambda_.4} parent=5 // pred_fallthru
      _
    %p226 = scmp.lt.s32.totalorder %s13, 2
    // Predicated region
    $region33: #{_lambda_.4} parent=5 // pred_check
      %p227 = pneg %p226
    $region34: #{_lambda_.4} parent=5 // pred_check_branch
      %229 = sbr.rel (%p227) target = $region36
    $region35: #{_lambda_.4} parent=5 // pred_region
      // Predicated region
      $region37: #{_lambda_.4} parent=35 // pred_check
        %p230 = pneg %p33
      $region38: #{_lambda_.4} parent=35 // pred_check_branch
        %232 = sbr.rel (%p230) target = $region40
      $region39: #{_lambda_.4} parent=35 // pred_region
        %p233 = scmp.lt.s32.totalorder %s13, 1
        %s234 = scalar_select %p233, %s13, 1
        %s235 = smul.addr %s234, 34
        %s236 = smul.addr %s235, 4
        %s237 = scalar_lea.vmem %s0, %s236
      $region40: #{_lambda_.4} parent=35 // pred_fallthru
        _
      // Predicated region
      $region41: #{_lambda_.4} parent=35 // pred_check
        %p238 = pneg %p80
      $region42: #{_lambda_.4} parent=35 // pred_check_branch
        %240 = sbr.rel (%p238) target = $region44
      $region43: #{_lambda_.4} parent=35 // pred_region
        %p241 = scmp.lt.s32.totalorder %s13, 1
        %s242 = scalar_select %p241, %s13, 1
        %s243 = smul.addr %s242, 34
        %s244 = smul.addr %s243, 4
        %s245 = scalar_lea.vmem %s2, %s244
      $region44: #{_lambda_.4} parent=35 // pred_fallthru
        _
    $region36: #{_lambda_.4} parent=5 // pred_fallthru
      _
    %p246 = scmp.le.s32.totalorder 1, %s13
    %p247 = scmp.lt.s32.totalorder %s13, 3
    %p248 = pnand %p246, %p247
    %p249 = pneg %p248
    // Predicated region
    $region45: #{_lambda_.4} parent=5 // pred_check
      _
    $region46: #{_lambda_.4} parent=5 // pred_check_branch
      %251 = sbr.rel (%p248) target = $region48
    $region47: #{_lambda_.4} parent=5 // pred_region
      %s252 = ssub.s32 %s13, 1
      %p253 = scmp.lt.s32.totalorder %s18, 1
      %s254 = scalar_select %p253, %s18, 1
      %s255 = smul.addr %s254, 34
      %s256 = smul.addr %s255, 4
      %s257 = scalar_lea.vmem %s0, %s256
      %p258 = pneg %p39
      %p259 = pneg %p36
      %p260 = pneg %p60
      %p261 = pneg %p57
      %p262 = scmp.lt.s32.totalorder %s18, 1
      %s263 = scalar_select %p262, %s18, 1
      %s264 = smul.addr %s263, 34
      %s265 = smul.addr %s264, 4
      %s266 = scalar_lea.vmem %s2, %s265
      %p267 = pneg %p86
      %p268 = pneg %p83
      %p269 = pneg %p107
      %p270 = pneg %p104
      %p271 = pneg %p128
      %p272 = pneg %p125
      %p273 = pneg %p149
      %p274 = pneg %p146
      %p275 = pneg %p170
      %p276 = pneg %p167
      %p277 = pneg %p196
      %p278 = pneg %p193
      %p279 = scmp.lt.s32.totalorder %s18, 1
      %s280 = scalar_select %p279, %s18, 1
      %s281 = smul.addr %s280, 29
      %s282 = smul.addr %s281, 4
      %s283 = scalar_lea.vmem %s7, %s282
      %p284 = scmp.lt.s32.totalorder %s18, 1
      %s285 = scalar_select %p284, %s18, 1
      %s286 = smul.addr %s285, 34
      %s287 = smul.addr %s286, 4
      %s288 = scalar_lea.vmem %s0, %s287
      %p289 = scmp.lt.s32.totalorder %s18, 1
      %s290 = scalar_select %p289, %s18, 1
      %s291 = smul.addr %s290, 34
      %s292 = smul.addr %s291, 4
      %s293 = scalar_lea.vmem %s2, %s292
      %p294 = scmp.lt.s32.totalorder %s18, 1
      %s295 = scalar_select %p294, %s18, 1
      %s296 = smul.addr %s295, 29
      %s297 = smul.addr %s296, 4
      %s298 = scalar_lea.vmem %s7, %s297
      %v299 = vld [vmem:[%s288] sm:$0xf]
      %v300 = vld [vmem:[%s288 + $0x4] sm:$0xf]
      %v301 = vld [vmem:[%s288 + $0x8] sm:$0xf]
      %v302 = vld [vmem:[%s288 + $0xc] sm:$0xf]
      %v303 = vld [vmem:[%s288 + $0x10] sm:$0xf]
      %v304 = vld [vmem:[%s288 + $0x14] sm:$0xf]
      %v305 = vld [vmem:[%s288 + $0x18] sm:$0xf]
      %v306 = vld [vmem:[%s288 + $0x1c] sm:$0xf]
      %v307 = vld [vmem:[%s288 + $0x20] sm:$0xf]
      %v308 = vld [vmem:[%s288 + $0x24] sm:$0xf]
      %v309 = vld [vmem:[%s288 + $0x28] sm:$0xf]
      %v310 = vld [vmem:[%s288 + $0x2c] sm:$0xf]
      %v311 = vld [vmem:[%s288 + $0x30] sm:$0xf]
      %v312 = vld [vmem:[%s288 + $0x34] sm:$0xf]
      %v313 = vld [vmem:[%s288 + $0x38] sm:$0xf]
      %v314 = vld [vmem:[%s288 + $0x3c] sm:$0xf]
      %v315 = vld [vmem:[%s288 + $0x40] sm:$0xf]
      %v316 = vld [vmem:[%s288 + $0x44] sm:$0xf]
      %v317 = vld [vmem:[%s288 + $0x48] sm:$0xf]
      %v318 = vld [vmem:[%s288 + $0x4c] sm:$0xf]
      %v319 = vld [vmem:[%s288 + $0x50] sm:$0xf]
      %v320 = vld [vmem:[%s288 + $0x54] sm:$0xf]
      %v321 = vld [vmem:[%s288 + $0x58] sm:$0xf]
      %v322 = vld [vmem:[%s288 + $0x5c] sm:$0xf]
      %v323 = vld [vmem:[%s288 + $0x60] sm:$0xf]
      %v324 = vld [vmem:[%s288 + $0x64] sm:$0xf]
      %v325 = vld [vmem:[%s288 + $0x68] sm:$0xf]
      %v326 = vld [vmem:[%s288 + $0x6c] sm:$0xf]
      %v327 = vld [vmem:[%s288 + $0x70] sm:$0xf]
      %v328 = vld [vmem:[%s1] sm:$0xf]
      %v329 = vld [vmem:[%s1 + $0x4] sm:$0xf]
      %v330 = vld [vmem:[%s1 + $0x8] sm:$0xf]
      %v331 = vld [vmem:[%s1 + $0xc] sm:$0xf]
      %v332 = vld [vmem:[%s1 + $0x10] sm:$0xf]
      %v333 = vld [vmem:[%s1 + $0x14] sm:$0xf]
      %v334 = vld [vmem:[%s1 + $0x18] sm:$0xf]
      %v335 = vld [vmem:[%s1 + $0x1c] sm:$0xf]
      %v336 = vld [vmem:[%s1 + $0x20] sm:$0xf]
      %v337 = vld [vmem:[%s1 + $0x24] sm:$0xf]
      %v338 = vld [vmem:[%s1 + $0x28] sm:$0xf]
      %v339 = vld [vmem:[%s1 + $0x2c] sm:$0xf]
      %v340 = vld [vmem:[%s1 + $0x30] sm:$0xf]
      %v341 = vld [vmem:[%s1 + $0x34] sm:$0xf]
      %v342 = vld [vmem:[%s1 + $0x38] sm:$0xf]
      %v343 = vld [vmem:[%s1 + $0x3c] sm:$0xf]
      %v344 = vld [vmem:[%s288 + $0x74] sm:$0x1]
      %s345 = scalar_lea.vmem %s1, 64
      %v346 = vld [vmem:[%s345] sm:$0xf]
      %v347 = vld [vmem:[%s345 + $0x4] sm:$0xf]
      %v348 = vld [vmem:[%s345 + $0x8] sm:$0xf]
      %v349 = vld [vmem:[%s345 + $0xc] sm:$0xf]
      %v350 = vld [vmem:[%s345 + $0x10] sm:$0xf]
      %v351 = vld [vmem:[%s345 + $0x14] sm:$0xf]
      %v352 = vld [vmem:[%s345 + $0x18] sm:$0xf]
      %v353 = vld [vmem:[%s345 + $0x1c] sm:$0xf]
      %v354 = vld [vmem:[%s345 + $0x20] sm:$0xf]
      %v355 = vld [vmem:[%s345 + $0x24] sm:$0xf]
      %v356 = vld [vmem:[%s345 + $0x28] sm:$0xf]
      %v357 = vld [vmem:[%s345 + $0x2c] sm:$0xf]
      %v358 = vld [vmem:[%s345 + $0x30] sm:$0xf]
      %v359 = vld [vmem:[%s345 + $0x34] sm:$0xf]
      %v360 = vld [vmem:[%s345 + $0x38] sm:$0xf]
      %v361 = vld [vmem:[%s345 + $0x3c] sm:$0xf]
      %v392 = vunpack.c.l.b16 %v299
      %v393 = vunpack.c.l.b16 %v300
      %v394 = vunpack.c.l.b16 %v301
      %v395 = vunpack.c.l.b16 %v302
      %v396 = vunpack.c.l.b16 %v303
      %v397 = vunpack.c.l.b16 %v304
      %v398 = vunpack.c.l.b16 %v305
      %v399 = vunpack.c.l.b16 %v306
      %v400 = vunpack.c.l.b16 %v307
      %v401 = vunpack.c.l.b16 %v308
      %v402 = vunpack.c.l.b16 %v309
      %v403 = vunpack.c.l.b16 %v310
      %v404 = vunpack.c.l.b16 %v311
      %v405 = vunpack.c.l.b16 %v312
      %v406 = vunpack.c.l.b16 %v313
      %v407 = vunpack.c.l.b16 %v314
      %v408 = vunpack.c.l.b16 %v315
      %v409 = vunpack.c.l.b16 %v316
      %v410 = vunpack.c.l.b16 %v317
      %v411 = vunpack.c.l.b16 %v318
      %v412 = vunpack.c.l.b16 %v319
      %v413 = vunpack.c.l.b16 %v320
      %v414 = vunpack.c.l.b16 %v321
      %v415 = vunpack.c.l.b16 %v322
      %v416 = vunpack.c.l.b16 %v323
      %v417 = vunpack.c.l.b16 %v324
      %v418 = vunpack.c.l.b16 %v325
      %v419 = vunpack.c.l.b16 %v326
      %v420 = vunpack.c.l.b16 %v327
      %v421 = vunpack.c.l.b16 %v344
      %v422 = vpack.c.b16 %v393, %v392
      %v423 = vpack.c.b16 %v395, %v394
      %v424 = vpack.c.b16 %v397, %v396
      %v425 = vpack.c.b16 %v399, %v398
      %v426 = vpack.c.b16 %v401, %v400
      %v427 = vpack.c.b16 %v403, %v402
      %v428 = vpack.c.b16 %v405, %v404
      %v429 = vpack.c.b16 %v407, %v406
      %v430 = vpack.c.b16 %v409, %v408
      %v431 = vpack.c.b16 %v411, %v410
      %v432 = vpack.c.b16 %v413, %v412
      %v433 = vpack.c.b16 %v415, %v414
      %v434 = vpack.c.b16 %v417, %v416
      %v435 = vpack.c.b16 %v419, %v418
      %v436 = vpack.c.b16 %v421, %v420
      %vm437 = vsmask.f32 7424
      %v439 = vshrl.u32 %v422, 16
      %v441 = vshll.u32 %v422, 16
      %v443 = vrot.slane %v441, 1
      %v444 = vor.u32 %v439, %v443
      %v446 = vshll.u32 %v423, 16
      %v448 = vrot.slane %v446, 1
      %v449 = vsel %vm437, %v444, %v448
      %v450 = vshrl.u32 %v423, 16
      %v452 = vor.u32 %v450, %v448
      %v454 = vshll.u32 %v424, 16
      %v456 = vrot.slane %v454, 1
      %v457 = vsel %vm437, %v452, %v456
      %v458 = vshrl.u32 %v424, 16
      %v460 = vor.u32 %v458, %v456
      %v462 = vshll.u32 %v425, 16
      %v464 = vrot.slane %v462, 1
      %v465 = vsel %vm437, %v460, %v464
      %v466 = vshrl.u32 %v425, 16
      %v468 = vor.u32 %v466, %v464
      %v470 = vshll.u32 %v426, 16
      %v472 = vrot.slane %v470, 1
      %v473 = vsel %vm437, %v468, %v472
      %v474 = vshrl.u32 %v426, 16
      %v476 = vor.u32 %v474, %v472
      %v478 = vshll.u32 %v427, 16
      %v480 = vrot.slane %v478, 1
      %v481 = vsel %vm437, %v476, %v480
      %v482 = vshrl.u32 %v427, 16
      %v484 = vor.u32 %v482, %v480
      %v486 = vshll.u32 %v428, 16
      %v488 = vrot.slane %v486, 1
      %v489 = vsel %vm437, %v484, %v488
      %v490 = vshrl.u32 %v428, 16
      %v492 = vor.u32 %v490, %v488
      %v494 = vshll.u32 %v429, 16
      %v496 = vrot.slane %v494, 1
      %v497 = vsel %vm437, %v492, %v496
      %v498 = vshrl.u32 %v429, 16
      %v500 = vor.u32 %v498, %v496
      %v502 = vshll.u32 %v430, 16
      %v504 = vrot.slane %v502, 1
      %v505 = vsel %vm437, %v500, %v504
      %v506 = vshrl.u32 %v430, 16
      %v508 = vor.u32 %v506, %v504
      %v510 = vshll.u32 %v431, 16
      %v512 = vrot.slane %v510, 1
      %v513 = vsel %vm437, %v508, %v512
      %v514 = vshrl.u32 %v431, 16
      %v516 = vor.u32 %v514, %v512
      %v518 = vshll.u32 %v432, 16
      %v520 = vrot.slane %v518, 1
      %v521 = vsel %vm437, %v516, %v520
      %v522 = vshrl.u32 %v432, 16
      %v524 = vor.u32 %v522, %v520
      %v526 = vshll.u32 %v433, 16
      %v528 = vrot.slane %v526, 1
      %v529 = vsel %vm437, %v524, %v528
      %v530 = vshrl.u32 %v433, 16
      %v532 = vor.u32 %v530, %v528
      %v534 = vshll.u32 %v434, 16
      %v536 = vrot.slane %v534, 1
      %v537 = vsel %vm437, %v532, %v536
      %v538 = vshrl.u32 %v434, 16
      %v540 = vor.u32 %v538, %v536
      %v542 = vshll.u32 %v435, 16
      %v544 = vrot.slane %v542, 1
      %v545 = vsel %vm437, %v540, %v544
      %v546 = vshrl.u32 %v435, 16
      %v548 = vor.u32 %v546, %v544
      %v550 = vshll.u32 %v436, 16
      %v552 = vrot.slane %v550, 1
      %v553 = vsel %vm437, %v548, %v552
      %v554 = vshrl.u32 %v436, 16
      %v556 = vor.u32 %v554, %v552
      %v588 = vunpack.c.l.b16 %v346
      %v589 = vunpack.c.l.b16 %v347
      %v590 = vunpack.c.l.b16 %v348
      %v591 = vunpack.c.l.b16 %v349
      %v592 = vunpack.c.l.b16 %v350
      %v593 = vunpack.c.l.b16 %v351
      %v594 = vunpack.c.l.b16 %v352
      %v595 = vunpack.c.l.b16 %v353
      %v596 = vunpack.c.l.b16 %v354
      %v597 = vunpack.c.l.b16 %v355
      %v598 = vunpack.c.l.b16 %v356
      %v599 = vunpack.c.l.b16 %v357
      %v600 = vunpack.c.l.b16 %v358
      %v601 = vunpack.c.l.b16 %v359
      %v602 = vunpack.c.l.b16 %v360
      %v603 = vunpack.c.l.b16 %v361
      %v604 = vpack.c.b16 %v589, %v588
      %v605 = vpack.c.b16 %v591, %v590
      %v606 = vpack.c.b16 %v593, %v592
      %v607 = vpack.c.b16 %v595, %v594
      %v608 = vpack.c.b16 %v597, %v596
      %v609 = vpack.c.b16 %v599, %v598
      %v610 = vpack.c.b16 %v601, %v600
      %v611 = vpack.c.b16 %v603, %v602
      %620 = vmatpush.bf16.msra.mxu0 %v611
      %621 = vmatpush.bf16.msra.mxu0 %v610
      %622 = vmatpush.bf16.msra.mxu0 %v609
      %623 = vmatpush.bf16.msra.mxu0 %v608
      %624 = vmatpush.bf16.msra.mxu0 %v607
      %625 = vmatpush.bf16.msra.mxu0 %v606
      %626 = vmatpush.bf16.msra.mxu0 %v605
      %627 = vmatpush.bf16.msra.mxu0 %v604
      %628 = vmatmul.bf16.gmra.mxu0 %v449
      %v629 = vpop.f32.mrf.mxu0
      %v630 = vadd.f32 0.0, %v629
      %v631 = vpop.f32.mrf.mxu0
      %v632 = vadd.f32 0.0, %v631
      %633 = vmatmul.bf16.gmra.mxu0 %v457
      %v634 = vpop.f32.mrf.mxu0
      %v635 = vadd.f32 0.0, %v634
      %v636 = vpop.f32.mrf.mxu0
      %v637 = vadd.f32 0.0, %v636
      %638 = vmatmul.bf16.gmra.mxu0 %v465
      %v639 = vpop.f32.mrf.mxu0
      %v640 = vadd.f32 0.0, %v639
      %v641 = vpop.f32.mrf.mxu0
      %v642 = vadd.f32 0.0, %v641
      %643 = vmatmul.bf16.gmra.mxu0 %v473
      %v644 = vpop.f32.mrf.mxu0
      %v645 = vadd.f32 0.0, %v644
      %v646 = vpop.f32.mrf.mxu0
      %v647 = vadd.f32 0.0, %v646
      %648 = vmatmul.bf16.gmra.mxu0 %v481
      %v649 = vpop.f32.mrf.mxu0
      %v650 = vadd.f32 0.0, %v649
      %v651 = vpop.f32.mrf.mxu0
      %v652 = vadd.f32 0.0, %v651
      %653 = vmatmul.bf16.gmra.mxu0 %v489
      %v654 = vpop.f32.mrf.mxu0
      %v655 = vadd.f32 0.0, %v654
      %v656 = vpop.f32.mrf.mxu0
      %v657 = vadd.f32 0.0, %v656
      %658 = vmatmul.bf16.gmra.mxu0 %v497
      %v659 = vpop.f32.mrf.mxu0
      %v660 = vadd.f32 0.0, %v659
      %v661 = vpop.f32.mrf.mxu0
      %v662 = vadd.f32 0.0, %v661
      %663 = vmatmul.bf16.gmra.mxu0 %v505
      %v664 = vpop.f32.mrf.mxu0
      %v665 = vadd.f32 0.0, %v664
      %v666 = vpop.f32.mrf.mxu0
      %v667 = vadd.f32 0.0, %v666
      %668 = vmatmul.bf16.gmra.mxu0 %v513
      %v669 = vpop.f32.mrf.mxu0
      %v670 = vadd.f32 0.0, %v669
      %v671 = vpop.f32.mrf.mxu0
      %v672 = vadd.f32 0.0, %v671
      %673 = vmatmul.bf16.gmra.mxu0 %v521
      %v674 = vpop.f32.mrf.mxu0
      %v675 = vadd.f32 0.0, %v674
      %v676 = vpop.f32.mrf.mxu0
      %v677 = vadd.f32 0.0, %v676
      %678 = vmatmul.bf16.gmra.mxu0 %v529
      %v679 = vpop.f32.mrf.mxu0
      %v680 = vadd.f32 0.0, %v679
      %v681 = vpop.f32.mrf.mxu0
      %v682 = vadd.f32 0.0, %v681
      %683 = vmatmul.bf16.gmra.mxu0 %v537
      %v684 = vpop.f32.mrf.mxu0
      %v685 = vadd.f32 0.0, %v684
      %v686 = vpop.f32.mrf.mxu0
      %v687 = vadd.f32 0.0, %v686
      %688 = vmatmul.bf16.gmra.mxu0 %v545
      %v689 = vpop.f32.mrf.mxu0
      %v690 = vadd.f32 0.0, %v689
      %v691 = vpop.f32.mrf.mxu0
      %v692 = vadd.f32 0.0, %v691
      %693 = vmatmul.bf16.gmra.mxu0 %v553
      %v694 = vpop.f32.mrf.mxu0
      %v695 = vadd.f32 0.0, %v694
      %v696 = vpop.f32.mrf.mxu0
      %v697 = vadd.f32 0.0, %v696
      %698 = vmatmul.bf16.gmra.mxu0 %v556
      %v699 = vpop.f32.mrf.mxu0
      %v700 = vadd.f32 0.0, %v699
      %v701 = vpop.f32.mrf.mxu0
      %702 = vdwg.mxu0
      %v703 = vpack.c.b16 %v420, %v420
      %v735 = vunpack.c.l.b16 %v328
      %v736 = vunpack.c.l.b16 %v329
      %v737 = vunpack.c.l.b16 %v330
      %v738 = vunpack.c.l.b16 %v331
      %v739 = vunpack.c.l.b16 %v332
      %v740 = vunpack.c.l.b16 %v333
      %v741 = vunpack.c.l.b16 %v334
      %v742 = vunpack.c.l.b16 %v335
      %v743 = vunpack.c.l.b16 %v336
      %v744 = vunpack.c.l.b16 %v337
      %v745 = vunpack.c.l.b16 %v338
      %v746 = vunpack.c.l.b16 %v339
      %v747 = vunpack.c.l.b16 %v340
      %v748 = vunpack.c.l.b16 %v341
      %v749 = vunpack.c.l.b16 %v342
      %v750 = vunpack.c.l.b16 %v343
      %v751 = vpack.c.b16 %v736, %v735
      %v752 = vpack.c.b16 %v738, %v737
      %v753 = vpack.c.b16 %v740, %v739
      %v754 = vpack.c.b16 %v742, %v741
      %v755 = vpack.c.b16 %v744, %v743
      %v756 = vpack.c.b16 %v746, %v745
      %v757 = vpack.c.b16 %v748, %v747
      %v758 = vpack.c.b16 %v750, %v749
      %767 = vmatpush.bf16.msra.mxu0 %v758
      %768 = vmatpush.bf16.msra.mxu0 %v757
      %769 = vmatpush.bf16.msra.mxu0 %v756
      %770 = vmatpush.bf16.msra.mxu0 %v755
      %771 = vmatpush.bf16.msra.mxu0 %v754
      %772 = vmatpush.bf16.msra.mxu0 %v753
      %773 = vmatpush.bf16.msra.mxu0 %v752
      %774 = vmatpush.bf16.msra.mxu0 %v751
      %775 = vmatmul.bf16.gmra.mxu0 %v422
      %v776 = vpop.f32.mrf.mxu0
      %v777 = vadd.f32 %v630, %v776
      %v778 = vpop.f32.mrf.mxu0
      %v779 = vadd.f32 %v632, %v778
      %780 = vmatmul.bf16.gmra.mxu0 %v423
      %v781 = vpop.f32.mrf.mxu0
      %v782 = vadd.f32 %v635, %v781
      %v783 = vpop.f32.mrf.mxu0
      %v784 = vadd.f32 %v637, %v783
      %785 = vmatmul.bf16.gmra.mxu0 %v424
      %v786 = vpop.f32.mrf.mxu0
      %v787 = vadd.f32 %v640, %v786
      %v788 = vpop.f32.mrf.mxu0
      %v789 = vadd.f32 %v642, %v788
      %790 = vmatmul.bf16.gmra.mxu0 %v425
      %v791 = vpop.f32.mrf.mxu0
      %v792 = vadd.f32 %v645, %v791
      %v793 = vpop.f32.mrf.mxu0
      %v794 = vadd.f32 %v647, %v793
      %795 = vmatmul.bf16.gmra.mxu0 %v426
      %v796 = vpop.f32.mrf.mxu0
      %v797 = vadd.f32 %v650, %v796
      %v798 = vpop.f32.mrf.mxu0
      %v799 = vadd.f32 %v652, %v798
      %800 = vmatmul.bf16.gmra.mxu0 %v427
      %v801 = vpop.f32.mrf.mxu0
      %v802 = vadd.f32 %v655, %v801
      %v803 = vpop.f32.mrf.mxu0
      %v804 = vadd.f32 %v657, %v803
      %805 = vmatmul.bf16.gmra.mxu0 %v428
      %v806 = vpop.f32.mrf.mxu0
      %v807 = vadd.f32 %v660, %v806
      %v808 = vpop.f32.mrf.mxu0
      %v809 = vadd.f32 %v662, %v808
      %810 = vmatmul.bf16.gmra.mxu0 %v429
      %v811 = vpop.f32.mrf.mxu0
      %v812 = vadd.f32 %v665, %v811
      %v813 = vpop.f32.mrf.mxu0
      %v814 = vadd.f32 %v667, %v813
      %815 = vmatmul.bf16.gmra.mxu0 %v430
      %v816 = vpop.f32.mrf.mxu0
      %v817 = vadd.f32 %v670, %v816
      %v818 = vpop.f32.mrf.mxu0
      %v819 = vadd.f32 %v672, %v818
      %820 = vmatmul.bf16.gmra.mxu0 %v431
      %v821 = vpop.f32.mrf.mxu0
      %v822 = vadd.f32 %v675, %v821
      %v823 = vpop.f32.mrf.mxu0
      %v824 = vadd.f32 %v677, %v823
      %825 = vmatmul.bf16.gmra.mxu0 %v432
      %v826 = vpop.f32.mrf.mxu0
      %v827 = vadd.f32 %v680, %v826
      %v828 = vpop.f32.mrf.mxu0
      %v829 = vadd.f32 %v682, %v828
      %830 = vmatmul.bf16.gmra.mxu0 %v433
      %v831 = vpop.f32.mrf.mxu0
      %v832 = vadd.f32 %v685, %v831
      %v833 = vpop.f32.mrf.mxu0
      %v834 = vadd.f32 %v687, %v833
      %835 = vmatmul.bf16.gmra.mxu0 %v434
      %v836 = vpop.f32.mrf.mxu0
      %v837 = vadd.f32 %v690, %v836
      %v838 = vpop.f32.mrf.mxu0
      %v839 = vadd.f32 %v692, %v838
      %840 = vmatmul.bf16.gmra.mxu0 %v435
      %v841 = vpop.f32.mrf.mxu0
      %v842 = vadd.f32 %v695, %v841
      %v843 = vpop.f32.mrf.mxu0
      %v844 = vadd.f32 %v697, %v843
      %845 = vmatmul.bf16.gmra.mxu0 %v703
      %v846 = vpop.f32.mrf.mxu0
      %v847 = vadd.f32 %v700, %v846
      %v848 = vpop.f32.mrf.mxu0
      %849 = vdwg.mxu0
      %v850 = vld [vmem:[%s288] sm:$0xe]
      %s851 = scalar_lea.vmem %s1, 128
      %v852 = vld [vmem:[%s851] sm:$0xf]
      %v853 = vld [vmem:[%s851 + $0x4] sm:$0xf]
      %v854 = vld [vmem:[%s851 + $0x8] sm:$0xf]
      %v855 = vld [vmem:[%s851 + $0xc] sm:$0xf]
      %v856 = vld [vmem:[%s851 + $0x10] sm:$0xf]
      %v857 = vld [vmem:[%s851 + $0x14] sm:$0xf]
      %v858 = vld [vmem:[%s851 + $0x18] sm:$0xf]
      %v859 = vld [vmem:[%s851 + $0x1c] sm:$0xf]
      %v860 = vld [vmem:[%s851 + $0x20] sm:$0xf]
      %v861 = vld [vmem:[%s851 + $0x24] sm:$0xf]
      %v862 = vld [vmem:[%s851 + $0x28] sm:$0xf]
      %v863 = vld [vmem:[%s851 + $0x2c] sm:$0xf]
      %v864 = vld [vmem:[%s851 + $0x30] sm:$0xf]
      %v865 = vld [vmem:[%s851 + $0x34] sm:$0xf]
      %v866 = vld [vmem:[%s851 + $0x38] sm:$0xf]
      %v867 = vld [vmem:[%s851 + $0x3c] sm:$0xf]
      %v869 = vunpack.c.l.b16 %v850
      %v870 = vpack.c.b16 %v393, %v869
      %vm871 = vcmask 1046528
      %v872 = vrot.slane %v870, 1
      %v873 = vrot.slane %v423, 1
      %v874 = vsel %vm871, %v872, %v873
      %v875 = vrot.slane %v424, 1
      %v876 = vsel %vm871, %v873, %v875
      %v877 = vrot.slane %v425, 1
      %v878 = vsel %vm871, %v875, %v877
      %v879 = vrot.slane %v426, 1
      %v880 = vsel %vm871, %v877, %v879
      %v881 = vrot.slane %v427, 1
      %v882 = vsel %vm871, %v879, %v881
      %v883 = vrot.slane %v428, 1
      %v884 = vsel %vm871, %v881, %v883
      %v885 = vrot.slane %v429, 1
      %v886 = vsel %vm871, %v883, %v885
      %v887 = vrot.slane %v430, 1
      %v888 = vsel %vm871, %v885, %v887
      %v889 = vrot.slane %v431, 1
      %v890 = vsel %vm871, %v887, %v889
      %v891 = vrot.slane %v432, 1
      %v892 = vsel %vm871, %v889, %v891
      %v893 = vrot.slane %v433, 1
      %v894 = vsel %vm871, %v891, %v893
      %v895 = vrot.slane %v434, 1
      %v896 = vsel %vm871, %v893, %v895
      %v897 = vrot.slane %v435, 1
      %v898 = vsel %vm871, %v895, %v897
      %v899 = vrot.slane %v436, 1
      %v900 = vsel %vm871, %v897, %v899
      %v932 = vunpack.c.l.b16 %v852
      %v933 = vunpack.c.l.b16 %v853
      %v934 = vunpack.c.l.b16 %v854
      %v935 = vunpack.c.l.b16 %v855
      %v936 = vunpack.c.l.b16 %v856
      %v937 = vunpack.c.l.b16 %v857
      %v938 = vunpack.c.l.b16 %v858
      %v939 = vunpack.c.l.b16 %v859
      %v940 = vunpack.c.l.b16 %v860
      %v941 = vunpack.c.l.b16 %v861
      %v942 = vunpack.c.l.b16 %v862
      %v943 = vunpack.c.l.b16 %v863
      %v944 = vunpack.c.l.b16 %v864
      %v945 = vunpack.c.l.b16 %v865
      %v946 = vunpack.c.l.b16 %v866
      %v947 = vunpack.c.l.b16 %v867
      %v948 = vpack.c.b16 %v933, %v932
      %v949 = vpack.c.b16 %v935, %v934
      %v950 = vpack.c.b16 %v937, %v936
      %v951 = vpack.c.b16 %v939, %v938
      %v952 = vpack.c.b16 %v941, %v940
      %v953 = vpack.c.b16 %v943, %v942
      %v954 = vpack.c.b16 %v945, %v944
      %v955 = vpack.c.b16 %v947, %v946
      %964 = vmatpush.bf16.msra.mxu0 %v955
      %965 = vmatpush.bf16.msra.mxu0 %v954
      %966 = vmatpush.bf16.msra.mxu0 %v953
      %967 = vmatpush.bf16.msra.mxu0 %v952
      %968 = vmatpush.bf16.msra.mxu0 %v951
      %969 = vmatpush.bf16.msra.mxu0 %v950
      %970 = vmatpush.bf16.msra.mxu0 %v949
      %971 = vmatpush.bf16.msra.mxu0 %v948
      %972 = vmatmul.bf16.gmra.mxu0 %v874
      %v973 = vpop.f32.mrf.mxu0
      %v974 = vadd.f32 0.0, %v973
      %v975 = vpop.f32.mrf.mxu0
      %v976 = vadd.f32 0.0, %v975
      %977 = vmatmul.bf16.gmra.mxu0 %v876
      %v978 = vpop.f32.mrf.mxu0
      %v979 = vadd.f32 0.0, %v978
      %v980 = vpop.f32.mrf.mxu0
      %v981 = vadd.f32 0.0, %v980
      %982 = vmatmul.bf16.gmra.mxu0 %v878
      %v983 = vpop.f32.mrf.mxu0
      %v984 = vadd.f32 0.0, %v983
      %v985 = vpop.f32.mrf.mxu0
      %v986 = vadd.f32 0.0, %v985
      %987 = vmatmul.bf16.gmra.mxu0 %v880
      %v988 = vpop.f32.mrf.mxu0
      %v989 = vadd.f32 0.0, %v988
      %v990 = vpop.f32.mrf.mxu0
      %v991 = vadd.f32 0.0, %v990
      %992 = vmatmul.bf16.gmra.mxu0 %v882
      %v993 = vpop.f32.mrf.mxu0
      %v994 = vadd.f32 0.0, %v993
      %v995 = vpop.f32.mrf.mxu0
      %v996 = vadd.f32 0.0, %v995
      %997 = vmatmul.bf16.gmra.mxu0 %v884
      %v998 = vpop.f32.mrf.mxu0
      %v999 = vadd.f32 0.0, %v998
      %v1000 = vpop.f32.mrf.mxu0
      %v1001 = vadd.f32 0.0, %v1000
      %1002 = vmatmul.bf16.gmra.mxu0 %v886
      %v1003 = vpop.f32.mrf.mxu0
      %v1004 = vadd.f32 0.0, %v1003
      %v1005 = vpop.f32.mrf.mxu0
      %v1006 = vadd.f32 0.0, %v1005
      %1007 = vmatmul.bf16.gmra.mxu0 %v888
      %v1008 = vpop.f32.mrf.mxu0
      %v1009 = vadd.f32 0.0, %v1008
      %v1010 = vpop.f32.mrf.mxu0
      %v1011 = vadd.f32 0.0, %v1010
      %1012 = vmatmul.bf16.gmra.mxu0 %v890
      %v1013 = vpop.f32.mrf.mxu0
      %v1014 = vadd.f32 0.0, %v1013
      %v1015 = vpop.f32.mrf.mxu0
      %v1016 = vadd.f32 0.0, %v1015
      %1017 = vmatmul.bf16.gmra.mxu0 %v892
      %v1018 = vpop.f32.mrf.mxu0
      %v1019 = vadd.f32 0.0, %v1018
      %v1020 = vpop.f32.mrf.mxu0
      %v1021 = vadd.f32 0.0, %v1020
      %1022 = vmatmul.bf16.gmra.mxu0 %v894
      %v1023 = vpop.f32.mrf.mxu0
      %v1024 = vadd.f32 0.0, %v1023
      %v1025 = vpop.f32.mrf.mxu0
      %v1026 = vadd.f32 0.0, %v1025
      %1027 = vmatmul.bf16.gmra.mxu0 %v896
      %v1028 = vpop.f32.mrf.mxu0
      %v1029 = vadd.f32 0.0, %v1028
      %v1030 = vpop.f32.mrf.mxu0
      %v1031 = vadd.f32 0.0, %v1030
      %1032 = vmatmul.bf16.gmra.mxu0 %v898
      %v1033 = vpop.f32.mrf.mxu0
      %v1034 = vadd.f32 0.0, %v1033
      %v1035 = vpop.f32.mrf.mxu0
      %v1036 = vadd.f32 0.0, %v1035
      %1037 = vmatmul.bf16.gmra.mxu0 %v900
      %v1038 = vpop.f32.mrf.mxu0
      %v1039 = vadd.f32 0.0, %v1038
      %v1040 = vpop.f32.mrf.mxu0
      %v1041 = vadd.f32 0.0, %v1040
      %1042 = vmatmul.bf16.gmra.mxu0 %v899
      %v1043 = vpop.f32.mrf.mxu0
      %v1044 = vadd.f32 0.0, %v1043
      %v1045 = vpop.f32.mrf.mxu0
      %1046 = vdwg.mxu0
      %v1047 = vadd.f32 %v777, %v974
      %v1048 = vadd.f32 %v779, %v976
      %v1049 = vadd.f32 %v782, %v979
      %v1050 = vadd.f32 %v784, %v981
      %v1051 = vadd.f32 %v787, %v984
      %v1052 = vadd.f32 %v789, %v986
      %v1053 = vadd.f32 %v792, %v989
      %v1054 = vadd.f32 %v794, %v991
      %v1055 = vadd.f32 %v797, %v994
      %v1056 = vadd.f32 %v799, %v996
      %v1057 = vadd.f32 %v802, %v999
      %v1058 = vadd.f32 %v804, %v1001
      %v1059 = vadd.f32 %v807, %v1004
      %v1060 = vadd.f32 %v809, %v1006
      %v1061 = vadd.f32 %v812, %v1009
      %v1062 = vadd.f32 %v814, %v1011
      %v1063 = vadd.f32 %v817, %v1014
      %v1064 = vadd.f32 %v819, %v1016
      %v1065 = vadd.f32 %v822, %v1019
      %v1066 = vadd.f32 %v824, %v1021
      %v1067 = vadd.f32 %v827, %v1024
      %v1068 = vadd.f32 %v829, %v1026
      %v1069 = vadd.f32 %v832, %v1029
      %v1070 = vadd.f32 %v834, %v1031
      %v1071 = vadd.f32 %v837, %v1034
      %v1072 = vadd.f32 %v839, %v1036
      %v1073 = vadd.f32 %v842, %v1039
      %v1074 = vadd.f32 %v844, %v1041
      %v1075 = vadd.f32 %v847, %v1044
      %v1076 = vld [vmem:[%s288 + $0x8] sm:$0xf]
      %v1077 = vld [vmem:[%s288 + $0xc] sm:$0xf]
      %v1078 = vld [vmem:[%s288 + $0x10] sm:$0xf]
      %v1079 = vld [vmem:[%s288 + $0x14] sm:$0xf]
      %v1080 = vld [vmem:[%s288 + $0x18] sm:$0xf]
      %v1081 = vld [vmem:[%s288 + $0x1c] sm:$0xf]
      %v1082 = vld [vmem:[%s288 + $0x20] sm:$0xf]
      %v1083 = vld [vmem:[%s288 + $0x24] sm:$0xf]
      %v1084 = vld [vmem:[%s288 + $0x28] sm:$0xf]
      %v1085 = vld [vmem:[%s288 + $0x2c] sm:$0xf]
      %v1086 = vld [vmem:[%s288 + $0x30] sm:$0xf]
      %v1087 = vld [vmem:[%s288 + $0x34] sm:$0xf]
      %v1088 = vld [vmem:[%s288 + $0x38] sm:$0xf]
      %v1089 = vld [vmem:[%s288 + $0x3c] sm:$0xf]
      %v1090 = vld [vmem:[%s288 + $0x40] sm:$0xf]
      %v1091 = vld [vmem:[%s288 + $0x44] sm:$0xf]
      %v1092 = vld [vmem:[%s288 + $0x48] sm:$0xf]
      %v1093 = vld [vmem:[%s288 + $0x4c] sm:$0xf]
      %v1094 = vld [vmem:[%s288 + $0x50] sm:$0xf]
      %v1095 = vld [vmem:[%s288 + $0x54] sm:$0xf]
      %v1096 = vld [vmem:[%s288 + $0x58] sm:$0xf]
      %v1097 = vld [vmem:[%s288 + $0x5c] sm:$0xf]
      %v1098 = vld [vmem:[%s288 + $0x60] sm:$0xf]
      %v1099 = vld [vmem:[%s288 + $0x64] sm:$0xf]
      %v1100 = vld [vmem:[%s288 + $0x68] sm:$0xf]
      %v1101 = vld [vmem:[%s288 + $0x6c] sm:$0xf]
      %v1102 = vld [vmem:[%s288 + $0x70] sm:$0xf]
      %v1103 = vld [vmem:[%s288 + $0x74] sm:$0xf]
      %v1104 = vld [vmem:[%s288 + $0x78] sm:$0xf]
      %s1105 = scalar_lea.vmem %s1, 192
      %v1106 = vld [vmem:[%s1105] sm:$0xf]
      %v1107 = vld [vmem:[%s1105 + $0x4] sm:$0xf]
      %v1108 = vld [vmem:[%s1105 + $0x8] sm:$0xf]
      %v1109 = vld [vmem:[%s1105 + $0xc] sm:$0xf]
      %v1110 = vld [vmem:[%s1105 + $0x10] sm:$0xf]
      %v1111 = vld [vmem:[%s1105 + $0x14] sm:$0xf]
      %v1112 = vld [vmem:[%s1105 + $0x18] sm:$0xf]
      %v1113 = vld [vmem:[%s1105 + $0x1c] sm:$0xf]
      %v1114 = vld [vmem:[%s1105 + $0x20] sm:$0xf]
      %v1115 = vld [vmem:[%s1105 + $0x24] sm:$0xf]
      %v1116 = vld [vmem:[%s1105 + $0x28] sm:$0xf]
      %v1117 = vld [vmem:[%s1105 + $0x2c] sm:$0xf]
      %v1118 = vld [vmem:[%s1105 + $0x30] sm:$0xf]
      %v1119 = vld [vmem:[%s1105 + $0x34] sm:$0xf]
      %v1120 = vld [vmem:[%s1105 + $0x38] sm:$0xf]
      %v1121 = vld [vmem:[%s1105 + $0x3c] sm:$0xf]
      %v1151 = vunpack.c.l.b16 %v1076
      %v1152 = vunpack.c.l.b16 %v1077
      %v1153 = vunpack.c.l.b16 %v1078
      %v1154 = vunpack.c.l.b16 %v1079
      %v1155 = vunpack.c.l.b16 %v1080
      %v1156 = vunpack.c.l.b16 %v1081
      %v1157 = vunpack.c.l.b16 %v1082
      %v1158 = vunpack.c.l.b16 %v1083
      %v1159 = vunpack.c.l.b16 %v1084
      %v1160 = vunpack.c.l.b16 %v1085
      %v1161 = vunpack.c.l.b16 %v1086
      %v1162 = vunpack.c.l.b16 %v1087
      %v1163 = vunpack.c.l.b16 %v1088
      %v1164 = vunpack.c.l.b16 %v1089
      %v1165 = vunpack.c.l.b16 %v1090
      %v1166 = vunpack.c.l.b16 %v1091
      %v1167 = vunpack.c.l.b16 %v1092
      %v1168 = vunpack.c.l.b16 %v1093
      %v1169 = vunpack.c.l.b16 %v1094
      %v1170 = vunpack.c.l.b16 %v1095
      %v1171 = vunpack.c.l.b16 %v1096
      %v1172 = vunpack.c.l.b16 %v1097
      %v1173 = vunpack.c.l.b16 %v1098
      %v1174 = vunpack.c.l.b16 %v1099
      %v1175 = vunpack.c.l.b16 %v1100
      %v1176 = vunpack.c.l.b16 %v1101
      %v1177 = vunpack.c.l.b16 %v1102
      %v1178 = vunpack.c.l.b16 %v1103
      %v1179 = vunpack.c.l.b16 %v1104
      %v1180 = vpack.c.b16 %v1152, %v1151
      %v1181 = vpack.c.b16 %v1154, %v1153
      %v1182 = vpack.c.b16 %v1156, %v1155
      %v1183 = vpack.c.b16 %v1158, %v1157
      %v1184 = vpack.c.b16 %v1160, %v1159
      %v1185 = vpack.c.b16 %v1162, %v1161
      %v1186 = vpack.c.b16 %v1164, %v1163
      %v1187 = vpack.c.b16 %v1166, %v1165
      %v1188 = vpack.c.b16 %v1168, %v1167
      %v1189 = vpack.c.b16 %v1170, %v1169
      %v1190 = vpack.c.b16 %v1172, %v1171
      %v1191 = vpack.c.b16 %v1174, %v1173
      %v1192 = vpack.c.b16 %v1176, %v1175
      %v1193 = vpack.c.b16 %v1178, %v1177
      %v1194 = vpack.c.b16 %v1179, %v1179
      %v1226 = vunpack.c.l.b16 %v1106
      %v1227 = vunpack.c.l.b16 %v1107
      %v1228 = vunpack.c.l.b16 %v1108
      %v1229 = vunpack.c.l.b16 %v1109
      %v1230 = vunpack.c.l.b16 %v1110
      %v1231 = vunpack.c.l.b16 %v1111
      %v1232 = vunpack.c.l.b16 %v1112
      %v1233 = vunpack.c.l.b16 %v1113
      %v1234 = vunpack.c.l.b16 %v1114
      %v1235 = vunpack.c.l.b16 %v1115
      %v1236 = vunpack.c.l.b16 %v1116
      %v1237 = vunpack.c.l.b16 %v1117
      %v1238 = vunpack.c.l.b16 %v1118
      %v1239 = vunpack.c.l.b16 %v1119
      %v1240 = vunpack.c.l.b16 %v1120
      %v1241 = vunpack.c.l.b16 %v1121
      %v1242 = vpack.c.b16 %v1227, %v1226
      %v1243 = vpack.c.b16 %v1229, %v1228
      %v1244 = vpack.c.b16 %v1231, %v1230
      %v1245 = vpack.c.b16 %v1233, %v1232
      %v1246 = vpack.c.b16 %v1235, %v1234
      %v1247 = vpack.c.b16 %v1237, %v1236
      %v1248 = vpack.c.b16 %v1239, %v1238
      %v1249 = vpack.c.b16 %v1241, %v1240
      %1258 = vmatpush.bf16.msra.mxu0 %v1249
      %1259 = vmatpush.bf16.msra.mxu0 %v1248
      %1260 = vmatpush.bf16.msra.mxu0 %v1247
      %1261 = vmatpush.bf16.msra.mxu0 %v1246
      %1262 = vmatpush.bf16.msra.mxu0 %v1245
      %1263 = vmatpush.bf16.msra.mxu0 %v1244
      %1264 = vmatpush.bf16.msra.mxu0 %v1243
      %1265 = vmatpush.bf16.msra.mxu0 %v1242
      %1266 = vmatmul.bf16.gmra.mxu0 %v1180
      %v1267 = vpop.f32.mrf.mxu0
      %v1268 = vadd.f32 0.0, %v1267
      %v1269 = vpop.f32.mrf.mxu0
      %v1270 = vadd.f32 0.0, %v1269
      %1271 = vmatmul.bf16.gmra.mxu0 %v1181
      %v1272 = vpop.f32.mrf.mxu0
      %v1273 = vadd.f32 0.0, %v1272
      %v1274 = vpop.f32.mrf.mxu0
      %v1275 = vadd.f32 0.0, %v1274
      %1276 = vmatmul.bf16.gmra.mxu0 %v1182
      %v1277 = vpop.f32.mrf.mxu0
      %v1278 = vadd.f32 0.0, %v1277
      %v1279 = vpop.f32.mrf.mxu0
      %v1280 = vadd.f32 0.0, %v1279
      %1281 = vmatmul.bf16.gmra.mxu0 %v1183
      %v1282 = vpop.f32.mrf.mxu0
      %v1283 = vadd.f32 0.0, %v1282
      %v1284 = vpop.f32.mrf.mxu0
      %v1285 = vadd.f32 0.0, %v1284
      %1286 = vmatmul.bf16.gmra.mxu0 %v1184
      %v1287 = vpop.f32.mrf.mxu0
      %v1288 = vadd.f32 0.0, %v1287
      %v1289 = vpop.f32.mrf.mxu0
      %v1290 = vadd.f32 0.0, %v1289
      %1291 = vmatmul.bf16.gmra.mxu0 %v1185
      %v1292 = vpop.f32.mrf.mxu0
      %v1293 = vadd.f32 0.0, %v1292
      %v1294 = vpop.f32.mrf.mxu0
      %v1295 = vadd.f32 0.0, %v1294
      %1296 = vmatmul.bf16.gmra.mxu0 %v1186
      %v1297 = vpop.f32.mrf.mxu0
      %v1298 = vadd.f32 0.0, %v1297
      %v1299 = vpop.f32.mrf.mxu0
      %v1300 = vadd.f32 0.0, %v1299
      %1301 = vmatmul.bf16.gmra.mxu0 %v1187
      %v1302 = vpop.f32.mrf.mxu0
      %v1303 = vadd.f32 0.0, %v1302
      %v1304 = vpop.f32.mrf.mxu0
      %v1305 = vadd.f32 0.0, %v1304
      %1306 = vmatmul.bf16.gmra.mxu0 %v1188
      %v1307 = vpop.f32.mrf.mxu0
      %v1308 = vadd.f32 0.0, %v1307
      %v1309 = vpop.f32.mrf.mxu0
      %v1310 = vadd.f32 0.0, %v1309
      %1311 = vmatmul.bf16.gmra.mxu0 %v1189
      %v1312 = vpop.f32.mrf.mxu0
      %v1313 = vadd.f32 0.0, %v1312
      %v1314 = vpop.f32.mrf.mxu0
      %v1315 = vadd.f32 0.0, %v1314
      %1316 = vmatmul.bf16.gmra.mxu0 %v1190
      %v1317 = vpop.f32.mrf.mxu0
      %v1318 = vadd.f32 0.0, %v1317
      %v1319 = vpop.f32.mrf.mxu0
      %v1320 = vadd.f32 0.0, %v1319
      %1321 = vmatmul.bf16.gmra.mxu0 %v1191
      %v1322 = vpop.f32.mrf.mxu0
      %v1323 = vadd.f32 0.0, %v1322
      %v1324 = vpop.f32.mrf.mxu0
      %v1325 = vadd.f32 0.0, %v1324
      %1326 = vmatmul.bf16.gmra.mxu0 %v1192
      %v1327 = vpop.f32.mrf.mxu0
      %v1328 = vadd.f32 0.0, %v1327
      %v1329 = vpop.f32.mrf.mxu0
      %v1330 = vadd.f32 0.0, %v1329
      %1331 = vmatmul.bf16.gmra.mxu0 %v1193
      %v1332 = vpop.f32.mrf.mxu0
      %v1333 = vadd.f32 0.0, %v1332
      %v1334 = vpop.f32.mrf.mxu0
      %v1335 = vadd.f32 0.0, %v1334
      %1336 = vmatmul.bf16.gmra.mxu0 %v1194
      %v1337 = vpop.f32.mrf.mxu0
      %v1338 = vadd.f32 0.0, %v1337
      %v1339 = vpop.f32.mrf.mxu0
      %1340 = vdwg.mxu0
      %v1341 = vadd.f32 %v1047, %v1268
      %v1342 = vadd.f32 %v1048, %v1270
      %v1343 = vadd.f32 %v1049, %v1273
      %v1344 = vadd.f32 %v1050, %v1275
      %v1345 = vadd.f32 %v1051, %v1278
      %v1346 = vadd.f32 %v1052, %v1280
      %v1347 = vadd.f32 %v1053, %v1283
      %v1348 = vadd.f32 %v1054, %v1285
      %v1349 = vadd.f32 %v1055, %v1288
      %v1350 = vadd.f32 %v1056, %v1290
      %v1351 = vadd.f32 %v1057, %v1293
      %v1352 = vadd.f32 %v1058, %v1295
      %v1353 = vadd.f32 %v1059, %v1298
      %v1354 = vadd.f32 %v1060, %v1300
      %v1355 = vadd.f32 %v1061, %v1303
      %v1356 = vadd.f32 %v1062, %v1305
      %v1357 = vadd.f32 %v1063, %v1308
      %v1358 = vadd.f32 %v1064, %v1310
      %v1359 = vadd.f32 %v1065, %v1313
      %v1360 = vadd.f32 %v1066, %v1315
      %v1361 = vadd.f32 %v1067, %v1318
      %v1362 = vadd.f32 %v1068, %v1320
      %v1363 = vadd.f32 %v1069, %v1323
      %v1364 = vadd.f32 %v1070, %v1325
      %v1365 = vadd.f32 %v1071, %v1328
      %v1366 = vadd.f32 %v1072, %v1330
      %v1367 = vadd.f32 %v1073, %v1333
      %v1368 = vadd.f32 %v1074, %v1335
      %v1369 = vadd.f32 %v1075, %v1338
      %v1370 = vld [vmem:[%s288 + $0x8] sm:$0xf]
      %v1371 = vld [vmem:[%s288 + $0xc] sm:$0xf]
      %v1372 = vld [vmem:[%s288 + $0x10] sm:$0xf]
      %v1373 = vld [vmem:[%s288 + $0x14] sm:$0xf]
      %v1374 = vld [vmem:[%s288 + $0x18] sm:$0xf]
      %v1375 = vld [vmem:[%s288 + $0x1c] sm:$0xf]
      %v1376 = vld [vmem:[%s288 + $0x20] sm:$0xf]
      %v1377 = vld [vmem:[%s288 + $0x24] sm:$0xf]
      %v1378 = vld [vmem:[%s288 + $0x28] sm:$0xf]
      %v1379 = vld [vmem:[%s288 + $0x2c] sm:$0xf]
      %v1380 = vld [vmem:[%s288 + $0x30] sm:$0xf]
      %v1381 = vld [vmem:[%s288 + $0x34] sm:$0xf]
      %v1382 = vld [vmem:[%s288 + $0x38] sm:$0xf]
      %v1383 = vld [vmem:[%s288 + $0x3c] sm:$0xf]
      %v1384 = vld [vmem:[%s288 + $0x40] sm:$0xf]
      %v1385 = vld [vmem:[%s288 + $0x44] sm:$0xf]
      %v1386 = vld [vmem:[%s288 + $0x48] sm:$0xf]
      %v1387 = vld [vmem:[%s288 + $0x4c] sm:$0xf]
      %v1388 = vld [vmem:[%s288 + $0x50] sm:$0xf]
      %v1389 = vld [vmem:[%s288 + $0x54] sm:$0xf]
      %v1390 = vld [vmem:[%s288 + $0x58] sm:$0xf]
      %v1391 = vld [vmem:[%s288 + $0x5c] sm:$0xf]
      %v1392 = vld [vmem:[%s288 + $0x60] sm:$0xf]
      %v1393 = vld [vmem:[%s288 + $0x64] sm:$0xf]
      %v1394 = vld [vmem:[%s288 + $0x68] sm:$0xf]
      %v1395 = vld [vmem:[%s288 + $0x6c] sm:$0xf]
      %v1396 = vld [vmem:[%s288 + $0x70] sm:$0xf]
      %v1397 = vld [vmem:[%s288 + $0x74] sm:$0xf]
      %v1398 = vld [vmem:[%s288 + $0x78] sm:$0xf]
      %v1399 = vld [vmem:[%s288 + $0x7c] sm:$0x1]
      %s1400 = scalar_lea.vmem %s1, 256
      %v1401 = vld [vmem:[%s1400] sm:$0xf]
      %v1402 = vld [vmem:[%s1400 + $0x4] sm:$0xf]
      %v1403 = vld [vmem:[%s1400 + $0x8] sm:$0xf]
      %v1404 = vld [vmem:[%s1400 + $0xc] sm:$0xf]
      %v1405 = vld [vmem:[%s1400 + $0x10] sm:$0xf]
      %v1406 = vld [vmem:[%s1400 + $0x14] sm:$0xf]
      %v1407 = vld [vmem:[%s1400 + $0x18] sm:$0xf]
      %v1408 = vld [vmem:[%s1400 + $0x1c] sm:$0xf]
      %v1409 = vld [vmem:[%s1400 + $0x20] sm:$0xf]
      %v1410 = vld [vmem:[%s1400 + $0x24] sm:$0xf]
      %v1411 = vld [vmem:[%s1400 + $0x28] sm:$0xf]
      %v1412 = vld [vmem:[%s1400 + $0x2c] sm:$0xf]
      %v1413 = vld [vmem:[%s1400 + $0x30] sm:$0xf]
      %v1414 = vld [vmem:[%s1400 + $0x34] sm:$0xf]
      %v1415 = vld [vmem:[%s1400 + $0x38] sm:$0xf]
      %v1416 = vld [vmem:[%s1400 + $0x3c] sm:$0xf]
      %v1447 = vunpack.c.l.b16 %v1370
      %v1448 = vunpack.c.l.b16 %v1371
      %v1449 = vunpack.c.l.b16 %v1372
      %v1450 = vunpack.c.l.b16 %v1373
      %v1451 = vunpack.c.l.b16 %v1374
      %v1452 = vunpack.c.l.b16 %v1375
      %v1453 = vunpack.c.l.b16 %v1376
      %v1454 = vunpack.c.l.b16 %v1377
      %v1455 = vunpack.c.l.b16 %v1378
      %v1456 = vunpack.c.l.b16 %v1379
      %v1457 = vunpack.c.l.b16 %v1380
      %v1458 = vunpack.c.l.b16 %v1381
      %v1459 = vunpack.c.l.b16 %v1382
      %v1460 = vunpack.c.l.b16 %v1383
      %v1461 = vunpack.c.l.b16 %v1384
      %v1462 = vunpack.c.l.b16 %v1385
      %v1463 = vunpack.c.l.b16 %v1386
      %v1464 = vunpack.c.l.b16 %v1387
      %v1465 = vunpack.c.l.b16 %v1388
      %v1466 = vunpack.c.l.b16 %v1389
      %v1467 = vunpack.c.l.b16 %v1390
      %v1468 = vunpack.c.l.b16 %v1391
      %v1469 = vunpack.c.l.b16 %v1392
      %v1470 = vunpack.c.l.b16 %v1393
      %v1471 = vunpack.c.l.b16 %v1394
      %v1472 = vunpack.c.l.b16 %v1395
      %v1473 = vunpack.c.l.b16 %v1396
      %v1474 = vunpack.c.l.b16 %v1397
      %v1475 = vunpack.c.l.b16 %v1398
      %v1476 = vunpack.c.l.b16 %v1399
      %v1477 = vpack.c.b16 %v1448, %v1447
      %v1478 = vpack.c.b16 %v1450, %v1449
      %v1479 = vpack.c.b16 %v1452, %v1451
      %v1480 = vpack.c.b16 %v1454, %v1453
      %v1481 = vpack.c.b16 %v1456, %v1455
      %v1482 = vpack.c.b16 %v1458, %v1457
      %v1483 = vpack.c.b16 %v1460, %v1459
      %v1484 = vpack.c.b16 %v1462, %v1461
      %v1485 = vpack.c.b16 %v1464, %v1463
      %v1486 = vpack.c.b16 %v1466, %v1465
      %v1487 = vpack.c.b16 %v1468, %v1467
      %v1488 = vpack.c.b16 %v1470, %v1469
      %v1489 = vpack.c.b16 %v1472, %v1471
      %v1490 = vpack.c.b16 %v1474, %v1473
      %v1491 = vpack.c.b16 %v1476, %v1475
      %v1493 = vshrl.u32 %v1477, 16
      %v1495 = vshll.u32 %v1477, 16
      %v1497 = vrot.slane %v1495, 1
      %v1498 = vor.u32 %v1493, %v1497
      %v1500 = vshll.u32 %v1478, 16
      %v1502 = vrot.slane %v1500, 1
      %v1503 = vsel %vm437, %v1498, %v1502
      %v1504 = vshrl.u32 %v1478, 16
      %v1506 = vor.u32 %v1504, %v1502
      %v1508 = vshll.u32 %v1479, 16
      %v1510 = vrot.slane %v1508, 1
      %v1511 = vsel %vm437, %v1506, %v1510
      %v1512 = vshrl.u32 %v1479, 16
      %v1514 = vor.u32 %v1512, %v1510
      %v1516 = vshll.u32 %v1480, 16
      %v1518 = vrot.slane %v1516, 1
      %v1519 = vsel %vm437, %v1514, %v1518
      %v1520 = vshrl.u32 %v1480, 16
      %v1522 = vor.u32 %v1520, %v1518
      %v1524 = vshll.u32 %v1481, 16
      %v1526 = vrot.slane %v1524, 1
      %v1527 = vsel %vm437, %v1522, %v1526
      %v1528 = vshrl.u32 %v1481, 16
      %v1530 = vor.u32 %v1528, %v1526
      %v1532 = vshll.u32 %v1482, 16
      %v1534 = vrot.slane %v1532, 1
      %v1535 = vsel %vm437, %v1530, %v1534
      %v1536 = vshrl.u32 %v1482, 16
      %v1538 = vor.u32 %v1536, %v1534
      %v1540 = vshll.u32 %v1483, 16
      %v1542 = vrot.slane %v1540, 1
      %v1543 = vsel %vm437, %v1538, %v1542
      %v1544 = vshrl.u32 %v1483, 16
      %v1546 = vor.u32 %v1544, %v1542
      %v1548 = vshll.u32 %v1484, 16
      %v1550 = vrot.slane %v1548, 1
      %v1551 = vsel %vm437, %v1546, %v1550
      %v1552 = vshrl.u32 %v1484, 16
      %v1554 = vor.u32 %v1552, %v1550
      %v1556 = vshll.u32 %v1485, 16
      %v1558 = vrot.slane %v1556, 1
      %v1559 = vsel %vm437, %v1554, %v1558
      %v1560 = vshrl.u32 %v1485, 16
      %v1562 = vor.u32 %v1560, %v1558
      %v1564 = vshll.u32 %v1486, 16
      %v1566 = vrot.slane %v1564, 1
      %v1567 = vsel %vm437, %v1562, %v1566
      %v1568 = vshrl.u32 %v1486, 16
      %v1570 = vor.u32 %v1568, %v1566
      %v1572 = vshll.u32 %v1487, 16
      %v1574 = vrot.slane %v1572, 1
      %v1575 = vsel %vm437, %v1570, %v1574
      %v1576 = vshrl.u32 %v1487, 16
      %v1578 = vor.u32 %v1576, %v1574
      %v1580 = vshll.u32 %v1488, 16
      %v1582 = vrot.slane %v1580, 1
      %v1583 = vsel %vm437, %v1578, %v1582
      %v1584 = vshrl.u32 %v1488, 16
      %v1586 = vor.u32 %v1584, %v1582
      %v1588 = vshll.u32 %v1489, 16
      %v1590 = vrot.slane %v1588, 1
      %v1591 = vsel %vm437, %v1586, %v1590
      %v1592 = vshrl.u32 %v1489, 16
      %v1594 = vor.u32 %v1592, %v1590
      %v1596 = vshll.u32 %v1490, 16
      %v1598 = vrot.slane %v1596, 1
      %v1599 = vsel %vm437, %v1594, %v1598
      %v1600 = vshrl.u32 %v1490, 16
      %v1602 = vor.u32 %v1600, %v1598
      %v1604 = vshll.u32 %v1491, 16
      %v1606 = vrot.slane %v1604, 1
      %v1607 = vsel %vm437, %v1602, %v1606
      %v1608 = vshrl.u32 %v1491, 16
      %v1610 = vor.u32 %v1608, %v1606
      %v1642 = vunpack.c.l.b16 %v1401
      %v1643 = vunpack.c.l.b16 %v1402
      %v1644 = vunpack.c.l.b16 %v1403
      %v1645 = vunpack.c.l.b16 %v1404
      %v1646 = vunpack.c.l.b16 %v1405
      %v1647 = vunpack.c.l.b16 %v1406
      %v1648 = vunpack.c.l.b16 %v1407
      %v1649 = vunpack.c.l.b16 %v1408
      %v1650 = vunpack.c.l.b16 %v1409
      %v1651 = vunpack.c.l.b16 %v1410
      %v1652 = vunpack.c.l.b16 %v1411
      %v1653 = vunpack.c.l.b16 %v1412
      %v1654 = vunpack.c.l.b16 %v1413
      %v1655 = vunpack.c.l.b16 %v1414
      %v1656 = vunpack.c.l.b16 %v1415
      %v1657 = vunpack.c.l.b16 %v1416
      %v1658 = vpack.c.b16 %v1643, %v1642
      %v1659 = vpack.c.b16 %v1645, %v1644
      %v1660 = vpack.c.b16 %v1647, %v1646
      %v1661 = vpack.c.b16 %v1649, %v1648
      %v1662 = vpack.c.b16 %v1651, %v1650
      %v1663 = vpack.c.b16 %v1653, %v1652
      %v1664 = vpack.c.b16 %v1655, %v1654
      %v1665 = vpack.c.b16 %v1657, %v1656
      %1674 = vmatpush.bf16.msra.mxu0 %v1665
      %1675 = vmatpush.bf16.msra.mxu0 %v1664
      %1676 = vmatpush.bf16.msra.mxu0 %v1663
      %1677 = vmatpush.bf16.msra.mxu0 %v1662
      %1678 = vmatpush.bf16.msra.mxu0 %v1661
      %1679 = vmatpush.bf16.msra.mxu0 %v1660
      %1680 = vmatpush.bf16.msra.mxu0 %v1659
      %1681 = vmatpush.bf16.msra.mxu0 %v1658
      %1682 = vmatmul.bf16.gmra.mxu0 %v1503
      %v1683 = vpop.f32.mrf.mxu0
      %v1684 = vadd.f32 0.0, %v1683
      %v1685 = vpop.f32.mrf.mxu0
      %v1686 = vadd.f32 0.0, %v1685
      %1687 = vmatmul.bf16.gmra.mxu0 %v1511
      %v1688 = vpop.f32.mrf.mxu0
      %v1689 = vadd.f32 0.0, %v1688
      %v1690 = vpop.f32.mrf.mxu0
      %v1691 = vadd.f32 0.0, %v1690
      %1692 = vmatmul.bf16.gmra.mxu0 %v1519
      %v1693 = vpop.f32.mrf.mxu0
      %v1694 = vadd.f32 0.0, %v1693
      %v1695 = vpop.f32.mrf.mxu0
      %v1696 = vadd.f32 0.0, %v1695
      %1697 = vmatmul.bf16.gmra.mxu0 %v1527
      %v1698 = vpop.f32.mrf.mxu0
      %v1699 = vadd.f32 0.0, %v1698
      %v1700 = vpop.f32.mrf.mxu0
      %v1701 = vadd.f32 0.0, %v1700
      %1702 = vmatmul.bf16.gmra.mxu0 %v1535
      %v1703 = vpop.f32.mrf.mxu0
      %v1704 = vadd.f32 0.0, %v1703
      %v1705 = vpop.f32.mrf.mxu0
      %v1706 = vadd.f32 0.0, %v1705
      %1707 = vmatmul.bf16.gmra.mxu0 %v1543
      %v1708 = vpop.f32.mrf.mxu0
      %v1709 = vadd.f32 0.0, %v1708
      %v1710 = vpop.f32.mrf.mxu0
      %v1711 = vadd.f32 0.0, %v1710
      %1712 = vmatmul.bf16.gmra.mxu0 %v1551
      %v1713 = vpop.f32.mrf.mxu0
      %v1714 = vadd.f32 0.0, %v1713
      %v1715 = vpop.f32.mrf.mxu0
      %v1716 = vadd.f32 0.0, %v1715
      %1717 = vmatmul.bf16.gmra.mxu0 %v1559
      %v1718 = vpop.f32.mrf.mxu0
      %v1719 = vadd.f32 0.0, %v1718
      %v1720 = vpop.f32.mrf.mxu0
      %v1721 = vadd.f32 0.0, %v1720
      %1722 = vmatmul.bf16.gmra.mxu0 %v1567
      %v1723 = vpop.f32.mrf.mxu0
      %v1724 = vadd.f32 0.0, %v1723
      %v1725 = vpop.f32.mrf.mxu0
      %v1726 = vadd.f32 0.0, %v1725
      %1727 = vmatmul.bf16.gmra.mxu0 %v1575
      %v1728 = vpop.f32.mrf.mxu0
      %v1729 = vadd.f32 0.0, %v1728
      %v1730 = vpop.f32.mrf.mxu0
      %v1731 = vadd.f32 0.0, %v1730
      %1732 = vmatmul.bf16.gmra.mxu0 %v1583
      %v1733 = vpop.f32.mrf.mxu0
      %v1734 = vadd.f32 0.0, %v1733
      %v1735 = vpop.f32.mrf.mxu0
      %v1736 = vadd.f32 0.0, %v1735
      %1737 = vmatmul.bf16.gmra.mxu0 %v1591
      %v1738 = vpop.f32.mrf.mxu0
      %v1739 = vadd.f32 0.0, %v1738
      %v1740 = vpop.f32.mrf.mxu0
      %v1741 = vadd.f32 0.0, %v1740
      %1742 = vmatmul.bf16.gmra.mxu0 %v1599
      %v1743 = vpop.f32.mrf.mxu0
      %v1744 = vadd.f32 0.0, %v1743
      %v1745 = vpop.f32.mrf.mxu0
      %v1746 = vadd.f32 0.0, %v1745
      %1747 = vmatmul.bf16.gmra.mxu0 %v1607
      %v1748 = vpop.f32.mrf.mxu0
      %v1749 = vadd.f32 0.0, %v1748
      %v1750 = vpop.f32.mrf.mxu0
      %v1751 = vadd.f32 0.0, %v1750
      %1752 = vmatmul.bf16.gmra.mxu0 %v1610
      %v1753 = vpop.f32.mrf.mxu0
      %v1754 = vadd.f32 0.0, %v1753
      %v1755 = vpop.f32.mrf.mxu0
      %1756 = vdwg.mxu0
      %v1757 = vadd.f32 %v1341, %v1684
      %v1758 = vadd.f32 %v1342, %v1686
      %v1759 = vadd.f32 %v1343, %v1689
      %v1760 = vadd.f32 %v1344, %v1691
      %v1761 = vadd.f32 %v1345, %v1694
      %v1762 = vadd.f32 %v1346, %v1696
      %v1763 = vadd.f32 %v1347, %v1699
      %v1764 = vadd.f32 %v1348, %v1701
      %v1765 = vadd.f32 %v1349, %v1704
      %v1766 = vadd.f32 %v1350, %v1706
      %v1767 = vadd.f32 %v1351, %v1709
      %v1768 = vadd.f32 %v1352, %v1711
      %v1769 = vadd.f32 %v1353, %v1714
      %v1770 = vadd.f32 %v1354, %v1716
      %v1771 = vadd.f32 %v1355, %v1719
      %v1772 = vadd.f32 %v1356, %v1721
      %v1773 = vadd.f32 %v1357, %v1724
      %v1774 = vadd.f32 %v1358, %v1726
      %v1775 = vadd.f32 %v1359, %v1729
      %v1776 = vadd.f32 %v1360, %v1731
      %v1777 = vadd.f32 %v1361, %v1734
      %v1778 = vadd.f32 %v1362, %v1736
      %v1779 = vadd.f32 %v1363, %v1739
      %v1780 = vadd.f32 %v1364, %v1741
      %v1781 = vadd.f32 %v1365, %v1744
      %v1782 = vadd.f32 %v1366, %v1746
      %v1783 = vadd.f32 %v1367, %v1749
      %v1784 = vadd.f32 %v1368, %v1751
      %v1785 = vadd.f32 %v1369, %v1754
      %v1786 = vld [vmem:[%s288 + $0x8] sm:$0xe]
      %s1787 = scalar_lea.vmem %s1, 320
      %v1788 = vld [vmem:[%s1787] sm:$0xf]
      %v1789 = vld [vmem:[%s1787 + $0x4] sm:$0xf]
      %v1790 = vld [vmem:[%s1787 + $0x8] sm:$0xf]
      %v1791 = vld [vmem:[%s1787 + $0xc] sm:$0xf]
      %v1792 = vld [vmem:[%s1787 + $0x10] sm:$0xf]
      %v1793 = vld [vmem:[%s1787 + $0x14] sm:$0xf]
      %v1794 = vld [vmem:[%s1787 + $0x18] sm:$0xf]
      %v1795 = vld [vmem:[%s1787 + $0x1c] sm:$0xf]
      %v1796 = vld [vmem:[%s1787 + $0x20] sm:$0xf]
      %v1797 = vld [vmem:[%s1787 + $0x24] sm:$0xf]
      %v1798 = vld [vmem:[%s1787 + $0x28] sm:$0xf]
      %v1799 = vld [vmem:[%s1787 + $0x2c] sm:$0xf]
      %v1800 = vld [vmem:[%s1787 + $0x30] sm:$0xf]
      %v1801 = vld [vmem:[%s1787 + $0x34] sm:$0xf]
      %v1802 = vld [vmem:[%s1787 + $0x38] sm:$0xf]
      %v1803 = vld [vmem:[%s1787 + $0x3c] sm:$0xf]
      %v1805 = vunpack.c.l.b16 %v1786
      %v1806 = vpack.c.b16 %v1448, %v1805
      %v1807 = vrot.slane %v1806, 1
      %v1808 = vrot.slane %v1478, 1
      %v1809 = vsel %vm871, %v1807, %v1808
      %v1810 = vrot.slane %v1479, 1
      %v1811 = vsel %vm871, %v1808, %v1810
      %v1812 = vrot.slane %v1480, 1
      %v1813 = vsel %vm871, %v1810, %v1812
      %v1814 = vrot.slane %v1481, 1
      %v1815 = vsel %vm871, %v1812, %v1814
      %v1816 = vrot.slane %v1482, 1
      %v1817 = vsel %vm871, %v1814, %v1816
      %v1818 = vrot.slane %v1483, 1
      %v1819 = vsel %vm871, %v1816, %v1818
      %v1820 = vrot.slane %v1484, 1
      %v1821 = vsel %vm871, %v1818, %v1820
      %v1822 = vrot.slane %v1485, 1
      %v1823 = vsel %vm871, %v1820, %v1822
      %v1824 = vrot.slane %v1486, 1
      %v1825 = vsel %vm871, %v1822, %v1824
      %v1826 = vrot.slane %v1487, 1
      %v1827 = vsel %vm871, %v1824, %v1826
      %v1828 = vrot.slane %v1488, 1
      %v1829 = vsel %vm871, %v1826, %v1828
      %v1830 = vrot.slane %v1489, 1
      %v1831 = vsel %vm871, %v1828, %v1830
      %v1832 = vrot.slane %v1490, 1
      %v1833 = vsel %vm871, %v1830, %v1832
      %v1834 = vrot.slane %v1491, 1
      %v1835 = vsel %vm871, %v1832, %v1834
      %v1867 = vunpack.c.l.b16 %v1788
      %v1868 = vunpack.c.l.b16 %v1789
      %v1869 = vunpack.c.l.b16 %v1790
      %v1870 = vunpack.c.l.b16 %v1791
      %v1871 = vunpack.c.l.b16 %v1792
      %v1872 = vunpack.c.l.b16 %v1793
      %v1873 = vunpack.c.l.b16 %v1794
      %v1874 = vunpack.c.l.b16 %v1795
      %v1875 = vunpack.c.l.b16 %v1796
      %v1876 = vunpack.c.l.b16 %v1797
      %v1877 = vunpack.c.l.b16 %v1798
      %v1878 = vunpack.c.l.b16 %v1799
      %v1879 = vunpack.c.l.b16 %v1800
      %v1880 = vunpack.c.l.b16 %v1801
      %v1881 = vunpack.c.l.b16 %v1802
      %v1882 = vunpack.c.l.b16 %v1803
      %v1883 = vpack.c.b16 %v1868, %v1867
      %v1884 = vpack.c.b16 %v1870, %v1869
      %v1885 = vpack.c.b16 %v1872, %v1871
      %v1886 = vpack.c.b16 %v1874, %v1873
      %v1887 = vpack.c.b16 %v1876, %v1875
      %v1888 = vpack.c.b16 %v1878, %v1877
      %v1889 = vpack.c.b16 %v1880, %v1879
      %v1890 = vpack.c.b16 %v1882, %v1881
      %1899 = vmatpush.bf16.msra.mxu0 %v1890
      %1900 = vmatpush.bf16.msra.mxu0 %v1889
      %1901 = vmatpush.bf16.msra.mxu0 %v1888
      %1902 = vmatpush.bf16.msra.mxu0 %v1887
      %1903 = vmatpush.bf16.msra.mxu0 %v1886
      %1904 = vmatpush.bf16.msra.mxu0 %v1885
      %1905 = vmatpush.bf16.msra.mxu0 %v1884
      %1906 = vmatpush.bf16.msra.mxu0 %v1883
      %1907 = vmatmul.bf16.gmra.mxu0 %v1809
      %v1908 = vpop.f32.mrf.mxu0
      %v1909 = vadd.f32 0.0, %v1908
      %v1910 = vpop.f32.mrf.mxu0
      %v1911 = vadd.f32 0.0, %v1910
      %1912 = vmatmul.bf16.gmra.mxu0 %v1811
      %v1913 = vpop.f32.mrf.mxu0
      %v1914 = vadd.f32 0.0, %v1913
      %v1915 = vpop.f32.mrf.mxu0
      %v1916 = vadd.f32 0.0, %v1915
      %1917 = vmatmul.bf16.gmra.mxu0 %v1813
      %v1918 = vpop.f32.mrf.mxu0
      %v1919 = vadd.f32 0.0, %v1918
      %v1920 = vpop.f32.mrf.mxu0
      %v1921 = vadd.f32 0.0, %v1920
      %1922 = vmatmul.bf16.gmra.mxu0 %v1815
      %v1923 = vpop.f32.mrf.mxu0
      %v1924 = vadd.f32 0.0, %v1923
      %v1925 = vpop.f32.mrf.mxu0
      %v1926 = vadd.f32 0.0, %v1925
      %1927 = vmatmul.bf16.gmra.mxu0 %v1817
      %v1928 = vpop.f32.mrf.mxu0
      %v1929 = vadd.f32 0.0, %v1928
      %v1930 = vpop.f32.mrf.mxu0
      %v1931 = vadd.f32 0.0, %v1930
      %1932 = vmatmul.bf16.gmra.mxu0 %v1819
      %v1933 = vpop.f32.mrf.mxu0
      %v1934 = vadd.f32 0.0, %v1933
      %v1935 = vpop.f32.mrf.mxu0
      %v1936 = vadd.f32 0.0, %v1935
      %1937 = vmatmul.bf16.gmra.mxu0 %v1821
      %v1938 = vpop.f32.mrf.mxu0
      %v1939 = vadd.f32 0.0, %v1938
      %v1940 = vpop.f32.mrf.mxu0
      %v1941 = vadd.f32 0.0, %v1940
      %1942 = vmatmul.bf16.gmra.mxu0 %v1823
      %v1943 = vpop.f32.mrf.mxu0
      %v1944 = vadd.f32 0.0, %v1943
      %v1945 = vpop.f32.mrf.mxu0
      %v1946 = vadd.f32 0.0, %v1945
      %1947 = vmatmul.bf16.gmra.mxu0 %v1825
      %v1948 = vpop.f32.mrf.mxu0
      %v1949 = vadd.f32 0.0, %v1948
      %v1950 = vpop.f32.mrf.mxu0
      %v1951 = vadd.f32 0.0, %v1950
      %1952 = vmatmul.bf16.gmra.mxu0 %v1827
      %v1953 = vpop.f32.mrf.mxu0
      %v1954 = vadd.f32 0.0, %v1953
      %v1955 = vpop.f32.mrf.mxu0
      %v1956 = vadd.f32 0.0, %v1955
      %1957 = vmatmul.bf16.gmra.mxu0 %v1829
      %v1958 = vpop.f32.mrf.mxu0
      %v1959 = vadd.f32 0.0, %v1958
      %v1960 = vpop.f32.mrf.mxu0
      %v1961 = vadd.f32 0.0, %v1960
      %1962 = vmatmul.bf16.gmra.mxu0 %v1831
      %v1963 = vpop.f32.mrf.mxu0
      %v1964 = vadd.f32 0.0, %v1963
      %v1965 = vpop.f32.mrf.mxu0
      %v1966 = vadd.f32 0.0, %v1965
      %1967 = vmatmul.bf16.gmra.mxu0 %v1833
      %v1968 = vpop.f32.mrf.mxu0
      %v1969 = vadd.f32 0.0, %v1968
      %v1970 = vpop.f32.mrf.mxu0
      %v1971 = vadd.f32 0.0, %v1970
      %1972 = vmatmul.bf16.gmra.mxu0 %v1835
      %v1973 = vpop.f32.mrf.mxu0
      %v1974 = vadd.f32 0.0, %v1973
      %v1975 = vpop.f32.mrf.mxu0
      %v1976 = vadd.f32 0.0, %v1975
      %1977 = vmatmul.bf16.gmra.mxu0 %v1834
      %v1978 = vpop.f32.mrf.mxu0
      %v1979 = vadd.f32 0.0, %v1978
      %v1980 = vpop.f32.mrf.mxu0
      %1981 = vdwg.mxu0
      %v1982 = vadd.f32 %v1757, %v1909
      %v1983 = vadd.f32 %v1758, %v1911
      %v1984 = vadd.f32 %v1759, %v1914
      %v1985 = vadd.f32 %v1760, %v1916
      %v1986 = vadd.f32 %v1761, %v1919
      %v1987 = vadd.f32 %v1762, %v1921
      %v1988 = vadd.f32 %v1763, %v1924
      %v1989 = vadd.f32 %v1764, %v1926
      %v1990 = vadd.f32 %v1765, %v1929
      %v1991 = vadd.f32 %v1766, %v1931
      %v1992 = vadd.f32 %v1767, %v1934
      %v1993 = vadd.f32 %v1768, %v1936
      %v1994 = vadd.f32 %v1769, %v1939
      %v1995 = vadd.f32 %v1770, %v1941
      %v1996 = vadd.f32 %v1771, %v1944
      %v1997 = vadd.f32 %v1772, %v1946
      %v1998 = vadd.f32 %v1773, %v1949
      %v1999 = vadd.f32 %v1774, %v1951
      %v2000 = vadd.f32 %v1775, %v1954
      %v2001 = vadd.f32 %v1776, %v1956
      %v2002 = vadd.f32 %v1777, %v1959
      %v2003 = vadd.f32 %v1778, %v1961
      %v2004 = vadd.f32 %v1779, %v1964
      %v2005 = vadd.f32 %v1780, %v1966
      %v2006 = vadd.f32 %v1781, %v1969
      %v2007 = vadd.f32 %v1782, %v1971
      %v2008 = vadd.f32 %v1783, %v1974
      %v2009 = vadd.f32 %v1784, %v1976
      %v2010 = vadd.f32 %v1785, %v1979
      %v2011 = vld [vmem:[%s288 + $0x10] sm:$0xf]
      %v2012 = vld [vmem:[%s288 + $0x14] sm:$0xf]
      %v2013 = vld [vmem:[%s288 + $0x18] sm:$0xf]
      %v2014 = vld [vmem:[%s288 + $0x1c] sm:$0xf]
      %v2015 = vld [vmem:[%s288 + $0x20] sm:$0xf]
      %v2016 = vld [vmem:[%s288 + $0x24] sm:$0xf]
      %v2017 = vld [vmem:[%s288 + $0x28] sm:$0xf]
      %v2018 = vld [vmem:[%s288 + $0x2c] sm:$0xf]
      %v2019 = vld [vmem:[%s288 + $0x30] sm:$0xf]
      %v2020 = vld [vmem:[%s288 + $0x34] sm:$0xf]
      %v2021 = vld [vmem:[%s288 + $0x38] sm:$0xf]
      %v2022 = vld [vmem:[%s288 + $0x3c] sm:$0xf]
      %v2023 = vld [vmem:[%s288 + $0x40] sm:$0xf]
      %v2024 = vld [vmem:[%s288 + $0x44] sm:$0xf]
      %v2025 = vld [vmem:[%s288 + $0x48] sm:$0xf]
      %v2026 = vld [vmem:[%s288 + $0x4c] sm:$0xf]
      %v2027 = vld [vmem:[%s288 + $0x50] sm:$0xf]
      %v2028 = vld [vmem:[%s288 + $0x54] sm:$0xf]
      %v2029 = vld [vmem:[%s288 + $0x58] sm:$0xf]
      %v2030 = vld [vmem:[%s288 + $0x5c] sm:$0xf]
      %v2031 = vld [vmem:[%s288 + $0x60] sm:$0xf]
      %v2032 = vld [vmem:[%s288 + $0x64] sm:$0xf]
      %v2033 = vld [vmem:[%s288 + $0x68] sm:$0xf]
      %v2034 = vld [vmem:[%s288 + $0x6c] sm:$0xf]
      %v2035 = vld [vmem:[%s288 + $0x70] sm:$0xf]
      %v2036 = vld [vmem:[%s288 + $0x74] sm:$0xf]
      %v2037 = vld [vmem:[%s288 + $0x78] sm:$0xf]
      %v2038 = vld [vmem:[%s288 + $0x7c] sm:$0xf]
      %v2039 = vld [vmem:[%s288 + $0x80] sm:$0xf]
      %s2040 = scalar_lea.vmem %s1, 384
      %v2041 = vld [vmem:[%s2040] sm:$0xf]
      %v2042 = vld [vmem:[%s2040 + $0x4] sm:$0xf]
      %v2043 = vld [vmem:[%s2040 + $0x8] sm:$0xf]
      %v2044 = vld [vmem:[%s2040 + $0xc] sm:$0xf]
      %v2045 = vld [vmem:[%s2040 + $0x10] sm:$0xf]
      %v2046 = vld [vmem:[%s2040 + $0x14] sm:$0xf]
      %v2047 = vld [vmem:[%s2040 + $0x18] sm:$0xf]
      %v2048 = vld [vmem:[%s2040 + $0x1c] sm:$0xf]
      %v2049 = vld [vmem:[%s2040 + $0x20] sm:$0xf]
      %v2050 = vld [vmem:[%s2040 + $0x24] sm:$0xf]
      %v2051 = vld [vmem:[%s2040 + $0x28] sm:$0xf]
      %v2052 = vld [vmem:[%s2040 + $0x2c] sm:$0xf]
      %v2053 = vld [vmem:[%s2040 + $0x30] sm:$0xf]
      %v2054 = vld [vmem:[%s2040 + $0x34] sm:$0xf]
      %v2055 = vld [vmem:[%s2040 + $0x38] sm:$0xf]
      %v2056 = vld [vmem:[%s2040 + $0x3c] sm:$0xf]
      %v2086 = vunpack.c.l.b16 %v2011
      %v2087 = vunpack.c.l.b16 %v2012
      %v2088 = vunpack.c.l.b16 %v2013
      %v2089 = vunpack.c.l.b16 %v2014
      %v2090 = vunpack.c.l.b16 %v2015
      %v2091 = vunpack.c.l.b16 %v2016
      %v2092 = vunpack.c.l.b16 %v2017
      %v2093 = vunpack.c.l.b16 %v2018
      %v2094 = vunpack.c.l.b16 %v2019
      %v2095 = vunpack.c.l.b16 %v2020
      %v2096 = vunpack.c.l.b16 %v2021
      %v2097 = vunpack.c.l.b16 %v2022
      %v2098 = vunpack.c.l.b16 %v2023
      %v2099 = vunpack.c.l.b16 %v2024
      %v2100 = vunpack.c.l.b16 %v2025
      %v2101 = vunpack.c.l.b16 %v2026
      %v2102 = vunpack.c.l.b16 %v2027
      %v2103 = vunpack.c.l.b16 %v2028
      %v2104 = vunpack.c.l.b16 %v2029
      %v2105 = vunpack.c.l.b16 %v2030
      %v2106 = vunpack.c.l.b16 %v2031
      %v2107 = vunpack.c.l.b16 %v2032
      %v2108 = vunpack.c.l.b16 %v2033
      %v2109 = vunpack.c.l.b16 %v2034
      %v2110 = vunpack.c.l.b16 %v2035
      %v2111 = vunpack.c.l.b16 %v2036
      %v2112 = vunpack.c.l.b16 %v2037
      %v2113 = vunpack.c.l.b16 %v2038
      %v2114 = vunpack.c.l.b16 %v2039
      %v2115 = vpack.c.b16 %v2087, %v2086
      %v2116 = vpack.c.b16 %v2089, %v2088
      %v2117 = vpack.c.b16 %v2091, %v2090
      %v2118 = vpack.c.b16 %v2093, %v2092
      %v2119 = vpack.c.b16 %v2095, %v2094
      %v2120 = vpack.c.b16 %v2097, %v2096
      %v2121 = vpack.c.b16 %v2099, %v2098
      %v2122 = vpack.c.b16 %v2101, %v2100
      %v2123 = vpack.c.b16 %v2103, %v2102
      %v2124 = vpack.c.b16 %v2105, %v2104
      %v2125 = vpack.c.b16 %v2107, %v2106
      %v2126 = vpack.c.b16 %v2109, %v2108
      %v2127 = vpack.c.b16 %v2111, %v2110
      %v2128 = vpack.c.b16 %v2113, %v2112
      %v2129 = vpack.c.b16 %v2114, %v2114
      %v2161 = vunpack.c.l.b16 %v2041
      %v2162 = vunpack.c.l.b16 %v2042
      %v2163 = vunpack.c.l.b16 %v2043
      %v2164 = vunpack.c.l.b16 %v2044
      %v2165 = vunpack.c.l.b16 %v2045
      %v2166 = vunpack.c.l.b16 %v2046
      %v2167 = vunpack.c.l.b16 %v2047
      %v2168 = vunpack.c.l.b16 %v2048
      %v2169 = vunpack.c.l.b16 %v2049
      %v2170 = vunpack.c.l.b16 %v2050
      %v2171 = vunpack.c.l.b16 %v2051
      %v2172 = vunpack.c.l.b16 %v2052
      %v2173 = vunpack.c.l.b16 %v2053
      %v2174 = vunpack.c.l.b16 %v2054
      %v2175 = vunpack.c.l.b16 %v2055
      %v2176 = vunpack.c.l.b16 %v2056
      %v2177 = vpack.c.b16 %v2162, %v2161
      %v2178 = vpack.c.b16 %v2164, %v2163
      %v2179 = vpack.c.b16 %v2166, %v2165
      %v2180 = vpack.c.b16 %v2168, %v2167
      %v2181 = vpack.c.b16 %v2170, %v2169
      %v2182 = vpack.c.b16 %v2172, %v2171
      %v2183 = vpack.c.b16 %v2174, %v2173
      %v2184 = vpack.c.b16 %v2176, %v2175
      %2193 = vmatpush.bf16.msra.mxu0 %v2184
      %2194 = vmatpush.bf16.msra.mxu0 %v2183
      %2195 = vmatpush.bf16.msra.mxu0 %v2182
      %2196 = vmatpush.bf16.msra.mxu0 %v2181
      %2197 = vmatpush.bf16.msra.mxu0 %v2180
      %2198 = vmatpush.bf16.msra.mxu0 %v2179
      %2199 = vmatpush.bf16.msra.mxu0 %v2178
      %2200 = vmatpush.bf16.msra.mxu0 %v2177
      %2201 = vmatmul.bf16.gmra.mxu0 %v2115
      %v2202 = vpop.f32.mrf.mxu0
      %v2203 = vadd.f32 0.0, %v2202
      %v2204 = vpop.f32.mrf.mxu0
      %v2205 = vadd.f32 0.0, %v2204
      %2206 = vmatmul.bf16.gmra.mxu0 %v2116
      %v2207 = vpop.f32.mrf.mxu0
      %v2208 = vadd.f32 0.0, %v2207
      %v2209 = vpop.f32.mrf.mxu0
      %v2210 = vadd.f32 0.0, %v2209
      %2211 = vmatmul.bf16.gmra.mxu0 %v2117
      %v2212 = vpop.f32.mrf.mxu0
      %v2213 = vadd.f32 0.0, %v2212
      %v2214 = vpop.f32.mrf.mxu0
      %v2215 = vadd.f32 0.0, %v2214
      %2216 = vmatmul.bf16.gmra.mxu0 %v2118
      %v2217 = vpop.f32.mrf.mxu0
      %v2218 = vadd.f32 0.0, %v2217
      %v2219 = vpop.f32.mrf.mxu0
      %v2220 = vadd.f32 0.0, %v2219
      %2221 = vmatmul.bf16.gmra.mxu0 %v2119
      %v2222 = vpop.f32.mrf.mxu0
      %v2223 = vadd.f32 0.0, %v2222
      %v2224 = vpop.f32.mrf.mxu0
      %v2225 = vadd.f32 0.0, %v2224
      %2226 = vmatmul.bf16.gmra.mxu0 %v2120
      %v2227 = vpop.f32.mrf.mxu0
      %v2228 = vadd.f32 0.0, %v2227
      %v2229 = vpop.f32.mrf.mxu0
      %v2230 = vadd.f32 0.0, %v2229
      %2231 = vmatmul.bf16.gmra.mxu0 %v2121
      %v2232 = vpop.f32.mrf.mxu0
      %v2233 = vadd.f32 0.0, %v2232
      %v2234 = vpop.f32.mrf.mxu0
      %v2235 = vadd.f32 0.0, %v2234
      %2236 = vmatmul.bf16.gmra.mxu0 %v2122
      %v2237 = vpop.f32.mrf.mxu0
      %v2238 = vadd.f32 0.0, %v2237
      %v2239 = vpop.f32.mrf.mxu0
      %v2240 = vadd.f32 0.0, %v2239
      %2241 = vmatmul.bf16.gmra.mxu0 %v2123
      %v2242 = vpop.f32.mrf.mxu0
      %v2243 = vadd.f32 0.0, %v2242
      %v2244 = vpop.f32.mrf.mxu0
      %v2245 = vadd.f32 0.0, %v2244
      %2246 = vmatmul.bf16.gmra.mxu0 %v2124
      %v2247 = vpop.f32.mrf.mxu0
      %v2248 = vadd.f32 0.0, %v2247
      %v2249 = vpop.f32.mrf.mxu0
      %v2250 = vadd.f32 0.0, %v2249
      %2251 = vmatmul.bf16.gmra.mxu0 %v2125
      %v2252 = vpop.f32.mrf.mxu0
      %v2253 = vadd.f32 0.0, %v2252
      %v2254 = vpop.f32.mrf.mxu0
      %v2255 = vadd.f32 0.0, %v2254
      %2256 = vmatmul.bf16.gmra.mxu0 %v2126
      %v2257 = vpop.f32.mrf.mxu0
      %v2258 = vadd.f32 0.0, %v2257
      %v2259 = vpop.f32.mrf.mxu0
      %v2260 = vadd.f32 0.0, %v2259
      %2261 = vmatmul.bf16.gmra.mxu0 %v2127
      %v2262 = vpop.f32.mrf.mxu0
      %v2263 = vadd.f32 0.0, %v2262
      %v2264 = vpop.f32.mrf.mxu0
      %v2265 = vadd.f32 0.0, %v2264
      %2266 = vmatmul.bf16.gmra.mxu0 %v2128
      %v2267 = vpop.f32.mrf.mxu0
      %v2268 = vadd.f32 0.0, %v2267
      %v2269 = vpop.f32.mrf.mxu0
      %v2270 = vadd.f32 0.0, %v2269
      %2271 = vmatmul.bf16.gmra.mxu0 %v2129
      %v2272 = vpop.f32.mrf.mxu0
      %v2273 = vadd.f32 0.0, %v2272
      %v2274 = vpop.f32.mrf.mxu0
      %2275 = vdwg.mxu0
      %v2276 = vadd.f32 %v1982, %v2203
      %v2277 = vadd.f32 %v1983, %v2205
      %v2278 = vadd.f32 %v1984, %v2208
      %v2279 = vadd.f32 %v1985, %v2210
      %v2280 = vadd.f32 %v1986, %v2213
      %v2281 = vadd.f32 %v1987, %v2215
      %v2282 = vadd.f32 %v1988, %v2218
      %v2283 = vadd.f32 %v1989, %v2220
      %v2284 = vadd.f32 %v1990, %v2223
      %v2285 = vadd.f32 %v1991, %v2225
      %v2286 = vadd.f32 %v1992, %v2228
      %v2287 = vadd.f32 %v1993, %v2230
      %v2288 = vadd.f32 %v1994, %v2233
      %v2289 = vadd.f32 %v1995, %v2235
      %v2290 = vadd.f32 %v1996, %v2238
      %v2291 = vadd.f32 %v1997, %v2240
      %v2292 = vadd.f32 %v1998, %v2243
      %v2293 = vadd.f32 %v1999, %v2245
      %v2294 = vadd.f32 %v2000, %v2248
      %v2295 = vadd.f32 %v2001, %v2250
      %v2296 = vadd.f32 %v2002, %v2253
      %v2297 = vadd.f32 %v2003, %v2255
      %v2298 = vadd.f32 %v2004, %v2258
      %v2299 = vadd.f32 %v2005, %v2260
      %v2300 = vadd.f32 %v2006, %v2263
      %v2301 = vadd.f32 %v2007, %v2265
      %v2302 = vadd.f32 %v2008, %v2268
      %v2303 = vadd.f32 %v2009, %v2270
      %v2304 = vadd.f32 %v2010, %v2273
      %v2305 = vld [vmem:[%s288 + $0x10] sm:$0xf]
      %v2306 = vld [vmem:[%s288 + $0x14] sm:$0xf]
      %v2307 = vld [vmem:[%s288 + $0x18] sm:$0xf]
      %v2308 = vld [vmem:[%s288 + $0x1c] sm:$0xf]
      %v2309 = vld [vmem:[%s288 + $0x20] sm:$0xf]
      %v2310 = vld [vmem:[%s288 + $0x24] sm:$0xf]
      %v2311 = vld [vmem:[%s288 + $0x28] sm:$0xf]
      %v2312 = vld [vmem:[%s288 + $0x2c] sm:$0xf]
      %v2313 = vld [vmem:[%s288 + $0x30] sm:$0xf]
      %v2314 = vld [vmem:[%s288 + $0x34] sm:$0xf]
      %v2315 = vld [vmem:[%s288 + $0x38] sm:$0xf]
      %v2316 = vld [vmem:[%s288 + $0x3c] sm:$0xf]
      %v2317 = vld [vmem:[%s288 + $0x40] sm:$0xf]
      %v2318 = vld [vmem:[%s288 + $0x44] sm:$0xf]
      %v2319 = vld [vmem:[%s288 + $0x48] sm:$0xf]
      %v2320 = vld [vmem:[%s288 + $0x4c] sm:$0xf]
      %v2321 = vld [vmem:[%s288 + $0x50] sm:$0xf]
      %v2322 = vld [vmem:[%s288 + $0x54] sm:$0xf]
      %v2323 = vld [vmem:[%s288 + $0x58] sm:$0xf]
      %v2324 = vld [vmem:[%s288 + $0x5c] sm:$0xf]
      %v2325 = vld [vmem:[%s288 + $0x60] sm:$0xf]
      %v2326 = vld [vmem:[%s288 + $0x64] sm:$0xf]
      %v2327 = vld [vmem:[%s288 + $0x68] sm:$0xf]
      %v2328 = vld [vmem:[%s288 + $0x6c] sm:$0xf]
      %v2329 = vld [vmem:[%s288 + $0x70] sm:$0xf]
      %v2330 = vld [vmem:[%s288 + $0x74] sm:$0xf]
      %v2331 = vld [vmem:[%s288 + $0x78] sm:$0xf]
      %v2332 = vld [vmem:[%s288 + $0x7c] sm:$0xf]
      %v2333 = vld [vmem:[%s288 + $0x80] sm:$0xf]
      %v2334 = vld [vmem:[%s288 + $0x84] sm:$0x1]
      %s2335 = scalar_lea.vmem %s1, 448
      %v2336 = vld [vmem:[%s2335] sm:$0xf]
      %v2337 = vld [vmem:[%s2335 + $0x4] sm:$0xf]
      %v2338 = vld [vmem:[%s2335 + $0x8] sm:$0xf]
      %v2339 = vld [vmem:[%s2335 + $0xc] sm:$0xf]
      %v2340 = vld [vmem:[%s2335 + $0x10] sm:$0xf]
      %v2341 = vld [vmem:[%s2335 + $0x14] sm:$0xf]
      %v2342 = vld [vmem:[%s2335 + $0x18] sm:$0xf]
      %v2343 = vld [vmem:[%s2335 + $0x1c] sm:$0xf]
      %v2344 = vld [vmem:[%s2335 + $0x20] sm:$0xf]
      %v2345 = vld [vmem:[%s2335 + $0x24] sm:$0xf]
      %v2346 = vld [vmem:[%s2335 + $0x28] sm:$0xf]
      %v2347 = vld [vmem:[%s2335 + $0x2c] sm:$0xf]
      %v2348 = vld [vmem:[%s2335 + $0x30] sm:$0xf]
      %v2349 = vld [vmem:[%s2335 + $0x34] sm:$0xf]
      %v2350 = vld [vmem:[%s2335 + $0x38] sm:$0xf]
      %v2351 = vld [vmem:[%s2335 + $0x3c] sm:$0xf]
      %v2382 = vunpack.c.l.b16 %v2305
      %v2383 = vunpack.c.l.b16 %v2306
      %v2384 = vunpack.c.l.b16 %v2307
      %v2385 = vunpack.c.l.b16 %v2308
      %v2386 = vunpack.c.l.b16 %v2309
      %v2387 = vunpack.c.l.b16 %v2310
      %v2388 = vunpack.c.l.b16 %v2311
      %v2389 = vunpack.c.l.b16 %v2312
      %v2390 = vunpack.c.l.b16 %v2313
      %v2391 = vunpack.c.l.b16 %v2314
      %v2392 = vunpack.c.l.b16 %v2315
      %v2393 = vunpack.c.l.b16 %v2316
      %v2394 = vunpack.c.l.b16 %v2317
      %v2395 = vunpack.c.l.b16 %v2318
      %v2396 = vunpack.c.l.b16 %v2319
      %v2397 = vunpack.c.l.b16 %v2320
      %v2398 = vunpack.c.l.b16 %v2321
      %v2399 = vunpack.c.l.b16 %v2322
      %v2400 = vunpack.c.l.b16 %v2323
      %v2401 = vunpack.c.l.b16 %v2324
      %v2402 = vunpack.c.l.b16 %v2325
      %v2403 = vunpack.c.l.b16 %v2326
      %v2404 = vunpack.c.l.b16 %v2327
      %v2405 = vunpack.c.l.b16 %v2328
      %v2406 = vunpack.c.l.b16 %v2329
      %v2407 = vunpack.c.l.b16 %v2330
      %v2408 = vunpack.c.l.b16 %v2331
      %v2409 = vunpack.c.l.b16 %v2332
      %v2410 = vunpack.c.l.b16 %v2333
      %v2411 = vunpack.c.l.b16 %v2334
      %v2412 = vpack.c.b16 %v2383, %v2382
      %v2413 = vpack.c.b16 %v2385, %v2384
      %v2414 = vpack.c.b16 %v2387, %v2386
      %v2415 = vpack.c.b16 %v2389, %v2388
      %v2416 = vpack.c.b16 %v2391, %v2390
      %v2417 = vpack.c.b16 %v2393, %v2392
      %v2418 = vpack.c.b16 %v2395, %v2394
      %v2419 = vpack.c.b16 %v2397, %v2396
      %v2420 = vpack.c.b16 %v2399, %v2398
      %v2421 = vpack.c.b16 %v2401, %v2400
      %v2422 = vpack.c.b16 %v2403, %v2402
      %v2423 = vpack.c.b16 %v2405, %v2404
      %v2424 = vpack.c.b16 %v2407, %v2406
      %v2425 = vpack.c.b16 %v2409, %v2408
      %v2426 = vpack.c.b16 %v2411, %v2410
      %v2428 = vshrl.u32 %v2412, 16
      %v2430 = vshll.u32 %v2412, 16
      %v2432 = vrot.slane %v2430, 1
      %v2433 = vor.u32 %v2428, %v2432
      %v2435 = vshll.u32 %v2413, 16
      %v2437 = vrot.slane %v2435, 1
      %v2438 = vsel %vm437, %v2433, %v2437
      %v2439 = vshrl.u32 %v2413, 16
      %v2441 = vor.u32 %v2439, %v2437
      %v2443 = vshll.u32 %v2414, 16
      %v2445 = vrot.slane %v2443, 1
      %v2446 = vsel %vm437, %v2441, %v2445
      %v2447 = vshrl.u32 %v2414, 16
      %v2449 = vor.u32 %v2447, %v2445
      %v2451 = vshll.u32 %v2415, 16
      %v2453 = vrot.slane %v2451, 1
      %v2454 = vsel %vm437, %v2449, %v2453
      %v2455 = vshrl.u32 %v2415, 16
      %v2457 = vor.u32 %v2455, %v2453
      %v2459 = vshll.u32 %v2416, 16
      %v2461 = vrot.slane %v2459, 1
      %v2462 = vsel %vm437, %v2457, %v2461
      %v2463 = vshrl.u32 %v2416, 16
      %v2465 = vor.u32 %v2463, %v2461
      %v2467 = vshll.u32 %v2417, 16
      %v2469 = vrot.slane %v2467, 1
      %v2470 = vsel %vm437, %v2465, %v2469
      %v2471 = vshrl.u32 %v2417, 16
      %v2473 = vor.u32 %v2471, %v2469
      %v2475 = vshll.u32 %v2418, 16
      %v2477 = vrot.slane %v2475, 1
      %v2478 = vsel %vm437, %v2473, %v2477
      %v2479 = vshrl.u32 %v2418, 16
      %v2481 = vor.u32 %v2479, %v2477
      %v2483 = vshll.u32 %v2419, 16
      %v2485 = vrot.slane %v2483, 1
      %v2486 = vsel %vm437, %v2481, %v2485
      %v2487 = vshrl.u32 %v2419, 16
      %v2489 = vor.u32 %v2487, %v2485
      %v2491 = vshll.u32 %v2420, 16
      %v2493 = vrot.slane %v2491, 1
      %v2494 = vsel %vm437, %v2489, %v2493
      %v2495 = vshrl.u32 %v2420, 16
      %v2497 = vor.u32 %v2495, %v2493
      %v2499 = vshll.u32 %v2421, 16
      %v2501 = vrot.slane %v2499, 1
      %v2502 = vsel %vm437, %v2497, %v2501
      %v2503 = vshrl.u32 %v2421, 16
      %v2505 = vor.u32 %v2503, %v2501
      %v2507 = vshll.u32 %v2422, 16
      %v2509 = vrot.slane %v2507, 1
      %v2510 = vsel %vm437, %v2505, %v2509
      %v2511 = vshrl.u32 %v2422, 16
      %v2513 = vor.u32 %v2511, %v2509
      %v2515 = vshll.u32 %v2423, 16
      %v2517 = vrot.slane %v2515, 1
      %v2518 = vsel %vm437, %v2513, %v2517
      %v2519 = vshrl.u32 %v2423, 16
      %v2521 = vor.u32 %v2519, %v2517
      %v2523 = vshll.u32 %v2424, 16
      %v2525 = vrot.slane %v2523, 1
      %v2526 = vsel %vm437, %v2521, %v2525
      %v2527 = vshrl.u32 %v2424, 16
      %v2529 = vor.u32 %v2527, %v2525
      %v2531 = vshll.u32 %v2425, 16
      %v2533 = vrot.slane %v2531, 1
      %v2534 = vsel %vm437, %v2529, %v2533
      %v2535 = vshrl.u32 %v2425, 16
      %v2537 = vor.u32 %v2535, %v2533
      %v2539 = vshll.u32 %v2426, 16
      %v2541 = vrot.slane %v2539, 1
      %v2542 = vsel %vm437, %v2537, %v2541
      %v2543 = vshrl.u32 %v2426, 16
      %v2545 = vor.u32 %v2543, %v2541
      %v2577 = vunpack.c.l.b16 %v2336
      %v2578 = vunpack.c.l.b16 %v2337
      %v2579 = vunpack.c.l.b16 %v2338
      %v2580 = vunpack.c.l.b16 %v2339
      %v2581 = vunpack.c.l.b16 %v2340
      %v2582 = vunpack.c.l.b16 %v2341
      %v2583 = vunpack.c.l.b16 %v2342
      %v2584 = vunpack.c.l.b16 %v2343
      %v2585 = vunpack.c.l.b16 %v2344
      %v2586 = vunpack.c.l.b16 %v2345
      %v2587 = vunpack.c.l.b16 %v2346
      %v2588 = vunpack.c.l.b16 %v2347
      %v2589 = vunpack.c.l.b16 %v2348
      %v2590 = vunpack.c.l.b16 %v2349
      %v2591 = vunpack.c.l.b16 %v2350
      %v2592 = vunpack.c.l.b16 %v2351
      %v2593 = vpack.c.b16 %v2578, %v2577
      %v2594 = vpack.c.b16 %v2580, %v2579
      %v2595 = vpack.c.b16 %v2582, %v2581
      %v2596 = vpack.c.b16 %v2584, %v2583
      %v2597 = vpack.c.b16 %v2586, %v2585
      %v2598 = vpack.c.b16 %v2588, %v2587
      %v2599 = vpack.c.b16 %v2590, %v2589
      %v2600 = vpack.c.b16 %v2592, %v2591
      %2609 = vmatpush.bf16.msra.mxu0 %v2600
      %2610 = vmatpush.bf16.msra.mxu0 %v2599
      %2611 = vmatpush.bf16.msra.mxu0 %v2598
      %2612 = vmatpush.bf16.msra.mxu0 %v2597
      %2613 = vmatpush.bf16.msra.mxu0 %v2596
      %2614 = vmatpush.bf16.msra.mxu0 %v2595
      %2615 = vmatpush.bf16.msra.mxu0 %v2594
      %2616 = vmatpush.bf16.msra.mxu0 %v2593
      %2617 = vmatmul.bf16.gmra.mxu0 %v2438
      %v2618 = vpop.f32.mrf.mxu0
      %v2619 = vadd.f32 0.0, %v2618
      %v2620 = vpop.f32.mrf.mxu0
      %v2621 = vadd.f32 0.0, %v2620
      %2622 = vmatmul.bf16.gmra.mxu0 %v2446
      %v2623 = vpop.f32.mrf.mxu0
      %v2624 = vadd.f32 0.0, %v2623
      %v2625 = vpop.f32.mrf.mxu0
      %v2626 = vadd.f32 0.0, %v2625
      %2627 = vmatmul.bf16.gmra.mxu0 %v2454
      %v2628 = vpop.f32.mrf.mxu0
      %v2629 = vadd.f32 0.0, %v2628
      %v2630 = vpop.f32.mrf.mxu0
      %v2631 = vadd.f32 0.0, %v2630
      %2632 = vmatmul.bf16.gmra.mxu0 %v2462
      %v2633 = vpop.f32.mrf.mxu0
      %v2634 = vadd.f32 0.0, %v2633
      %v2635 = vpop.f32.mrf.mxu0
      %v2636 = vadd.f32 0.0, %v2635
      %2637 = vmatmul.bf16.gmra.mxu0 %v2470
      %v2638 = vpop.f32.mrf.mxu0
      %v2639 = vadd.f32 0.0, %v2638
      %v2640 = vpop.f32.mrf.mxu0
      %v2641 = vadd.f32 0.0, %v2640
      %2642 = vmatmul.bf16.gmra.mxu0 %v2478
      %v2643 = vpop.f32.mrf.mxu0
      %v2644 = vadd.f32 0.0, %v2643
      %v2645 = vpop.f32.mrf.mxu0
      %v2646 = vadd.f32 0.0, %v2645
      %2647 = vmatmul.bf16.gmra.mxu0 %v2486
      %v2648 = vpop.f32.mrf.mxu0
      %v2649 = vadd.f32 0.0, %v2648
      %v2650 = vpop.f32.mrf.mxu0
      %v2651 = vadd.f32 0.0, %v2650
      %2652 = vmatmul.bf16.gmra.mxu0 %v2494
      %v2653 = vpop.f32.mrf.mxu0
      %v2654 = vadd.f32 0.0, %v2653
      %v2655 = vpop.f32.mrf.mxu0
      %v2656 = vadd.f32 0.0, %v2655
      %2657 = vmatmul.bf16.gmra.mxu0 %v2502
      %v2658 = vpop.f32.mrf.mxu0
      %v2659 = vadd.f32 0.0, %v2658
      %v2660 = vpop.f32.mrf.mxu0
      %v2661 = vadd.f32 0.0, %v2660
      %2662 = vmatmul.bf16.gmra.mxu0 %v2510
      %v2663 = vpop.f32.mrf.mxu0
      %v2664 = vadd.f32 0.0, %v2663
      %v2665 = vpop.f32.mrf.mxu0
      %v2666 = vadd.f32 0.0, %v2665
      %2667 = vmatmul.bf16.gmra.mxu0 %v2518
      %v2668 = vpop.f32.mrf.mxu0
      %v2669 = vadd.f32 0.0, %v2668
      %v2670 = vpop.f32.mrf.mxu0
      %v2671 = vadd.f32 0.0, %v2670
      %2672 = vmatmul.bf16.gmra.mxu0 %v2526
      %v2673 = vpop.f32.mrf.mxu0
      %v2674 = vadd.f32 0.0, %v2673
      %v2675 = vpop.f32.mrf.mxu0
      %v2676 = vadd.f32 0.0, %v2675
      %2677 = vmatmul.bf16.gmra.mxu0 %v2534
      %v2678 = vpop.f32.mrf.mxu0
      %v2679 = vadd.f32 0.0, %v2678
      %v2680 = vpop.f32.mrf.mxu0
      %v2681 = vadd.f32 0.0, %v2680
      %2682 = vmatmul.bf16.gmra.mxu0 %v2542
      %v2683 = vpop.f32.mrf.mxu0
      %v2684 = vadd.f32 0.0, %v2683
      %v2685 = vpop.f32.mrf.mxu0
      %v2686 = vadd.f32 0.0, %v2685
      %2687 = vmatmul.bf16.gmra.mxu0 %v2545
      %v2688 = vpop.f32.mrf.mxu0
      %v2689 = vadd.f32 0.0, %v2688
      %v2690 = vpop.f32.mrf.mxu0
      %2691 = vdwg.mxu0
      %v2692 = vadd.f32 %v2276, %v2619
      %v2693 = vadd.f32 %v2277, %v2621
      %v2694 = vadd.f32 %v2278, %v2624
      %v2695 = vadd.f32 %v2279, %v2626
      %v2696 = vadd.f32 %v2280, %v2629
      %v2697 = vadd.f32 %v2281, %v2631
      %v2698 = vadd.f32 %v2282, %v2634
      %v2699 = vadd.f32 %v2283, %v2636
      %v2700 = vadd.f32 %v2284, %v2639
      %v2701 = vadd.f32 %v2285, %v2641
      %v2702 = vadd.f32 %v2286, %v2644
      %v2703 = vadd.f32 %v2287, %v2646
      %v2704 = vadd.f32 %v2288, %v2649
      %v2705 = vadd.f32 %v2289, %v2651
      %v2706 = vadd.f32 %v2290, %v2654
      %v2707 = vadd.f32 %v2291, %v2656
      %v2708 = vadd.f32 %v2292, %v2659
      %v2709 = vadd.f32 %v2293, %v2661
      %v2710 = vadd.f32 %v2294, %v2664
      %v2711 = vadd.f32 %v2295, %v2666
      %v2712 = vadd.f32 %v2296, %v2669
      %v2713 = vadd.f32 %v2297, %v2671
      %v2714 = vadd.f32 %v2298, %v2674
      %v2715 = vadd.f32 %v2299, %v2676
      %v2716 = vadd.f32 %v2300, %v2679
      %v2717 = vadd.f32 %v2301, %v2681
      %v2718 = vadd.f32 %v2302, %v2684
      %v2719 = vadd.f32 %v2303, %v2686
      %v2720 = vadd.f32 %v2304, %v2689
      %v2721 = vld [vmem:[%s288 + $0x10] sm:$0xe]
      %s2722 = scalar_lea.vmem %s1, 512
      %v2723 = vld [vmem:[%s2722] sm:$0xf]
      %v2724 = vld [vmem:[%s2722 + $0x4] sm:$0xf]
      %v2725 = vld [vmem:[%s2722 + $0x8] sm:$0xf]
      %v2726 = vld [vmem:[%s2722 + $0xc] sm:$0xf]
      %v2727 = vld [vmem:[%s2722 + $0x10] sm:$0xf]
      %v2728 = vld [vmem:[%s2722 + $0x14] sm:$0xf]
      %v2729 = vld [vmem:[%s2722 + $0x18] sm:$0xf]
      %v2730 = vld [vmem:[%s2722 + $0x1c] sm:$0xf]
      %v2731 = vld [vmem:[%s2722 + $0x20] sm:$0xf]
      %v2732 = vld [vmem:[%s2722 + $0x24] sm:$0xf]
      %v2733 = vld [vmem:[%s2722 + $0x28] sm:$0xf]
      %v2734 = vld [vmem:[%s2722 + $0x2c] sm:$0xf]
      %v2735 = vld [vmem:[%s2722 + $0x30] sm:$0xf]
      %v2736 = vld [vmem:[%s2722 + $0x34] sm:$0xf]
      %v2737 = vld [vmem:[%s2722 + $0x38] sm:$0xf]
      %v2738 = vld [vmem:[%s2722 + $0x3c] sm:$0xf]
      %v2740 = vunpack.c.l.b16 %v2721
      %v2741 = vpack.c.b16 %v2383, %v2740
      %v2742 = vrot.slane %v2741, 1
      %v2743 = vrot.slane %v2413, 1
      %v2744 = vsel %vm871, %v2742, %v2743
      %v2745 = vrot.slane %v2414, 1
      %v2746 = vsel %vm871, %v2743, %v2745
      %v2747 = vrot.slane %v2415, 1
      %v2748 = vsel %vm871, %v2745, %v2747
      %v2749 = vrot.slane %v2416, 1
      %v2750 = vsel %vm871, %v2747, %v2749
      %v2751 = vrot.slane %v2417, 1
      %v2752 = vsel %vm871, %v2749, %v2751
      %v2753 = vrot.slane %v2418, 1
      %v2754 = vsel %vm871, %v2751, %v2753
      %v2755 = vrot.slane %v2419, 1
      %v2756 = vsel %vm871, %v2753, %v2755
      %v2757 = vrot.slane %v2420, 1
      %v2758 = vsel %vm871, %v2755, %v2757
      %v2759 = vrot.slane %v2421, 1
      %v2760 = vsel %vm871, %v2757, %v2759
      %v2761 = vrot.slane %v2422, 1
      %v2762 = vsel %vm871, %v2759, %v2761
      %v2763 = vrot.slane %v2423, 1
      %v2764 = vsel %vm871, %v2761, %v2763
      %v2765 = vrot.slane %v2424, 1
      %v2766 = vsel %vm871, %v2763, %v2765
      %v2767 = vrot.slane %v2425, 1
      %v2768 = vsel %vm871, %v2765, %v2767
      %v2769 = vrot.slane %v2426, 1
      %v2770 = vsel %vm871, %v2767, %v2769
      %v2802 = vunpack.c.l.b16 %v2723
      %v2803 = vunpack.c.l.b16 %v2724
      %v2804 = vunpack.c.l.b16 %v2725
      %v2805 = vunpack.c.l.b16 %v2726
      %v2806 = vunpack.c.l.b16 %v2727
      %v2807 = vunpack.c.l.b16 %v2728
      %v2808 = vunpack.c.l.b16 %v2729
      %v2809 = vunpack.c.l.b16 %v2730
      %v2810 = vunpack.c.l.b16 %v2731
      %v2811 = vunpack.c.l.b16 %v2732
      %v2812 = vunpack.c.l.b16 %v2733
      %v2813 = vunpack.c.l.b16 %v2734
      %v2814 = vunpack.c.l.b16 %v2735
      %v2815 = vunpack.c.l.b16 %v2736
      %v2816 = vunpack.c.l.b16 %v2737
      %v2817 = vunpack.c.l.b16 %v2738
      %v2818 = vpack.c.b16 %v2803, %v2802
      %v2819 = vpack.c.b16 %v2805, %v2804
      %v2820 = vpack.c.b16 %v2807, %v2806
      %v2821 = vpack.c.b16 %v2809, %v2808
      %v2822 = vpack.c.b16 %v2811, %v2810
      %v2823 = vpack.c.b16 %v2813, %v2812
      %v2824 = vpack.c.b16 %v2815, %v2814
      %v2825 = vpack.c.b16 %v2817, %v2816
      %2834 = vmatpush.bf16.msra.mxu0 %v2825
      %2835 = vmatpush.bf16.msra.mxu0 %v2824
      %2836 = vmatpush.bf16.msra.mxu0 %v2823
      %2837 = vmatpush.bf16.msra.mxu0 %v2822
      %2838 = vmatpush.bf16.msra.mxu0 %v2821
      %2839 = vmatpush.bf16.msra.mxu0 %v2820
      %2840 = vmatpush.bf16.msra.mxu0 %v2819
      %2841 = vmatpush.bf16.msra.mxu0 %v2818
      %2842 = vmatmul.bf16.gmra.mxu0 %v2744
      %v2843 = vpop.f32.mrf.mxu0
      %v2844 = vadd.f32 0.0, %v2843
      %v2845 = vpop.f32.mrf.mxu0
      %v2846 = vadd.f32 0.0, %v2845
      %2847 = vmatmul.bf16.gmra.mxu0 %v2746
      %v2848 = vpop.f32.mrf.mxu0
      %v2849 = vadd.f32 0.0, %v2848
      %v2850 = vpop.f32.mrf.mxu0
      %v2851 = vadd.f32 0.0, %v2850
      %2852 = vmatmul.bf16.gmra.mxu0 %v2748
      %v2853 = vpop.f32.mrf.mxu0
      %v2854 = vadd.f32 0.0, %v2853
      %v2855 = vpop.f32.mrf.mxu0
      %v2856 = vadd.f32 0.0, %v2855
      %2857 = vmatmul.bf16.gmra.mxu0 %v2750
      %v2858 = vpop.f32.mrf.mxu0
      %v2859 = vadd.f32 0.0, %v2858
      %v2860 = vpop.f32.mrf.mxu0
      %v2861 = vadd.f32 0.0, %v2860
      %2862 = vmatmul.bf16.gmra.mxu0 %v2752
      %v2863 = vpop.f32.mrf.mxu0
      %v2864 = vadd.f32 0.0, %v2863
      %v2865 = vpop.f32.mrf.mxu0
      %v2866 = vadd.f32 0.0, %v2865
      %2867 = vmatmul.bf16.gmra.mxu0 %v2754
      %v2868 = vpop.f32.mrf.mxu0
      %v2869 = vadd.f32 0.0, %v2868
      %v2870 = vpop.f32.mrf.mxu0
      %v2871 = vadd.f32 0.0, %v2870
      %2872 = vmatmul.bf16.gmra.mxu0 %v2756
      %v2873 = vpop.f32.mrf.mxu0
      %v2874 = vadd.f32 0.0, %v2873
      %v2875 = vpop.f32.mrf.mxu0
      %v2876 = vadd.f32 0.0, %v2875
      %2877 = vmatmul.bf16.gmra.mxu0 %v2758
      %v2878 = vpop.f32.mrf.mxu0
      %v2879 = vadd.f32 0.0, %v2878
      %v2880 = vpop.f32.mrf.mxu0
      %v2881 = vadd.f32 0.0, %v2880
      %2882 = vmatmul.bf16.gmra.mxu0 %v2760
      %v2883 = vpop.f32.mrf.mxu0
      %v2884 = vadd.f32 0.0, %v2883
      %v2885 = vpop.f32.mrf.mxu0
      %v2886 = vadd.f32 0.0, %v2885
      %2887 = vmatmul.bf16.gmra.mxu0 %v2762
      %v2888 = vpop.f32.mrf.mxu0
      %v2889 = vadd.f32 0.0, %v2888
      %v2890 = vpop.f32.mrf.mxu0
      %v2891 = vadd.f32 0.0, %v2890
      %2892 = vmatmul.bf16.gmra.mxu0 %v2764
      %v2893 = vpop.f32.mrf.mxu0
      %v2894 = vadd.f32 0.0, %v2893
      %v2895 = vpop.f32.mrf.mxu0
      %v2896 = vadd.f32 0.0, %v2895
      %2897 = vmatmul.bf16.gmra.mxu0 %v2766
      %v2898 = vpop.f32.mrf.mxu0
      %v2899 = vadd.f32 0.0, %v2898
      %v2900 = vpop.f32.mrf.mxu0
      %v2901 = vadd.f32 0.0, %v2900
      %2902 = vmatmul.bf16.gmra.mxu0 %v2768
      %v2903 = vpop.f32.mrf.mxu0
      %v2904 = vadd.f32 0.0, %v2903
      %v2905 = vpop.f32.mrf.mxu0
      %v2906 = vadd.f32 0.0, %v2905
      %2907 = vmatmul.bf16.gmra.mxu0 %v2770
      %v2908 = vpop.f32.mrf.mxu0
      %v2909 = vadd.f32 0.0, %v2908
      %v2910 = vpop.f32.mrf.mxu0
      %v2911 = vadd.f32 0.0, %v2910
      %2912 = vmatmul.bf16.gmra.mxu0 %v2769
      %v2913 = vpop.f32.mrf.mxu0
      %v2914 = vadd.f32 0.0, %v2913
      %v2915 = vpop.f32.mrf.mxu0
      %2916 = vdwg.mxu0
      %v2917 = vadd.f32 %v2692, %v2844
      %v2918 = vadd.f32 %v2693, %v2846
      %v2919 = vadd.f32 %v2694, %v2849
      %v2920 = vadd.f32 %v2695, %v2851
      %v2921 = vadd.f32 %v2696, %v2854
      %v2922 = vadd.f32 %v2697, %v2856
      %v2923 = vadd.f32 %v2698, %v2859
      %v2924 = vadd.f32 %v2699, %v2861
      %v2925 = vadd.f32 %v2700, %v2864
      %v2926 = vadd.f32 %v2701, %v2866
      %v2927 = vadd.f32 %v2702, %v2869
      %v2928 = vadd.f32 %v2703, %v2871
      %v2929 = vadd.f32 %v2704, %v2874
      %v2930 = vadd.f32 %v2705, %v2876
      %v2931 = vadd.f32 %v2706, %v2879
      %v2932 = vadd.f32 %v2707, %v2881
      %v2933 = vadd.f32 %v2708, %v2884
      %v2934 = vadd.f32 %v2709, %v2886
      %v2935 = vadd.f32 %v2710, %v2889
      %v2936 = vadd.f32 %v2711, %v2891
      %v2937 = vadd.f32 %v2712, %v2894
      %v2938 = vadd.f32 %v2713, %v2896
      %v2939 = vadd.f32 %v2714, %v2899
      %v2940 = vadd.f32 %v2715, %v2901
      %v2941 = vadd.f32 %v2716, %v2904
      %v2942 = vadd.f32 %v2717, %v2906
      %v2943 = vadd.f32 %v2718, %v2909
      %v2944 = vadd.f32 %v2719, %v2911
      %v2945 = vadd.f32 %v2720, %v2914
      %v2946 = vld [vmem:[%s293] sm:$0xf]
      %v2947 = vld [vmem:[%s293 + $0x4] sm:$0xf]
      %v2948 = vld [vmem:[%s293 + $0x8] sm:$0xf]
      %v2949 = vld [vmem:[%s293 + $0xc] sm:$0xf]
      %v2950 = vld [vmem:[%s293 + $0x10] sm:$0xf]
      %v2951 = vld [vmem:[%s293 + $0x14] sm:$0xf]
      %v2952 = vld [vmem:[%s293 + $0x18] sm:$0xf]
      %v2953 = vld [vmem:[%s293 + $0x1c] sm:$0xf]
      %v2954 = vld [vmem:[%s293 + $0x20] sm:$0xf]
      %v2955 = vld [vmem:[%s293 + $0x24] sm:$0xf]
      %v2956 = vld [vmem:[%s293 + $0x28] sm:$0xf]
      %v2957 = vld [vmem:[%s293 + $0x2c] sm:$0xf]
      %v2958 = vld [vmem:[%s293 + $0x30] sm:$0xf]
      %v2959 = vld [vmem:[%s293 + $0x34] sm:$0xf]
      %v2960 = vld [vmem:[%s293 + $0x38] sm:$0xf]
      %v2961 = vld [vmem:[%s293 + $0x3c] sm:$0xf]
      %v2962 = vld [vmem:[%s293 + $0x40] sm:$0xf]
      %v2963 = vld [vmem:[%s293 + $0x44] sm:$0xf]
      %v2964 = vld [vmem:[%s293 + $0x48] sm:$0xf]
      %v2965 = vld [vmem:[%s293 + $0x4c] sm:$0xf]
      %v2966 = vld [vmem:[%s293 + $0x50] sm:$0xf]
      %v2967 = vld [vmem:[%s293 + $0x54] sm:$0xf]
      %v2968 = vld [vmem:[%s293 + $0x58] sm:$0xf]
      %v2969 = vld [vmem:[%s293 + $0x5c] sm:$0xf]
      %v2970 = vld [vmem:[%s293 + $0x60] sm:$0xf]
      %v2971 = vld [vmem:[%s293 + $0x64] sm:$0xf]
      %v2972 = vld [vmem:[%s293 + $0x68] sm:$0xf]
      %v2973 = vld [vmem:[%s293 + $0x6c] sm:$0xf]
      %v2974 = vld [vmem:[%s293 + $0x70] sm:$0xf]
      %v2975 = vld [vmem:[%s3] sm:$0xf]
      %v2976 = vld [vmem:[%s3 + $0x4] sm:$0xf]
      %v2977 = vld [vmem:[%s3 + $0x8] sm:$0xf]
      %v2978 = vld [vmem:[%s3 + $0xc] sm:$0xf]
      %v2979 = vld [vmem:[%s3 + $0x10] sm:$0xf]
      %v2980 = vld [vmem:[%s3 + $0x14] sm:$0xf]
      %v2981 = vld [vmem:[%s3 + $0x18] sm:$0xf]
      %v2982 = vld [vmem:[%s3 + $0x1c] sm:$0xf]
      %v2983 = vld [vmem:[%s3 + $0x20] sm:$0xf]
      %v2984 = vld [vmem:[%s3 + $0x24] sm:$0xf]
      %v2985 = vld [vmem:[%s3 + $0x28] sm:$0xf]
      %v2986 = vld [vmem:[%s3 + $0x2c] sm:$0xf]
      %v2987 = vld [vmem:[%s3 + $0x30] sm:$0xf]
      %v2988 = vld [vmem:[%s3 + $0x34] sm:$0xf]
      %v2989 = vld [vmem:[%s3 + $0x38] sm:$0xf]
      %v2990 = vld [vmem:[%s3 + $0x3c] sm:$0xf]
      %v3020 = vunpack.c.l.b16 %v2946
      %v3021 = vunpack.c.l.b16 %v2947
      %v3022 = vunpack.c.l.b16 %v2948
      %v3023 = vunpack.c.l.b16 %v2949
      %v3024 = vunpack.c.l.b16 %v2950
      %v3025 = vunpack.c.l.b16 %v2951
      %v3026 = vunpack.c.l.b16 %v2952
      %v3027 = vunpack.c.l.b16 %v2953
      %v3028 = vunpack.c.l.b16 %v2954
      %v3029 = vunpack.c.l.b16 %v2955
      %v3030 = vunpack.c.l.b16 %v2956
      %v3031 = vunpack.c.l.b16 %v2957
      %v3032 = vunpack.c.l.b16 %v2958
      %v3033 = vunpack.c.l.b16 %v2959
      %v3034 = vunpack.c.l.b16 %v2960
      %v3035 = vunpack.c.l.b16 %v2961
      %v3036 = vunpack.c.l.b16 %v2962
      %v3037 = vunpack.c.l.b16 %v2963
      %v3038 = vunpack.c.l.b16 %v2964
      %v3039 = vunpack.c.l.b16 %v2965
      %v3040 = vunpack.c.l.b16 %v2966
      %v3041 = vunpack.c.l.b16 %v2967
      %v3042 = vunpack.c.l.b16 %v2968
      %v3043 = vunpack.c.l.b16 %v2969
      %v3044 = vunpack.c.l.b16 %v2970
      %v3045 = vunpack.c.l.b16 %v2971
      %v3046 = vunpack.c.l.b16 %v2972
      %v3047 = vunpack.c.l.b16 %v2973
      %v3048 = vunpack.c.l.b16 %v2974
      %v3049 = vpack.c.b16 %v3021, %v3020
      %v3050 = vpack.c.b16 %v3023, %v3022
      %v3051 = vpack.c.b16 %v3025, %v3024
      %v3052 = vpack.c.b16 %v3027, %v3026
      %v3053 = vpack.c.b16 %v3029, %v3028
      %v3054 = vpack.c.b16 %v3031, %v3030
      %v3055 = vpack.c.b16 %v3033, %v3032
      %v3056 = vpack.c.b16 %v3035, %v3034
      %v3057 = vpack.c.b16 %v3037, %v3036
      %v3058 = vpack.c.b16 %v3039, %v3038
      %v3059 = vpack.c.b16 %v3041, %v3040
      %v3060 = vpack.c.b16 %v3043, %v3042
      %v3061 = vpack.c.b16 %v3045, %v3044
      %v3062 = vpack.c.b16 %v3047, %v3046
      %v3063 = vpack.c.b16 %v3048, %v3048
      %v3095 = vunpack.c.l.b16 %v2975
      %v3096 = vunpack.c.l.b16 %v2976
      %v3097 = vunpack.c.l.b16 %v2977
      %v3098 = vunpack.c.l.b16 %v2978
      %v3099 = vunpack.c.l.b16 %v2979
      %v3100 = vunpack.c.l.b16 %v2980
      %v3101 = vunpack.c.l.b16 %v2981
      %v3102 = vunpack.c.l.b16 %v2982
      %v3103 = vunpack.c.l.b16 %v2983
      %v3104 = vunpack.c.l.b16 %v2984
      %v3105 = vunpack.c.l.b16 %v2985
      %v3106 = vunpack.c.l.b16 %v2986
      %v3107 = vunpack.c.l.b16 %v2987
      %v3108 = vunpack.c.l.b16 %v2988
      %v3109 = vunpack.c.l.b16 %v2989
      %v3110 = vunpack.c.l.b16 %v2990
      %v3111 = vpack.c.b16 %v3096, %v3095
      %v3112 = vpack.c.b16 %v3098, %v3097
      %v3113 = vpack.c.b16 %v3100, %v3099
      %v3114 = vpack.c.b16 %v3102, %v3101
      %v3115 = vpack.c.b16 %v3104, %v3103
      %v3116 = vpack.c.b16 %v3106, %v3105
      %v3117 = vpack.c.b16 %v3108, %v3107
      %v3118 = vpack.c.b16 %v3110, %v3109
      %3127 = vmatpush.bf16.msra.mxu0 %v3118
      %3128 = vmatpush.bf16.msra.mxu0 %v3117
      %3129 = vmatpush.bf16.msra.mxu0 %v3116
      %3130 = vmatpush.bf16.msra.mxu0 %v3115
      %3131 = vmatpush.bf16.msra.mxu0 %v3114
      %3132 = vmatpush.bf16.msra.mxu0 %v3113
      %3133 = vmatpush.bf16.msra.mxu0 %v3112
      %3134 = vmatpush.bf16.msra.mxu0 %v3111
      %3135 = vmatmul.bf16.gmra.mxu0 %v3049
      %v3136 = vpop.f32.mrf.mxu0
      %v3137 = vadd.f32 0.0, %v3136
      %v3138 = vpop.f32.mrf.mxu0
      %v3139 = vadd.f32 0.0, %v3138
      %3140 = vmatmul.bf16.gmra.mxu0 %v3050
      %v3141 = vpop.f32.mrf.mxu0
      %v3142 = vadd.f32 0.0, %v3141
      %v3143 = vpop.f32.mrf.mxu0
      %v3144 = vadd.f32 0.0, %v3143
      %3145 = vmatmul.bf16.gmra.mxu0 %v3051
      %v3146 = vpop.f32.mrf.mxu0
      %v3147 = vadd.f32 0.0, %v3146
      %v3148 = vpop.f32.mrf.mxu0
      %v3149 = vadd.f32 0.0, %v3148
      %3150 = vmatmul.bf16.gmra.mxu0 %v3052
      %v3151 = vpop.f32.mrf.mxu0
      %v3152 = vadd.f32 0.0, %v3151
      %v3153 = vpop.f32.mrf.mxu0
      %v3154 = vadd.f32 0.0, %v3153
      %3155 = vmatmul.bf16.gmra.mxu0 %v3053
      %v3156 = vpop.f32.mrf.mxu0
      %v3157 = vadd.f32 0.0, %v3156
      %v3158 = vpop.f32.mrf.mxu0
      %v3159 = vadd.f32 0.0, %v3158
      %3160 = vmatmul.bf16.gmra.mxu0 %v3054
      %v3161 = vpop.f32.mrf.mxu0
      %v3162 = vadd.f32 0.0, %v3161
      %v3163 = vpop.f32.mrf.mxu0
      %v3164 = vadd.f32 0.0, %v3163
      %3165 = vmatmul.bf16.gmra.mxu0 %v3055
      %v3166 = vpop.f32.mrf.mxu0
      %v3167 = vadd.f32 0.0, %v3166
      %v3168 = vpop.f32.mrf.mxu0
      %v3169 = vadd.f32 0.0, %v3168
      %3170 = vmatmul.bf16.gmra.mxu0 %v3056
      %v3171 = vpop.f32.mrf.mxu0
      %v3172 = vadd.f32 0.0, %v3171
      %v3173 = vpop.f32.mrf.mxu0
      %v3174 = vadd.f32 0.0, %v3173
      %3175 = vmatmul.bf16.gmra.mxu0 %v3057
      %v3176 = vpop.f32.mrf.mxu0
      %v3177 = vadd.f32 0.0, %v3176
      %v3178 = vpop.f32.mrf.mxu0
      %v3179 = vadd.f32 0.0, %v3178
      %3180 = vmatmul.bf16.gmra.mxu0 %v3058
      %v3181 = vpop.f32.mrf.mxu0
      %v3182 = vadd.f32 0.0, %v3181
      %v3183 = vpop.f32.mrf.mxu0
      %v3184 = vadd.f32 0.0, %v3183
      %3185 = vmatmul.bf16.gmra.mxu0 %v3059
      %v3186 = vpop.f32.mrf.mxu0
      %v3187 = vadd.f32 0.0, %v3186
      %v3188 = vpop.f32.mrf.mxu0
      %v3189 = vadd.f32 0.0, %v3188
      %3190 = vmatmul.bf16.gmra.mxu0 %v3060
      %v3191 = vpop.f32.mrf.mxu0
      %v3192 = vadd.f32 0.0, %v3191
      %v3193 = vpop.f32.mrf.mxu0
      %v3194 = vadd.f32 0.0, %v3193
      %3195 = vmatmul.bf16.gmra.mxu0 %v3061
      %v3196 = vpop.f32.mrf.mxu0
      %v3197 = vadd.f32 0.0, %v3196
      %v3198 = vpop.f32.mrf.mxu0
      %v3199 = vadd.f32 0.0, %v3198
      %3200 = vmatmul.bf16.gmra.mxu0 %v3062
      %v3201 = vpop.f32.mrf.mxu0
      %v3202 = vadd.f32 0.0, %v3201
      %v3203 = vpop.f32.mrf.mxu0
      %v3204 = vadd.f32 0.0, %v3203
      %3205 = vmatmul.bf16.gmra.mxu0 %v3063
      %v3206 = vpop.f32.mrf.mxu0
      %v3207 = vadd.f32 0.0, %v3206
      %v3208 = vpop.f32.mrf.mxu0
      %3209 = vdwg.mxu0
      %v3210 = vadd.f32 %v2917, %v3137
      %v3211 = vadd.f32 %v2918, %v3139
      %v3212 = vadd.f32 %v2919, %v3142
      %v3213 = vadd.f32 %v2920, %v3144
      %v3214 = vadd.f32 %v2921, %v3147
      %v3215 = vadd.f32 %v2922, %v3149
      %v3216 = vadd.f32 %v2923, %v3152
      %v3217 = vadd.f32 %v2924, %v3154
      %v3218 = vadd.f32 %v2925, %v3157
      %v3219 = vadd.f32 %v2926, %v3159
      %v3220 = vadd.f32 %v2927, %v3162
      %v3221 = vadd.f32 %v2928, %v3164
      %v3222 = vadd.f32 %v2929, %v3167
      %v3223 = vadd.f32 %v2930, %v3169
      %v3224 = vadd.f32 %v2931, %v3172
      %v3225 = vadd.f32 %v2932, %v3174
      %v3226 = vadd.f32 %v2933, %v3177
      %v3227 = vadd.f32 %v2934, %v3179
      %v3228 = vadd.f32 %v2935, %v3182
      %v3229 = vadd.f32 %v2936, %v3184
      %v3230 = vadd.f32 %v2937, %v3187
      %v3231 = vadd.f32 %v2938, %v3189
      %v3232 = vadd.f32 %v2939, %v3192
      %v3233 = vadd.f32 %v2940, %v3194
      %v3234 = vadd.f32 %v2941, %v3197
      %v3235 = vadd.f32 %v2942, %v3199
      %v3236 = vadd.f32 %v2943, %v3202
      %v3237 = vadd.f32 %v2944, %v3204
      %v3238 = vadd.f32 %v2945, %v3207
      %v3239 = vld [vmem:[%s293] sm:$0xf]
      %v3240 = vld [vmem:[%s293 + $0x4] sm:$0xf]
      %v3241 = vld [vmem:[%s293 + $0x8] sm:$0xf]
      %v3242 = vld [vmem:[%s293 + $0xc] sm:$0xf]
      %v3243 = vld [vmem:[%s293 + $0x10] sm:$0xf]
      %v3244 = vld [vmem:[%s293 + $0x14] sm:$0xf]
      %v3245 = vld [vmem:[%s293 + $0x18] sm:$0xf]
      %v3246 = vld [vmem:[%s293 + $0x1c] sm:$0xf]
      %v3247 = vld [vmem:[%s293 + $0x20] sm:$0xf]
      %v3248 = vld [vmem:[%s293 + $0x24] sm:$0xf]
      %v3249 = vld [vmem:[%s293 + $0x28] sm:$0xf]
      %v3250 = vld [vmem:[%s293 + $0x2c] sm:$0xf]
      %v3251 = vld [vmem:[%s293 + $0x30] sm:$0xf]
      %v3252 = vld [vmem:[%s293 + $0x34] sm:$0xf]
      %v3253 = vld [vmem:[%s293 + $0x38] sm:$0xf]
      %v3254 = vld [vmem:[%s293 + $0x3c] sm:$0xf]
      %v3255 = vld [vmem:[%s293 + $0x40] sm:$0xf]
      %v3256 = vld [vmem:[%s293 + $0x44] sm:$0xf]
      %v3257 = vld [vmem:[%s293 + $0x48] sm:$0xf]
      %v3258 = vld [vmem:[%s293 + $0x4c] sm:$0xf]
      %v3259 = vld [vmem:[%s293 + $0x50] sm:$0xf]
      %v3260 = vld [vmem:[%s293 + $0x54] sm:$0xf]
      %v3261 = vld [vmem:[%s293 + $0x58] sm:$0xf]
      %v3262 = vld [vmem:[%s293 + $0x5c] sm:$0xf]
      %v3263 = vld [vmem:[%s293 + $0x60] sm:$0xf]
      %v3264 = vld [vmem:[%s293 + $0x64] sm:$0xf]
      %v3265 = vld [vmem:[%s293 + $0x68] sm:$0xf]
      %v3266 = vld [vmem:[%s293 + $0x6c] sm:$0xf]
      %v3267 = vld [vmem:[%s293 + $0x70] sm:$0xf]
      %v3268 = vld [vmem:[%s293 + $0x74] sm:$0x1]
      %s3269 = scalar_lea.vmem %s3, 64
      %v3270 = vld [vmem:[%s3269] sm:$0xf]
      %v3271 = vld [vmem:[%s3269 + $0x4] sm:$0xf]
      %v3272 = vld [vmem:[%s3269 + $0x8] sm:$0xf]
      %v3273 = vld [vmem:[%s3269 + $0xc] sm:$0xf]
      %v3274 = vld [vmem:[%s3269 + $0x10] sm:$0xf]
      %v3275 = vld [vmem:[%s3269 + $0x14] sm:$0xf]
      %v3276 = vld [vmem:[%s3269 + $0x18] sm:$0xf]
      %v3277 = vld [vmem:[%s3269 + $0x1c] sm:$0xf]
      %v3278 = vld [vmem:[%s3269 + $0x20] sm:$0xf]
      %v3279 = vld [vmem:[%s3269 + $0x24] sm:$0xf]
      %v3280 = vld [vmem:[%s3269 + $0x28] sm:$0xf]
      %v3281 = vld [vmem:[%s3269 + $0x2c] sm:$0xf]
      %v3282 = vld [vmem:[%s3269 + $0x30] sm:$0xf]
      %v3283 = vld [vmem:[%s3269 + $0x34] sm:$0xf]
      %v3284 = vld [vmem:[%s3269 + $0x38] sm:$0xf]
      %v3285 = vld [vmem:[%s3269 + $0x3c] sm:$0xf]
      %v3316 = vunpack.c.l.b16 %v3239
      %v3317 = vunpack.c.l.b16 %v3240
      %v3318 = vunpack.c.l.b16 %v3241
      %v3319 = vunpack.c.l.b16 %v3242
      %v3320 = vunpack.c.l.b16 %v3243
      %v3321 = vunpack.c.l.b16 %v3244
      %v3322 = vunpack.c.l.b16 %v3245
      %v3323 = vunpack.c.l.b16 %v3246
      %v3324 = vunpack.c.l.b16 %v3247
      %v3325 = vunpack.c.l.b16 %v3248
      %v3326 = vunpack.c.l.b16 %v3249
      %v3327 = vunpack.c.l.b16 %v3250
      %v3328 = vunpack.c.l.b16 %v3251
      %v3329 = vunpack.c.l.b16 %v3252
      %v3330 = vunpack.c.l.b16 %v3253
      %v3331 = vunpack.c.l.b16 %v3254
      %v3332 = vunpack.c.l.b16 %v3255
      %v3333 = vunpack.c.l.b16 %v3256
      %v3334 = vunpack.c.l.b16 %v3257
      %v3335 = vunpack.c.l.b16 %v3258
      %v3336 = vunpack.c.l.b16 %v3259
      %v3337 = vunpack.c.l.b16 %v3260
      %v3338 = vunpack.c.l.b16 %v3261
      %v3339 = vunpack.c.l.b16 %v3262
      %v3340 = vunpack.c.l.b16 %v3263
      %v3341 = vunpack.c.l.b16 %v3264
      %v3342 = vunpack.c.l.b16 %v3265
      %v3343 = vunpack.c.l.b16 %v3266
      %v3344 = vunpack.c.l.b16 %v3267
      %v3345 = vunpack.c.l.b16 %v3268
      %v3346 = vpack.c.b16 %v3317, %v3316
      %v3347 = vpack.c.b16 %v3319, %v3318
      %v3348 = vpack.c.b16 %v3321, %v3320
      %v3349 = vpack.c.b16 %v3323, %v3322
      %v3350 = vpack.c.b16 %v3325, %v3324
      %v3351 = vpack.c.b16 %v3327, %v3326
      %v3352 = vpack.c.b16 %v3329, %v3328
      %v3353 = vpack.c.b16 %v3331, %v3330
      %v3354 = vpack.c.b16 %v3333, %v3332
      %v3355 = vpack.c.b16 %v3335, %v3334
      %v3356 = vpack.c.b16 %v3337, %v3336
      %v3357 = vpack.c.b16 %v3339, %v3338
      %v3358 = vpack.c.b16 %v3341, %v3340
      %v3359 = vpack.c.b16 %v3343, %v3342
      %v3360 = vpack.c.b16 %v3345, %v3344
      %v3362 = vshrl.u32 %v3346, 16
      %v3364 = vshll.u32 %v3346, 16
      %v3366 = vrot.slane %v3364, 1
      %v3367 = vor.u32 %v3362, %v3366
      %v3369 = vshll.u32 %v3347, 16
      %v3371 = vrot.slane %v3369, 1
      %v3372 = vsel %vm437, %v3367, %v3371
      %v3373 = vshrl.u32 %v3347, 16
      %v3375 = vor.u32 %v3373, %v3371
      %v3377 = vshll.u32 %v3348, 16
      %v3379 = vrot.slane %v3377, 1
      %v3380 = vsel %vm437, %v3375, %v3379
      %v3381 = vshrl.u32 %v3348, 16
      %v3383 = vor.u32 %v3381, %v3379
      %v3385 = vshll.u32 %v3349, 16
      %v3387 = vrot.slane %v3385, 1
      %v3388 = vsel %vm437, %v3383, %v3387
      %v3389 = vshrl.u32 %v3349, 16
      %v3391 = vor.u32 %v3389, %v3387
      %v3393 = vshll.u32 %v3350, 16
      %v3395 = vrot.slane %v3393, 1
      %v3396 = vsel %vm437, %v3391, %v3395
      %v3397 = vshrl.u32 %v3350, 16
      %v3399 = vor.u32 %v3397, %v3395
      %v3401 = vshll.u32 %v3351, 16
      %v3403 = vrot.slane %v3401, 1
      %v3404 = vsel %vm437, %v3399, %v3403
      %v3405 = vshrl.u32 %v3351, 16
      %v3407 = vor.u32 %v3405, %v3403
      %v3409 = vshll.u32 %v3352, 16
      %v3411 = vrot.slane %v3409, 1
      %v3412 = vsel %vm437, %v3407, %v3411
      %v3413 = vshrl.u32 %v3352, 16
      %v3415 = vor.u32 %v3413, %v3411
      %v3417 = vshll.u32 %v3353, 16
      %v3419 = vrot.slane %v3417, 1
      %v3420 = vsel %vm437, %v3415, %v3419
      %v3421 = vshrl.u32 %v3353, 16
      %v3423 = vor.u32 %v3421, %v3419
      %v3425 = vshll.u32 %v3354, 16
      %v3427 = vrot.slane %v3425, 1
      %v3428 = vsel %vm437, %v3423, %v3427
      %v3429 = vshrl.u32 %v3354, 16
      %v3431 = vor.u32 %v3429, %v3427
      %v3433 = vshll.u32 %v3355, 16
      %v3435 = vrot.slane %v3433, 1
      %v3436 = vsel %vm437, %v3431, %v3435
      %v3437 = vshrl.u32 %v3355, 16
      %v3439 = vor.u32 %v3437, %v3435
      %v3441 = vshll.u32 %v3356, 16
      %v3443 = vrot.slane %v3441, 1
      %v3444 = vsel %vm437, %v3439, %v3443
      %v3445 = vshrl.u32 %v3356, 16
      %v3447 = vor.u32 %v3445, %v3443
      %v3449 = vshll.u32 %v3357, 16
      %v3451 = vrot.slane %v3449, 1
      %v3452 = vsel %vm437, %v3447, %v3451
      %v3453 = vshrl.u32 %v3357, 16
      %v3455 = vor.u32 %v3453, %v3451
      %v3457 = vshll.u32 %v3358, 16
      %v3459 = vrot.slane %v3457, 1
      %v3460 = vsel %vm437, %v3455, %v3459
      %v3461 = vshrl.u32 %v3358, 16
      %v3463 = vor.u32 %v3461, %v3459
      %v3465 = vshll.u32 %v3359, 16
      %v3467 = vrot.slane %v3465, 1
      %v3468 = vsel %vm437, %v3463, %v3467
      %v3469 = vshrl.u32 %v3359, 16
      %v3471 = vor.u32 %v3469, %v3467
      %v3473 = vshll.u32 %v3360, 16
      %v3475 = vrot.slane %v3473, 1
      %v3476 = vsel %vm437, %v3471, %v3475
      %v3477 = vshrl.u32 %v3360, 16
      %v3479 = vor.u32 %v3477, %v3475
      %v3511 = vunpack.c.l.b16 %v3270
      %v3512 = vunpack.c.l.b16 %v3271
      %v3513 = vunpack.c.l.b16 %v3272
      %v3514 = vunpack.c.l.b16 %v3273
      %v3515 = vunpack.c.l.b16 %v3274
      %v3516 = vunpack.c.l.b16 %v3275
      %v3517 = vunpack.c.l.b16 %v3276
      %v3518 = vunpack.c.l.b16 %v3277
      %v3519 = vunpack.c.l.b16 %v3278
      %v3520 = vunpack.c.l.b16 %v3279
      %v3521 = vunpack.c.l.b16 %v3280
      %v3522 = vunpack.c.l.b16 %v3281
      %v3523 = vunpack.c.l.b16 %v3282
      %v3524 = vunpack.c.l.b16 %v3283
      %v3525 = vunpack.c.l.b16 %v3284
      %v3526 = vunpack.c.l.b16 %v3285
      %v3527 = vpack.c.b16 %v3512, %v3511
      %v3528 = vpack.c.b16 %v3514, %v3513
      %v3529 = vpack.c.b16 %v3516, %v3515
      %v3530 = vpack.c.b16 %v3518, %v3517
      %v3531 = vpack.c.b16 %v3520, %v3519
      %v3532 = vpack.c.b16 %v3522, %v3521
      %v3533 = vpack.c.b16 %v3524, %v3523
      %v3534 = vpack.c.b16 %v3526, %v3525
      %3543 = vmatpush.bf16.msra.mxu0 %v3534
      %3544 = vmatpush.bf16.msra.mxu0 %v3533
      %3545 = vmatpush.bf16.msra.mxu0 %v3532
      %3546 = vmatpush.bf16.msra.mxu0 %v3531
      %3547 = vmatpush.bf16.msra.mxu0 %v3530
      %3548 = vmatpush.bf16.msra.mxu0 %v3529
      %3549 = vmatpush.bf16.msra.mxu0 %v3528
      %3550 = vmatpush.bf16.msra.mxu0 %v3527
      %3551 = vmatmul.bf16.gmra.mxu0 %v3372
      %v3552 = vpop.f32.mrf.mxu0
      %v3553 = vadd.f32 0.0, %v3552
      %v3554 = vpop.f32.mrf.mxu0
      %v3555 = vadd.f32 0.0, %v3554
      %3556 = vmatmul.bf16.gmra.mxu0 %v3380
      %v3557 = vpop.f32.mrf.mxu0
      %v3558 = vadd.f32 0.0, %v3557
      %v3559 = vpop.f32.mrf.mxu0
      %v3560 = vadd.f32 0.0, %v3559
      %3561 = vmatmul.bf16.gmra.mxu0 %v3388
      %v3562 = vpop.f32.mrf.mxu0
      %v3563 = vadd.f32 0.0, %v3562
      %v3564 = vpop.f32.mrf.mxu0
      %v3565 = vadd.f32 0.0, %v3564
      %3566 = vmatmul.bf16.gmra.mxu0 %v3396
      %v3567 = vpop.f32.mrf.mxu0
      %v3568 = vadd.f32 0.0, %v3567
      %v3569 = vpop.f32.mrf.mxu0
      %v3570 = vadd.f32 0.0, %v3569
      %3571 = vmatmul.bf16.gmra.mxu0 %v3404
      %v3572 = vpop.f32.mrf.mxu0
      %v3573 = vadd.f32 0.0, %v3572
      %v3574 = vpop.f32.mrf.mxu0
      %v3575 = vadd.f32 0.0, %v3574
      %3576 = vmatmul.bf16.gmra.mxu0 %v3412
      %v3577 = vpop.f32.mrf.mxu0
      %v3578 = vadd.f32 0.0, %v3577
      %v3579 = vpop.f32.mrf.mxu0
      %v3580 = vadd.f32 0.0, %v3579
      %3581 = vmatmul.bf16.gmra.mxu0 %v3420
      %v3582 = vpop.f32.mrf.mxu0
      %v3583 = vadd.f32 0.0, %v3582
      %v3584 = vpop.f32.mrf.mxu0
      %v3585 = vadd.f32 0.0, %v3584
      %3586 = vmatmul.bf16.gmra.mxu0 %v3428
      %v3587 = vpop.f32.mrf.mxu0
      %v3588 = vadd.f32 0.0, %v3587
      %v3589 = vpop.f32.mrf.mxu0
      %v3590 = vadd.f32 0.0, %v3589
      %3591 = vmatmul.bf16.gmra.mxu0 %v3436
      %v3592 = vpop.f32.mrf.mxu0
      %v3593 = vadd.f32 0.0, %v3592
      %v3594 = vpop.f32.mrf.mxu0
      %v3595 = vadd.f32 0.0, %v3594
      %3596 = vmatmul.bf16.gmra.mxu0 %v3444
      %v3597 = vpop.f32.mrf.mxu0
      %v3598 = vadd.f32 0.0, %v3597
      %v3599 = vpop.f32.mrf.mxu0
      %v3600 = vadd.f32 0.0, %v3599
      %3601 = vmatmul.bf16.gmra.mxu0 %v3452
      %v3602 = vpop.f32.mrf.mxu0
      %v3603 = vadd.f32 0.0, %v3602
      %v3604 = vpop.f32.mrf.mxu0
      %v3605 = vadd.f32 0.0, %v3604
      %3606 = vmatmul.bf16.gmra.mxu0 %v3460
      %v3607 = vpop.f32.mrf.mxu0
      %v3608 = vadd.f32 0.0, %v3607
      %v3609 = vpop.f32.mrf.mxu0
      %v3610 = vadd.f32 0.0, %v3609
      %3611 = vmatmul.bf16.gmra.mxu0 %v3468
      %v3612 = vpop.f32.mrf.mxu0
      %v3613 = vadd.f32 0.0, %v3612
      %v3614 = vpop.f32.mrf.mxu0
      %v3615 = vadd.f32 0.0, %v3614
      %3616 = vmatmul.bf16.gmra.mxu0 %v3476
      %v3617 = vpop.f32.mrf.mxu0
      %v3618 = vadd.f32 0.0, %v3617
      %v3619 = vpop.f32.mrf.mxu0
      %v3620 = vadd.f32 0.0, %v3619
      %3621 = vmatmul.bf16.gmra.mxu0 %v3479
      %v3622 = vpop.f32.mrf.mxu0
      %v3623 = vadd.f32 0.0, %v3622
      %v3624 = vpop.f32.mrf.mxu0
      %3625 = vdwg.mxu0
      %v3626 = vadd.f32 %v3210, %v3553
      %v3627 = vadd.f32 %v3211, %v3555
      %v3628 = vadd.f32 %v3212, %v3558
      %v3629 = vadd.f32 %v3213, %v3560
      %v3630 = vadd.f32 %v3214, %v3563
      %v3631 = vadd.f32 %v3215, %v3565
      %v3632 = vadd.f32 %v3216, %v3568
      %v3633 = vadd.f32 %v3217, %v3570
      %v3634 = vadd.f32 %v3218, %v3573
      %v3635 = vadd.f32 %v3219, %v3575
      %v3636 = vadd.f32 %v3220, %v3578
      %v3637 = vadd.f32 %v3221, %v3580
      %v3638 = vadd.f32 %v3222, %v3583
      %v3639 = vadd.f32 %v3223, %v3585
      %v3640 = vadd.f32 %v3224, %v3588
      %v3641 = vadd.f32 %v3225, %v3590
      %v3642 = vadd.f32 %v3226, %v3593
      %v3643 = vadd.f32 %v3227, %v3595
      %v3644 = vadd.f32 %v3228, %v3598
      %v3645 = vadd.f32 %v3229, %v3600
      %v3646 = vadd.f32 %v3230, %v3603
      %v3647 = vadd.f32 %v3231, %v3605
      %v3648 = vadd.f32 %v3232, %v3608
      %v3649 = vadd.f32 %v3233, %v3610
      %v3650 = vadd.f32 %v3234, %v3613
      %v3651 = vadd.f32 %v3235, %v3615
      %v3652 = vadd.f32 %v3236, %v3618
      %v3653 = vadd.f32 %v3237, %v3620
      %v3654 = vadd.f32 %v3238, %v3623
      %v3655 = vld [vmem:[%s293] sm:$0xe]
      %s3656 = scalar_lea.vmem %s3, 128
      %v3657 = vld [vmem:[%s3656] sm:$0xf]
      %v3658 = vld [vmem:[%s3656 + $0x4] sm:$0xf]
      %v3659 = vld [vmem:[%s3656 + $0x8] sm:$0xf]
      %v3660 = vld [vmem:[%s3656 + $0xc] sm:$0xf]
      %v3661 = vld [vmem:[%s3656 + $0x10] sm:$0xf]
      %v3662 = vld [vmem:[%s3656 + $0x14] sm:$0xf]
      %v3663 = vld [vmem:[%s3656 + $0x18] sm:$0xf]
      %v3664 = vld [vmem:[%s3656 + $0x1c] sm:$0xf]
      %v3665 = vld [vmem:[%s3656 + $0x20] sm:$0xf]
      %v3666 = vld [vmem:[%s3656 + $0x24] sm:$0xf]
      %v3667 = vld [vmem:[%s3656 + $0x28] sm:$0xf]
      %v3668 = vld [vmem:[%s3656 + $0x2c] sm:$0xf]
      %v3669 = vld [vmem:[%s3656 + $0x30] sm:$0xf]
      %v3670 = vld [vmem:[%s3656 + $0x34] sm:$0xf]
      %v3671 = vld [vmem:[%s3656 + $0x38] sm:$0xf]
      %v3672 = vld [vmem:[%s3656 + $0x3c] sm:$0xf]
      %v3674 = vunpack.c.l.b16 %v3655
      %v3675 = vpack.c.b16 %v3317, %v3674
      %v3676 = vrot.slane %v3675, 1
      %v3677 = vrot.slane %v3347, 1
      %v3678 = vsel %vm871, %v3676, %v3677
      %v3679 = vrot.slane %v3348, 1
      %v3680 = vsel %vm871, %v3677, %v3679
      %v3681 = vrot.slane %v3349, 1
      %v3682 = vsel %vm871, %v3679, %v3681
      %v3683 = vrot.slane %v3350, 1
      %v3684 = vsel %vm871, %v3681, %v3683
      %v3685 = vrot.slane %v3351, 1
      %v3686 = vsel %vm871, %v3683, %v3685
      %v3687 = vrot.slane %v3352, 1
      %v3688 = vsel %vm871, %v3685, %v3687
      %v3689 = vrot.slane %v3353, 1
      %v3690 = vsel %vm871, %v3687, %v3689
      %v3691 = vrot.slane %v3354, 1
      %v3692 = vsel %vm871, %v3689, %v3691
      %v3693 = vrot.slane %v3355, 1
      %v3694 = vsel %vm871, %v3691, %v3693
      %v3695 = vrot.slane %v3356, 1
      %v3696 = vsel %vm871, %v3693, %v3695
      %v3697 = vrot.slane %v3357, 1
      %v3698 = vsel %vm871, %v3695, %v3697
      %v3699 = vrot.slane %v3358, 1
      %v3700 = vsel %vm871, %v3697, %v3699
      %v3701 = vrot.slane %v3359, 1
      %v3702 = vsel %vm871, %v3699, %v3701
      %v3703 = vrot.slane %v3360, 1
      %v3704 = vsel %vm871, %v3701, %v3703
      %v3736 = vunpack.c.l.b16 %v3657
      %v3737 = vunpack.c.l.b16 %v3658
      %v3738 = vunpack.c.l.b16 %v3659
      %v3739 = vunpack.c.l.b16 %v3660
      %v3740 = vunpack.c.l.b16 %v3661
      %v3741 = vunpack.c.l.b16 %v3662
      %v3742 = vunpack.c.l.b16 %v3663
      %v3743 = vunpack.c.l.b16 %v3664
      %v3744 = vunpack.c.l.b16 %v3665
      %v3745 = vunpack.c.l.b16 %v3666
      %v3746 = vunpack.c.l.b16 %v3667
      %v3747 = vunpack.c.l.b16 %v3668
      %v3748 = vunpack.c.l.b16 %v3669
      %v3749 = vunpack.c.l.b16 %v3670
      %v3750 = vunpack.c.l.b16 %v3671
      %v3751 = vunpack.c.l.b16 %v3672
      %v3752 = vpack.c.b16 %v3737, %v3736
      %v3753 = vpack.c.b16 %v3739, %v3738
      %v3754 = vpack.c.b16 %v3741, %v3740
      %v3755 = vpack.c.b16 %v3743, %v3742
      %v3756 = vpack.c.b16 %v3745, %v3744
      %v3757 = vpack.c.b16 %v3747, %v3746
      %v3758 = vpack.c.b16 %v3749, %v3748
      %v3759 = vpack.c.b16 %v3751, %v3750
      %3768 = vmatpush.bf16.msra.mxu0 %v3759
      %3769 = vmatpush.bf16.msra.mxu0 %v3758
      %3770 = vmatpush.bf16.msra.mxu0 %v3757
      %3771 = vmatpush.bf16.msra.mxu0 %v3756
      %3772 = vmatpush.bf16.msra.mxu0 %v3755
      %3773 = vmatpush.bf16.msra.mxu0 %v3754
      %3774 = vmatpush.bf16.msra.mxu0 %v3753
      %3775 = vmatpush.bf16.msra.mxu0 %v3752
      %3776 = vmatmul.bf16.gmra.mxu0 %v3678
      %v3777 = vpop.f32.mrf.mxu0
      %v3778 = vadd.f32 0.0, %v3777
      %v3779 = vpop.f32.mrf.mxu0
      %v3780 = vadd.f32 0.0, %v3779
      %3781 = vmatmul.bf16.gmra.mxu0 %v3680
      %v3782 = vpop.f32.mrf.mxu0
      %v3783 = vadd.f32 0.0, %v3782
      %v3784 = vpop.f32.mrf.mxu0
      %v3785 = vadd.f32 0.0, %v3784
      %3786 = vmatmul.bf16.gmra.mxu0 %v3682
      %v3787 = vpop.f32.mrf.mxu0
      %v3788 = vadd.f32 0.0, %v3787
      %v3789 = vpop.f32.mrf.mxu0
      %v3790 = vadd.f32 0.0, %v3789
      %3791 = vmatmul.bf16.gmra.mxu0 %v3684
      %v3792 = vpop.f32.mrf.mxu0
      %v3793 = vadd.f32 0.0, %v3792
      %v3794 = vpop.f32.mrf.mxu0
      %v3795 = vadd.f32 0.0, %v3794
      %3796 = vmatmul.bf16.gmra.mxu0 %v3686
      %v3797 = vpop.f32.mrf.mxu0
      %v3798 = vadd.f32 0.0, %v3797
      %v3799 = vpop.f32.mrf.mxu0
      %v3800 = vadd.f32 0.0, %v3799
      %3801 = vmatmul.bf16.gmra.mxu0 %v3688
      %v3802 = vpop.f32.mrf.mxu0
      %v3803 = vadd.f32 0.0, %v3802
      %v3804 = vpop.f32.mrf.mxu0
      %v3805 = vadd.f32 0.0, %v3804
      %3806 = vmatmul.bf16.gmra.mxu0 %v3690
      %v3807 = vpop.f32.mrf.mxu0
      %v3808 = vadd.f32 0.0, %v3807
      %v3809 = vpop.f32.mrf.mxu0
      %v3810 = vadd.f32 0.0, %v3809
      %3811 = vmatmul.bf16.gmra.mxu0 %v3692
      %v3812 = vpop.f32.mrf.mxu0
      %v3813 = vadd.f32 0.0, %v3812
      %v3814 = vpop.f32.mrf.mxu0
      %v3815 = vadd.f32 0.0, %v3814
      %3816 = vmatmul.bf16.gmra.mxu0 %v3694
      %v3817 = vpop.f32.mrf.mxu0
      %v3818 = vadd.f32 0.0, %v3817
      %v3819 = vpop.f32.mrf.mxu0
      %v3820 = vadd.f32 0.0, %v3819
      %3821 = vmatmul.bf16.gmra.mxu0 %v3696
      %v3822 = vpop.f32.mrf.mxu0
      %v3823 = vadd.f32 0.0, %v3822
      %v3824 = vpop.f32.mrf.mxu0
      %v3825 = vadd.f32 0.0, %v3824
      %3826 = vmatmul.bf16.gmra.mxu0 %v3698
      %v3827 = vpop.f32.mrf.mxu0
      %v3828 = vadd.f32 0.0, %v3827
      %v3829 = vpop.f32.mrf.mxu0
      %v3830 = vadd.f32 0.0, %v3829
      %3831 = vmatmul.bf16.gmra.mxu0 %v3700
      %v3832 = vpop.f32.mrf.mxu0
      %v3833 = vadd.f32 0.0, %v3832
      %v3834 = vpop.f32.mrf.mxu0
      %v3835 = vadd.f32 0.0, %v3834
      %3836 = vmatmul.bf16.gmra.mxu0 %v3702
      %v3837 = vpop.f32.mrf.mxu0
      %v3838 = vadd.f32 0.0, %v3837
      %v3839 = vpop.f32.mrf.mxu0
      %v3840 = vadd.f32 0.0, %v3839
      %3841 = vmatmul.bf16.gmra.mxu0 %v3704
      %v3842 = vpop.f32.mrf.mxu0
      %v3843 = vadd.f32 0.0, %v3842
      %v3844 = vpop.f32.mrf.mxu0
      %v3845 = vadd.f32 0.0, %v3844
      %3846 = vmatmul.bf16.gmra.mxu0 %v3703
      %v3847 = vpop.f32.mrf.mxu0
      %v3848 = vadd.f32 0.0, %v3847
      %v3849 = vpop.f32.mrf.mxu0
      %3850 = vdwg.mxu0
      %v3851 = vadd.f32 %v3626, %v3778
      %v3852 = vadd.f32 %v3627, %v3780
      %v3853 = vadd.f32 %v3628, %v3783
      %v3854 = vadd.f32 %v3629, %v3785
      %v3855 = vadd.f32 %v3630, %v3788
      %v3856 = vadd.f32 %v3631, %v3790
      %v3857 = vadd.f32 %v3632, %v3793
      %v3858 = vadd.f32 %v3633, %v3795
      %v3859 = vadd.f32 %v3634, %v3798
      %v3860 = vadd.f32 %v3635, %v3800
      %v3861 = vadd.f32 %v3636, %v3803
      %v3862 = vadd.f32 %v3637, %v3805
      %v3863 = vadd.f32 %v3638, %v3808
      %v3864 = vadd.f32 %v3639, %v3810
      %v3865 = vadd.f32 %v3640, %v3813
      %v3866 = vadd.f32 %v3641, %v3815
      %v3867 = vadd.f32 %v3642, %v3818
      %v3868 = vadd.f32 %v3643, %v3820
      %v3869 = vadd.f32 %v3644, %v3823
      %v3870 = vadd.f32 %v3645, %v3825
      %v3871 = vadd.f32 %v3646, %v3828
      %v3872 = vadd.f32 %v3647, %v3830
      %v3873 = vadd.f32 %v3648, %v3833
      %v3874 = vadd.f32 %v3649, %v3835
      %v3875 = vadd.f32 %v3650, %v3838
      %v3876 = vadd.f32 %v3651, %v3840
      %v3877 = vadd.f32 %v3652, %v3843
      %v3878 = vadd.f32 %v3653, %v3845
      %v3879 = vadd.f32 %v3654, %v3848
      %v3880 = vld [vmem:[%s293 + $0x8] sm:$0xf]
      %v3881 = vld [vmem:[%s293 + $0xc] sm:$0xf]
      %v3882 = vld [vmem:[%s293 + $0x10] sm:$0xf]
      %v3883 = vld [vmem:[%s293 + $0x14] sm:$0xf]
      %v3884 = vld [vmem:[%s293 + $0x18] sm:$0xf]
      %v3885 = vld [vmem:[%s293 + $0x1c] sm:$0xf]
      %v3886 = vld [vmem:[%s293 + $0x20] sm:$0xf]
      %v3887 = vld [vmem:[%s293 + $0x24] sm:$0xf]
      %v3888 = vld [vmem:[%s293 + $0x28] sm:$0xf]
      %v3889 = vld [vmem:[%s293 + $0x2c] sm:$0xf]
      %v3890 = vld [vmem:[%s293 + $0x30] sm:$0xf]
      %v3891 = vld [vmem:[%s293 + $0x34] sm:$0xf]
      %v3892 = vld [vmem:[%s293 + $0x38] sm:$0xf]
      %v3893 = vld [vmem:[%s293 + $0x3c] sm:$0xf]
      %v3894 = vld [vmem:[%s293 + $0x40] sm:$0xf]
      %v3895 = vld [vmem:[%s293 + $0x44] sm:$0xf]
      %v3896 = vld [vmem:[%s293 + $0x48] sm:$0xf]
      %v3897 = vld [vmem:[%s293 + $0x4c] sm:$0xf]
      %v3898 = vld [vmem:[%s293 + $0x50] sm:$0xf]
      %v3899 = vld [vmem:[%s293 + $0x54] sm:$0xf]
      %v3900 = vld [vmem:[%s293 + $0x58] sm:$0xf]
      %v3901 = vld [vmem:[%s293 + $0x5c] sm:$0xf]
      %v3902 = vld [vmem:[%s293 + $0x60] sm:$0xf]
      %v3903 = vld [vmem:[%s293 + $0x64] sm:$0xf]
      %v3904 = vld [vmem:[%s293 + $0x68] sm:$0xf]
      %v3905 = vld [vmem:[%s293 + $0x6c] sm:$0xf]
      %v3906 = vld [vmem:[%s293 + $0x70] sm:$0xf]
      %v3907 = vld [vmem:[%s293 + $0x74] sm:$0xf]
      %v3908 = vld [vmem:[%s293 + $0x78] sm:$0xf]
      %s3909 = scalar_lea.vmem %s3, 192
      %v3910 = vld [vmem:[%s3909] sm:$0xf]
      %v3911 = vld [vmem:[%s3909 + $0x4] sm:$0xf]
      %v3912 = vld [vmem:[%s3909 + $0x8] sm:$0xf]
      %v3913 = vld [vmem:[%s3909 + $0xc] sm:$0xf]
      %v3914 = vld [vmem:[%s3909 + $0x10] sm:$0xf]
      %v3915 = vld [vmem:[%s3909 + $0x14] sm:$0xf]
      %v3916 = vld [vmem:[%s3909 + $0x18] sm:$0xf]
      %v3917 = vld [vmem:[%s3909 + $0x1c] sm:$0xf]
      %v3918 = vld [vmem:[%s3909 + $0x20] sm:$0xf]
      %v3919 = vld [vmem:[%s3909 + $0x24] sm:$0xf]
      %v3920 = vld [vmem:[%s3909 + $0x28] sm:$0xf]
      %v3921 = vld [vmem:[%s3909 + $0x2c] sm:$0xf]
      %v3922 = vld [vmem:[%s3909 + $0x30] sm:$0xf]
      %v3923 = vld [vmem:[%s3909 + $0x34] sm:$0xf]
      %v3924 = vld [vmem:[%s3909 + $0x38] sm:$0xf]
      %v3925 = vld [vmem:[%s3909 + $0x3c] sm:$0xf]
      %v3955 = vunpack.c.l.b16 %v3880
      %v3956 = vunpack.c.l.b16 %v3881
      %v3957 = vunpack.c.l.b16 %v3882
      %v3958 = vunpack.c.l.b16 %v3883
      %v3959 = vunpack.c.l.b16 %v3884
      %v3960 = vunpack.c.l.b16 %v3885
      %v3961 = vunpack.c.l.b16 %v3886
      %v3962 = vunpack.c.l.b16 %v3887
      %v3963 = vunpack.c.l.b16 %v3888
      %v3964 = vunpack.c.l.b16 %v3889
      %v3965 = vunpack.c.l.b16 %v3890
      %v3966 = vunpack.c.l.b16 %v3891
      %v3967 = vunpack.c.l.b16 %v3892
      %v3968 = vunpack.c.l.b16 %v3893
      %v3969 = vunpack.c.l.b16 %v3894
      %v3970 = vunpack.c.l.b16 %v3895
      %v3971 = vunpack.c.l.b16 %v3896
      %v3972 = vunpack.c.l.b16 %v3897
      %v3973 = vunpack.c.l.b16 %v3898
      %v3974 = vunpack.c.l.b16 %v3899
      %v3975 = vunpack.c.l.b16 %v3900
      %v3976 = vunpack.c.l.b16 %v3901
      %v3977 = vunpack.c.l.b16 %v3902
      %v3978 = vunpack.c.l.b16 %v3903
      %v3979 = vunpack.c.l.b16 %v3904
      %v3980 = vunpack.c.l.b16 %v3905
      %v3981 = vunpack.c.l.b16 %v3906
      %v3982 = vunpack.c.l.b16 %v3907
      %v3983 = vunpack.c.l.b16 %v3908
      %v3984 = vpack.c.b16 %v3956, %v3955
      %v3985 = vpack.c.b16 %v3958, %v3957
      %v3986 = vpack.c.b16 %v3960, %v3959
      %v3987 = vpack.c.b16 %v3962, %v3961
      %v3988 = vpack.c.b16 %v3964, %v3963
      %v3989 = vpack.c.b16 %v3966, %v3965
      %v3990 = vpack.c.b16 %v3968, %v3967
      %v3991 = vpack.c.b16 %v3970, %v3969
      %v3992 = vpack.c.b16 %v3972, %v3971
      %v3993 = vpack.c.b16 %v3974, %v3973
      %v3994 = vpack.c.b16 %v3976, %v3975
      %v3995 = vpack.c.b16 %v3978, %v3977
      %v3996 = vpack.c.b16 %v3980, %v3979
      %v3997 = vpack.c.b16 %v3982, %v3981
      %v3998 = vpack.c.b16 %v3983, %v3983
      %v4030 = vunpack.c.l.b16 %v3910
      %v4031 = vunpack.c.l.b16 %v3911
      %v4032 = vunpack.c.l.b16 %v3912
      %v4033 = vunpack.c.l.b16 %v3913
      %v4034 = vunpack.c.l.b16 %v3914
      %v4035 = vunpack.c.l.b16 %v3915
      %v4036 = vunpack.c.l.b16 %v3916
      %v4037 = vunpack.c.l.b16 %v3917
      %v4038 = vunpack.c.l.b16 %v3918
      %v4039 = vunpack.c.l.b16 %v3919
      %v4040 = vunpack.c.l.b16 %v3920
      %v4041 = vunpack.c.l.b16 %v3921
      %v4042 = vunpack.c.l.b16 %v3922
      %v4043 = vunpack.c.l.b16 %v3923
      %v4044 = vunpack.c.l.b16 %v3924
      %v4045 = vunpack.c.l.b16 %v3925
      %v4046 = vpack.c.b16 %v4031, %v4030
      %v4047 = vpack.c.b16 %v4033, %v4032
      %v4048 = vpack.c.b16 %v4035, %v4034
      %v4049 = vpack.c.b16 %v4037, %v4036
      %v4050 = vpack.c.b16 %v4039, %v4038
      %v4051 = vpack.c.b16 %v4041, %v4040
      %v4052 = vpack.c.b16 %v4043, %v4042
      %v4053 = vpack.c.b16 %v4045, %v4044
      %4062 = vmatpush.bf16.msra.mxu0 %v4053
      %4063 = vmatpush.bf16.msra.mxu0 %v4052
      %4064 = vmatpush.bf16.msra.mxu0 %v4051
      %4065 = vmatpush.bf16.msra.mxu0 %v4050
      %4066 = vmatpush.bf16.msra.mxu0 %v4049
      %4067 = vmatpush.bf16.msra.mxu0 %v4048
      %4068 = vmatpush.bf16.msra.mxu0 %v4047
      %4069 = vmatpush.bf16.msra.mxu0 %v4046
      %4070 = vmatmul.bf16.gmra.mxu0 %v3984
      %v4071 = vpop.f32.mrf.mxu0
      %v4072 = vadd.f32 0.0, %v4071
      %v4073 = vpop.f32.mrf.mxu0
      %v4074 = vadd.f32 0.0, %v4073
      %4075 = vmatmul.bf16.gmra.mxu0 %v3985
      %v4076 = vpop.f32.mrf.mxu0
      %v4077 = vadd.f32 0.0, %v4076
      %v4078 = vpop.f32.mrf.mxu0
      %v4079 = vadd.f32 0.0, %v4078
      %4080 = vmatmul.bf16.gmra.mxu0 %v3986
      %v4081 = vpop.f32.mrf.mxu0
      %v4082 = vadd.f32 0.0, %v4081
      %v4083 = vpop.f32.mrf.mxu0
      %v4084 = vadd.f32 0.0, %v4083
      %4085 = vmatmul.bf16.gmra.mxu0 %v3987
      %v4086 = vpop.f32.mrf.mxu0
      %v4087 = vadd.f32 0.0, %v4086
      %v4088 = vpop.f32.mrf.mxu0
      %v4089 = vadd.f32 0.0, %v4088
      %4090 = vmatmul.bf16.gmra.mxu0 %v3988
      %v4091 = vpop.f32.mrf.mxu0
      %v4092 = vadd.f32 0.0, %v4091
      %v4093 = vpop.f32.mrf.mxu0
      %v4094 = vadd.f32 0.0, %v4093
      %4095 = vmatmul.bf16.gmra.mxu0 %v3989
      %v4096 = vpop.f32.mrf.mxu0
      %v4097 = vadd.f32 0.0, %v4096
      %v4098 = vpop.f32.mrf.mxu0
      %v4099 = vadd.f32 0.0, %v4098
      %4100 = vmatmul.bf16.gmra.mxu0 %v3990
      %v4101 = vpop.f32.mrf.mxu0
      %v4102 = vadd.f32 0.0, %v4101
      %v4103 = vpop.f32.mrf.mxu0
      %v4104 = vadd.f32 0.0, %v4103
      %4105 = vmatmul.bf16.gmra.mxu0 %v3991
      %v4106 = vpop.f32.mrf.mxu0
      %v4107 = vadd.f32 0.0, %v4106
      %v4108 = vpop.f32.mrf.mxu0
      %v4109 = vadd.f32 0.0, %v4108
      %4110 = vmatmul.bf16.gmra.mxu0 %v3992
      %v4111 = vpop.f32.mrf.mxu0
      %v4112 = vadd.f32 0.0, %v4111
      %v4113 = vpop.f32.mrf.mxu0
      %v4114 = vadd.f32 0.0, %v4113
      %4115 = vmatmul.bf16.gmra.mxu0 %v3993
      %v4116 = vpop.f32.mrf.mxu0
      %v4117 = vadd.f32 0.0, %v4116
      %v4118 = vpop.f32.mrf.mxu0
      %v4119 = vadd.f32 0.0, %v4118
      %4120 = vmatmul.bf16.gmra.mxu0 %v3994
      %v4121 = vpop.f32.mrf.mxu0
      %v4122 = vadd.f32 0.0, %v4121
      %v4123 = vpop.f32.mrf.mxu0
      %v4124 = vadd.f32 0.0, %v4123
      %4125 = vmatmul.bf16.gmra.mxu0 %v3995
      %v4126 = vpop.f32.mrf.mxu0
      %v4127 = vadd.f32 0.0, %v4126
      %v4128 = vpop.f32.mrf.mxu0
      %v4129 = vadd.f32 0.0, %v4128
      %4130 = vmatmul.bf16.gmra.mxu0 %v3996
      %v4131 = vpop.f32.mrf.mxu0
      %v4132 = vadd.f32 0.0, %v4131
      %v4133 = vpop.f32.mrf.mxu0
      %v4134 = vadd.f32 0.0, %v4133
      %4135 = vmatmul.bf16.gmra.mxu0 %v3997
      %v4136 = vpop.f32.mrf.mxu0
      %v4137 = vadd.f32 0.0, %v4136
      %v4138 = vpop.f32.mrf.mxu0
      %v4139 = vadd.f32 0.0, %v4138
      %4140 = vmatmul.bf16.gmra.mxu0 %v3998
      %v4141 = vpop.f32.mrf.mxu0
      %v4142 = vadd.f32 0.0, %v4141
      %v4143 = vpop.f32.mrf.mxu0
      %4144 = vdwg.mxu0
      %v4145 = vadd.f32 %v3851, %v4072
      %v4146 = vadd.f32 %v3852, %v4074
      %v4147 = vadd.f32 %v3853, %v4077
      %v4148 = vadd.f32 %v3854, %v4079
      %v4149 = vadd.f32 %v3855, %v4082
      %v4150 = vadd.f32 %v3856, %v4084
      %v4151 = vadd.f32 %v3857, %v4087
      %v4152 = vadd.f32 %v3858, %v4089
      %v4153 = vadd.f32 %v3859, %v4092
      %v4154 = vadd.f32 %v3860, %v4094
      %v4155 = vadd.f32 %v3861, %v4097
      %v4156 = vadd.f32 %v3862, %v4099
      %v4157 = vadd.f32 %v3863, %v4102
      %v4158 = vadd.f32 %v3864, %v4104
      %v4159 = vadd.f32 %v3865, %v4107
      %v4160 = vadd.f32 %v3866, %v4109
      %v4161 = vadd.f32 %v3867, %v4112
      %v4162 = vadd.f32 %v3868, %v4114
      %v4163 = vadd.f32 %v3869, %v4117
      %v4164 = vadd.f32 %v3870, %v4119
      %v4165 = vadd.f32 %v3871, %v4122
      %v4166 = vadd.f32 %v3872, %v4124
      %v4167 = vadd.f32 %v3873, %v4127
      %v4168 = vadd.f32 %v3874, %v4129
      %v4169 = vadd.f32 %v3875, %v4132
      %v4170 = vadd.f32 %v3876, %v4134
      %v4171 = vadd.f32 %v3877, %v4137
      %v4172 = vadd.f32 %v3878, %v4139
      %v4173 = vadd.f32 %v3879, %v4142
      %v4174 = vld [vmem:[%s293 + $0x8] sm:$0xf]
      %v4175 = vld [vmem:[%s293 + $0xc] sm:$0xf]
      %v4176 = vld [vmem:[%s293 + $0x10] sm:$0xf]
      %v4177 = vld [vmem:[%s293 + $0x14] sm:$0xf]
      %v4178 = vld [vmem:[%s293 + $0x18] sm:$0xf]
      %v4179 = vld [vmem:[%s293 + $0x1c] sm:$0xf]
      %v4180 = vld [vmem:[%s293 + $0x20] sm:$0xf]
      %v4181 = vld [vmem:[%s293 + $0x24] sm:$0xf]
      %v4182 = vld [vmem:[%s293 + $0x28] sm:$0xf]
      %v4183 = vld [vmem:[%s293 + $0x2c] sm:$0xf]
      %v4184 = vld [vmem:[%s293 + $0x30] sm:$0xf]
      %v4185 = vld [vmem:[%s293 + $0x34] sm:$0xf]
      %v4186 = vld [vmem:[%s293 + $0x38] sm:$0xf]
      %v4187 = vld [vmem:[%s293 + $0x3c] sm:$0xf]
      %v4188 = vld [vmem:[%s293 + $0x40] sm:$0xf]
      %v4189 = vld [vmem:[%s293 + $0x44] sm:$0xf]
      %v4190 = vld [vmem:[%s293 + $0x48] sm:$0xf]
      %v4191 = vld [vmem:[%s293 + $0x4c] sm:$0xf]
      %v4192 = vld [vmem:[%s293 + $0x50] sm:$0xf]
      %v4193 = vld [vmem:[%s293 + $0x54] sm:$0xf]
      %v4194 = vld [vmem:[%s293 + $0x58] sm:$0xf]
      %v4195 = vld [vmem:[%s293 + $0x5c] sm:$0xf]
      %v4196 = vld [vmem:[%s293 + $0x60] sm:$0xf]
      %v4197 = vld [vmem:[%s293 + $0x64] sm:$0xf]
      %v4198 = vld [vmem:[%s293 + $0x68] sm:$0xf]
      %v4199 = vld [vmem:[%s293 + $0x6c] sm:$0xf]
      %v4200 = vld [vmem:[%s293 + $0x70] sm:$0xf]
      %v4201 = vld [vmem:[%s293 + $0x74] sm:$0xf]
      %v4202 = vld [vmem:[%s293 + $0x78] sm:$0xf]
      %v4203 = vld [vmem:[%s293 + $0x7c] sm:$0x1]
      %s4204 = scalar_lea.vmem %s3, 256
      %v4205 = vld [vmem:[%s4204] sm:$0xf]
      %v4206 = vld [vmem:[%s4204 + $0x4] sm:$0xf]
      %v4207 = vld [vmem:[%s4204 + $0x8] sm:$0xf]
      %v4208 = vld [vmem:[%s4204 + $0xc] sm:$0xf]
      %v4209 = vld [vmem:[%s4204 + $0x10] sm:$0xf]
      %v4210 = vld [vmem:[%s4204 + $0x14] sm:$0xf]
      %v4211 = vld [vmem:[%s4204 + $0x18] sm:$0xf]
      %v4212 = vld [vmem:[%s4204 + $0x1c] sm:$0xf]
      %v4213 = vld [vmem:[%s4204 + $0x20] sm:$0xf]
      %v4214 = vld [vmem:[%s4204 + $0x24] sm:$0xf]
      %v4215 = vld [vmem:[%s4204 + $0x28] sm:$0xf]
      %v4216 = vld [vmem:[%s4204 + $0x2c] sm:$0xf]
      %v4217 = vld [vmem:[%s4204 + $0x30] sm:$0xf]
      %v4218 = vld [vmem:[%s4204 + $0x34] sm:$0xf]
      %v4219 = vld [vmem:[%s4204 + $0x38] sm:$0xf]
      %v4220 = vld [vmem:[%s4204 + $0x3c] sm:$0xf]
      %v4251 = vunpack.c.l.b16 %v4174
      %v4252 = vunpack.c.l.b16 %v4175
      %v4253 = vunpack.c.l.b16 %v4176
      %v4254 = vunpack.c.l.b16 %v4177
      %v4255 = vunpack.c.l.b16 %v4178
      %v4256 = vunpack.c.l.b16 %v4179
      %v4257 = vunpack.c.l.b16 %v4180
      %v4258 = vunpack.c.l.b16 %v4181
      %v4259 = vunpack.c.l.b16 %v4182
      %v4260 = vunpack.c.l.b16 %v4183
      %v4261 = vunpack.c.l.b16 %v4184
      %v4262 = vunpack.c.l.b16 %v4185
      %v4263 = vunpack.c.l.b16 %v4186
      %v4264 = vunpack.c.l.b16 %v4187
      %v4265 = vunpack.c.l.b16 %v4188
      %v4266 = vunpack.c.l.b16 %v4189
      %v4267 = vunpack.c.l.b16 %v4190
      %v4268 = vunpack.c.l.b16 %v4191
      %v4269 = vunpack.c.l.b16 %v4192
      %v4270 = vunpack.c.l.b16 %v4193
      %v4271 = vunpack.c.l.b16 %v4194
      %v4272 = vunpack.c.l.b16 %v4195
      %v4273 = vunpack.c.l.b16 %v4196
      %v4274 = vunpack.c.l.b16 %v4197
      %v4275 = vunpack.c.l.b16 %v4198
      %v4276 = vunpack.c.l.b16 %v4199
      %v4277 = vunpack.c.l.b16 %v4200
      %v4278 = vunpack.c.l.b16 %v4201
      %v4279 = vunpack.c.l.b16 %v4202
      %v4280 = vunpack.c.l.b16 %v4203
      %v4281 = vpack.c.b16 %v4252, %v4251
      %v4282 = vpack.c.b16 %v4254, %v4253
      %v4283 = vpack.c.b16 %v4256, %v4255
      %v4284 = vpack.c.b16 %v4258, %v4257
      %v4285 = vpack.c.b16 %v4260, %v4259
      %v4286 = vpack.c.b16 %v4262, %v4261
      %v4287 = vpack.c.b16 %v4264, %v4263
      %v4288 = vpack.c.b16 %v4266, %v4265
      %v4289 = vpack.c.b16 %v4268, %v4267
      %v4290 = vpack.c.b16 %v4270, %v4269
      %v4291 = vpack.c.b16 %v4272, %v4271
      %v4292 = vpack.c.b16 %v4274, %v4273
      %v4293 = vpack.c.b16 %v4276, %v4275
      %v4294 = vpack.c.b16 %v4278, %v4277
      %v4295 = vpack.c.b16 %v4280, %v4279
      %v4297 = vshrl.u32 %v4281, 16
      %v4299 = vshll.u32 %v4281, 16
      %v4301 = vrot.slane %v4299, 1
      %v4302 = vor.u32 %v4297, %v4301
      %v4304 = vshll.u32 %v4282, 16
      %v4306 = vrot.slane %v4304, 1
      %v4307 = vsel %vm437, %v4302, %v4306
      %v4308 = vshrl.u32 %v4282, 16
      %v4310 = vor.u32 %v4308, %v4306
      %v4312 = vshll.u32 %v4283, 16
      %v4314 = vrot.slane %v4312, 1
      %v4315 = vsel %vm437, %v4310, %v4314
      %v4316 = vshrl.u32 %v4283, 16
      %v4318 = vor.u32 %v4316, %v4314
      %v4320 = vshll.u32 %v4284, 16
      %v4322 = vrot.slane %v4320, 1
      %v4323 = vsel %vm437, %v4318, %v4322
      %v4324 = vshrl.u32 %v4284, 16
      %v4326 = vor.u32 %v4324, %v4322
      %v4328 = vshll.u32 %v4285, 16
      %v4330 = vrot.slane %v4328, 1
      %v4331 = vsel %vm437, %v4326, %v4330
      %v4332 = vshrl.u32 %v4285, 16
      %v4334 = vor.u32 %v4332, %v4330
      %v4336 = vshll.u32 %v4286, 16
      %v4338 = vrot.slane %v4336, 1
      %v4339 = vsel %vm437, %v4334, %v4338
      %v4340 = vshrl.u32 %v4286, 16
      %v4342 = vor.u32 %v4340, %v4338
      %v4344 = vshll.u32 %v4287, 16
      %v4346 = vrot.slane %v4344, 1
      %v4347 = vsel %vm437, %v4342, %v4346
      %v4348 = vshrl.u32 %v4287, 16
      %v4350 = vor.u32 %v4348, %v4346
      %v4352 = vshll.u32 %v4288, 16
      %v4354 = vrot.slane %v4352, 1
      %v4355 = vsel %vm437, %v4350, %v4354
      %v4356 = vshrl.u32 %v4288, 16
      %v4358 = vor.u32 %v4356, %v4354
      %v4360 = vshll.u32 %v4289, 16
      %v4362 = vrot.slane %v4360, 1
      %v4363 = vsel %vm437, %v4358, %v4362
      %v4364 = vshrl.u32 %v4289, 16
      %v4366 = vor.u32 %v4364, %v4362
      %v4368 = vshll.u32 %v4290, 16
      %v4370 = vrot.slane %v4368, 1
      %v4371 = vsel %vm437, %v4366, %v4370
      %v4372 = vshrl.u32 %v4290, 16
      %v4374 = vor.u32 %v4372, %v4370
      %v4376 = vshll.u32 %v4291, 16
      %v4378 = vrot.slane %v4376, 1
      %v4379 = vsel %vm437, %v4374, %v4378
      %v4380 = vshrl.u32 %v4291, 16
      %v4382 = vor.u32 %v4380, %v4378
      %v4384 = vshll.u32 %v4292, 16
      %v4386 = vrot.slane %v4384, 1
      %v4387 = vsel %vm437, %v4382, %v4386
      %v4388 = vshrl.u32 %v4292, 16
      %v4390 = vor.u32 %v4388, %v4386
      %v4392 = vshll.u32 %v4293, 16
      %v4394 = vrot.slane %v4392, 1
      %v4395 = vsel %vm437, %v4390, %v4394
      %v4396 = vshrl.u32 %v4293, 16
      %v4398 = vor.u32 %v4396, %v4394
      %v4400 = vshll.u32 %v4294, 16
      %v4402 = vrot.slane %v4400, 1
      %v4403 = vsel %vm437, %v4398, %v4402
      %v4404 = vshrl.u32 %v4294, 16
      %v4406 = vor.u32 %v4404, %v4402
      %v4408 = vshll.u32 %v4295, 16
      %v4410 = vrot.slane %v4408, 1
      %v4411 = vsel %vm437, %v4406, %v4410
      %v4412 = vshrl.u32 %v4295, 16
      %v4414 = vor.u32 %v4412, %v4410
      %v4446 = vunpack.c.l.b16 %v4205
      %v4447 = vunpack.c.l.b16 %v4206
      %v4448 = vunpack.c.l.b16 %v4207
      %v4449 = vunpack.c.l.b16 %v4208
      %v4450 = vunpack.c.l.b16 %v4209
      %v4451 = vunpack.c.l.b16 %v4210
      %v4452 = vunpack.c.l.b16 %v4211
      %v4453 = vunpack.c.l.b16 %v4212
      %v4454 = vunpack.c.l.b16 %v4213
      %v4455 = vunpack.c.l.b16 %v4214
      %v4456 = vunpack.c.l.b16 %v4215
      %v4457 = vunpack.c.l.b16 %v4216
      %v4458 = vunpack.c.l.b16 %v4217
      %v4459 = vunpack.c.l.b16 %v4218
      %v4460 = vunpack.c.l.b16 %v4219
      %v4461 = vunpack.c.l.b16 %v4220
      %v4462 = vpack.c.b16 %v4447, %v4446
      %v4463 = vpack.c.b16 %v4449, %v4448
      %v4464 = vpack.c.b16 %v4451, %v4450
      %v4465 = vpack.c.b16 %v4453, %v4452
      %v4466 = vpack.c.b16 %v4455, %v4454
      %v4467 = vpack.c.b16 %v4457, %v4456
      %v4468 = vpack.c.b16 %v4459, %v4458
      %v4469 = vpack.c.b16 %v4461, %v4460
      %4478 = vmatpush.bf16.msra.mxu0 %v4469
      %4479 = vmatpush.bf16.msra.mxu0 %v4468
      %4480 = vmatpush.bf16.msra.mxu0 %v4467
      %4481 = vmatpush.bf16.msra.mxu0 %v4466
      %4482 = vmatpush.bf16.msra.mxu0 %v4465
      %4483 = vmatpush.bf16.msra.mxu0 %v4464
      %4484 = vmatpush.bf16.msra.mxu0 %v4463
      %4485 = vmatpush.bf16.msra.mxu0 %v4462
      %4486 = vmatmul.bf16.gmra.mxu0 %v4307
      %v4487 = vpop.f32.mrf.mxu0
      %v4488 = vadd.f32 0.0, %v4487
      %v4489 = vpop.f32.mrf.mxu0
      %v4490 = vadd.f32 0.0, %v4489
      %4491 = vmatmul.bf16.gmra.mxu0 %v4315
      %v4492 = vpop.f32.mrf.mxu0
      %v4493 = vadd.f32 0.0, %v4492
      %v4494 = vpop.f32.mrf.mxu0
      %v4495 = vadd.f32 0.0, %v4494
      %4496 = vmatmul.bf16.gmra.mxu0 %v4323
      %v4497 = vpop.f32.mrf.mxu0
      %v4498 = vadd.f32 0.0, %v4497
      %v4499 = vpop.f32.mrf.mxu0
      %v4500 = vadd.f32 0.0, %v4499
      %4501 = vmatmul.bf16.gmra.mxu0 %v4331
      %v4502 = vpop.f32.mrf.mxu0
      %v4503 = vadd.f32 0.0, %v4502
      %v4504 = vpop.f32.mrf.mxu0
      %v4505 = vadd.f32 0.0, %v4504
      %4506 = vmatmul.bf16.gmra.mxu0 %v4339
      %v4507 = vpop.f32.mrf.mxu0
      %v4508 = vadd.f32 0.0, %v4507
      %v4509 = vpop.f32.mrf.mxu0
      %v4510 = vadd.f32 0.0, %v4509
      %4511 = vmatmul.bf16.gmra.mxu0 %v4347
      %v4512 = vpop.f32.mrf.mxu0
      %v4513 = vadd.f32 0.0, %v4512
      %v4514 = vpop.f32.mrf.mxu0
      %v4515 = vadd.f32 0.0, %v4514
      %4516 = vmatmul.bf16.gmra.mxu0 %v4355
      %v4517 = vpop.f32.mrf.mxu0
      %v4518 = vadd.f32 0.0, %v4517
      %v4519 = vpop.f32.mrf.mxu0
      %v4520 = vadd.f32 0.0, %v4519
      %4521 = vmatmul.bf16.gmra.mxu0 %v4363
      %v4522 = vpop.f32.mrf.mxu0
      %v4523 = vadd.f32 0.0, %v4522
      %v4524 = vpop.f32.mrf.mxu0
      %v4525 = vadd.f32 0.0, %v4524
      %4526 = vmatmul.bf16.gmra.mxu0 %v4371
      %v4527 = vpop.f32.mrf.mxu0
      %v4528 = vadd.f32 0.0, %v4527
      %v4529 = vpop.f32.mrf.mxu0
      %v4530 = vadd.f32 0.0, %v4529
      %4531 = vmatmul.bf16.gmra.mxu0 %v4379
      %v4532 = vpop.f32.mrf.mxu0
      %v4533 = vadd.f32 0.0, %v4532
      %v4534 = vpop.f32.mrf.mxu0
      %v4535 = vadd.f32 0.0, %v4534
      %4536 = vmatmul.bf16.gmra.mxu0 %v4387
      %v4537 = vpop.f32.mrf.mxu0
      %v4538 = vadd.f32 0.0, %v4537
      %v4539 = vpop.f32.mrf.mxu0
      %v4540 = vadd.f32 0.0, %v4539
      %4541 = vmatmul.bf16.gmra.mxu0 %v4395
      %v4542 = vpop.f32.mrf.mxu0
      %v4543 = vadd.f32 0.0, %v4542
      %v4544 = vpop.f32.mrf.mxu0
      %v4545 = vadd.f32 0.0, %v4544
      %4546 = vmatmul.bf16.gmra.mxu0 %v4403
      %v4547 = vpop.f32.mrf.mxu0
      %v4548 = vadd.f32 0.0, %v4547
      %v4549 = vpop.f32.mrf.mxu0
      %v4550 = vadd.f32 0.0, %v4549
      %4551 = vmatmul.bf16.gmra.mxu0 %v4411
      %v4552 = vpop.f32.mrf.mxu0
      %v4553 = vadd.f32 0.0, %v4552
      %v4554 = vpop.f32.mrf.mxu0
      %v4555 = vadd.f32 0.0, %v4554
      %4556 = vmatmul.bf16.gmra.mxu0 %v4414
      %v4557 = vpop.f32.mrf.mxu0
      %v4558 = vadd.f32 0.0, %v4557
      %v4559 = vpop.f32.mrf.mxu0
      %4560 = vdwg.mxu0
      %v4561 = vadd.f32 %v4145, %v4488
      %v4562 = vadd.f32 %v4146, %v4490
      %v4563 = vadd.f32 %v4147, %v4493
      %v4564 = vadd.f32 %v4148, %v4495
      %v4565 = vadd.f32 %v4149, %v4498
      %v4566 = vadd.f32 %v4150, %v4500
      %v4567 = vadd.f32 %v4151, %v4503
      %v4568 = vadd.f32 %v4152, %v4505
      %v4569 = vadd.f32 %v4153, %v4508
      %v4570 = vadd.f32 %v4154, %v4510
      %v4571 = vadd.f32 %v4155, %v4513
      %v4572 = vadd.f32 %v4156, %v4515
      %v4573 = vadd.f32 %v4157, %v4518
      %v4574 = vadd.f32 %v4158, %v4520
      %v4575 = vadd.f32 %v4159, %v4523
      %v4576 = vadd.f32 %v4160, %v4525
      %v4577 = vadd.f32 %v4161, %v4528
      %v4578 = vadd.f32 %v4162, %v4530
      %v4579 = vadd.f32 %v4163, %v4533
      %v4580 = vadd.f32 %v4164, %v4535
      %v4581 = vadd.f32 %v4165, %v4538
      %v4582 = vadd.f32 %v4166, %v4540
      %v4583 = vadd.f32 %v4167, %v4543
      %v4584 = vadd.f32 %v4168, %v4545
      %v4585 = vadd.f32 %v4169, %v4548
      %v4586 = vadd.f32 %v4170, %v4550
      %v4587 = vadd.f32 %v4171, %v4553
      %v4588 = vadd.f32 %v4172, %v4555
      %v4589 = vadd.f32 %v4173, %v4558
      %v4590 = vld [vmem:[%s293 + $0x8] sm:$0xe]
      %s4591 = scalar_lea.vmem %s3, 320
      %v4592 = vld [vmem:[%s4591] sm:$0xf]
      %v4593 = vld [vmem:[%s4591 + $0x4] sm:$0xf]
      %v4594 = vld [vmem:[%s4591 + $0x8] sm:$0xf]
      %v4595 = vld [vmem:[%s4591 + $0xc] sm:$0xf]
      %v4596 = vld [vmem:[%s4591 + $0x10] sm:$0xf]
      %v4597 = vld [vmem:[%s4591 + $0x14] sm:$0xf]
      %v4598 = vld [vmem:[%s4591 + $0x18] sm:$0xf]
      %v4599 = vld [vmem:[%s4591 + $0x1c] sm:$0xf]
      %v4600 = vld [vmem:[%s4591 + $0x20] sm:$0xf]
      %v4601 = vld [vmem:[%s4591 + $0x24] sm:$0xf]
      %v4602 = vld [vmem:[%s4591 + $0x28] sm:$0xf]
      %v4603 = vld [vmem:[%s4591 + $0x2c] sm:$0xf]
      %v4604 = vld [vmem:[%s4591 + $0x30] sm:$0xf]
      %v4605 = vld [vmem:[%s4591 + $0x34] sm:$0xf]
      %v4606 = vld [vmem:[%s4591 + $0x38] sm:$0xf]
      %v4607 = vld [vmem:[%s4591 + $0x3c] sm:$0xf]
      %v4609 = vunpack.c.l.b16 %v4590
      %v4610 = vpack.c.b16 %v4252, %v4609
      %v4611 = vrot.slane %v4610, 1
      %v4612 = vrot.slane %v4282, 1
      %v4613 = vsel %vm871, %v4611, %v4612
      %v4614 = vrot.slane %v4283, 1
      %v4615 = vsel %vm871, %v4612, %v4614
      %v4616 = vrot.slane %v4284, 1
      %v4617 = vsel %vm871, %v4614, %v4616
      %v4618 = vrot.slane %v4285, 1
      %v4619 = vsel %vm871, %v4616, %v4618
      %v4620 = vrot.slane %v4286, 1
      %v4621 = vsel %vm871, %v4618, %v4620
      %v4622 = vrot.slane %v4287, 1
      %v4623 = vsel %vm871, %v4620, %v4622
      %v4624 = vrot.slane %v4288, 1
      %v4625 = vsel %vm871, %v4622, %v4624
      %v4626 = vrot.slane %v4289, 1
      %v4627 = vsel %vm871, %v4624, %v4626
      %v4628 = vrot.slane %v4290, 1
      %v4629 = vsel %vm871, %v4626, %v4628
      %v4630 = vrot.slane %v4291, 1
      %v4631 = vsel %vm871, %v4628, %v4630
      %v4632 = vrot.slane %v4292, 1
      %v4633 = vsel %vm871, %v4630, %v4632
      %v4634 = vrot.slane %v4293, 1
      %v4635 = vsel %vm871, %v4632, %v4634
      %v4636 = vrot.slane %v4294, 1
      %v4637 = vsel %vm871, %v4634, %v4636
      %v4638 = vrot.slane %v4295, 1
      %v4639 = vsel %vm871, %v4636, %v4638
      %v4671 = vunpack.c.l.b16 %v4592
      %v4672 = vunpack.c.l.b16 %v4593
      %v4673 = vunpack.c.l.b16 %v4594
      %v4674 = vunpack.c.l.b16 %v4595
      %v4675 = vunpack.c.l.b16 %v4596
      %v4676 = vunpack.c.l.b16 %v4597
      %v4677 = vunpack.c.l.b16 %v4598
      %v4678 = vunpack.c.l.b16 %v4599
      %v4679 = vunpack.c.l.b16 %v4600
      %v4680 = vunpack.c.l.b16 %v4601
      %v4681 = vunpack.c.l.b16 %v4602
      %v4682 = vunpack.c.l.b16 %v4603
      %v4683 = vunpack.c.l.b16 %v4604
      %v4684 = vunpack.c.l.b16 %v4605
      %v4685 = vunpack.c.l.b16 %v4606
      %v4686 = vunpack.c.l.b16 %v4607
      %v4687 = vpack.c.b16 %v4672, %v4671
      %v4688 = vpack.c.b16 %v4674, %v4673
      %v4689 = vpack.c.b16 %v4676, %v4675
      %v4690 = vpack.c.b16 %v4678, %v4677
      %v4691 = vpack.c.b16 %v4680, %v4679
      %v4692 = vpack.c.b16 %v4682, %v4681
      %v4693 = vpack.c.b16 %v4684, %v4683
      %v4694 = vpack.c.b16 %v4686, %v4685
      %4703 = vmatpush.bf16.msra.mxu0 %v4694
      %4704 = vmatpush.bf16.msra.mxu0 %v4693
      %4705 = vmatpush.bf16.msra.mxu0 %v4692
      %4706 = vmatpush.bf16.msra.mxu0 %v4691
      %4707 = vmatpush.bf16.msra.mxu0 %v4690
      %4708 = vmatpush.bf16.msra.mxu0 %v4689
      %4709 = vmatpush.bf16.msra.mxu0 %v4688
      %4710 = vmatpush.bf16.msra.mxu0 %v4687
      %4711 = vmatmul.bf16.gmra.mxu0 %v4613
      %v4712 = vpop.f32.mrf.mxu0
      %v4713 = vadd.f32 0.0, %v4712
      %v4714 = vpop.f32.mrf.mxu0
      %v4715 = vadd.f32 0.0, %v4714
      %4716 = vmatmul.bf16.gmra.mxu0 %v4615
      %v4717 = vpop.f32.mrf.mxu0
      %v4718 = vadd.f32 0.0, %v4717
      %v4719 = vpop.f32.mrf.mxu0
      %v4720 = vadd.f32 0.0, %v4719
      %4721 = vmatmul.bf16.gmra.mxu0 %v4617
      %v4722 = vpop.f32.mrf.mxu0
      %v4723 = vadd.f32 0.0, %v4722
      %v4724 = vpop.f32.mrf.mxu0
      %v4725 = vadd.f32 0.0, %v4724
      %4726 = vmatmul.bf16.gmra.mxu0 %v4619
      %v4727 = vpop.f32.mrf.mxu0
      %v4728 = vadd.f32 0.0, %v4727
      %v4729 = vpop.f32.mrf.mxu0
      %v4730 = vadd.f32 0.0, %v4729
      %4731 = vmatmul.bf16.gmra.mxu0 %v4621
      %v4732 = vpop.f32.mrf.mxu0
      %v4733 = vadd.f32 0.0, %v4732
      %v4734 = vpop.f32.mrf.mxu0
      %v4735 = vadd.f32 0.0, %v4734
      %4736 = vmatmul.bf16.gmra.mxu0 %v4623
      %v4737 = vpop.f32.mrf.mxu0
      %v4738 = vadd.f32 0.0, %v4737
      %v4739 = vpop.f32.mrf.mxu0
      %v4740 = vadd.f32 0.0, %v4739
      %4741 = vmatmul.bf16.gmra.mxu0 %v4625
      %v4742 = vpop.f32.mrf.mxu0
      %v4743 = vadd.f32 0.0, %v4742
      %v4744 = vpop.f32.mrf.mxu0
      %v4745 = vadd.f32 0.0, %v4744
      %4746 = vmatmul.bf16.gmra.mxu0 %v4627
      %v4747 = vpop.f32.mrf.mxu0
      %v4748 = vadd.f32 0.0, %v4747
      %v4749 = vpop.f32.mrf.mxu0
      %v4750 = vadd.f32 0.0, %v4749
      %4751 = vmatmul.bf16.gmra.mxu0 %v4629
      %v4752 = vpop.f32.mrf.mxu0
      %v4753 = vadd.f32 0.0, %v4752
      %v4754 = vpop.f32.mrf.mxu0
      %v4755 = vadd.f32 0.0, %v4754
      %4756 = vmatmul.bf16.gmra.mxu0 %v4631
      %v4757 = vpop.f32.mrf.mxu0
      %v4758 = vadd.f32 0.0, %v4757
      %v4759 = vpop.f32.mrf.mxu0
      %v4760 = vadd.f32 0.0, %v4759
      %4761 = vmatmul.bf16.gmra.mxu0 %v4633
      %v4762 = vpop.f32.mrf.mxu0
      %v4763 = vadd.f32 0.0, %v4762
      %v4764 = vpop.f32.mrf.mxu0
      %v4765 = vadd.f32 0.0, %v4764
      %4766 = vmatmul.bf16.gmra.mxu0 %v4635
      %v4767 = vpop.f32.mrf.mxu0
      %v4768 = vadd.f32 0.0, %v4767
      %v4769 = vpop.f32.mrf.mxu0
      %v4770 = vadd.f32 0.0, %v4769
      %4771 = vmatmul.bf16.gmra.mxu0 %v4637
      %v4772 = vpop.f32.mrf.mxu0
      %v4773 = vadd.f32 0.0, %v4772
      %v4774 = vpop.f32.mrf.mxu0
      %v4775 = vadd.f32 0.0, %v4774
      %4776 = vmatmul.bf16.gmra.mxu0 %v4639
      %v4777 = vpop.f32.mrf.mxu0
      %v4778 = vadd.f32 0.0, %v4777
      %v4779 = vpop.f32.mrf.mxu0
      %v4780 = vadd.f32 0.0, %v4779
      %4781 = vmatmul.bf16.gmra.mxu0 %v4638
      %v4782 = vpop.f32.mrf.mxu0
      %v4783 = vadd.f32 0.0, %v4782
      %v4784 = vpop.f32.mrf.mxu0
      %4785 = vdwg.mxu0
      %v4786 = vadd.f32 %v4561, %v4713
      %v4787 = vadd.f32 %v4562, %v4715
      %v4788 = vadd.f32 %v4563, %v4718
      %v4789 = vadd.f32 %v4564, %v4720
      %v4790 = vadd.f32 %v4565, %v4723
      %v4791 = vadd.f32 %v4566, %v4725
      %v4792 = vadd.f32 %v4567, %v4728
      %v4793 = vadd.f32 %v4568, %v4730
      %v4794 = vadd.f32 %v4569, %v4733
      %v4795 = vadd.f32 %v4570, %v4735
      %v4796 = vadd.f32 %v4571, %v4738
      %v4797 = vadd.f32 %v4572, %v4740
      %v4798 = vadd.f32 %v4573, %v4743
      %v4799 = vadd.f32 %v4574, %v4745
      %v4800 = vadd.f32 %v4575, %v4748
      %v4801 = vadd.f32 %v4576, %v4750
      %v4802 = vadd.f32 %v4577, %v4753
      %v4803 = vadd.f32 %v4578, %v4755
      %v4804 = vadd.f32 %v4579, %v4758
      %v4805 = vadd.f32 %v4580, %v4760
      %v4806 = vadd.f32 %v4581, %v4763
      %v4807 = vadd.f32 %v4582, %v4765
      %v4808 = vadd.f32 %v4583, %v4768
      %v4809 = vadd.f32 %v4584, %v4770
      %v4810 = vadd.f32 %v4585, %v4773
      %v4811 = vadd.f32 %v4586, %v4775
      %v4812 = vadd.f32 %v4587, %v4778
      %v4813 = vadd.f32 %v4588, %v4780
      %v4814 = vadd.f32 %v4589, %v4783
      %v4815 = vld [vmem:[%s293 + $0x10] sm:$0xf]
      %v4816 = vld [vmem:[%s293 + $0x14] sm:$0xf]
      %v4817 = vld [vmem:[%s293 + $0x18] sm:$0xf]
      %v4818 = vld [vmem:[%s293 + $0x1c] sm:$0xf]
      %v4819 = vld [vmem:[%s293 + $0x20] sm:$0xf]
      %v4820 = vld [vmem:[%s293 + $0x24] sm:$0xf]
      %v4821 = vld [vmem:[%s293 + $0x28] sm:$0xf]
      %v4822 = vld [vmem:[%s293 + $0x2c] sm:$0xf]
      %v4823 = vld [vmem:[%s293 + $0x30] sm:$0xf]
      %v4824 = vld [vmem:[%s293 + $0x34] sm:$0xf]
      %v4825 = vld [vmem:[%s293 + $0x38] sm:$0xf]
      %v4826 = vld [vmem:[%s293 + $0x3c] sm:$0xf]
      %v4827 = vld [vmem:[%s293 + $0x40] sm:$0xf]
      %v4828 = vld [vmem:[%s293 + $0x44] sm:$0xf]
      %v4829 = vld [vmem:[%s293 + $0x48] sm:$0xf]
      %v4830 = vld [vmem:[%s293 + $0x4c] sm:$0xf]
      %v4831 = vld [vmem:[%s293 + $0x50] sm:$0xf]
      %v4832 = vld [vmem:[%s293 + $0x54] sm:$0xf]
      %v4833 = vld [vmem:[%s293 + $0x58] sm:$0xf]
      %v4834 = vld [vmem:[%s293 + $0x5c] sm:$0xf]
      %v4835 = vld [vmem:[%s293 + $0x60] sm:$0xf]
      %v4836 = vld [vmem:[%s293 + $0x64] sm:$0xf]
      %v4837 = vld [vmem:[%s293 + $0x68] sm:$0xf]
      %v4838 = vld [vmem:[%s293 + $0x6c] sm:$0xf]
      %v4839 = vld [vmem:[%s293 + $0x70] sm:$0xf]
      %v4840 = vld [vmem:[%s293 + $0x74] sm:$0xf]
      %v4841 = vld [vmem:[%s293 + $0x78] sm:$0xf]
      %v4842 = vld [vmem:[%s293 + $0x7c] sm:$0xf]
      %v4843 = vld [vmem:[%s293 + $0x80] sm:$0xf]
      %s4844 = scalar_lea.vmem %s3, 384
      %v4845 = vld [vmem:[%s4844] sm:$0xf]
      %v4846 = vld [vmem:[%s4844 + $0x4] sm:$0xf]
      %v4847 = vld [vmem:[%s4844 + $0x8] sm:$0xf]
      %v4848 = vld [vmem:[%s4844 + $0xc] sm:$0xf]
      %v4849 = vld [vmem:[%s4844 + $0x10] sm:$0xf]
      %v4850 = vld [vmem:[%s4844 + $0x14] sm:$0xf]
      %v4851 = vld [vmem:[%s4844 + $0x18] sm:$0xf]
      %v4852 = vld [vmem:[%s4844 + $0x1c] sm:$0xf]
      %v4853 = vld [vmem:[%s4844 + $0x20] sm:$0xf]
      %v4854 = vld [vmem:[%s4844 + $0x24] sm:$0xf]
      %v4855 = vld [vmem:[%s4844 + $0x28] sm:$0xf]
      %v4856 = vld [vmem:[%s4844 + $0x2c] sm:$0xf]
      %v4857 = vld [vmem:[%s4844 + $0x30] sm:$0xf]
      %v4858 = vld [vmem:[%s4844 + $0x34] sm:$0xf]
      %v4859 = vld [vmem:[%s4844 + $0x38] sm:$0xf]
      %v4860 = vld [vmem:[%s4844 + $0x3c] sm:$0xf]
      %v4890 = vunpack.c.l.b16 %v4815
      %v4891 = vunpack.c.l.b16 %v4816
      %v4892 = vunpack.c.l.b16 %v4817
      %v4893 = vunpack.c.l.b16 %v4818
      %v4894 = vunpack.c.l.b16 %v4819
      %v4895 = vunpack.c.l.b16 %v4820
      %v4896 = vunpack.c.l.b16 %v4821
      %v4897 = vunpack.c.l.b16 %v4822
      %v4898 = vunpack.c.l.b16 %v4823
      %v4899 = vunpack.c.l.b16 %v4824
      %v4900 = vunpack.c.l.b16 %v4825
      %v4901 = vunpack.c.l.b16 %v4826
      %v4902 = vunpack.c.l.b16 %v4827
      %v4903 = vunpack.c.l.b16 %v4828
      %v4904 = vunpack.c.l.b16 %v4829
      %v4905 = vunpack.c.l.b16 %v4830
      %v4906 = vunpack.c.l.b16 %v4831
      %v4907 = vunpack.c.l.b16 %v4832
      %v4908 = vunpack.c.l.b16 %v4833
      %v4909 = vunpack.c.l.b16 %v4834
      %v4910 = vunpack.c.l.b16 %v4835
      %v4911 = vunpack.c.l.b16 %v4836
      %v4912 = vunpack.c.l.b16 %v4837
      %v4913 = vunpack.c.l.b16 %v4838
      %v4914 = vunpack.c.l.b16 %v4839
      %v4915 = vunpack.c.l.b16 %v4840
      %v4916 = vunpack.c.l.b16 %v4841
      %v4917 = vunpack.c.l.b16 %v4842
      %v4918 = vunpack.c.l.b16 %v4843
      %v4919 = vpack.c.b16 %v4891, %v4890
      %v4920 = vpack.c.b16 %v4893, %v4892
      %v4921 = vpack.c.b16 %v4895, %v4894
      %v4922 = vpack.c.b16 %v4897, %v4896
      %v4923 = vpack.c.b16 %v4899, %v4898
      %v4924 = vpack.c.b16 %v4901, %v4900
      %v4925 = vpack.c.b16 %v4903, %v4902
      %v4926 = vpack.c.b16 %v4905, %v4904
      %v4927 = vpack.c.b16 %v4907, %v4906
      %v4928 = vpack.c.b16 %v4909, %v4908
      %v4929 = vpack.c.b16 %v4911, %v4910
      %v4930 = vpack.c.b16 %v4913, %v4912
      %v4931 = vpack.c.b16 %v4915, %v4914
      %v4932 = vpack.c.b16 %v4917, %v4916
      %v4933 = vpack.c.b16 %v4918, %v4918
      %v4965 = vunpack.c.l.b16 %v4845
      %v4966 = vunpack.c.l.b16 %v4846
      %v4967 = vunpack.c.l.b16 %v4847
      %v4968 = vunpack.c.l.b16 %v4848
      %v4969 = vunpack.c.l.b16 %v4849
      %v4970 = vunpack.c.l.b16 %v4850
      %v4971 = vunpack.c.l.b16 %v4851
      %v4972 = vunpack.c.l.b16 %v4852
      %v4973 = vunpack.c.l.b16 %v4853
      %v4974 = vunpack.c.l.b16 %v4854
      %v4975 = vunpack.c.l.b16 %v4855
      %v4976 = vunpack.c.l.b16 %v4856
      %v4977 = vunpack.c.l.b16 %v4857
      %v4978 = vunpack.c.l.b16 %v4858
      %v4979 = vunpack.c.l.b16 %v4859
      %v4980 = vunpack.c.l.b16 %v4860
      %v4981 = vpack.c.b16 %v4966, %v4965
      %v4982 = vpack.c.b16 %v4968, %v4967
      %v4983 = vpack.c.b16 %v4970, %v4969
      %v4984 = vpack.c.b16 %v4972, %v4971
      %v4985 = vpack.c.b16 %v4974, %v4973
      %v4986 = vpack.c.b16 %v4976, %v4975
      %v4987 = vpack.c.b16 %v4978, %v4977
      %v4988 = vpack.c.b16 %v4980, %v4979
      %4997 = vmatpush.bf16.msra.mxu0 %v4988
      %4998 = vmatpush.bf16.msra.mxu0 %v4987
      %4999 = vmatpush.bf16.msra.mxu0 %v4986
      %5000 = vmatpush.bf16.msra.mxu0 %v4985
      %5001 = vmatpush.bf16.msra.mxu0 %v4984
      %5002 = vmatpush.bf16.msra.mxu0 %v4983
      %5003 = vmatpush.bf16.msra.mxu0 %v4982
      %5004 = vmatpush.bf16.msra.mxu0 %v4981
      %5005 = vmatmul.bf16.gmra.mxu0 %v4919
      %v5006 = vpop.f32.mrf.mxu0
      %v5007 = vadd.f32 0.0, %v5006
      %v5008 = vpop.f32.mrf.mxu0
      %v5009 = vadd.f32 0.0, %v5008
      %5010 = vmatmul.bf16.gmra.mxu0 %v4920
      %v5011 = vpop.f32.mrf.mxu0
      %v5012 = vadd.f32 0.0, %v5011
      %v5013 = vpop.f32.mrf.mxu0
      %v5014 = vadd.f32 0.0, %v5013
      %5015 = vmatmul.bf16.gmra.mxu0 %v4921
      %v5016 = vpop.f32.mrf.mxu0
      %v5017 = vadd.f32 0.0, %v5016
      %v5018 = vpop.f32.mrf.mxu0
      %v5019 = vadd.f32 0.0, %v5018
      %5020 = vmatmul.bf16.gmra.mxu0 %v4922
      %v5021 = vpop.f32.mrf.mxu0
      %v5022 = vadd.f32 0.0, %v5021
      %v5023 = vpop.f32.mrf.mxu0
      %v5024 = vadd.f32 0.0, %v5023
      %5025 = vmatmul.bf16.gmra.mxu0 %v4923
      %v5026 = vpop.f32.mrf.mxu0
      %v5027 = vadd.f32 0.0, %v5026
      %v5028 = vpop.f32.mrf.mxu0
      %v5029 = vadd.f32 0.0, %v5028
      %5030 = vmatmul.bf16.gmra.mxu0 %v4924
      %v5031 = vpop.f32.mrf.mxu0
      %v5032 = vadd.f32 0.0, %v5031
      %v5033 = vpop.f32.mrf.mxu0
      %v5034 = vadd.f32 0.0, %v5033
      %5035 = vmatmul.bf16.gmra.mxu0 %v4925
      %v5036 = vpop.f32.mrf.mxu0
      %v5037 = vadd.f32 0.0, %v5036
      %v5038 = vpop.f32.mrf.mxu0
      %v5039 = vadd.f32 0.0, %v5038
      %5040 = vmatmul.bf16.gmra.mxu0 %v4926
      %v5041 = vpop.f32.mrf.mxu0
      %v5042 = vadd.f32 0.0, %v5041
      %v5043 = vpop.f32.mrf.mxu0
      %v5044 = vadd.f32 0.0, %v5043
      %5045 = vmatmul.bf16.gmra.mxu0 %v4927
      %v5046 = vpop.f32.mrf.mxu0
      %v5047 = vadd.f32 0.0, %v5046
      %v5048 = vpop.f32.mrf.mxu0
      %v5049 = vadd.f32 0.0, %v5048
      %5050 = vmatmul.bf16.gmra.mxu0 %v4928
      %v5051 = vpop.f32.mrf.mxu0
      %v5052 = vadd.f32 0.0, %v5051
      %v5053 = vpop.f32.mrf.mxu0
      %v5054 = vadd.f32 0.0, %v5053
      %5055 = vmatmul.bf16.gmra.mxu0 %v4929
      %v5056 = vpop.f32.mrf.mxu0
      %v5057 = vadd.f32 0.0, %v5056
      %v5058 = vpop.f32.mrf.mxu0
      %v5059 = vadd.f32 0.0, %v5058
      %5060 = vmatmul.bf16.gmra.mxu0 %v4930
      %v5061 = vpop.f32.mrf.mxu0
      %v5062 = vadd.f32 0.0, %v5061
      %v5063 = vpop.f32.mrf.mxu0
      %v5064 = vadd.f32 0.0, %v5063
      %5065 = vmatmul.bf16.gmra.mxu0 %v4931
      %v5066 = vpop.f32.mrf.mxu0
      %v5067 = vadd.f32 0.0, %v5066
      %v5068 = vpop.f32.mrf.mxu0
      %v5069 = vadd.f32 0.0, %v5068
      %5070 = vmatmul.bf16.gmra.mxu0 %v4932
      %v5071 = vpop.f32.mrf.mxu0
      %v5072 = vadd.f32 0.0, %v5071
      %v5073 = vpop.f32.mrf.mxu0
      %v5074 = vadd.f32 0.0, %v5073
      %5075 = vmatmul.bf16.gmra.mxu0 %v4933
      %v5076 = vpop.f32.mrf.mxu0
      %v5077 = vadd.f32 0.0, %v5076
      %v5078 = vpop.f32.mrf.mxu0
      %5079 = vdwg.mxu0
      %v5080 = vadd.f32 %v4786, %v5007
      %v5081 = vadd.f32 %v4787, %v5009
      %v5082 = vadd.f32 %v4788, %v5012
      %v5083 = vadd.f32 %v4789, %v5014
      %v5084 = vadd.f32 %v4790, %v5017
      %v5085 = vadd.f32 %v4791, %v5019
      %v5086 = vadd.f32 %v4792, %v5022
      %v5087 = vadd.f32 %v4793, %v5024
      %v5088 = vadd.f32 %v4794, %v5027
      %v5089 = vadd.f32 %v4795, %v5029
      %v5090 = vadd.f32 %v4796, %v5032
      %v5091 = vadd.f32 %v4797, %v5034
      %v5092 = vadd.f32 %v4798, %v5037
      %v5093 = vadd.f32 %v4799, %v5039
      %v5094 = vadd.f32 %v4800, %v5042
      %v5095 = vadd.f32 %v4801, %v5044
      %v5096 = vadd.f32 %v4802, %v5047
      %v5097 = vadd.f32 %v4803, %v5049
      %v5098 = vadd.f32 %v4804, %v5052
      %v5099 = vadd.f32 %v4805, %v5054
      %v5100 = vadd.f32 %v4806, %v5057
      %v5101 = vadd.f32 %v4807, %v5059
      %v5102 = vadd.f32 %v4808, %v5062
      %v5103 = vadd.f32 %v4809, %v5064
      %v5104 = vadd.f32 %v4810, %v5067
      %v5105 = vadd.f32 %v4811, %v5069
      %v5106 = vadd.f32 %v4812, %v5072
      %v5107 = vadd.f32 %v4813, %v5074
      %v5108 = vadd.f32 %v4814, %v5077
      %v5109 = vld [vmem:[%s293 + $0x10] sm:$0xf]
      %v5110 = vld [vmem:[%s293 + $0x14] sm:$0xf]
      %v5111 = vld [vmem:[%s293 + $0x18] sm:$0xf]
      %v5112 = vld [vmem:[%s293 + $0x1c] sm:$0xf]
      %v5113 = vld [vmem:[%s293 + $0x20] sm:$0xf]
      %v5114 = vld [vmem:[%s293 + $0x24] sm:$0xf]
      %v5115 = vld [vmem:[%s293 + $0x28] sm:$0xf]
      %v5116 = vld [vmem:[%s293 + $0x2c] sm:$0xf]
      %v5117 = vld [vmem:[%s293 + $0x30] sm:$0xf]
      %v5118 = vld [vmem:[%s293 + $0x34] sm:$0xf]
      %v5119 = vld [vmem:[%s293 + $0x38] sm:$0xf]
      %v5120 = vld [vmem:[%s293 + $0x3c] sm:$0xf]
      %v5121 = vld [vmem:[%s293 + $0x40] sm:$0xf]
      %v5122 = vld [vmem:[%s293 + $0x44] sm:$0xf]
      %v5123 = vld [vmem:[%s293 + $0x48] sm:$0xf]
      %v5124 = vld [vmem:[%s293 + $0x4c] sm:$0xf]
      %v5125 = vld [vmem:[%s293 + $0x50] sm:$0xf]
      %v5126 = vld [vmem:[%s293 + $0x54] sm:$0xf]
      %v5127 = vld [vmem:[%s293 + $0x58] sm:$0xf]
      %v5128 = vld [vmem:[%s293 + $0x5c] sm:$0xf]
      %v5129 = vld [vmem:[%s293 + $0x60] sm:$0xf]
      %v5130 = vld [vmem:[%s293 + $0x64] sm:$0xf]
      %v5131 = vld [vmem:[%s293 + $0x68] sm:$0xf]
      %v5132 = vld [vmem:[%s293 + $0x6c] sm:$0xf]
      %v5133 = vld [vmem:[%s293 + $0x70] sm:$0xf]
      %v5134 = vld [vmem:[%s293 + $0x74] sm:$0xf]
      %v5135 = vld [vmem:[%s293 + $0x78] sm:$0xf]
      %v5136 = vld [vmem:[%s293 + $0x7c] sm:$0xf]
      %v5137 = vld [vmem:[%s293 + $0x80] sm:$0xf]
      %v5138 = vld [vmem:[%s293 + $0x84] sm:$0x1]
      %s5139 = scalar_lea.vmem %s3, 448
      %v5140 = vld [vmem:[%s5139] sm:$0xf]
      %v5141 = vld [vmem:[%s5139 + $0x4] sm:$0xf]
      %v5142 = vld [vmem:[%s5139 + $0x8] sm:$0xf]
      %v5143 = vld [vmem:[%s5139 + $0xc] sm:$0xf]
      %v5144 = vld [vmem:[%s5139 + $0x10] sm:$0xf]
      %v5145 = vld [vmem:[%s5139 + $0x14] sm:$0xf]
      %v5146 = vld [vmem:[%s5139 + $0x18] sm:$0xf]
      %v5147 = vld [vmem:[%s5139 + $0x1c] sm:$0xf]
      %v5148 = vld [vmem:[%s5139 + $0x20] sm:$0xf]
      %v5149 = vld [vmem:[%s5139 + $0x24] sm:$0xf]
      %v5150 = vld [vmem:[%s5139 + $0x28] sm:$0xf]
      %v5151 = vld [vmem:[%s5139 + $0x2c] sm:$0xf]
      %v5152 = vld [vmem:[%s5139 + $0x30] sm:$0xf]
      %v5153 = vld [vmem:[%s5139 + $0x34] sm:$0xf]
      %v5154 = vld [vmem:[%s5139 + $0x38] sm:$0xf]
      %v5155 = vld [vmem:[%s5139 + $0x3c] sm:$0xf]
      %v5186 = vunpack.c.l.b16 %v5109
      %v5187 = vunpack.c.l.b16 %v5110
      %v5188 = vunpack.c.l.b16 %v5111
      %v5189 = vunpack.c.l.b16 %v5112
      %v5190 = vunpack.c.l.b16 %v5113
      %v5191 = vunpack.c.l.b16 %v5114
      %v5192 = vunpack.c.l.b16 %v5115
      %v5193 = vunpack.c.l.b16 %v5116
      %v5194 = vunpack.c.l.b16 %v5117
      %v5195 = vunpack.c.l.b16 %v5118
      %v5196 = vunpack.c.l.b16 %v5119
      %v5197 = vunpack.c.l.b16 %v5120
      %v5198 = vunpack.c.l.b16 %v5121
      %v5199 = vunpack.c.l.b16 %v5122
      %v5200 = vunpack.c.l.b16 %v5123
      %v5201 = vunpack.c.l.b16 %v5124
      %v5202 = vunpack.c.l.b16 %v5125
      %v5203 = vunpack.c.l.b16 %v5126
      %v5204 = vunpack.c.l.b16 %v5127
      %v5205 = vunpack.c.l.b16 %v5128
      %v5206 = vunpack.c.l.b16 %v5129
      %v5207 = vunpack.c.l.b16 %v5130
      %v5208 = vunpack.c.l.b16 %v5131
      %v5209 = vunpack.c.l.b16 %v5132
      %v5210 = vunpack.c.l.b16 %v5133
      %v5211 = vunpack.c.l.b16 %v5134
      %v5212 = vunpack.c.l.b16 %v5135
      %v5213 = vunpack.c.l.b16 %v5136
      %v5214 = vunpack.c.l.b16 %v5137
      %v5215 = vunpack.c.l.b16 %v5138
      %v5216 = vpack.c.b16 %v5187, %v5186
      %v5217 = vpack.c.b16 %v5189, %v5188
      %v5218 = vpack.c.b16 %v5191, %v5190
      %v5219 = vpack.c.b16 %v5193, %v5192
      %v5220 = vpack.c.b16 %v5195, %v5194
      %v5221 = vpack.c.b16 %v5197, %v5196
      %v5222 = vpack.c.b16 %v5199, %v5198
      %v5223 = vpack.c.b16 %v5201, %v5200
      %v5224 = vpack.c.b16 %v5203, %v5202
      %v5225 = vpack.c.b16 %v5205, %v5204
      %v5226 = vpack.c.b16 %v5207, %v5206
      %v5227 = vpack.c.b16 %v5209, %v5208
      %v5228 = vpack.c.b16 %v5211, %v5210
      %v5229 = vpack.c.b16 %v5213, %v5212
      %v5230 = vpack.c.b16 %v5215, %v5214
      %v5232 = vshrl.u32 %v5216, 16
      %v5234 = vshll.u32 %v5216, 16
      %v5236 = vrot.slane %v5234, 1
      %v5237 = vor.u32 %v5232, %v5236
      %v5239 = vshll.u32 %v5217, 16
      %v5241 = vrot.slane %v5239, 1
      %v5242 = vsel %vm437, %v5237, %v5241
      %v5243 = vshrl.u32 %v5217, 16
      %v5245 = vor.u32 %v5243, %v5241
      %v5247 = vshll.u32 %v5218, 16
      %v5249 = vrot.slane %v5247, 1
      %v5250 = vsel %vm437, %v5245, %v5249
      %v5251 = vshrl.u32 %v5218, 16
      %v5253 = vor.u32 %v5251, %v5249
      %v5255 = vshll.u32 %v5219, 16
      %v5257 = vrot.slane %v5255, 1
      %v5258 = vsel %vm437, %v5253, %v5257
      %v5259 = vshrl.u32 %v5219, 16
      %v5261 = vor.u32 %v5259, %v5257
      %v5263 = vshll.u32 %v5220, 16
      %v5265 = vrot.slane %v5263, 1
      %v5266 = vsel %vm437, %v5261, %v5265
      %v5267 = vshrl.u32 %v5220, 16
      %v5269 = vor.u32 %v5267, %v5265
      %v5271 = vshll.u32 %v5221, 16
      %v5273 = vrot.slane %v5271, 1
      %v5274 = vsel %vm437, %v5269, %v5273
      %v5275 = vshrl.u32 %v5221, 16
      %v5277 = vor.u32 %v5275, %v5273
      %v5279 = vshll.u32 %v5222, 16
      %v5281 = vrot.slane %v5279, 1
      %v5282 = vsel %vm437, %v5277, %v5281
      %v5283 = vshrl.u32 %v5222, 16
      %v5285 = vor.u32 %v5283, %v5281
      %v5287 = vshll.u32 %v5223, 16
      %v5289 = vrot.slane %v5287, 1
      %v5290 = vsel %vm437, %v5285, %v5289
      %v5291 = vshrl.u32 %v5223, 16
      %v5293 = vor.u32 %v5291, %v5289
      %v5295 = vshll.u32 %v5224, 16
      %v5297 = vrot.slane %v5295, 1
      %v5298 = vsel %vm437, %v5293, %v5297
      %v5299 = vshrl.u32 %v5224, 16
      %v5301 = vor.u32 %v5299, %v5297
      %v5303 = vshll.u32 %v5225, 16
      %v5305 = vrot.slane %v5303, 1
      %v5306 = vsel %vm437, %v5301, %v5305
      %v5307 = vshrl.u32 %v5225, 16
      %v5309 = vor.u32 %v5307, %v5305
      %v5311 = vshll.u32 %v5226, 16
      %v5313 = vrot.slane %v5311, 1
      %v5314 = vsel %vm437, %v5309, %v5313
      %v5315 = vshrl.u32 %v5226, 16
      %v5317 = vor.u32 %v5315, %v5313
      %v5319 = vshll.u32 %v5227, 16
      %v5321 = vrot.slane %v5319, 1
      %v5322 = vsel %vm437, %v5317, %v5321
      %v5323 = vshrl.u32 %v5227, 16
      %v5325 = vor.u32 %v5323, %v5321
      %v5327 = vshll.u32 %v5228, 16
      %v5329 = vrot.slane %v5327, 1
      %v5330 = vsel %vm437, %v5325, %v5329
      %v5331 = vshrl.u32 %v5228, 16
      %v5333 = vor.u32 %v5331, %v5329
      %v5335 = vshll.u32 %v5229, 16
      %v5337 = vrot.slane %v5335, 1
      %v5338 = vsel %vm437, %v5333, %v5337
      %v5339 = vshrl.u32 %v5229, 16
      %v5341 = vor.u32 %v5339, %v5337
      %v5343 = vshll.u32 %v5230, 16
      %v5345 = vrot.slane %v5343, 1
      %v5346 = vsel %vm437, %v5341, %v5345
      %v5347 = vshrl.u32 %v5230, 16
      %v5349 = vor.u32 %v5347, %v5345
      %v5381 = vunpack.c.l.b16 %v5140
      %v5382 = vunpack.c.l.b16 %v5141
      %v5383 = vunpack.c.l.b16 %v5142
      %v5384 = vunpack.c.l.b16 %v5143
      %v5385 = vunpack.c.l.b16 %v5144
      %v5386 = vunpack.c.l.b16 %v5145
      %v5387 = vunpack.c.l.b16 %v5146
      %v5388 = vunpack.c.l.b16 %v5147
      %v5389 = vunpack.c.l.b16 %v5148
      %v5390 = vunpack.c.l.b16 %v5149
      %v5391 = vunpack.c.l.b16 %v5150
      %v5392 = vunpack.c.l.b16 %v5151
      %v5393 = vunpack.c.l.b16 %v5152
      %v5394 = vunpack.c.l.b16 %v5153
      %v5395 = vunpack.c.l.b16 %v5154
      %v5396 = vunpack.c.l.b16 %v5155
      %v5397 = vpack.c.b16 %v5382, %v5381
      %v5398 = vpack.c.b16 %v5384, %v5383
      %v5399 = vpack.c.b16 %v5386, %v5385
      %v5400 = vpack.c.b16 %v5388, %v5387
      %v5401 = vpack.c.b16 %v5390, %v5389
      %v5402 = vpack.c.b16 %v5392, %v5391
      %v5403 = vpack.c.b16 %v5394, %v5393
      %v5404 = vpack.c.b16 %v5396, %v5395
      %5413 = vmatpush.bf16.msra.mxu0 %v5404
      %5414 = vmatpush.bf16.msra.mxu0 %v5403
      %5415 = vmatpush.bf16.msra.mxu0 %v5402
      %5416 = vmatpush.bf16.msra.mxu0 %v5401
      %5417 = vmatpush.bf16.msra.mxu0 %v5400
      %5418 = vmatpush.bf16.msra.mxu0 %v5399
      %5419 = vmatpush.bf16.msra.mxu0 %v5398
      %5420 = vmatpush.bf16.msra.mxu0 %v5397
      %5421 = vmatmul.bf16.gmra.mxu0 %v5242
      %v5422 = vpop.f32.mrf.mxu0
      %v5423 = vadd.f32 0.0, %v5422
      %v5424 = vpop.f32.mrf.mxu0
      %v5425 = vadd.f32 0.0, %v5424
      %5426 = vmatmul.bf16.gmra.mxu0 %v5250
      %v5427 = vpop.f32.mrf.mxu0
      %v5428 = vadd.f32 0.0, %v5427
      %v5429 = vpop.f32.mrf.mxu0
      %v5430 = vadd.f32 0.0, %v5429
      %5431 = vmatmul.bf16.gmra.mxu0 %v5258
      %v5432 = vpop.f32.mrf.mxu0
      %v5433 = vadd.f32 0.0, %v5432
      %v5434 = vpop.f32.mrf.mxu0
      %v5435 = vadd.f32 0.0, %v5434
      %5436 = vmatmul.bf16.gmra.mxu0 %v5266
      %v5437 = vpop.f32.mrf.mxu0
      %v5438 = vadd.f32 0.0, %v5437
      %v5439 = vpop.f32.mrf.mxu0
      %v5440 = vadd.f32 0.0, %v5439
      %5441 = vmatmul.bf16.gmra.mxu0 %v5274
      %v5442 = vpop.f32.mrf.mxu0
      %v5443 = vadd.f32 0.0, %v5442
      %v5444 = vpop.f32.mrf.mxu0
      %v5445 = vadd.f32 0.0, %v5444
      %5446 = vmatmul.bf16.gmra.mxu0 %v5282
      %v5447 = vpop.f32.mrf.mxu0
      %v5448 = vadd.f32 0.0, %v5447
      %v5449 = vpop.f32.mrf.mxu0
      %v5450 = vadd.f32 0.0, %v5449
      %5451 = vmatmul.bf16.gmra.mxu0 %v5290
      %v5452 = vpop.f32.mrf.mxu0
      %v5453 = vadd.f32 0.0, %v5452
      %v5454 = vpop.f32.mrf.mxu0
      %v5455 = vadd.f32 0.0, %v5454
      %5456 = vmatmul.bf16.gmra.mxu0 %v5298
      %v5457 = vpop.f32.mrf.mxu0
      %v5458 = vadd.f32 0.0, %v5457
      %v5459 = vpop.f32.mrf.mxu0
      %v5460 = vadd.f32 0.0, %v5459
      %5461 = vmatmul.bf16.gmra.mxu0 %v5306
      %v5462 = vpop.f32.mrf.mxu0
      %v5463 = vadd.f32 0.0, %v5462
      %v5464 = vpop.f32.mrf.mxu0
      %v5465 = vadd.f32 0.0, %v5464
      %5466 = vmatmul.bf16.gmra.mxu0 %v5314
      %v5467 = vpop.f32.mrf.mxu0
      %v5468 = vadd.f32 0.0, %v5467
      %v5469 = vpop.f32.mrf.mxu0
      %v5470 = vadd.f32 0.0, %v5469
      %5471 = vmatmul.bf16.gmra.mxu0 %v5322
      %v5472 = vpop.f32.mrf.mxu0
      %v5473 = vadd.f32 0.0, %v5472
      %v5474 = vpop.f32.mrf.mxu0
      %v5475 = vadd.f32 0.0, %v5474
      %5476 = vmatmul.bf16.gmra.mxu0 %v5330
      %v5477 = vpop.f32.mrf.mxu0
      %v5478 = vadd.f32 0.0, %v5477
      %v5479 = vpop.f32.mrf.mxu0
      %v5480 = vadd.f32 0.0, %v5479
      %5481 = vmatmul.bf16.gmra.mxu0 %v5338
      %v5482 = vpop.f32.mrf.mxu0
      %v5483 = vadd.f32 0.0, %v5482
      %v5484 = vpop.f32.mrf.mxu0
      %v5485 = vadd.f32 0.0, %v5484
      %5486 = vmatmul.bf16.gmra.mxu0 %v5346
      %v5487 = vpop.f32.mrf.mxu0
      %v5488 = vadd.f32 0.0, %v5487
      %v5489 = vpop.f32.mrf.mxu0
      %v5490 = vadd.f32 0.0, %v5489
      %5491 = vmatmul.bf16.gmra.mxu0 %v5349
      %v5492 = vpop.f32.mrf.mxu0
      %v5493 = vadd.f32 0.0, %v5492
      %v5494 = vpop.f32.mrf.mxu0
      %5495 = vdwg.mxu0
      %v5496 = vadd.f32 %v5080, %v5423
      %v5497 = vadd.f32 %v5081, %v5425
      %v5498 = vadd.f32 %v5082, %v5428
      %v5499 = vadd.f32 %v5083, %v5430
      %v5500 = vadd.f32 %v5084, %v5433
      %v5501 = vadd.f32 %v5085, %v5435
      %v5502 = vadd.f32 %v5086, %v5438
      %v5503 = vadd.f32 %v5087, %v5440
      %v5504 = vadd.f32 %v5088, %v5443
      %v5505 = vadd.f32 %v5089, %v5445
      %v5506 = vadd.f32 %v5090, %v5448
      %v5507 = vadd.f32 %v5091, %v5450
      %v5508 = vadd.f32 %v5092, %v5453
      %v5509 = vadd.f32 %v5093, %v5455
      %v5510 = vadd.f32 %v5094, %v5458
      %v5511 = vadd.f32 %v5095, %v5460
      %v5512 = vadd.f32 %v5096, %v5463
      %v5513 = vadd.f32 %v5097, %v5465
      %v5514 = vadd.f32 %v5098, %v5468
      %v5515 = vadd.f32 %v5099, %v5470
      %v5516 = vadd.f32 %v5100, %v5473
      %v5517 = vadd.f32 %v5101, %v5475
      %v5518 = vadd.f32 %v5102, %v5478
      %v5519 = vadd.f32 %v5103, %v5480
      %v5520 = vadd.f32 %v5104, %v5483
      %v5521 = vadd.f32 %v5105, %v5485
      %v5522 = vadd.f32 %v5106, %v5488
      %v5523 = vadd.f32 %v5107, %v5490
      %v5524 = vadd.f32 %v5108, %v5493
      %v5525 = vld [vmem:[%s293 + $0x10] sm:$0xe]
      %s5526 = scalar_lea.vmem %s3, 512
      %v5527 = vld [vmem:[%s5526] sm:$0xf]
      %v5528 = vld [vmem:[%s5526 + $0x4] sm:$0xf]
      %v5529 = vld [vmem:[%s5526 + $0x8] sm:$0xf]
      %v5530 = vld [vmem:[%s5526 + $0xc] sm:$0xf]
      %v5531 = vld [vmem:[%s5526 + $0x10] sm:$0xf]
      %v5532 = vld [vmem:[%s5526 + $0x14] sm:$0xf]
      %v5533 = vld [vmem:[%s5526 + $0x18] sm:$0xf]
      %v5534 = vld [vmem:[%s5526 + $0x1c] sm:$0xf]
      %v5535 = vld [vmem:[%s5526 + $0x20] sm:$0xf]
      %v5536 = vld [vmem:[%s5526 + $0x24] sm:$0xf]
      %v5537 = vld [vmem:[%s5526 + $0x28] sm:$0xf]
      %v5538 = vld [vmem:[%s5526 + $0x2c] sm:$0xf]
      %v5539 = vld [vmem:[%s5526 + $0x30] sm:$0xf]
      %v5540 = vld [vmem:[%s5526 + $0x34] sm:$0xf]
      %v5541 = vld [vmem:[%s5526 + $0x38] sm:$0xf]
      %v5542 = vld [vmem:[%s5526 + $0x3c] sm:$0xf]
      %v5544 = vunpack.c.l.b16 %v5525
      %v5545 = vpack.c.b16 %v5187, %v5544
      %v5546 = vrot.slane %v5545, 1
      %v5547 = vrot.slane %v5217, 1
      %v5548 = vsel %vm871, %v5546, %v5547
      %v5549 = vrot.slane %v5218, 1
      %v5550 = vsel %vm871, %v5547, %v5549
      %v5551 = vrot.slane %v5219, 1
      %v5552 = vsel %vm871, %v5549, %v5551
      %v5553 = vrot.slane %v5220, 1
      %v5554 = vsel %vm871, %v5551, %v5553
      %v5555 = vrot.slane %v5221, 1
      %v5556 = vsel %vm871, %v5553, %v5555
      %v5557 = vrot.slane %v5222, 1
      %v5558 = vsel %vm871, %v5555, %v5557
      %v5559 = vrot.slane %v5223, 1
      %v5560 = vsel %vm871, %v5557, %v5559
      %v5561 = vrot.slane %v5224, 1
      %v5562 = vsel %vm871, %v5559, %v5561
      %v5563 = vrot.slane %v5225, 1
      %v5564 = vsel %vm871, %v5561, %v5563
      %v5565 = vrot.slane %v5226, 1
      %v5566 = vsel %vm871, %v5563, %v5565
      %v5567 = vrot.slane %v5227, 1
      %v5568 = vsel %vm871, %v5565, %v5567
      %v5569 = vrot.slane %v5228, 1
      %v5570 = vsel %vm871, %v5567, %v5569
      %v5571 = vrot.slane %v5229, 1
      %v5572 = vsel %vm871, %v5569, %v5571
      %v5573 = vrot.slane %v5230, 1
      %v5574 = vsel %vm871, %v5571, %v5573
      %v5606 = vunpack.c.l.b16 %v5527
      %v5607 = vunpack.c.l.b16 %v5528
      %v5608 = vunpack.c.l.b16 %v5529
      %v5609 = vunpack.c.l.b16 %v5530
      %v5610 = vunpack.c.l.b16 %v5531
      %v5611 = vunpack.c.l.b16 %v5532
      %v5612 = vunpack.c.l.b16 %v5533
      %v5613 = vunpack.c.l.b16 %v5534
      %v5614 = vunpack.c.l.b16 %v5535
      %v5615 = vunpack.c.l.b16 %v5536
      %v5616 = vunpack.c.l.b16 %v5537
      %v5617 = vunpack.c.l.b16 %v5538
      %v5618 = vunpack.c.l.b16 %v5539
      %v5619 = vunpack.c.l.b16 %v5540
      %v5620 = vunpack.c.l.b16 %v5541
      %v5621 = vunpack.c.l.b16 %v5542
      %v5622 = vpack.c.b16 %v5607, %v5606
      %v5623 = vpack.c.b16 %v5609, %v5608
      %v5624 = vpack.c.b16 %v5611, %v5610
      %v5625 = vpack.c.b16 %v5613, %v5612
      %v5626 = vpack.c.b16 %v5615, %v5614
      %v5627 = vpack.c.b16 %v5617, %v5616
      %v5628 = vpack.c.b16 %v5619, %v5618
      %v5629 = vpack.c.b16 %v5621, %v5620
      %5638 = vmatpush.bf16.msra.mxu0 %v5629
      %5639 = vmatpush.bf16.msra.mxu0 %v5628
      %5640 = vmatpush.bf16.msra.mxu0 %v5627
      %5641 = vmatpush.bf16.msra.mxu0 %v5626
      %5642 = vmatpush.bf16.msra.mxu0 %v5625
      %5643 = vmatpush.bf16.msra.mxu0 %v5624
      %5644 = vmatpush.bf16.msra.mxu0 %v5623
      %5645 = vmatpush.bf16.msra.mxu0 %v5622
      %5646 = vmatmul.bf16.gmra.mxu0 %v5548
      %v5647 = vpop.f32.mrf.mxu0
      %v5648 = vadd.f32 0.0, %v5647
      %v5649 = vpop.f32.mrf.mxu0
      %v5650 = vadd.f32 0.0, %v5649
      %5651 = vmatmul.bf16.gmra.mxu0 %v5550
      %v5652 = vpop.f32.mrf.mxu0
      %v5653 = vadd.f32 0.0, %v5652
      %v5654 = vpop.f32.mrf.mxu0
      %v5655 = vadd.f32 0.0, %v5654
      %5656 = vmatmul.bf16.gmra.mxu0 %v5552
      %v5657 = vpop.f32.mrf.mxu0
      %v5658 = vadd.f32 0.0, %v5657
      %v5659 = vpop.f32.mrf.mxu0
      %v5660 = vadd.f32 0.0, %v5659
      %5661 = vmatmul.bf16.gmra.mxu0 %v5554
      %v5662 = vpop.f32.mrf.mxu0
      %v5663 = vadd.f32 0.0, %v5662
      %v5664 = vpop.f32.mrf.mxu0
      %v5665 = vadd.f32 0.0, %v5664
      %5666 = vmatmul.bf16.gmra.mxu0 %v5556
      %v5667 = vpop.f32.mrf.mxu0
      %v5668 = vadd.f32 0.0, %v5667
      %v5669 = vpop.f32.mrf.mxu0
      %v5670 = vadd.f32 0.0, %v5669
      %5671 = vmatmul.bf16.gmra.mxu0 %v5558
      %v5672 = vpop.f32.mrf.mxu0
      %v5673 = vadd.f32 0.0, %v5672
      %v5674 = vpop.f32.mrf.mxu0
      %v5675 = vadd.f32 0.0, %v5674
      %5676 = vmatmul.bf16.gmra.mxu0 %v5560
      %v5677 = vpop.f32.mrf.mxu0
      %v5678 = vadd.f32 0.0, %v5677
      %v5679 = vpop.f32.mrf.mxu0
      %v5680 = vadd.f32 0.0, %v5679
      %5681 = vmatmul.bf16.gmra.mxu0 %v5562
      %v5682 = vpop.f32.mrf.mxu0
      %v5683 = vadd.f32 0.0, %v5682
      %v5684 = vpop.f32.mrf.mxu0
      %v5685 = vadd.f32 0.0, %v5684
      %5686 = vmatmul.bf16.gmra.mxu0 %v5564
      %v5687 = vpop.f32.mrf.mxu0
      %v5688 = vadd.f32 0.0, %v5687
      %v5689 = vpop.f32.mrf.mxu0
      %v5690 = vadd.f32 0.0, %v5689
      %5691 = vmatmul.bf16.gmra.mxu0 %v5566
      %v5692 = vpop.f32.mrf.mxu0
      %v5693 = vadd.f32 0.0, %v5692
      %v5694 = vpop.f32.mrf.mxu0
      %v5695 = vadd.f32 0.0, %v5694
      %5696 = vmatmul.bf16.gmra.mxu0 %v5568
      %v5697 = vpop.f32.mrf.mxu0
      %v5698 = vadd.f32 0.0, %v5697
      %v5699 = vpop.f32.mrf.mxu0
      %v5700 = vadd.f32 0.0, %v5699
      %5701 = vmatmul.bf16.gmra.mxu0 %v5570
      %v5702 = vpop.f32.mrf.mxu0
      %v5703 = vadd.f32 0.0, %v5702
      %v5704 = vpop.f32.mrf.mxu0
      %v5705 = vadd.f32 0.0, %v5704
      %5706 = vmatmul.bf16.gmra.mxu0 %v5572
      %v5707 = vpop.f32.mrf.mxu0
      %v5708 = vadd.f32 0.0, %v5707
      %v5709 = vpop.f32.mrf.mxu0
      %v5710 = vadd.f32 0.0, %v5709
      %5711 = vmatmul.bf16.gmra.mxu0 %v5574
      %v5712 = vpop.f32.mrf.mxu0
      %v5713 = vadd.f32 0.0, %v5712
      %v5714 = vpop.f32.mrf.mxu0
      %v5715 = vadd.f32 0.0, %v5714
      %5716 = vmatmul.bf16.gmra.mxu0 %v5573
      %v5717 = vpop.f32.mrf.mxu0
      %v5718 = vadd.f32 0.0, %v5717
      %v5719 = vpop.f32.mrf.mxu0
      %5720 = vdwg.mxu0
      %v5721 = vadd.f32 %v5496, %v5648
      %v5722 = vadd.f32 %v5497, %v5650
      %v5723 = vadd.f32 %v5498, %v5653
      %v5724 = vadd.f32 %v5499, %v5655
      %v5725 = vadd.f32 %v5500, %v5658
      %v5726 = vadd.f32 %v5501, %v5660
      %v5727 = vadd.f32 %v5502, %v5663
      %v5728 = vadd.f32 %v5503, %v5665
      %v5729 = vadd.f32 %v5504, %v5668
      %v5730 = vadd.f32 %v5505, %v5670
      %v5731 = vadd.f32 %v5506, %v5673
      %v5732 = vadd.f32 %v5507, %v5675
      %v5733 = vadd.f32 %v5508, %v5678
      %v5734 = vadd.f32 %v5509, %v5680
      %v5735 = vadd.f32 %v5510, %v5683
      %v5736 = vadd.f32 %v5511, %v5685
      %v5737 = vadd.f32 %v5512, %v5688
      %v5738 = vadd.f32 %v5513, %v5690
      %v5739 = vadd.f32 %v5514, %v5693
      %v5740 = vadd.f32 %v5515, %v5695
      %v5741 = vadd.f32 %v5516, %v5698
      %v5742 = vadd.f32 %v5517, %v5700
      %v5743 = vadd.f32 %v5518, %v5703
      %v5744 = vadd.f32 %v5519, %v5705
      %v5745 = vadd.f32 %v5520, %v5708
      %v5746 = vadd.f32 %v5521, %v5710
      %v5747 = vadd.f32 %v5522, %v5713
      %v5748 = vadd.f32 %v5523, %v5715
      %v5749 = vadd.f32 %v5524, %v5718
      %v5750 = vld [vmem:[%s4] sm:$0x1]
      %v5752 = vperm.slane %v5750, 0
      %v5754 = vadd.f32 %v5721, %v5752
      %v5755 = vadd.f32 %v5722, %v5752
      %v5756 = vadd.f32 %v5723, %v5752
      %v5757 = vadd.f32 %v5724, %v5752
      %v5758 = vadd.f32 %v5725, %v5752
      %v5759 = vadd.f32 %v5726, %v5752
      %v5760 = vadd.f32 %v5727, %v5752
      %v5761 = vadd.f32 %v5728, %v5752
      %v5762 = vadd.f32 %v5729, %v5752
      %v5763 = vadd.f32 %v5730, %v5752
      %v5764 = vadd.f32 %v5731, %v5752
      %v5765 = vadd.f32 %v5732, %v5752
      %v5766 = vadd.f32 %v5733, %v5752
      %v5767 = vadd.f32 %v5734, %v5752
      %v5768 = vadd.f32 %v5735, %v5752
      %v5769 = vadd.f32 %v5736, %v5752
      %v5770 = vadd.f32 %v5737, %v5752
      %v5771 = vadd.f32 %v5738, %v5752
      %v5772 = vadd.f32 %v5739, %v5752
      %v5773 = vadd.f32 %v5740, %v5752
      %v5774 = vadd.f32 %v5741, %v5752
      %v5775 = vadd.f32 %v5742, %v5752
      %v5776 = vadd.f32 %v5743, %v5752
      %v5777 = vadd.f32 %v5744, %v5752
      %v5778 = vadd.f32 %v5745, %v5752
      %v5779 = vadd.f32 %v5746, %v5752
      %v5780 = vadd.f32 %v5747, %v5752
      %v5781 = vadd.f32 %v5748, %v5752
      %v5782 = vadd.f32 %v5749, %v5752
      %v5783 = vmax.f32 %v5754, 0.0
      %v5784 = vmax.f32 %v5755, 0.0
      %v5785 = vmax.f32 %v5756, 0.0
      %v5786 = vmax.f32 %v5757, 0.0
      %v5787 = vmax.f32 %v5758, 0.0
      %v5788 = vmax.f32 %v5759, 0.0
      %v5789 = vmax.f32 %v5760, 0.0
      %v5790 = vmax.f32 %v5761, 0.0
      %v5791 = vmax.f32 %v5762, 0.0
      %v5792 = vmax.f32 %v5763, 0.0
      %v5793 = vmax.f32 %v5764, 0.0
      %v5794 = vmax.f32 %v5765, 0.0
      %v5795 = vmax.f32 %v5766, 0.0
      %v5796 = vmax.f32 %v5767, 0.0
      %v5797 = vmax.f32 %v5768, 0.0
      %v5798 = vmax.f32 %v5769, 0.0
      %v5799 = vmax.f32 %v5770, 0.0
      %v5800 = vmax.f32 %v5771, 0.0
      %v5801 = vmax.f32 %v5772, 0.0
      %v5802 = vmax.f32 %v5773, 0.0
      %v5803 = vmax.f32 %v5774, 0.0
      %v5804 = vmax.f32 %v5775, 0.0
      %v5805 = vmax.f32 %v5776, 0.0
      %v5806 = vmax.f32 %v5777, 0.0
      %v5807 = vmax.f32 %v5778, 0.0
      %v5808 = vmax.f32 %v5779, 0.0
      %v5809 = vmax.f32 %v5780, 0.0
      %v5810 = vmax.f32 %v5781, 0.0
      %v5811 = vmax.f32 %v5782, 0.0
      %v5812 = vld [vmem:[%s5] sm:$0x1]
      %v5814 = vperm.slane %v5812, 0
      %v5816 = vmul.f32 %v5783, %v5814
      %v5817 = vmul.f32 %v5784, %v5814
      %v5818 = vmul.f32 %v5785, %v5814
      %v5819 = vmul.f32 %v5786, %v5814
      %v5820 = vmul.f32 %v5787, %v5814
      %v5821 = vmul.f32 %v5788, %v5814
      %v5822 = vmul.f32 %v5789, %v5814
      %v5823 = vmul.f32 %v5790, %v5814
      %v5824 = vmul.f32 %v5791, %v5814
      %v5825 = vmul.f32 %v5792, %v5814
      %v5826 = vmul.f32 %v5793, %v5814
      %v5827 = vmul.f32 %v5794, %v5814
      %v5828 = vmul.f32 %v5795, %v5814
      %v5829 = vmul.f32 %v5796, %v5814
      %v5830 = vmul.f32 %v5797, %v5814
      %v5831 = vmul.f32 %v5798, %v5814
      %v5832 = vmul.f32 %v5799, %v5814
      %v5833 = vmul.f32 %v5800, %v5814
      %v5834 = vmul.f32 %v5801, %v5814
      %v5835 = vmul.f32 %v5802, %v5814
      %v5836 = vmul.f32 %v5803, %v5814
      %v5837 = vmul.f32 %v5804, %v5814
      %v5838 = vmul.f32 %v5805, %v5814
      %v5839 = vmul.f32 %v5806, %v5814
      %v5840 = vmul.f32 %v5807, %v5814
      %v5841 = vmul.f32 %v5808, %v5814
      %v5842 = vmul.f32 %v5809, %v5814
      %v5843 = vmul.f32 %v5810, %v5814
      %v5844 = vmul.f32 %v5811, %v5814
      %v5845 = vld [vmem:[%s6] sm:$0x1]
      %v5847 = vperm.slane %v5845, 0
      %v5849 = vadd.f32 %v5816, %v5847
      %v5850 = vadd.f32 %v5817, %v5847
      %v5851 = vadd.f32 %v5818, %v5847
      %v5852 = vadd.f32 %v5819, %v5847
      %v5853 = vadd.f32 %v5820, %v5847
      %v5854 = vadd.f32 %v5821, %v5847
      %v5855 = vadd.f32 %v5822, %v5847
      %v5856 = vadd.f32 %v5823, %v5847
      %v5857 = vadd.f32 %v5824, %v5847
      %v5858 = vadd.f32 %v5825, %v5847
      %v5859 = vadd.f32 %v5826, %v5847
      %v5860 = vadd.f32 %v5827, %v5847
      %v5861 = vadd.f32 %v5828, %v5847
      %v5862 = vadd.f32 %v5829, %v5847
      %v5863 = vadd.f32 %v5830, %v5847
      %v5864 = vadd.f32 %v5831, %v5847
      %v5865 = vadd.f32 %v5832, %v5847
      %v5866 = vadd.f32 %v5833, %v5847
      %v5867 = vadd.f32 %v5834, %v5847
      %v5868 = vadd.f32 %v5835, %v5847
      %v5869 = vadd.f32 %v5836, %v5847
      %v5870 = vadd.f32 %v5837, %v5847
      %v5871 = vadd.f32 %v5838, %v5847
      %v5872 = vadd.f32 %v5839, %v5847
      %v5873 = vadd.f32 %v5840, %v5847
      %v5874 = vadd.f32 %v5841, %v5847
      %v5875 = vadd.f32 %v5842, %v5847
      %v5876 = vadd.f32 %v5843, %v5847
      %v5877 = vadd.f32 %v5844, %v5847
      %v5878 = vpack.c.bf16 %v5849, %v5849
      %v5879 = vpack.c.bf16 %v5850, %v5850
      %v5880 = vpack.c.bf16 %v5851, %v5851
      %v5881 = vpack.c.bf16 %v5852, %v5852
      %v5882 = vpack.c.bf16 %v5853, %v5853
      %v5883 = vpack.c.bf16 %v5854, %v5854
      %v5884 = vpack.c.bf16 %v5855, %v5855
      %v5885 = vpack.c.bf16 %v5856, %v5856
      %v5886 = vpack.c.bf16 %v5857, %v5857
      %v5887 = vpack.c.bf16 %v5858, %v5858
      %v5888 = vpack.c.bf16 %v5859, %v5859
      %v5889 = vpack.c.bf16 %v5860, %v5860
      %v5890 = vpack.c.bf16 %v5861, %v5861
      %v5891 = vpack.c.bf16 %v5862, %v5862
      %v5892 = vpack.c.bf16 %v5863, %v5863
      %v5893 = vpack.c.bf16 %v5864, %v5864
      %v5894 = vpack.c.bf16 %v5865, %v5865
      %v5895 = vpack.c.bf16 %v5866, %v5866
      %v5896 = vpack.c.bf16 %v5867, %v5867
      %v5897 = vpack.c.bf16 %v5868, %v5868
      %v5898 = vpack.c.bf16 %v5869, %v5869
      %v5899 = vpack.c.bf16 %v5870, %v5870
      %v5900 = vpack.c.bf16 %v5871, %v5871
      %v5901 = vpack.c.bf16 %v5872, %v5872
      %v5902 = vpack.c.bf16 %v5873, %v5873
      %v5903 = vpack.c.bf16 %v5874, %v5874
      %v5904 = vpack.c.bf16 %v5875, %v5875
      %v5905 = vpack.c.bf16 %v5876, %v5876
      %v5906 = vpack.c.bf16 %v5877, %v5877
      %5907 = vst [vmem:[%s298] sm:$0xf] %v5878
      %5908 = vst [vmem:[%s298 + $0x4] sm:$0xf] %v5879
      %5909 = vst [vmem:[%s298 + $0x8] sm:$0xf] %v5880
      %5910 = vst [vmem:[%s298 + $0xc] sm:$0xf] %v5881
      %5911 = vst [vmem:[%s298 + $0x10] sm:$0xf] %v5882
      %5912 = vst [vmem:[%s298 + $0x14] sm:$0xf] %v5883
      %5913 = vst [vmem:[%s298 + $0x18] sm:$0xf] %v5884
      %5914 = vst [vmem:[%s298 + $0x1c] sm:$0xf] %v5885
      %5915 = vst [vmem:[%s298 + $0x20] sm:$0xf] %v5886
      %5916 = vst [vmem:[%s298 + $0x24] sm:$0xf] %v5887
      %5917 = vst [vmem:[%s298 + $0x28] sm:$0xf] %v5888
      %5918 = vst [vmem:[%s298 + $0x2c] sm:$0xf] %v5889
      %5919 = vst [vmem:[%s298 + $0x30] sm:$0xf] %v5890
      %5920 = vst [vmem:[%s298 + $0x34] sm:$0xf] %v5891
      %5921 = vst [vmem:[%s298 + $0x38] sm:$0xf] %v5892
      %5922 = vst [vmem:[%s298 + $0x3c] sm:$0xf] %v5893
      %5923 = vst [vmem:[%s298 + $0x40] sm:$0xf] %v5894
      %5924 = vst [vmem:[%s298 + $0x44] sm:$0xf] %v5895
      %5925 = vst [vmem:[%s298 + $0x48] sm:$0xf] %v5896
      %5926 = vst [vmem:[%s298 + $0x4c] sm:$0xf] %v5897
      %5927 = vst [vmem:[%s298 + $0x50] sm:$0xf] %v5898
      %5928 = vst [vmem:[%s298 + $0x54] sm:$0xf] %v5899
      %5929 = vst [vmem:[%s298 + $0x58] sm:$0xf] %v5900
      %5930 = vst [vmem:[%s298 + $0x5c] sm:$0xf] %v5901
      %5931 = vst [vmem:[%s298 + $0x60] sm:$0xf] %v5902
      %5932 = vst [vmem:[%s298 + $0x64] sm:$0xf] %v5903
      %5933 = vst [vmem:[%s298 + $0x68] sm:$0xf] %v5904
      %5934 = vst [vmem:[%s298 + $0x6c] sm:$0xf] %v5905
      %5935 = vst [vmem:[%s298 + $0x70] sm:$0xf] %v5906
      %p5936 = scmp.lt.s32.totalorder %s18, 1
      %s5937 = scalar_select %p5936, %s18, 1
      %s5938 = smul.addr %s5937, 29
      %s5939 = smul.addr %s5938, 4
      %s5940 = scalar_lea.vmem %s7, %s5939
      // Predicated region
      $region49: #{_lambda_.4} parent=47 // pred_check
        %p5941 = pneg %p193
      $region50: #{_lambda_.4} parent=47 // pred_check_branch
        %5943 = sbr.rel (%p5941) target = $region52
      $region51: #{_lambda_.4} parent=47 // pred_region
        _
      $region52: #{_lambda_.4} parent=47 // pred_fallthru
        _
    $region48: #{_lambda_.4} parent=5 // pred_fallthru
      _
    %p5944 = scmp.le.s32.totalorder 2, %s13
    // Predicated region
    $region53: #{_lambda_.4} parent=5 // pred_check
      %p5945 = pneg %p5944
    $region54: #{_lambda_.4} parent=5 // pred_check_branch
      %5947 = sbr.rel (%p5945) target = $region56
    $region55: #{_lambda_.4} parent=5 // pred_region
      %s5948 = ssub.s32 %s13, 2
      // Predicated region
      $region57: #{_lambda_.4} parent=55 // pred_check
        %p5949 = pneg %p199
      $region58: #{_lambda_.4} parent=55 // pred_check_branch
        %5951 = sbr.rel (%p5949) target = $region60
      $region59: #{_lambda_.4} parent=55 // pred_region
        %p5952 = scmp.lt.s32.totalorder %s19, 1
        %s5953 = scalar_select %p5952, %s19, 1
        %s5954 = smul.addr %s5953, 29
        %s5955 = smul.addr %s5954, 4
        %s5956 = scalar_lea.vmem %s7, %s5955
      $region60: #{_lambda_.4} parent=55 // pred_fallthru
        _
    $region56: #{_lambda_.4} parent=5 // pred_fallthru
      _
  $region6: #{_lambda_.4} parent=0 // loop_footer
    %s17 = sadd.s32 1, %s13
  $region7: #{_lambda_.4} parent=0 // loop_footer_branch
    %12 = sbr.rel target = $region3
  $region8: #{_lambda_.4} parent=0 // loop_exit
    _

</llo_original>
